<compile_context>
chip_gen: v7x
topology: tpu7x:2x2x1
jax: 0.10.0
libtpu: 0.0.40
codegen_flags: <defaults>
</compile_context>

<pallas_src>
import functools
import math

import jax
import jax.numpy as jnp
from jax.experimental import pallas as pl
from jax.experimental.pallas import tpu as pltpu


_NEG_INF = -1e9
_LN_EPS = 1e-6


# ----------------------------------------------------------------------------
# Small helpers
# ----------------------------------------------------------------------------

def _layer_norm(x, gamma, beta, eps=_LN_EPS):
    """Row-wise LayerNorm in f32 (x is f32; gamma/beta are (1, D) f32)."""
    mean = jnp.mean(x, axis=-1, keepdims=True)
    var = jnp.mean((x - mean) ** 2, axis=-1, keepdims=True)
    return (x - mean) * jax.lax.rsqrt(var + eps) * gamma + beta


def _pick_block_batch(batch, rows_per_item, target=128, cap=1024):
    """Largest divisor of `batch` whose row count stays <= cap, preferring >= target."""
    best = 1
    for d in range(1, batch + 1):
        if batch % d == 0 and d * rows_per_item <= cap:
            best = d
            if d * rows_per_item >= target:
                break
    return best


def _pick_rows_block(total, cap=512):
    if total <= cap:
        return total
    for rb in range(cap, 0, -1):
        if total % rb == 0 and rb % 8 == 0:
            return rb
    return total


def _pick_vocab_tile(v_pad, cap=4096):
    best = 128
    for tv in range(128, min(v_pad, cap) + 1, 128):
        if v_pad % tv == 0:
            best = tv
    return best


# ----------------------------------------------------------------------------
# Scene encoder kernel: relu(F2d@W2+b2) + relu(F3d@W3+b3) -> LayerNorm (fused)
# Operates on row-flattened (B*T, d_feat) inputs; rows are independent.
# ----------------------------------------------------------------------------

def _scene_encoder_kernel(f2_ref, f3_ref, w2_ref, b2_ref, w3_ref, b3_ref,
                          g_ref, beta_ref, o_ref):
    h2 = jnp.dot(f2_ref[...], w2_ref[...],
                 preferred_element_type=jnp.float32) + b2_ref[...]
    h3 = jnp.dot(f3_ref[...], w3_ref[...],
                 preferred_element_type=jnp.float32) + b3_ref[...]
    h = jnp.maximum(h2, 0.0) + jnp.maximum(h3, 0.0)
    o_ref[...] = _layer_norm(h, g_ref[...], beta_ref[...]).astype(o_ref.dtype)


def scene_encoder(p, F_2D, F_3D):
    B, T, d2 = F_2D.shape
    d3 = F_3D.shape[-1]
    D = p["w2d"].shape[1]
    rows = B * T
    rb = _pick_rows_block(rows)
    f2 = F_2D.reshape(rows, d2).astype(jnp.bfloat16)
    f3 = F_3D.reshape(rows, d3).astype(jnp.bfloat16)
    return pl.pallas_call(
        _scene_encoder_kernel,
        out_shape=jax.ShapeDtypeStruct((rows, D), jnp.bfloat16),
        grid=(rows // rb,),
        in_specs=[pl.BlockSpec((rb, d2), lambda r: (r, 0)),
                  pl.BlockSpec((rb, d3), lambda r: (r, 0)),
                  pl.BlockSpec((d2, D), lambda r: (0, 0)),
                  pl.BlockSpec((1, D), lambda r: (0, 0)),
                  pl.BlockSpec((d3, D), lambda r: (0, 0)),
                  pl.BlockSpec((1, D), lambda r: (0, 0)),
                  pl.BlockSpec((1, D), lambda r: (0, 0)),
                  pl.BlockSpec((1, D), lambda r: (0, 0))],
        out_specs=pl.BlockSpec((rb, D), lambda r: (r, 0)),
        compiler_params=pltpu.CompilerParams(dimension_semantics=("parallel",)),
    )(f2, f3, p["w2d"], p["b2d"], p["w3d"], p["b3d"], p["ln_g"], p["ln_b"])


# ----------------------------------------------------------------------------
# Fused decoder stack: grid = (batch_blocks, n_layers); activation VMEM-resident
# ----------------------------------------------------------------------------

_LAYER_WEIGHT_NAMES = (
    "sa_wqkv", "sa_bqkv", "sa_wo", "sa_bo", "ln1_g", "ln1_b",
    "ca_wq", "ca_bq", "ca_wkv", "ca_bkv", "ca_wo", "ca_bo", "ln2_g", "ln2_b",
    "ffn_w1", "ffn_b1", "ffn_w2", "ffn_b2", "ln3_g", "ln3_b",
)


def _decoder_stack_kernel(tok_ref, enc_ref, pad_ref, pos_ref, eg_ref, eb_ref,
                          sa_wqkv_ref, sa_bqkv_ref, sa_wo_ref, sa_bo_ref,
                          ln1g_ref, ln1b_ref,
                          ca_wq_ref, ca_bq_ref, ca_wkv_ref, ca_bkv_ref,
                          ca_wo_ref, ca_bo_ref, ln2g_ref, ln2b_ref,
                          ffn_w1_ref, ffn_b1_ref, ffn_w2_ref, ffn_b2_ref,
                          ln3g_ref, ln3b_ref,
                          o_ref, x_scr, att_scr, *, n_heads):
    layer = pl.program_id(1)
    bblk, _, L = pad_ref.shape
    D = tok_ref.shape[1]
    T = enc_ref.shape[0] // bblk
    dh = D // n_heads
    scale = 1.0 / math.sqrt(dh)

    # ---- layer 0: fused (token embedding + positional encoding) -> LayerNorm
    @pl.when(layer == 0)
    def _():
        e = tok_ref[...].astype(jnp.float32) + pos_ref[...]
        x_scr[...] = _layer_norm(e, eg_ref[...], eb_ref[...])

    x = x_scr[...]                                     # (bblk*L, D) f32 resident
    pad = pad_ref[...]                                 # (bblk, 1, L) f32

    # causal mask built in-kernel (no (B*H, L, L) DMA); pad row streamed per batch.
    rix = jax.lax.broadcasted_iota(jnp.int32, (L, L), 0)
    cix = jax.lax.broadcasted_iota(jnp.int32, (L, L), 1)
    causal = jnp.where(cix <= rix, 0.0, _NEG_INF)      # (L, L) f32

    def mm(a, w):                                      # bf16 MXU, f32 accumulate
        return jnp.dot(a.astype(jnp.bfloat16), w,
                       preferred_element_type=jnp.float32)

    def attention(q, kv, kv_rows, masks):
        """q: (bblk*L, D) f32; kv: (bblk*kv_rows, 2D) with K=[:, :D], V=[:, D:].

        Heads are written into the att_scr VMEM slab at their lane offset so the
        output projection afterwards is a single full-K matmul.
        """
        for bb in range(bblk):
            r0, e0 = bb * L, bb * kv_rows
            for h in range(n_heads):
                lo = h * dh
                qh = (q[r0:r0 + L, lo:lo + dh] * scale).astype(jnp.bfloat16)
                kh = kv[e0:e0 + kv_rows, lo:lo + dh].astype(jnp.bfloat16)
                vh = kv[e0:e0 + kv_rows, D + lo:D + lo + dh].astype(jnp.bfloat16)
                s = jax.lax.dot_general(qh, kh, (((1,), (1,)), ((), ())),
                                        preferred_element_type=jnp.float32)
                if masks is not None:
                    s = s + masks[bb]
                s = s - jnp.max(s, axis=-1, keepdims=True)
                p_att = jnp.exp(s)
                p_att = p_att * pl.reciprocal(
                    jnp.sum(p_att, axis=-1, keepdims=True), approx=True)  # EUP
                att_scr[r0:r0 + L, lo:lo + dh] = jnp.dot(
                    p_att.astype(jnp.bfloat16), vh,
                    preferred_element_type=jnp.float32)
        return att_scr[...]                            # (bblk*L, D) f32

    # ---- masked self-attention (fused QKV) + residual + LayerNorm -----------
    qkv = mm(x, sa_wqkv_ref[0]) + sa_bqkv_ref[0]       # (rows, 3D)
    self_masks = [causal + pad[bb, 0] for bb in range(bblk)]
    att = attention(qkv[:, :D], qkv[:, D:], L, self_masks)
    x = _layer_norm(x + mm(att, sa_wo_ref[0]) + sa_bo_ref[0],
                    ln1g_ref[0], ln1b_ref[0])

    # ---- cross-attention over encoder output (fused KV) + residual + LN -----
    cq = mm(x, ca_wq_ref[0]) + ca_bq_ref[0]
    ckv = mm(enc_ref[...], ca_wkv_ref[0]) + ca_bkv_ref[0]
    att = attention(cq, ckv, T, None)
    x = _layer_norm(x + mm(att, ca_wo_ref[0]) + ca_bo_ref[0],
                    ln2g_ref[0], ln2b_ref[0])

    # ---- FFN + residual + LayerNorm ------------------------------------------
    f = jnp.maximum(mm(x, ffn_w1_ref[0]) + ffn_b1_ref[0], 0.0)
    x = _layer_norm(x + mm(f, ffn_w2_ref[0]) + ffn_b2_ref[0],
                    ln3g_ref[0], ln3b_ref[0])

    x_scr[...] = x

    @pl.when(layer == pl.num_programs(1) - 1)
    def _():
        o_ref[...] = x.astype(o_ref.dtype)


def decoder_stack(p, tok_flat, enc_flat, pad_add, pos_tiled, *,
                  n_heads, n_layers, bblk, L):
    R, D = tok_flat.shape                    # R = B * L
    B = R // L
    T = enc_flat.shape[0] // B
    weights = [p["layers"][name] for name in _LAYER_WEIGHT_NAMES]

    in_specs = ([
        pl.BlockSpec((bblk * L, D), lambda b, l: (b, 0)),       # token embeddings
        pl.BlockSpec((bblk * T, D), lambda b, l: (b, 0)),       # encoder output
        pl.BlockSpec((bblk, 1, L), lambda b, l: (b, 0, 0)),     # key-padding row
        pl.BlockSpec((bblk * L, D), lambda b, l: (0, 0)),       # pos enc (tiled)
        pl.BlockSpec((1, D), lambda b, l: (0, 0)),              # embed LN gamma
        pl.BlockSpec((1, D), lambda b, l: (0, 0)),              # embed LN beta
    ] + [pl.BlockSpec((1,) + tuple(w.shape[1:]), lambda b, l: (l, 0, 0))
         for w in weights])

    return pl.pallas_call(
        functools.partial(_decoder_stack_kernel, n_heads=n_heads),
        out_shape=jax.ShapeDtypeStruct((R, D), jnp.bfloat16),
        grid=(B // bblk, n_layers),
        in_specs=in_specs,
        out_specs=pl.BlockSpec((bblk * L, D), lambda b, l: (b, 0)),
        scratch_shapes=[pltpu.VMEM((bblk * L, D), jnp.float32),   # activation
                        pltpu.VMEM((bblk * L, D), jnp.float32)],  # head-output slab
        compiler_params=pltpu.CompilerParams(
            dimension_semantics=("parallel", "arbitrary"),
            vmem_limit_bytes=48 * 1024 * 1024),
    )(tok_flat, enc_flat, pad_add, pos_tiled, p["ln_g"], p["ln_b"], *weights)


# ----------------------------------------------------------------------------
# Shared-embedding logits, vocab-tiled, pre-transposed (D, V_pad) weight
# ----------------------------------------------------------------------------

def _logits_kernel(x_ref, embt_ref, o_ref, *, scale):
    logits = jnp.dot(x_ref[...], embt_ref[...],
                     preferred_element_type=jnp.float32)
    o_ref[...] = logits * scale


def shared_embedding_logits(x, emb_t, *, scale, rows_blk):
    R, D = x.shape
    V_pad = emb_t.shape[1]
    tv = _pick_vocab_tile(V_pad)
    return pl.pallas_call(
        functools.partial(_logits_kernel, scale=scale),
        out_shape=jax.ShapeDtypeStruct((R, V_pad), jnp.float32),
        grid=(R // rows_blk, V_pad // tv),
        in_specs=[pl.BlockSpec((rows_blk, D), lambda b, v: (b, 0)),
                  pl.BlockSpec((D, tv), lambda b, v: (0, v))],
        out_specs=pl.BlockSpec((rows_blk, tv), lambda b, v: (b, v)),
        compiler_params=pltpu.CompilerParams(
            dimension_semantics=("parallel", "parallel")),
    )(x, emb_t)


# ----------------------------------------------------------------------------
# Model forward (plain-JAX glue: embedding gather, pad-mask row, pos tile, slice)
# ----------------------------------------------------------------------------

def transformer_decoder(p, enc_flat, gt_seq, *, n_heads, n_layers, pad_idx, n_vocab):
    B, L = gt_seq.shape
    D = p["emb"].shape[1]
    bblk = _pick_block_batch(B, L)

    tok_flat = jnp.take(p["emb"], gt_seq.reshape(-1), axis=0)        # (B*L, D) bf16
    pad_add = jnp.where(gt_seq != pad_idx, 0.0, _NEG_INF)
    pad_add = pad_add.astype(jnp.float32).reshape(B, 1, L)           # key-padding row
    pos_tiled = jnp.tile(p["pos_enc"][:L], (bblk, 1))                # (bblk*L, D) f32

    dec = decoder_stack(p, tok_flat, enc_flat, pad_add, pos_tiled,
                        n_heads=n_heads, n_layers=n_layers, bblk=bblk, L=L)

    # emb_prj_weight_sharing=True: logits = x @ emb.T * d_model**-0.5
    logits = shared_embedding_logits(dec, p["emb_t"], scale=D ** -0.5,
                                     rows_blk=bblk * L)              # (B*L, V_pad)
    # TODO(synk): upstream repo returns raw logits as "distribution"; no softmax applied.
    return logits[:, :n_vocab]


def scene_branch_forward(params, F_2D, F_3D, gt_seq, *, n_heads, n_layers,
                         pad_idx, n_vocab):
    visual_features = scene_encoder(params["encoder"], F_2D, F_3D)   # (B*T, D) bf16
    return transformer_decoder(params["decoder"], visual_features, gt_seq,
                               n_heads=n_heads, n_layers=n_layers,
                               pad_idx=pad_idx, n_vocab=n_vocab)


# ----------------------------------------------------------------------------
# Deterministic parameter init (bf16 matrices, f32 biases / LayerNorm params)
# ----------------------------------------------------------------------------

def sinusoid_pos_encoding(max_len, d_model):
    pos = jnp.arange(max_len, dtype=jnp.float32)[:, None]
    i = jnp.arange(d_model)[None, :]
    angle = pos / jnp.power(10000.0, (2 * (i // 2)).astype(jnp.float32) / d_model)
    return jnp.where(i % 2 == 0, jnp.sin(angle), jnp.cos(angle)).astype(jnp.float32)


def init_params(key, *, T, d_2D, d_3D, out_feature_size, n_vocab, pad_idx,
                n_layers, n_heads, d_model, d_hidden, max_seq_len):
    assert out_feature_size == d_model, "cross-attention requires matching dims"
    assert d_model % n_heads == 0
    keys = iter(jax.random.split(key, 64 + 32 * n_layers))

    def w(shape, scale=0.02):
        return (scale * jax.random.normal(next(keys), shape, jnp.float32)
                ).astype(jnp.bfloat16)

    def zeros(shape):
        return jnp.zeros(shape, jnp.float32)

    def ones(shape):
        return jnp.ones(shape, jnp.float32)

    def stack_w(shape):
        return jnp.stack([w(shape) for _ in range(n_layers)])

    def stack_zeros(shape):
        return jnp.zeros((n_layers,) + shape, jnp.float32)

    def stack_ones(shape):
        return jnp.ones((n_layers,) + shape, jnp.float32)

    layers = {
        "sa_wqkv": stack_w((d_model, 3 * d_model)), "sa_bqkv": stack_zeros((1, 3 * d_model)),
        "sa_wo": stack_w((d_model, d_model)), "sa_bo": stack_zeros((1, d_model)),
        "ln1_g": stack_ones((1, d_model)), "ln1_b": stack_zeros((1, d_model)),
        "ca_wq": stack_w((d_model, d_model)), "ca_bq": stack_zeros((1, d_model)),
        "ca_wkv": stack_w((d_model, 2 * d_model)), "ca_bkv": stack_zeros((1, 2 * d_model)),
        "ca_wo": stack_w((d_model, d_model)), "ca_bo": stack_zeros((1, d_model)),
        "ln2_g": stack_ones((1, d_model)), "ln2_b": stack_zeros((1, d_model)),
        "ffn_w1": stack_w((d_model, d_hidden)), "ffn_b1": stack_zeros((1, d_hidden)),
        "ffn_w2": stack_w((d_hidden, d_model)), "ffn_b2": stack_zeros((1, d_model)),
        "ln3_g": stack_ones((1, d_model)), "ln3_b": stack_zeros((1, d_model)),
    }

    # nn.Embedding with padding_idx zeroed; vocab padded to a lane-dense multiple
    # of 128 so the vocab-tiled logits stores are unmasked.  emb_t is the
    # pre-transposed shared projection weight (same values, natural MXU layout).
    v_pad = ((n_vocab + 127) // 128) * 128
    emb = 0.02 * jax.random.normal(next(keys), (n_vocab, d_model), jnp.float32)
    emb = emb.at[pad_idx].set(0.0)
    if v_pad > n_vocab:
        emb = jnp.concatenate(
            [emb, jnp.zeros((v_pad - n_vocab, d_model), jnp.float32)], axis=0)
    emb = emb.astype(jnp.bfloat16)

    return {
        "encoder": {
            "w2d": w((d_2D, out_feature_size)), "b2d": zeros((1, out_feature_size)),
            "w3d": w((d_3D, out_feature_size)), "b3d": zeros((1, out_feature_size)),
            "ln_g": ones((1, out_feature_size)), "ln_b": zeros((1, out_feature_size)),
        },
        "decoder": {
            "emb": emb,                      # (V_pad, d_model) bf16 lookup table
            "emb_t": emb.T,                  # (d_model, V_pad) bf16 shared projection
            "pos_enc": sinusoid_pos_encoding(max_seq_len, d_model),
            "ln_g": ones((1, d_model)), "ln_b": zeros((1, d_model)),
            "layers": layers,
        },
    }


# ----------------------------------------------------------------------------
# Demo
# ----------------------------------------------------------------------------

if __name__ == "__main__":
    B, T = 2, 8
    d_2D, d_3D = 16, 24
    d_model = 128          # out_feature_size == d_model; lane-dense (multiple of 128)
    d_hidden = 256
    n_heads, n_layers = 4, 2
    n_vocab, pad_idx = 50, 0
    max_seq_len = 8

    key = jax.random.PRNGKey(0)
    k1, k2, k3, kp = jax.random.split(key, 4)

    F_2D = jax.random.normal(k1, (B, T, d_2D), jnp.float32)
    F_3D = jax.random.normal(k2, (B, T, d_3D), jnp.float32)
    gt_seq = jax.random.randint(k3, (B, max_seq_len), 1, n_vocab, dtype=jnp.int32)
    gt_seq = gt_seq.at[:, -2:].set(pad_idx)   # some padding at the tail

    params = init_params(
        kp, T=T, d_2D=d_2D, d_3D=d_3D, out_feature_size=d_model,
        n_vocab=n_vocab, pad_idx=pad_idx, n_layers=n_layers, n_heads=n_heads,
        d_model=d_model, d_hidden=d_hidden, max_seq_len=max_seq_len)

    fwd = jax.jit(functools.partial(
        scene_branch_forward, n_heads=n_heads, n_layers=n_layers,
        pad_idx=pad_idx, n_vocab=n_vocab))

    distribution = fwd(params, F_2D, F_3D, gt_seq)
    jax.block_until_ready(distribution)

    assert distribution.shape == (B * max_seq_len, n_vocab), distribution.shape
    assert bool(jnp.all(jnp.isfinite(distribution)))
    print("KERNEL_OK")
</pallas_src>

<mosaic_0001>
module attributes {stable_mosaic.version = 11 : i64} {
  func.func @_scene_encoder_kernel(%arg0: i32, %arg1: memref<16x16xbf16, #tpu.memory_space<vmem>>, %arg2: memref<16x24xbf16, #tpu.memory_space<vmem>>, %arg3: memref<16x128xbf16, #tpu.memory_space<vmem>>, %arg4: memref<1x128xf32, #tpu.memory_space<vmem>>, %arg5: memref<24x128xbf16, #tpu.memory_space<vmem>>, %arg6: memref<1x128xf32, #tpu.memory_space<vmem>>, %arg7: memref<1x128xf32, #tpu.memory_space<vmem>>, %arg8: memref<1x128xf32, #tpu.memory_space<vmem>>, %arg9: memref<16x128xbf16, #tpu.memory_space<vmem>>) attributes {dimension_semantics = [#tpu.dimension_semantics<parallel>], iteration_bounds = array<i64: 1>, scalar_prefetch = 0 : i64, scratch_operands = 0 : i64, tpu.core_type = #tpu.core_type<tc>, window_params = [{transform_indices = @transform_0, window_bounds = array<i64: 16, 16>}, {transform_indices = @transform_1, window_bounds = array<i64: 16, 24>}, {pipeline_mode = #tpu.pipeline_mode<synchronous>, transform_indices = @transform_2, window_bounds = array<i64: 16, 128>}, {pipeline_mode = #tpu.pipeline_mode<synchronous>, transform_indices = @transform_3, window_bounds = array<i64: 1, 128>}, {pipeline_mode = #tpu.pipeline_mode<synchronous>, transform_indices = @transform_4, window_bounds = array<i64: 24, 128>}, {pipeline_mode = #tpu.pipeline_mode<synchronous>, transform_indices = @transform_5, window_bounds = array<i64: 1, 128>}, {pipeline_mode = #tpu.pipeline_mode<synchronous>, transform_indices = @transform_6, window_bounds = array<i64: 1, 128>}, {pipeline_mode = #tpu.pipeline_mode<synchronous>, transform_indices = @transform_7, window_bounds = array<i64: 1, 128>}, {transform_indices = @transform_8, window_bounds = array<i64: 16, 128>}]} {
    %c0 = arith.constant 0 : index
    %c0_0 = arith.constant 0 : index
    %0 = vector.load %arg1[%c0, %c0_0] : memref<16x16xbf16, #tpu.memory_space<vmem>>, vector<16x16xbf16>
    %c0_1 = arith.constant 0 : index
    %c0_2 = arith.constant 0 : index
    %1 = vector.load %arg3[%c0_1, %c0_2] : memref<16x128xbf16, #tpu.memory_space<vmem>>, vector<16x128xbf16>
    %cst = arith.constant dense<0.000000e+00> : vector<16x128xf32>
    %2 = tpu.matmul %0, %1, %cst {dimension_numbers = #tpu.dot_dimension_numbers<[1], [0], [0], [1], [0, 0, 1, 1], [], []>} : vector<16x16xbf16>, vector<16x128xbf16>, vector<16x128xf32> -> vector<16x128xf32>
    %c0_3 = arith.constant 0 : index
    %c0_4 = arith.constant 0 : index
    %3 = vector.load %arg4[%c0_3, %c0_4] : memref<1x128xf32, #tpu.memory_space<vmem>>, vector<1x128xf32>
    %4 = vector.broadcast %3 : vector<1x128xf32> to vector<16x128xf32>
    %5 = arith.addf %2, %4 : vector<16x128xf32>
    %c0_5 = arith.constant 0 : index
    %c0_6 = arith.constant 0 : index
    %6 = vector.load %arg2[%c0_5, %c0_6] : memref<16x24xbf16, #tpu.memory_space<vmem>>, vector<16x24xbf16>
    %c0_7 = arith.constant 0 : index
    %c0_8 = arith.constant 0 : index
    %7 = vector.load %arg5[%c0_7, %c0_8] : memref<24x128xbf16, #tpu.memory_space<vmem>>, vector<24x128xbf16>
    %cst_9 = arith.constant dense<0.000000e+00> : vector<16x128xf32>
    %8 = tpu.matmul %6, %7, %cst_9 {dimension_numbers = #tpu.dot_dimension_numbers<[1], [0], [0], [1], [0, 0, 1, 1], [], []>} : vector<16x24xbf16>, vector<24x128xbf16>, vector<16x128xf32> -> vector<16x128xf32>
    %c0_10 = arith.constant 0 : index
    %c0_11 = arith.constant 0 : index
    %9 = vector.load %arg6[%c0_10, %c0_11] : memref<1x128xf32, #tpu.memory_space<vmem>>, vector<1x128xf32>
    %10 = vector.broadcast %9 : vector<1x128xf32> to vector<16x128xf32>
    %11 = arith.addf %8, %10 : vector<16x128xf32>
    %cst_12 = arith.constant 0.000000e+00 : f32
    %12 = vector.broadcast %cst_12 : f32 to vector<16x128xf32>
    %13 = arith.maximumf %5, %12 : vector<16x128xf32>
    %cst_13 = arith.constant 0.000000e+00 : f32
    %14 = vector.broadcast %cst_13 : f32 to vector<16x128xf32>
    %15 = arith.maximumf %11, %14 : vector<16x128xf32>
    %16 = arith.addf %13, %15 : vector<16x128xf32>
    %c0_14 = arith.constant 0 : index
    %c0_15 = arith.constant 0 : index
    %17 = vector.load %arg7[%c0_14, %c0_15] : memref<1x128xf32, #tpu.memory_space<vmem>>, vector<1x128xf32>
    %c0_16 = arith.constant 0 : index
    %c0_17 = arith.constant 0 : index
    %18 = vector.load %arg8[%c0_16, %c0_17] : memref<1x128xf32, #tpu.memory_space<vmem>>, vector<1x128xf32>
    %cst_18 = arith.constant dense<0.000000e+00> : vector<16xf32>
    %19 = vector.multi_reduction <add>, %16, %cst_18 [1] : vector<16x128xf32> to vector<16xf32>
    %20 = vector.shape_cast %19 : vector<16xf32> to vector<16x1xf32>
    %cst_19 = arith.constant 1.280000e+02 : f32
    %21 = vector.broadcast %cst_19 : f32 to vector<16x1xf32>
    %22 = arith.divf %20, %21 : vector<16x1xf32>
    %23 = vector.broadcast %22 : vector<16x1xf32> to vector<16x128xf32>
    %24 = arith.subf %16, %23 : vector<16x128xf32>
    %25 = arith.mulf %24, %24 : vector<16x128xf32>
    %cst_20 = arith.constant dense<0.000000e+00> : vector<16xf32>
    %26 = vector.multi_reduction <add>, %25, %cst_20 [1] : vector<16x128xf32> to vector<16xf32>
    %27 = vector.shape_cast %26 : vector<16xf32> to vector<16x1xf32>
    %cst_21 = arith.constant 1.280000e+02 : f32
    %28 = vector.broadcast %cst_21 : f32 to vector<16x1xf32>
    %29 = arith.divf %27, %28 : vector<16x1xf32>
    %30 = vector.broadcast %22 : vector<16x1xf32> to vector<16x128xf32>
    %31 = arith.subf %16, %30 : vector<16x128xf32>
    %cst_22 = arith.constant 9.99999997E-7 : f32
    %32 = vector.broadcast %cst_22 : f32 to vector<16x1xf32>
    %33 = arith.addf %29, %32 : vector<16x1xf32>
    %34 = math.rsqrt %33 : vector<16x1xf32>
    %35 = vector.broadcast %34 : vector<16x1xf32> to vector<16x128xf32>
    %36 = arith.mulf %31, %35 : vector<16x128xf32>
    %37 = vector.broadcast %17 : vector<1x128xf32> to vector<16x128xf32>
    %38 = arith.mulf %36, %37 : vector<16x128xf32>
    %39 = vector.broadcast %18 : vector<1x128xf32> to vector<16x128xf32>
    %40 = arith.addf %38, %39 : vector<16x128xf32>
    %41 = arith.truncf %40 : vector<16x128xf32> to vector<16x128xbf16>
    %c0_23 = arith.constant 0 : index
    %c0_24 = arith.constant 0 : index
    %42 = vector.load %arg9[%c0_23, %c0_24] : memref<16x128xbf16, #tpu.memory_space<vmem>>, vector<16x128xbf16>
    tpu.vector_store %arg9[%c0_23, %c0_24], %41 {strides = array<i32>} : memref<16x128xbf16, #tpu.memory_space<vmem>>, vector<16x128xbf16>,
    return
  }
  func.func @transform_0(%arg0: i32) -> (i32, i32) {
    %c0_i32 = arith.constant 0 : i32
    %c0_i32_0 = arith.constant 0 : i32
    return %arg0, %c0_i32 : i32, i32
  }
  func.func @transform_1(%arg0: i32) -> (i32, i32) {
    %c0_i32 = arith.constant 0 : i32
    %c0_i32_0 = arith.constant 0 : i32
    return %arg0, %c0_i32 : i32, i32
  }
  func.func @transform_2(%arg0: i32) -> (i32, i32) {
    %c0_i32 = arith.constant 0 : i32
    %c0_i32_0 = arith.constant 0 : i32
    %c0_i32_1 = arith.constant 0 : i32
    return %c0_i32, %c0_i32_0 : i32, i32
  }
  func.func @transform_3(%arg0: i32) -> (i32, i32) {
    %c0_i32 = arith.constant 0 : i32
    %c0_i32_0 = arith.constant 0 : i32
    %c0_i32_1 = arith.constant 0 : i32
    return %c0_i32, %c0_i32_0 : i32, i32
  }
  func.func @transform_4(%arg0: i32) -> (i32, i32) {
    %c0_i32 = arith.constant 0 : i32
    %c0_i32_0 = arith.constant 0 : i32
    %c0_i32_1 = arith.constant 0 : i32
    return %c0_i32, %c0_i32_0 : i32, i32
  }
  func.func @transform_5(%arg0: i32) -> (i32, i32) {
    %c0_i32 = arith.constant 0 : i32
    %c0_i32_0 = arith.constant 0 : i32
    %c0_i32_1 = arith.constant 0 : i32
    return %c0_i32, %c0_i32_0 : i32, i32
  }
  func.func @transform_6(%arg0: i32) -> (i32, i32) {
    %c0_i32 = arith.constant 0 : i32
    %c0_i32_0 = arith.constant 0 : i32
    %c0_i32_1 = arith.constant 0 : i32
    return %c0_i32, %c0_i32_0 : i32, i32
  }
  func.func @transform_7(%arg0: i32) -> (i32, i32) {
    %c0_i32 = arith.constant 0 : i32
    %c0_i32_0 = arith.constant 0 : i32
    %c0_i32_1 = arith.constant 0 : i32
    return %c0_i32, %c0_i32_0 : i32, i32
  }
  func.func @transform_8(%arg0: i32) -> (i32, i32) {
    %c0_i32 = arith.constant 0 : i32
    %c0_i32_0 = arith.constant 0 : i32
    return %arg0, %c0_i32 : i32, i32
  }
}

module attributes {stable_mosaic.version = 11 : i64} {
  func.func @_logits_kernel(%arg0: i32, %arg1: i32, %arg2: memref<16x128xbf16, #tpu.memory_space<vmem>>, %arg3: memref<128x128xbf16, #tpu.memory_space<vmem>>, %arg4: memref<16x128xf32, #tpu.memory_space<vmem>>) attributes {dimension_semantics = [#tpu.dimension_semantics<parallel>, #tpu.dimension_semantics<parallel>], iteration_bounds = array<i64: 1, 1>, scalar_prefetch = 0 : i64, scratch_operands = 0 : i64, tpu.core_type = #tpu.core_type<tc>, window_params = [{transform_indices = @transform_0, window_bounds = array<i64: 16, 128>}, {transform_indices = @transform_1, window_bounds = array<i64: 128, 128>}, {transform_indices = @transform_2, window_bounds = array<i64: 16, 128>}]} {
    %c0 = arith.constant 0 : index
    %c0_0 = arith.constant 0 : index
    %0 = vector.load %arg2[%c0, %c0_0] : memref<16x128xbf16, #tpu.memory_space<vmem>>, vector<16x128xbf16>
    %c0_1 = arith.constant 0 : index
    %c0_2 = arith.constant 0 : index
    %1 = vector.load %arg3[%c0_1, %c0_2] : memref<128x128xbf16, #tpu.memory_space<vmem>>, vector<128x128xbf16>
    %cst = arith.constant dense<0.000000e+00> : vector<16x128xf32>
    %2 = tpu.matmul %0, %1, %cst {dimension_numbers = #tpu.dot_dimension_numbers<[1], [0], [0], [1], [0, 0, 1, 1], [], []>} : vector<16x128xbf16>, vector<128x128xbf16>, vector<16x128xf32> -> vector<16x128xf32>
    %cst_3 = arith.constant 0.0883883461 : f32
    %3 = vector.broadcast %cst_3 : f32 to vector<16x128xf32>
    %4 = arith.mulf %2, %3 : vector<16x128xf32>
    %c0_4 = arith.constant 0 : index
    %c0_5 = arith.constant 0 : index
    %5 = vector.load %arg4[%c0_4, %c0_5] : memref<16x128xf32, #tpu.memory_space<vmem>>, vector<16x128xf32>
    tpu.vector_store %arg4[%c0_4, %c0_5], %4 {strides = array<i32>} : memref<16x128xf32, #tpu.memory_space<vmem>>, vector<16x128xf32>,
    return
  }
  func.func @transform_0(%arg0: i32, %arg1: i32) -> (i32, i32) {
    %c0_i32 = arith.constant 0 : i32
    %c0_i32_0 = arith.constant 0 : i32
    return %arg0, %c0_i32 : i32, i32
  }
  func.func @transform_1(%arg0: i32, %arg1: i32) -> (i32, i32) {
    %c0_i32 = arith.constant 0 : i32
    %c0_i32_0 = arith.constant 0 : i32
    return %c0_i32, %arg1 : i32, i32
  }
  func.func @transform_2(%arg0: i32, %arg1: i32) -> (i32, i32) {
    %c0_i32 = arith.constant 0 : i32
    return %arg0, %arg1 : i32, i32
  }
}

module attributes {stable_mosaic.version = 11 : i64} {
  func.func @_decoder_stack_kernel(%arg0: i32, %arg1: i32, %arg2: memref<16x128xbf16, #tpu.memory_space<vmem>>, %arg3: memref<16x128xbf16, #tpu.memory_space<vmem>>, %arg4: memref<2x1x8xf32, #tpu.memory_space<vmem>>, %arg5: memref<16x128xf32, #tpu.memory_space<vmem>>, %arg6: memref<1x128xf32, #tpu.memory_space<vmem>>, %arg7: memref<1x128xf32, #tpu.memory_space<vmem>>, %arg8: memref<1x128x384xbf16, #tpu.memory_space<vmem>>, %arg9: memref<1x1x384xf32, #tpu.memory_space<vmem>>, %arg10: memref<1x128x128xbf16, #tpu.memory_space<vmem>>, %arg11: memref<1x1x128xf32, #tpu.memory_space<vmem>>, %arg12: memref<1x1x128xf32, #tpu.memory_space<vmem>>, %arg13: memref<1x1x128xf32, #tpu.memory_space<vmem>>, %arg14: memref<1x128x128xbf16, #tpu.memory_space<vmem>>, %arg15: memref<1x1x128xf32, #tpu.memory_space<vmem>>, %arg16: memref<1x128x256xbf16, #tpu.memory_space<vmem>>, %arg17: memref<1x1x256xf32, #tpu.memory_space<vmem>>, %arg18: memref<1x128x128xbf16, #tpu.memory_space<vmem>>, %arg19: memref<1x1x128xf32, #tpu.memory_space<vmem>>, %arg20: memref<1x1x128xf32, #tpu.memory_space<vmem>>, %arg21: memref<1x1x128xf32, #tpu.memory_space<vmem>>, %arg22: memref<1x128x256xbf16, #tpu.memory_space<vmem>>, %arg23: memref<1x1x256xf32, #tpu.memory_space<vmem>>, %arg24: memref<1x256x128xbf16, #tpu.memory_space<vmem>>, %arg25: memref<1x1x128xf32, #tpu.memory_space<vmem>>, %arg26: memref<1x1x128xf32, #tpu.memory_space<vmem>>, %arg27: memref<1x1x128xf32, #tpu.memory_space<vmem>>, %arg28: memref<16x128xbf16, #tpu.memory_space<vmem>>, %arg29: memref<16x128xf32, #tpu.memory_space<vmem>>, %arg30: memref<16x128xf32, #tpu.memory_space<vmem>>) attributes {dimension_semantics = [#tpu.dimension_semantics<parallel>, #tpu.dimension_semantics<arbitrary>], iteration_bounds = array<i64: 1, 2>, scalar_prefetch = 0 : i64, scratch_operands = 2 : i64, tpu.core_type = #tpu.core_type<tc>, window_params = [{transform_indices = @transform_0, window_bounds = array<i64: 16, 128>}, {transform_indices = @transform_1, window_bounds = array<i64: 16, 128>}, {transform_indices = @transform_2, window_bounds = array<i64: 2, 1, 8>}, {pipeline_mode = #tpu.pipeline_mode<synchronous>, transform_indices = @transform_3, window_bounds = array<i64: 16, 128>}, {pipeline_mode = #tpu.pipeline_mode<synchronous>, transform_indices = @transform_4, window_bounds = array<i64: 1, 128>}, {pipeline_mode = #tpu.pipeline_mode<synchronous>, transform_indices = @transform_5, window_bounds = array<i64: 1, 128>}, {transform_indices = @transform_6, window_bounds = array<i64: 1, 128, 384>}, {transform_indices = @transform_7, window_bounds = array<i64: 1, 1, 384>}, {transform_indices = @transform_8, window_bounds = array<i64: 1, 128, 128>}, {transform_indices = @transform_9, window_bounds = array<i64: 1, 1, 128>}, {transform_indices = @transform_10, window_bounds = array<i64: 1, 1, 128>}, {transform_indices = @transform_11, window_bounds = array<i64: 1, 1, 128>}, {transform_indices = @transform_12, window_bounds = array<i64: 1, 128, 128>}, {transform_indices = @transform_13, window_bounds = array<i64: 1, 1, 128>}, {transform_indices = @transform_14, window_bounds = array<i64: 1, 128, 256>}, {transform_indices = @transform_15, window_bounds = array<i64: 1, 1, 256>}, {transform_indices = @transform_16, window_bounds = array<i64: 1, 128, 128>}, {transform_indices = @transform_17, window_bounds = array<i64: 1, 1, 128>}, {transform_indices = @transform_18, window_bounds = array<i64: 1, 1, 128>}, {transform_indices = @transform_19, window_bounds = array<i64: 1, 1, 128>}, {transform_indices = @transform_20, window_bounds = array<i64: 1, 128, 256>}, {transform_indices = @transform_21, window_bounds = array<i64: 1, 1, 256>}, {transform_indices = @transform_22, window_bounds = array<i64: 1, 256, 128>}, {transform_indices = @transform_23, window_bounds = array<i64: 1, 1, 128>}, {transform_indices = @transform_24, window_bounds = array<i64: 1, 1, 128>}, {transform_indices = @transform_25, window_bounds = array<i64: 1, 1, 128>}, {transform_indices = @transform_26, window_bounds = array<i64: 16, 128>}]} {
    %c0_i32 = arith.constant 0 : i32
    %0 = arith.cmpi eq, %arg1, %c0_i32 : i32
    %1 = arith.extui %0 : i1 to i32
    %c0_i32_0 = arith.constant 0 : i32
    %2 = arith.cmpi ne, %1, %c0_i32_0 : i32
    scf.if %2 {
      %c0_206 = arith.constant 0 : index
      %c0_207 = arith.constant 0 : index
      %528 = vector.load %arg2[%c0_206, %c0_207] : memref<16x128xbf16, #tpu.memory_space<vmem>>, vector<16x128xbf16>
      %529 = arith.extf %528 : vector<16x128xbf16> to vector<16x128xf32>
      %c0_208 = arith.constant 0 : index
      %c0_209 = arith.constant 0 : index
      %530 = vector.load %arg5[%c0_208, %c0_209] : memref<16x128xf32, #tpu.memory_space<vmem>>, vector<16x128xf32>
      %531 = arith.addf %529, %530 : vector<16x128xf32>
      %c0_210 = arith.constant 0 : index
      %c0_211 = arith.constant 0 : index
      %532 = vector.load %arg6[%c0_210, %c0_211] : memref<1x128xf32, #tpu.memory_space<vmem>>, vector<1x128xf32>
      %c0_212 = arith.constant 0 : index
      %c0_213 = arith.constant 0 : index
      %533 = vector.load %arg7[%c0_212, %c0_213] : memref<1x128xf32, #tpu.memory_space<vmem>>, vector<1x128xf32>
      %cst_214 = arith.constant dense<0.000000e+00> : vector<16xf32>
      %534 = vector.multi_reduction <add>, %531, %cst_214 [1] : vector<16x128xf32> to vector<16xf32>
      %535 = vector.shape_cast %534 : vector<16xf32> to vector<16x1xf32>
      %cst_215 = arith.constant 1.280000e+02 : f32
      %536 = vector.broadcast %cst_215 : f32 to vector<16x1xf32>
      %537 = arith.divf %535, %536 : vector<16x1xf32>
      %538 = vector.broadcast %537 : vector<16x1xf32> to vector<16x128xf32>
      %539 = arith.subf %531, %538 : vector<16x128xf32>
      %540 = arith.mulf %539, %539 : vector<16x128xf32>
      %cst_216 = arith.constant dense<0.000000e+00> : vector<16xf32>
      %541 = vector.multi_reduction <add>, %540, %cst_216 [1] : vector<16x128xf32> to vector<16xf32>
      %542 = vector.shape_cast %541 : vector<16xf32> to vector<16x1xf32>
      %cst_217 = arith.constant 1.280000e+02 : f32
      %543 = vector.broadcast %cst_217 : f32 to vector<16x1xf32>
      %544 = arith.divf %542, %543 : vector<16x1xf32>
      %545 = vector.broadcast %537 : vector<16x1xf32> to vector<16x128xf32>
      %546 = arith.subf %531, %545 : vector<16x128xf32>
      %cst_218 = arith.constant 9.99999997E-7 : f32
      %547 = vector.broadcast %cst_218 : f32 to vector<16x1xf32>
      %548 = arith.addf %544, %547 : vector<16x1xf32>
      %549 = math.rsqrt %548 : vector<16x1xf32>
      %550 = vector.broadcast %549 : vector<16x1xf32> to vector<16x128xf32>
      %551 = arith.mulf %546, %550 : vector<16x128xf32>
      %552 = vector.broadcast %532 : vector<1x128xf32> to vector<16x128xf32>
      %553 = arith.mulf %551, %552 : vector<16x128xf32>
      %554 = vector.broadcast %533 : vector<1x128xf32> to vector<16x128xf32>
      %555 = arith.addf %553, %554 : vector<16x128xf32>
      %c0_219 = arith.constant 0 : index
      %c0_220 = arith.constant 0 : index
      %556 = vector.load %arg29[%c0_219, %c0_220] : memref<16x128xf32, #tpu.memory_space<vmem>>, vector<16x128xf32>
      tpu.vector_store %arg29[%c0_219, %c0_220], %555 {strides = array<i32>} : memref<16x128xf32, #tpu.memory_space<vmem>>, vector<16x128xf32>,
    } else {
    }
    %c0 = arith.constant 0 : index
    %c0_1 = arith.constant 0 : index
    %3 = vector.load %arg29[%c0, %c0_1] : memref<16x128xf32, #tpu.memory_space<vmem>>, vector<16x128xf32>
    %c0_2 = arith.constant 0 : index
    %c0_3 = arith.constant 0 : index
    %c0_4 = arith.constant 0 : index
    %4 = vector.load %arg4[%c0_2, %c0_3, %c0_4] : memref<2x1x8xf32, #tpu.memory_space<vmem>>, vector<2x1x8xf32>
    %5 = tpu.iota {dimensions = array<i32: 0>} : vector<8x8xi32>
    %6 = tpu.iota {dimensions = array<i32: 1>} : vector<8x8xi32>
    %7 = arith.cmpi sle, %6, %5 : vector<8x8xi32>
    %cst = arith.constant 0.000000e+00 : f32
    %cst_5 = arith.constant -1.000000e+09 : f32
    %8 = vector.broadcast %cst : f32 to vector<8x8xf32>
    %9 = vector.broadcast %cst_5 : f32 to vector<8x8xf32>
    %10 = arith.select %7, %8, %9 : vector<8x8xi1>, vector<8x8xf32>
    %c0_6 = arith.constant 0 : index
    %c0_7 = arith.constant 0 : index
    %c0_8 = arith.constant 0 : index
    %11 = vector.load %arg8[%c0_6, %c0_7, %c0_8] : memref<1x128x384xbf16, #tpu.memory_space<vmem>>, vector<1x128x384xbf16>
    %12 = vector.shape_cast %11 : vector<1x128x384xbf16> to vector<128x384xbf16>
    %13 = arith.truncf %3 : vector<16x128xf32> to vector<16x128xbf16>
    %cst_9 = arith.constant dense<0.000000e+00> : vector<16x384xf32>
    %14 = tpu.matmul %13, %12, %cst_9 {dimension_numbers = #tpu.dot_dimension_numbers<[1], [0], [0], [1], [0, 0, 1, 1], [], []>} : vector<16x128xbf16>, vector<128x384xbf16>, vector<16x384xf32> -> vector<16x384xf32>
    %c0_10 = arith.constant 0 : index
    %c0_11 = arith.constant 0 : index
    %c0_12 = arith.constant 0 : index
    %15 = vector.load %arg9[%c0_10, %c0_11, %c0_12] : memref<1x1x384xf32, #tpu.memory_space<vmem>>, vector<1x1x384xf32>
    %16 = vector.shape_cast %15 : vector<1x1x384xf32> to vector<1x384xf32>
    %17 = vector.broadcast %16 : vector<1x384xf32> to vector<16x384xf32>
    %18 = arith.addf %14, %17 : vector<16x384xf32>
    %19 = vector.extract_strided_slice %4 {offsets = [0, 0, 0], sizes = [1, 1, 8], strides = [1, 1, 1]} : vector<2x1x8xf32> to vector<1x1x8xf32>
    %20 = vector.shape_cast %19 : vector<1x1x8xf32> to vector<8xf32>
    %21 = vector.shape_cast %20 : vector<8xf32> to vector<1x8xf32>
    %22 = vector.broadcast %21 : vector<1x8xf32> to vector<8x8xf32>
    %23 = arith.addf %10, %22 : vector<8x8xf32>
    %24 = vector.extract_strided_slice %4 {offsets = [1, 0, 0], sizes = [1, 1, 8], strides = [1, 1, 1]} : vector<2x1x8xf32> to vector<1x1x8xf32>
    %25 = vector.shape_cast %24 : vector<1x1x8xf32> to vector<8xf32>
    %26 = vector.shape_cast %25 : vector<8xf32> to vector<1x8xf32>
    %27 = vector.broadcast %26 : vector<1x8xf32> to vector<8x8xf32>
    %28 = arith.addf %10, %27 : vector<8x8xf32>
    %29 = vector.extract_strided_slice %18 {offsets = [0, 0], sizes = [16, 128], strides = [1, 1]} : vector<16x384xf32> to vector<16x128xf32>
    %30 = vector.extract_strided_slice %18 {offsets = [0, 128], sizes = [16, 256], strides = [1, 1]} : vector<16x384xf32> to vector<16x256xf32>
    %31 = vector.extract_strided_slice %29 {offsets = [0, 0], sizes = [8, 32], strides = [1, 1]} : vector<16x128xf32> to vector<8x32xf32>
    %cst_13 = arith.constant 0.176776692 : f32
    %32 = vector.broadcast %cst_13 : f32 to vector<8x32xf32>
    %33 = arith.mulf %31, %32 : vector<8x32xf32>
    %34 = arith.truncf %33 : vector<8x32xf32> to vector<8x32xbf16>
    %35 = vector.extract_strided_slice %30 {offsets = [0, 0], sizes = [8, 32], strides = [1, 1]} : vector<16x256xf32> to vector<8x32xf32>
    %36 = arith.truncf %35 : vector<8x32xf32> to vector<8x32xbf16>
    %37 = vector.extract_strided_slice %30 {offsets = [0, 128], sizes = [8, 32], strides = [1, 1]} : vector<16x256xf32> to vector<8x32xf32>
    %38 = arith.truncf %37 : vector<8x32xf32> to vector<8x32xbf16>
    %cst_14 = arith.constant dense<0.000000e+00> : vector<8x8xf32>
    %39 = tpu.matmul %34, %36, %cst_14 {dimension_numbers = #tpu.dot_dimension_numbers<[1], [1], [0], [0], [0, 0, 1, 0], [], []>} : vector<8x32xbf16>, vector<8x32xbf16>, vector<8x8xf32> -> vector<8x8xf32>
    %40 = arith.addf %39, %23 : vector<8x8xf32>
    %cst_15 = arith.constant dense<0xFF800000> : vector<8xf32>
    %41 = vector.multi_reduction <maximumf>, %40, %cst_15 [1] : vector<8x8xf32> to vector<8xf32>
    %42 = vector.shape_cast %41 : vector<8xf32> to vector<8x1xf32>
    %43 = vector.broadcast %42 : vector<8x1xf32> to vector<8x8xf32>
    %44 = arith.subf %40, %43 : vector<8x8xf32>
    %45 = math.exp %44 : vector<8x8xf32>
    %cst_16 = arith.constant dense<0.000000e+00> : vector<8xf32>
    %46 = vector.multi_reduction <add>, %45, %cst_16 [1] : vector<8x8xf32> to vector<8xf32>
    %47 = vector.shape_cast %46 : vector<8xf32> to vector<8x1xf32>
    %48 = tpu.reciprocal %47 {approx = true} : vector<8x1xf32> -> vector<8x1xf32>
    %49 = vector.broadcast %48 : vector<8x1xf32> to vector<8x8xf32>
    %50 = arith.mulf %45, %49 : vector<8x8xf32>
    %51 = arith.truncf %50 : vector<8x8xf32> to vector<8x8xbf16>
    %cst_17 = arith.constant dense<0.000000e+00> : vector<8x32xf32>
    %52 = tpu.matmul %51, %38, %cst_17 {dimension_numbers = #tpu.dot_dimension_numbers<[1], [0], [0], [1], [0, 0, 1, 1], [], []>} : vector<8x8xbf16>, vector<8x32xbf16>, vector<8x32xf32> -> vector<8x32xf32>
    %c0_18 = arith.constant 0 : index
    %c0_19 = arith.constant 0 : index
    %53 = vector.load %arg30[%c0_18, %c0_19] : memref<16x128xf32, #tpu.memory_space<vmem>>, vector<8x32xf32>
    tpu.vector_store %arg30[%c0_18, %c0_19], %52 {strides = array<i32>} : memref<16x128xf32, #tpu.memory_space<vmem>>, vector<8x32xf32>,
    %54 = vector.extract_strided_slice %29 {offsets = [0, 32], sizes = [8, 32], strides = [1, 1]} : vector<16x128xf32> to vector<8x32xf32>
    %cst_20 = arith.constant 0.176776692 : f32
    %55 = vector.broadcast %cst_20 : f32 to vector<8x32xf32>
    %56 = arith.mulf %54, %55 : vector<8x32xf32>
    %57 = arith.truncf %56 : vector<8x32xf32> to vector<8x32xbf16>
    %58 = vector.extract_strided_slice %30 {offsets = [0, 32], sizes = [8, 32], strides = [1, 1]} : vector<16x256xf32> to vector<8x32xf32>
    %59 = arith.truncf %58 : vector<8x32xf32> to vector<8x32xbf16>
    %60 = vector.extract_strided_slice %30 {offsets = [0, 160], sizes = [8, 32], strides = [1, 1]} : vector<16x256xf32> to vector<8x32xf32>
    %61 = arith.truncf %60 : vector<8x32xf32> to vector<8x32xbf16>
    %cst_21 = arith.constant dense<0.000000e+00> : vector<8x8xf32>
    %62 = tpu.matmul %57, %59, %cst_21 {dimension_numbers = #tpu.dot_dimension_numbers<[1], [1], [0], [0], [0, 0, 1, 0], [], []>} : vector<8x32xbf16>, vector<8x32xbf16>, vector<8x8xf32> -> vector<8x8xf32>
    %63 = arith.addf %62, %23 : vector<8x8xf32>
    %cst_22 = arith.constant dense<0xFF800000> : vector<8xf32>
    %64 = vector.multi_reduction <maximumf>, %63, %cst_22 [1] : vector<8x8xf32> to vector<8xf32>
    %65 = vector.shape_cast %64 : vector<8xf32> to vector<8x1xf32>
    %66 = vector.broadcast %65 : vector<8x1xf32> to vector<8x8xf32>
    %67 = arith.subf %63, %66 : vector<8x8xf32>
    %68 = math.exp %67 : vector<8x8xf32>
    %cst_23 = arith.constant dense<0.000000e+00> : vector<8xf32>
    %69 = vector.multi_reduction <add>, %68, %cst_23 [1] : vector<8x8xf32> to vector<8xf32>
    %70 = vector.shape_cast %69 : vector<8xf32> to vector<8x1xf32>
    %71 = tpu.reciprocal %70 {approx = true} : vector<8x1xf32> -> vector<8x1xf32>
    %72 = vector.broadcast %71 : vector<8x1xf32> to vector<8x8xf32>
    %73 = arith.mulf %68, %72 : vector<8x8xf32>
    %74 = arith.truncf %73 : vector<8x8xf32> to vector<8x8xbf16>
    %cst_24 = arith.constant dense<0.000000e+00> : vector<8x32xf32>
    %75 = tpu.matmul %74, %61, %cst_24 {dimension_numbers = #tpu.dot_dimension_numbers<[1], [0], [0], [1], [0, 0, 1, 1], [], []>} : vector<8x8xbf16>, vector<8x32xbf16>, vector<8x32xf32> -> vector<8x32xf32>
    %c0_25 = arith.constant 0 : index
    %c32 = arith.constant 32 : index
    %76 = vector.load %arg30[%c0_25, %c32] : memref<16x128xf32, #tpu.memory_space<vmem>>, vector<8x32xf32>
    tpu.vector_store %arg30[%c0_25, %c32], %75 {strides = array<i32>} : memref<16x128xf32, #tpu.memory_space<vmem>>, vector<8x32xf32>,
    %77 = vector.extract_strided_slice %29 {offsets = [0, 64], sizes = [8, 32], strides = [1, 1]} : vector<16x128xf32> to vector<8x32xf32>
    %cst_26 = arith.constant 0.176776692 : f32
    %78 = vector.broadcast %cst_26 : f32 to vector<8x32xf32>
    %79 = arith.mulf %77, %78 : vector<8x32xf32>
    %80 = arith.truncf %79 : vector<8x32xf32> to vector<8x32xbf16>
    %81 = vector.extract_strided_slice %30 {offsets = [0, 64], sizes = [8, 32], strides = [1, 1]} : vector<16x256xf32> to vector<8x32xf32>
    %82 = arith.truncf %81 : vector<8x32xf32> to vector<8x32xbf16>
    %83 = vector.extract_strided_slice %30 {offsets = [0, 192], sizes = [8, 32], strides = [1, 1]} : vector<16x256xf32> to vector<8x32xf32>
    %84 = arith.truncf %83 : vector<8x32xf32> to vector<8x32xbf16>
    %cst_27 = arith.constant dense<0.000000e+00> : vector<8x8xf32>
    %85 = tpu.matmul %80, %82, %cst_27 {dimension_numbers = #tpu.dot_dimension_numbers<[1], [1], [0], [0], [0, 0, 1, 0], [], []>} : vector<8x32xbf16>, vector<8x32xbf16>, vector<8x8xf32> -> vector<8x8xf32>
    %86 = arith.addf %85, %23 : vector<8x8xf32>
    %cst_28 = arith.constant dense<0xFF800000> : vector<8xf32>
    %87 = vector.multi_reduction <maximumf>, %86, %cst_28 [1] : vector<8x8xf32> to vector<8xf32>
    %88 = vector.shape_cast %87 : vector<8xf32> to vector<8x1xf32>
    %89 = vector.broadcast %88 : vector<8x1xf32> to vector<8x8xf32>
    %90 = arith.subf %86, %89 : vector<8x8xf32>
    %91 = math.exp %90 : vector<8x8xf32>
    %cst_29 = arith.constant dense<0.000000e+00> : vector<8xf32>
    %92 = vector.multi_reduction <add>, %91, %cst_29 [1] : vector<8x8xf32> to vector<8xf32>
    %93 = vector.shape_cast %92 : vector<8xf32> to vector<8x1xf32>
    %94 = tpu.reciprocal %93 {approx = true} : vector<8x1xf32> -> vector<8x1xf32>
    %95 = vector.broadcast %94 : vector<8x1xf32> to vector<8x8xf32>
    %96 = arith.mulf %91, %95 : vector<8x8xf32>
    %97 = arith.truncf %96 : vector<8x8xf32> to vector<8x8xbf16>
    %cst_30 = arith.constant dense<0.000000e+00> : vector<8x32xf32>
    %98 = tpu.matmul %97, %84, %cst_30 {dimension_numbers = #tpu.dot_dimension_numbers<[1], [0], [0], [1], [0, 0, 1, 1], [], []>} : vector<8x8xbf16>, vector<8x32xbf16>, vector<8x32xf32> -> vector<8x32xf32>
    %c0_31 = arith.constant 0 : index
    %c64 = arith.constant 64 : index
    %99 = vector.load %arg30[%c0_31, %c64] : memref<16x128xf32, #tpu.memory_space<vmem>>, vector<8x32xf32>
    tpu.vector_store %arg30[%c0_31, %c64], %98 {strides = array<i32>} : memref<16x128xf32, #tpu.memory_space<vmem>>, vector<8x32xf32>,
    %100 = vector.extract_strided_slice %29 {offsets = [0, 96], sizes = [8, 32], strides = [1, 1]} : vector<16x128xf32> to vector<8x32xf32>
    %cst_32 = arith.constant 0.176776692 : f32
    %101 = vector.broadcast %cst_32 : f32 to vector<8x32xf32>
    %102 = arith.mulf %100, %101 : vector<8x32xf32>
    %103 = arith.truncf %102 : vector<8x32xf32> to vector<8x32xbf16>
    %104 = vector.extract_strided_slice %30 {offsets = [0, 96], sizes = [8, 32], strides = [1, 1]} : vector<16x256xf32> to vector<8x32xf32>
    %105 = arith.truncf %104 : vector<8x32xf32> to vector<8x32xbf16>
    %106 = vector.extract_strided_slice %30 {offsets = [0, 224], sizes = [8, 32], strides = [1, 1]} : vector<16x256xf32> to vector<8x32xf32>
    %107 = arith.truncf %106 : vector<8x32xf32> to vector<8x32xbf16>
    %cst_33 = arith.constant dense<0.000000e+00> : vector<8x8xf32>
    %108 = tpu.matmul %103, %105, %cst_33 {dimension_numbers = #tpu.dot_dimension_numbers<[1], [1], [0], [0], [0, 0, 1, 0], [], []>} : vector<8x32xbf16>, vector<8x32xbf16>, vector<8x8xf32> -> vector<8x8xf32>
    %109 = arith.addf %108, %23 : vector<8x8xf32>
    %cst_34 = arith.constant dense<0xFF800000> : vector<8xf32>
    %110 = vector.multi_reduction <maximumf>, %109, %cst_34 [1] : vector<8x8xf32> to vector<8xf32>
    %111 = vector.shape_cast %110 : vector<8xf32> to vector<8x1xf32>
    %112 = vector.broadcast %111 : vector<8x1xf32> to vector<8x8xf32>
    %113 = arith.subf %109, %112 : vector<8x8xf32>
    %114 = math.exp %113 : vector<8x8xf32>
    %cst_35 = arith.constant dense<0.000000e+00> : vector<8xf32>
    %115 = vector.multi_reduction <add>, %114, %cst_35 [1] : vector<8x8xf32> to vector<8xf32>
    %116 = vector.shape_cast %115 : vector<8xf32> to vector<8x1xf32>
    %117 = tpu.reciprocal %116 {approx = true} : vector<8x1xf32> -> vector<8x1xf32>
    %118 = vector.broadcast %117 : vector<8x1xf32> to vector<8x8xf32>
    %119 = arith.mulf %114, %118 : vector<8x8xf32>
    %120 = arith.truncf %119 : vector<8x8xf32> to vector<8x8xbf16>
    %cst_36 = arith.constant dense<0.000000e+00> : vector<8x32xf32>
    %121 = tpu.matmul %120, %107, %cst_36 {dimension_numbers = #tpu.dot_dimension_numbers<[1], [0], [0], [1], [0, 0, 1, 1], [], []>} : vector<8x8xbf16>, vector<8x32xbf16>, vector<8x32xf32> -> vector<8x32xf32>
    %c0_37 = arith.constant 0 : index
    %c96 = arith.constant 96 : index
    %122 = vector.load %arg30[%c0_37, %c96] : memref<16x128xf32, #tpu.memory_space<vmem>>, vector<8x32xf32>
    tpu.vector_store %arg30[%c0_37, %c96], %121 {strides = array<i32>} : memref<16x128xf32, #tpu.memory_space<vmem>>, vector<8x32xf32>,
    %123 = vector.extract_strided_slice %29 {offsets = [8, 0], sizes = [8, 32], strides = [1, 1]} : vector<16x128xf32> to vector<8x32xf32>
    %cst_38 = arith.constant 0.176776692 : f32
    %124 = vector.broadcast %cst_38 : f32 to vector<8x32xf32>
    %125 = arith.mulf %123, %124 : vector<8x32xf32>
    %126 = arith.truncf %125 : vector<8x32xf32> to vector<8x32xbf16>
    %127 = vector.extract_strided_slice %30 {offsets = [8, 0], sizes = [8, 32], strides = [1, 1]} : vector<16x256xf32> to vector<8x32xf32>
    %128 = arith.truncf %127 : vector<8x32xf32> to vector<8x32xbf16>
    %129 = vector.extract_strided_slice %30 {offsets = [8, 128], sizes = [8, 32], strides = [1, 1]} : vector<16x256xf32> to vector<8x32xf32>
    %130 = arith.truncf %129 : vector<8x32xf32> to vector<8x32xbf16>
    %cst_39 = arith.constant dense<0.000000e+00> : vector<8x8xf32>
    %131 = tpu.matmul %126, %128, %cst_39 {dimension_numbers = #tpu.dot_dimension_numbers<[1], [1], [0], [0], [0, 0, 1, 0], [], []>} : vector<8x32xbf16>, vector<8x32xbf16>, vector<8x8xf32> -> vector<8x8xf32>
    %132 = arith.addf %131, %28 : vector<8x8xf32>
    %cst_40 = arith.constant dense<0xFF800000> : vector<8xf32>
    %133 = vector.multi_reduction <maximumf>, %132, %cst_40 [1] : vector<8x8xf32> to vector<8xf32>
    %134 = vector.shape_cast %133 : vector<8xf32> to vector<8x1xf32>
    %135 = vector.broadcast %134 : vector<8x1xf32> to vector<8x8xf32>
    %136 = arith.subf %132, %135 : vector<8x8xf32>
    %137 = math.exp %136 : vector<8x8xf32>
    %cst_41 = arith.constant dense<0.000000e+00> : vector<8xf32>
    %138 = vector.multi_reduction <add>, %137, %cst_41 [1] : vector<8x8xf32> to vector<8xf32>
    %139 = vector.shape_cast %138 : vector<8xf32> to vector<8x1xf32>
    %140 = tpu.reciprocal %139 {approx = true} : vector<8x1xf32> -> vector<8x1xf32>
    %141 = vector.broadcast %140 : vector<8x1xf32> to vector<8x8xf32>
    %142 = arith.mulf %137, %141 : vector<8x8xf32>
    %143 = arith.truncf %142 : vector<8x8xf32> to vector<8x8xbf16>
    %cst_42 = arith.constant dense<0.000000e+00> : vector<8x32xf32>
    %144 = tpu.matmul %143, %130, %cst_42 {dimension_numbers = #tpu.dot_dimension_numbers<[1], [0], [0], [1], [0, 0, 1, 1], [], []>} : vector<8x8xbf16>, vector<8x32xbf16>, vector<8x32xf32> -> vector<8x32xf32>
    %c8 = arith.constant 8 : index
    %c0_43 = arith.constant 0 : index
    %145 = vector.load %arg30[%c8, %c0_43] : memref<16x128xf32, #tpu.memory_space<vmem>>, vector<8x32xf32>
    tpu.vector_store %arg30[%c8, %c0_43], %144 {strides = array<i32>} : memref<16x128xf32, #tpu.memory_space<vmem>>, vector<8x32xf32>,
    %146 = vector.extract_strided_slice %29 {offsets = [8, 32], sizes = [8, 32], strides = [1, 1]} : vector<16x128xf32> to vector<8x32xf32>
    %cst_44 = arith.constant 0.176776692 : f32
    %147 = vector.broadcast %cst_44 : f32 to vector<8x32xf32>
    %148 = arith.mulf %146, %147 : vector<8x32xf32>
    %149 = arith.truncf %148 : vector<8x32xf32> to vector<8x32xbf16>
    %150 = vector.extract_strided_slice %30 {offsets = [8, 32], sizes = [8, 32], strides = [1, 1]} : vector<16x256xf32> to vector<8x32xf32>
    %151 = arith.truncf %150 : vector<8x32xf32> to vector<8x32xbf16>
    %152 = vector.extract_strided_slice %30 {offsets = [8, 160], sizes = [8, 32], strides = [1, 1]} : vector<16x256xf32> to vector<8x32xf32>
    %153 = arith.truncf %152 : vector<8x32xf32> to vector<8x32xbf16>
    %cst_45 = arith.constant dense<0.000000e+00> : vector<8x8xf32>
    %154 = tpu.matmul %149, %151, %cst_45 {dimension_numbers = #tpu.dot_dimension_numbers<[1], [1], [0], [0], [0, 0, 1, 0], [], []>} : vector<8x32xbf16>, vector<8x32xbf16>, vector<8x8xf32> -> vector<8x8xf32>
    %155 = arith.addf %154, %28 : vector<8x8xf32>
    %cst_46 = arith.constant dense<0xFF800000> : vector<8xf32>
    %156 = vector.multi_reduction <maximumf>, %155, %cst_46 [1] : vector<8x8xf32> to vector<8xf32>
    %157 = vector.shape_cast %156 : vector<8xf32> to vector<8x1xf32>
    %158 = vector.broadcast %157 : vector<8x1xf32> to vector<8x8xf32>
    %159 = arith.subf %155, %158 : vector<8x8xf32>
    %160 = math.exp %159 : vector<8x8xf32>
    %cst_47 = arith.constant dense<0.000000e+00> : vector<8xf32>
    %161 = vector.multi_reduction <add>, %160, %cst_47 [1] : vector<8x8xf32> to vector<8xf32>
    %162 = vector.shape_cast %161 : vector<8xf32> to vector<8x1xf32>
    %163 = tpu.reciprocal %162 {approx = true} : vector<8x1xf32> -> vector<8x1xf32>
    %164 = vector.broadcast %163 : vector<8x1xf32> to vector<8x8xf32>
    %165 = arith.mulf %160, %164 : vector<8x8xf32>
    %166 = arith.truncf %165 : vector<8x8xf32> to vector<8x8xbf16>
    %cst_48 = arith.constant dense<0.000000e+00> : vector<8x32xf32>
    %167 = tpu.matmul %166, %153, %cst_48 {dimension_numbers = #tpu.dot_dimension_numbers<[1], [0], [0], [1], [0, 0, 1, 1], [], []>} : vector<8x8xbf16>, vector<8x32xbf16>, vector<8x32xf32> -> vector<8x32xf32>
    %c8_49 = arith.constant 8 : index
    %c32_50 = arith.constant 32 : index
    %168 = vector.load %arg30[%c8_49, %c32_50] : memref<16x128xf32, #tpu.memory_space<vmem>>, vector<8x32xf32>
    tpu.vector_store %arg30[%c8_49, %c32_50], %167 {strides = array<i32>} : memref<16x128xf32, #tpu.memory_space<vmem>>, vector<8x32xf32>,
    %169 = vector.extract_strided_slice %29 {offsets = [8, 64], sizes = [8, 32], strides = [1, 1]} : vector<16x128xf32> to vector<8x32xf32>
    %cst_51 = arith.constant 0.176776692 : f32
    %170 = vector.broadcast %cst_51 : f32 to vector<8x32xf32>
    %171 = arith.mulf %169, %170 : vector<8x32xf32>
    %172 = arith.truncf %171 : vector<8x32xf32> to vector<8x32xbf16>
    %173 = vector.extract_strided_slice %30 {offsets = [8, 64], sizes = [8, 32], strides = [1, 1]} : vector<16x256xf32> to vector<8x32xf32>
    %174 = arith.truncf %173 : vector<8x32xf32> to vector<8x32xbf16>
    %175 = vector.extract_strided_slice %30 {offsets = [8, 192], sizes = [8, 32], strides = [1, 1]} : vector<16x256xf32> to vector<8x32xf32>
    %176 = arith.truncf %175 : vector<8x32xf32> to vector<8x32xbf16>
    %cst_52 = arith.constant dense<0.000000e+00> : vector<8x8xf32>
    %177 = tpu.matmul %172, %174, %cst_52 {dimension_numbers = #tpu.dot_dimension_numbers<[1], [1], [0], [0], [0, 0, 1, 0], [], []>} : vector<8x32xbf16>, vector<8x32xbf16>, vector<8x8xf32> -> vector<8x8xf32>
    %178 = arith.addf %177, %28 : vector<8x8xf32>
    %cst_53 = arith.constant dense<0xFF800000> : vector<8xf32>
    %179 = vector.multi_reduction <maximumf>, %178, %cst_53 [1] : vector<8x8xf32> to vector<8xf32>
    %180 = vector.shape_cast %179 : vector<8xf32> to vector<8x1xf32>
    %181 = vector.broadcast %180 : vector<8x1xf32> to vector<8x8xf32>
    %182 = arith.subf %178, %181 : vector<8x8xf32>
    %183 = math.exp %182 : vector<8x8xf32>
    %cst_54 = arith.constant dense<0.000000e+00> : vector<8xf32>
    %184 = vector.multi_reduction <add>, %183, %cst_54 [1] : vector<8x8xf32> to vector<8xf32>
    %185 = vector.shape_cast %184 : vector<8xf32> to vector<8x1xf32>
    %186 = tpu.reciprocal %185 {approx = true} : vector<8x1xf32> -> vector<8x1xf32>
    %187 = vector.broadcast %186 : vector<8x1xf32> to vector<8x8xf32>
    %188 = arith.mulf %183, %187 : vector<8x8xf32>
    %189 = arith.truncf %188 : vector<8x8xf32> to vector<8x8xbf16>
    %cst_55 = arith.constant dense<0.000000e+00> : vector<8x32xf32>
    %190 = tpu.matmul %189, %176, %cst_55 {dimension_numbers = #tpu.dot_dimension_numbers<[1], [0], [0], [1], [0, 0, 1, 1], [], []>} : vector<8x8xbf16>, vector<8x32xbf16>, vector<8x32xf32> -> vector<8x32xf32>
    %c8_56 = arith.constant 8 : index
    %c64_57 = arith.constant 64 : index
    %191 = vector.load %arg30[%c8_56, %c64_57] : memref<16x128xf32, #tpu.memory_space<vmem>>, vector<8x32xf32>
    tpu.vector_store %arg30[%c8_56, %c64_57], %190 {strides = array<i32>} : memref<16x128xf32, #tpu.memory_space<vmem>>, vector<8x32xf32>,
    %192 = vector.extract_strided_slice %29 {offsets = [8, 96], sizes = [8, 32], strides = [1, 1]} : vector<16x128xf32> to vector<8x32xf32>
    %cst_58 = arith.constant 0.176776692 : f32
    %193 = vector.broadcast %cst_58 : f32 to vector<8x32xf32>
    %194 = arith.mulf %192, %193 : vector<8x32xf32>
    %195 = arith.truncf %194 : vector<8x32xf32> to vector<8x32xbf16>
    %196 = vector.extract_strided_slice %30 {offsets = [8, 96], sizes = [8, 32], strides = [1, 1]} : vector<16x256xf32> to vector<8x32xf32>
    %197 = arith.truncf %196 : vector<8x32xf32> to vector<8x32xbf16>
    %198 = vector.extract_strided_slice %30 {offsets = [8, 224], sizes = [8, 32], strides = [1, 1]} : vector<16x256xf32> to vector<8x32xf32>
    %199 = arith.truncf %198 : vector<8x32xf32> to vector<8x32xbf16>
    %cst_59 = arith.constant dense<0.000000e+00> : vector<8x8xf32>
    %200 = tpu.matmul %195, %197, %cst_59 {dimension_numbers = #tpu.dot_dimension_numbers<[1], [1], [0], [0], [0, 0, 1, 0], [], []>} : vector<8x32xbf16>, vector<8x32xbf16>, vector<8x8xf32> -> vector<8x8xf32>
    %201 = arith.addf %200, %28 : vector<8x8xf32>
    %cst_60 = arith.constant dense<0xFF800000> : vector<8xf32>
    %202 = vector.multi_reduction <maximumf>, %201, %cst_60 [1] : vector<8x8xf32> to vector<8xf32>
    %203 = vector.shape_cast %202 : vector<8xf32> to vector<8x1xf32>
    %204 = vector.broadcast %203 : vector<8x1xf32> to vector<8x8xf32>
    %205 = arith.subf %201, %204 : vector<8x8xf32>
    %206 = math.exp %205 : vector<8x8xf32>
    %cst_61 = arith.constant dense<0.000000e+00> : vector<8xf32>
    %207 = vector.multi_reduction <add>, %206, %cst_61 [1] : vector<8x8xf32> to vector<8xf32>
    %208 = vector.shape_cast %207 : vector<8xf32> to vector<8x1xf32>
    %209 = tpu.reciprocal %208 {approx = true} : vector<8x1xf32> -> vector<8x1xf32>
    %210 = vector.broadcast %209 : vector<8x1xf32> to vector<8x8xf32>
    %211 = arith.mulf %206, %210 : vector<8x8xf32>
    %212 = arith.truncf %211 : vector<8x8xf32> to vector<8x8xbf16>
    %cst_62 = arith.constant dense<0.000000e+00> : vector<8x32xf32>
    %213 = tpu.matmul %212, %199, %cst_62 {dimension_numbers = #tpu.dot_dimension_numbers<[1], [0], [0], [1], [0, 0, 1, 1], [], []>} : vector<8x8xbf16>, vector<8x32xbf16>, vector<8x32xf32> -> vector<8x32xf32>
    %c8_63 = arith.constant 8 : index
    %c96_64 = arith.constant 96 : index
    %214 = vector.load %arg30[%c8_63, %c96_64] : memref<16x128xf32, #tpu.memory_space<vmem>>, vector<8x32xf32>
    tpu.vector_store %arg30[%c8_63, %c96_64], %213 {strides = array<i32>} : memref<16x128xf32, #tpu.memory_space<vmem>>, vector<8x32xf32>,
    %c0_65 = arith.constant 0 : index
    %c0_66 = arith.constant 0 : index
    %215 = vector.load %arg30[%c0_65, %c0_66] : memref<16x128xf32, #tpu.memory_space<vmem>>, vector<16x128xf32>
    %c0_67 = arith.constant 0 : index
    %c0_68 = arith.constant 0 : index
    %c0_69 = arith.constant 0 : index
    %216 = vector.load %arg10[%c0_67, %c0_68, %c0_69] : memref<1x128x128xbf16, #tpu.memory_space<vmem>>, vector<1x128x128xbf16>
    %217 = vector.shape_cast %216 : vector<1x128x128xbf16> to vector<128x128xbf16>
    %218 = arith.truncf %215 : vector<16x128xf32> to vector<16x128xbf16>
    %cst_70 = arith.constant dense<0.000000e+00> : vector<16x128xf32>
    %219 = tpu.matmul %218, %217, %cst_70 {dimension_numbers = #tpu.dot_dimension_numbers<[1], [0], [0], [1], [0, 0, 1, 1], [], []>} : vector<16x128xbf16>, vector<128x128xbf16>, vector<16x128xf32> -> vector<16x128xf32>
    %220 = arith.addf %3, %219 : vector<16x128xf32>
    %c0_71 = arith.constant 0 : index
    %c0_72 = arith.constant 0 : index
    %c0_73 = arith.constant 0 : index
    %221 = vector.load %arg11[%c0_71, %c0_72, %c0_73] : memref<1x1x128xf32, #tpu.memory_space<vmem>>, vector<1x1x128xf32>
    %222 = vector.shape_cast %221 : vector<1x1x128xf32> to vector<1x128xf32>
    %223 = vector.broadcast %222 : vector<1x128xf32> to vector<16x128xf32>
    %224 = arith.addf %220, %223 : vector<16x128xf32>
    %c0_74 = arith.constant 0 : index
    %c0_75 = arith.constant 0 : index
    %c0_76 = arith.constant 0 : index
    %225 = vector.load %arg12[%c0_74, %c0_75, %c0_76] : memref<1x1x128xf32, #tpu.memory_space<vmem>>, vector<1x1x128xf32>
    %226 = vector.shape_cast %225 : vector<1x1x128xf32> to vector<1x128xf32>
    %c0_77 = arith.constant 0 : index
    %c0_78 = arith.constant 0 : index
    %c0_79 = arith.constant 0 : index
    %227 = vector.load %arg13[%c0_77, %c0_78, %c0_79] : memref<1x1x128xf32, #tpu.memory_space<vmem>>, vector<1x1x128xf32>
    %228 = vector.shape_cast %227 : vector<1x1x128xf32> to vector<1x128xf32>
    %cst_80 = arith.constant dense<0.000000e+00> : vector<16xf32>
    %229 = vector.multi_reduction <add>, %224, %cst_80 [1] : vector<16x128xf32> to vector<16xf32>
    %230 = vector.shape_cast %229 : vector<16xf32> to vector<16x1xf32>
    %cst_81 = arith.constant 1.280000e+02 : f32
    %231 = vector.broadcast %cst_81 : f32 to vector<16x1xf32>
    %232 = arith.divf %230, %231 : vector<16x1xf32>
    %233 = vector.broadcast %232 : vector<16x1xf32> to vector<16x128xf32>
    %234 = arith.subf %224, %233 : vector<16x128xf32>
    %235 = arith.mulf %234, %234 : vector<16x128xf32>
    %cst_82 = arith.constant dense<0.000000e+00> : vector<16xf32>
    %236 = vector.multi_reduction <add>, %235, %cst_82 [1] : vector<16x128xf32> to vector<16xf32>
    %237 = vector.shape_cast %236 : vector<16xf32> to vector<16x1xf32>
    %cst_83 = arith.constant 1.280000e+02 : f32
    %238 = vector.broadcast %cst_83 : f32 to vector<16x1xf32>
    %239 = arith.divf %237, %238 : vector<16x1xf32>
    %240 = vector.broadcast %232 : vector<16x1xf32> to vector<16x128xf32>
    %241 = arith.subf %224, %240 : vector<16x128xf32>
    %cst_84 = arith.constant 9.99999997E-7 : f32
    %242 = vector.broadcast %cst_84 : f32 to vector<16x1xf32>
    %243 = arith.addf %239, %242 : vector<16x1xf32>
    %244 = math.rsqrt %243 : vector<16x1xf32>
    %245 = vector.broadcast %244 : vector<16x1xf32> to vector<16x128xf32>
    %246 = arith.mulf %241, %245 : vector<16x128xf32>
    %247 = vector.broadcast %226 : vector<1x128xf32> to vector<16x128xf32>
    %248 = arith.mulf %246, %247 : vector<16x128xf32>
    %249 = vector.broadcast %228 : vector<1x128xf32> to vector<16x128xf32>
    %250 = arith.addf %248, %249 : vector<16x128xf32>
    %c0_85 = arith.constant 0 : index
    %c0_86 = arith.constant 0 : index
    %c0_87 = arith.constant 0 : index
    %251 = vector.load %arg14[%c0_85, %c0_86, %c0_87] : memref<1x128x128xbf16, #tpu.memory_space<vmem>>, vector<1x128x128xbf16>
    %252 = vector.shape_cast %251 : vector<1x128x128xbf16> to vector<128x128xbf16>
    %253 = arith.truncf %250 : vector<16x128xf32> to vector<16x128xbf16>
    %cst_88 = arith.constant dense<0.000000e+00> : vector<16x128xf32>
    %254 = tpu.matmul %253, %252, %cst_88 {dimension_numbers = #tpu.dot_dimension_numbers<[1], [0], [0], [1], [0, 0, 1, 1], [], []>} : vector<16x128xbf16>, vector<128x128xbf16>, vector<16x128xf32> -> vector<16x128xf32>
    %c0_89 = arith.constant 0 : index
    %c0_90 = arith.constant 0 : index
    %c0_91 = arith.constant 0 : index
    %255 = vector.load %arg15[%c0_89, %c0_90, %c0_91] : memref<1x1x128xf32, #tpu.memory_space<vmem>>, vector<1x1x128xf32>
    %256 = vector.shape_cast %255 : vector<1x1x128xf32> to vector<1x128xf32>
    %257 = vector.broadcast %256 : vector<1x128xf32> to vector<16x128xf32>
    %258 = arith.addf %254, %257 : vector<16x128xf32>
    %c0_92 = arith.constant 0 : index
    %c0_93 = arith.constant 0 : index
    %259 = vector.load %arg3[%c0_92, %c0_93] : memref<16x128xbf16, #tpu.memory_space<vmem>>, vector<16x128xbf16>
    %c0_94 = arith.constant 0 : index
    %c0_95 = arith.constant 0 : index
    %c0_96 = arith.constant 0 : index
    %260 = vector.load %arg16[%c0_94, %c0_95, %c0_96] : memref<1x128x256xbf16, #tpu.memory_space<vmem>>, vector<1x128x256xbf16>
    %261 = vector.shape_cast %260 : vector<1x128x256xbf16> to vector<128x256xbf16>
    %cst_97 = arith.constant dense<0.000000e+00> : vector<16x256xf32>
    %262 = tpu.matmul %259, %261, %cst_97 {dimension_numbers = #tpu.dot_dimension_numbers<[1], [0], [0], [1], [0, 0, 1, 1], [], []>} : vector<16x128xbf16>, vector<128x256xbf16>, vector<16x256xf32> -> vector<16x256xf32>
    %c0_98 = arith.constant 0 : index
    %c0_99 = arith.constant 0 : index
    %c0_100 = arith.constant 0 : index
    %263 = vector.load %arg17[%c0_98, %c0_99, %c0_100] : memref<1x1x256xf32, #tpu.memory_space<vmem>>, vector<1x1x256xf32>
    %264 = vector.shape_cast %263 : vector<1x1x256xf32> to vector<1x256xf32>
    %265 = vector.broadcast %264 : vector<1x256xf32> to vector<16x256xf32>
    %266 = arith.addf %262, %265 : vector<16x256xf32>
    %267 = vector.extract_strided_slice %258 {offsets = [0, 0], sizes = [8, 32], strides = [1, 1]} : vector<16x128xf32> to vector<8x32xf32>
    %cst_101 = arith.constant 0.176776692 : f32
    %268 = vector.broadcast %cst_101 : f32 to vector<8x32xf32>
    %269 = arith.mulf %267, %268 : vector<8x32xf32>
    %270 = arith.truncf %269 : vector<8x32xf32> to vector<8x32xbf16>
    %271 = vector.extract_strided_slice %266 {offsets = [0, 0], sizes = [8, 32], strides = [1, 1]} : vector<16x256xf32> to vector<8x32xf32>
    %272 = arith.truncf %271 : vector<8x32xf32> to vector<8x32xbf16>
    %273 = vector.extract_strided_slice %266 {offsets = [0, 128], sizes = [8, 32], strides = [1, 1]} : vector<16x256xf32> to vector<8x32xf32>
    %274 = arith.truncf %273 : vector<8x32xf32> to vector<8x32xbf16>
    %cst_102 = arith.constant dense<0.000000e+00> : vector<8x8xf32>
    %275 = tpu.matmul %270, %272, %cst_102 {dimension_numbers = #tpu.dot_dimension_numbers<[1], [1], [0], [0], [0, 0, 1, 0], [], []>} : vector<8x32xbf16>, vector<8x32xbf16>, vector<8x8xf32> -> vector<8x8xf32>
    %cst_103 = arith.constant dense<0xFF800000> : vector<8xf32>
    %276 = vector.multi_reduction <maximumf>, %275, %cst_103 [1] : vector<8x8xf32> to vector<8xf32>
    %277 = vector.shape_cast %276 : vector<8xf32> to vector<8x1xf32>
    %278 = vector.broadcast %277 : vector<8x1xf32> to vector<8x8xf32>
    %279 = arith.subf %275, %278 : vector<8x8xf32>
    %280 = math.exp %279 : vector<8x8xf32>
    %cst_104 = arith.constant dense<0.000000e+00> : vector<8xf32>
    %281 = vector.multi_reduction <add>, %280, %cst_104 [1] : vector<8x8xf32> to vector<8xf32>
    %282 = vector.shape_cast %281 : vector<8xf32> to vector<8x1xf32>
    %283 = tpu.reciprocal %282 {approx = true} : vector<8x1xf32> -> vector<8x1xf32>
    %284 = vector.broadcast %283 : vector<8x1xf32> to vector<8x8xf32>
    %285 = arith.mulf %280, %284 : vector<8x8xf32>
    %286 = arith.truncf %285 : vector<8x8xf32> to vector<8x8xbf16>
    %cst_105 = arith.constant dense<0.000000e+00> : vector<8x32xf32>
    %287 = tpu.matmul %286, %274, %cst_105 {dimension_numbers = #tpu.dot_dimension_numbers<[1], [0], [0], [1], [0, 0, 1, 1], [], []>} : vector<8x8xbf16>, vector<8x32xbf16>, vector<8x32xf32> -> vector<8x32xf32>
    %c0_106 = arith.constant 0 : index
    %c0_107 = arith.constant 0 : index
    %288 = vector.load %arg30[%c0_106, %c0_107] : memref<16x128xf32, #tpu.memory_space<vmem>>, vector<8x32xf32>
    tpu.vector_store %arg30[%c0_106, %c0_107], %287 {strides = array<i32>} : memref<16x128xf32, #tpu.memory_space<vmem>>, vector<8x32xf32>,
    %289 = vector.extract_strided_slice %258 {offsets = [0, 32], sizes = [8, 32], strides = [1, 1]} : vector<16x128xf32> to vector<8x32xf32>
    %cst_108 = arith.constant 0.176776692 : f32
    %290 = vector.broadcast %cst_108 : f32 to vector<8x32xf32>
    %291 = arith.mulf %289, %290 : vector<8x32xf32>
    %292 = arith.truncf %291 : vector<8x32xf32> to vector<8x32xbf16>
    %293 = vector.extract_strided_slice %266 {offsets = [0, 32], sizes = [8, 32], strides = [1, 1]} : vector<16x256xf32> to vector<8x32xf32>
    %294 = arith.truncf %293 : vector<8x32xf32> to vector<8x32xbf16>
    %295 = vector.extract_strided_slice %266 {offsets = [0, 160], sizes = [8, 32], strides = [1, 1]} : vector<16x256xf32> to vector<8x32xf32>
    %296 = arith.truncf %295 : vector<8x32xf32> to vector<8x32xbf16>
    %cst_109 = arith.constant dense<0.000000e+00> : vector<8x8xf32>
    %297 = tpu.matmul %292, %294, %cst_109 {dimension_numbers = #tpu.dot_dimension_numbers<[1], [1], [0], [0], [0, 0, 1, 0], [], []>} : vector<8x32xbf16>, vector<8x32xbf16>, vector<8x8xf32> -> vector<8x8xf32>
    %cst_110 = arith.constant dense<0xFF800000> : vector<8xf32>
    %298 = vector.multi_reduction <maximumf>, %297, %cst_110 [1] : vector<8x8xf32> to vector<8xf32>
    %299 = vector.shape_cast %298 : vector<8xf32> to vector<8x1xf32>
    %300 = vector.broadcast %299 : vector<8x1xf32> to vector<8x8xf32>
    %301 = arith.subf %297, %300 : vector<8x8xf32>
    %302 = math.exp %301 : vector<8x8xf32>
    %cst_111 = arith.constant dense<0.000000e+00> : vector<8xf32>
    %303 = vector.multi_reduction <add>, %302, %cst_111 [1] : vector<8x8xf32> to vector<8xf32>
    %304 = vector.shape_cast %303 : vector<8xf32> to vector<8x1xf32>
    %305 = tpu.reciprocal %304 {approx = true} : vector<8x1xf32> -> vector<8x1xf32>
    %306 = vector.broadcast %305 : vector<8x1xf32> to vector<8x8xf32>
    %307 = arith.mulf %302, %306 : vector<8x8xf32>
    %308 = arith.truncf %307 : vector<8x8xf32> to vector<8x8xbf16>
    %cst_112 = arith.constant dense<0.000000e+00> : vector<8x32xf32>
    %309 = tpu.matmul %308, %296, %cst_112 {dimension_numbers = #tpu.dot_dimension_numbers<[1], [0], [0], [1], [0, 0, 1, 1], [], []>} : vector<8x8xbf16>, vector<8x32xbf16>, vector<8x32xf32> -> vector<8x32xf32>
    %c0_113 = arith.constant 0 : index
    %c32_114 = arith.constant 32 : index
    %310 = vector.load %arg30[%c0_113, %c32_114] : memref<16x128xf32, #tpu.memory_space<vmem>>, vector<8x32xf32>
    tpu.vector_store %arg30[%c0_113, %c32_114], %309 {strides = array<i32>} : memref<16x128xf32, #tpu.memory_space<vmem>>, vector<8x32xf32>,
    %311 = vector.extract_strided_slice %258 {offsets = [0, 64], sizes = [8, 32], strides = [1, 1]} : vector<16x128xf32> to vector<8x32xf32>
    %cst_115 = arith.constant 0.176776692 : f32
    %312 = vector.broadcast %cst_115 : f32 to vector<8x32xf32>
    %313 = arith.mulf %311, %312 : vector<8x32xf32>
    %314 = arith.truncf %313 : vector<8x32xf32> to vector<8x32xbf16>
    %315 = vector.extract_strided_slice %266 {offsets = [0, 64], sizes = [8, 32], strides = [1, 1]} : vector<16x256xf32> to vector<8x32xf32>
    %316 = arith.truncf %315 : vector<8x32xf32> to vector<8x32xbf16>
    %317 = vector.extract_strided_slice %266 {offsets = [0, 192], sizes = [8, 32], strides = [1, 1]} : vector<16x256xf32> to vector<8x32xf32>
    %318 = arith.truncf %317 : vector<8x32xf32> to vector<8x32xbf16>
    %cst_116 = arith.constant dense<0.000000e+00> : vector<8x8xf32>
    %319 = tpu.matmul %314, %316, %cst_116 {dimension_numbers = #tpu.dot_dimension_numbers<[1], [1], [0], [0], [0, 0, 1, 0], [], []>} : vector<8x32xbf16>, vector<8x32xbf16>, vector<8x8xf32> -> vector<8x8xf32>
    %cst_117 = arith.constant dense<0xFF800000> : vector<8xf32>
    %320 = vector.multi_reduction <maximumf>, %319, %cst_117 [1] : vector<8x8xf32> to vector<8xf32>
    %321 = vector.shape_cast %320 : vector<8xf32> to vector<8x1xf32>
    %322 = vector.broadcast %321 : vector<8x1xf32> to vector<8x8xf32>
    %323 = arith.subf %319, %322 : vector<8x8xf32>
    %324 = math.exp %323 : vector<8x8xf32>
    %cst_118 = arith.constant dense<0.000000e+00> : vector<8xf32>
    %325 = vector.multi_reduction <add>, %324, %cst_118 [1] : vector<8x8xf32> to vector<8xf32>
    %326 = vector.shape_cast %325 : vector<8xf32> to vector<8x1xf32>
    %327 = tpu.reciprocal %326 {approx = true} : vector<8x1xf32> -> vector<8x1xf32>
    %328 = vector.broadcast %327 : vector<8x1xf32> to vector<8x8xf32>
    %329 = arith.mulf %324, %328 : vector<8x8xf32>
    %330 = arith.truncf %329 : vector<8x8xf32> to vector<8x8xbf16>
    %cst_119 = arith.constant dense<0.000000e+00> : vector<8x32xf32>
    %331 = tpu.matmul %330, %318, %cst_119 {dimension_numbers = #tpu.dot_dimension_numbers<[1], [0], [0], [1], [0, 0, 1, 1], [], []>} : vector<8x8xbf16>, vector<8x32xbf16>, vector<8x32xf32> -> vector<8x32xf32>
    %c0_120 = arith.constant 0 : index
    %c64_121 = arith.constant 64 : index
    %332 = vector.load %arg30[%c0_120, %c64_121] : memref<16x128xf32, #tpu.memory_space<vmem>>, vector<8x32xf32>
    tpu.vector_store %arg30[%c0_120, %c64_121], %331 {strides = array<i32>} : memref<16x128xf32, #tpu.memory_space<vmem>>, vector<8x32xf32>,
    %333 = vector.extract_strided_slice %258 {offsets = [0, 96], sizes = [8, 32], strides = [1, 1]} : vector<16x128xf32> to vector<8x32xf32>
    %cst_122 = arith.constant 0.176776692 : f32
    %334 = vector.broadcast %cst_122 : f32 to vector<8x32xf32>
    %335 = arith.mulf %333, %334 : vector<8x32xf32>
    %336 = arith.truncf %335 : vector<8x32xf32> to vector<8x32xbf16>
    %337 = vector.extract_strided_slice %266 {offsets = [0, 96], sizes = [8, 32], strides = [1, 1]} : vector<16x256xf32> to vector<8x32xf32>
    %338 = arith.truncf %337 : vector<8x32xf32> to vector<8x32xbf16>
    %339 = vector.extract_strided_slice %266 {offsets = [0, 224], sizes = [8, 32], strides = [1, 1]} : vector<16x256xf32> to vector<8x32xf32>
    %340 = arith.truncf %339 : vector<8x32xf32> to vector<8x32xbf16>
    %cst_123 = arith.constant dense<0.000000e+00> : vector<8x8xf32>
    %341 = tpu.matmul %336, %338, %cst_123 {dimension_numbers = #tpu.dot_dimension_numbers<[1], [1], [0], [0], [0, 0, 1, 0], [], []>} : vector<8x32xbf16>, vector<8x32xbf16>, vector<8x8xf32> -> vector<8x8xf32>
    %cst_124 = arith.constant dense<0xFF800000> : vector<8xf32>
    %342 = vector.multi_reduction <maximumf>, %341, %cst_124 [1] : vector<8x8xf32> to vector<8xf32>
    %343 = vector.shape_cast %342 : vector<8xf32> to vector<8x1xf32>
    %344 = vector.broadcast %343 : vector<8x1xf32> to vector<8x8xf32>
    %345 = arith.subf %341, %344 : vector<8x8xf32>
    %346 = math.exp %345 : vector<8x8xf32>
    %cst_125 = arith.constant dense<0.000000e+00> : vector<8xf32>
    %347 = vector.multi_reduction <add>, %346, %cst_125 [1] : vector<8x8xf32> to vector<8xf32>
    %348 = vector.shape_cast %347 : vector<8xf32> to vector<8x1xf32>
    %349 = tpu.reciprocal %348 {approx = true} : vector<8x1xf32> -> vector<8x1xf32>
    %350 = vector.broadcast %349 : vector<8x1xf32> to vector<8x8xf32>
    %351 = arith.mulf %346, %350 : vector<8x8xf32>
    %352 = arith.truncf %351 : vector<8x8xf32> to vector<8x8xbf16>
    %cst_126 = arith.constant dense<0.000000e+00> : vector<8x32xf32>
    %353 = tpu.matmul %352, %340, %cst_126 {dimension_numbers = #tpu.dot_dimension_numbers<[1], [0], [0], [1], [0, 0, 1, 1], [], []>} : vector<8x8xbf16>, vector<8x32xbf16>, vector<8x32xf32> -> vector<8x32xf32>
    %c0_127 = arith.constant 0 : index
    %c96_128 = arith.constant 96 : index
    %354 = vector.load %arg30[%c0_127, %c96_128] : memref<16x128xf32, #tpu.memory_space<vmem>>, vector<8x32xf32>
    tpu.vector_store %arg30[%c0_127, %c96_128], %353 {strides = array<i32>} : memref<16x128xf32, #tpu.memory_space<vmem>>, vector<8x32xf32>,
    %355 = vector.extract_strided_slice %258 {offsets = [8, 0], sizes = [8, 32], strides = [1, 1]} : vector<16x128xf32> to vector<8x32xf32>
    %cst_129 = arith.constant 0.176776692 : f32
    %356 = vector.broadcast %cst_129 : f32 to vector<8x32xf32>
    %357 = arith.mulf %355, %356 : vector<8x32xf32>
    %358 = arith.truncf %357 : vector<8x32xf32> to vector<8x32xbf16>
    %359 = vector.extract_strided_slice %266 {offsets = [8, 0], sizes = [8, 32], strides = [1, 1]} : vector<16x256xf32> to vector<8x32xf32>
    %360 = arith.truncf %359 : vector<8x32xf32> to vector<8x32xbf16>
    %361 = vector.extract_strided_slice %266 {offsets = [8, 128], sizes = [8, 32], strides = [1, 1]} : vector<16x256xf32> to vector<8x32xf32>
    %362 = arith.truncf %361 : vector<8x32xf32> to vector<8x32xbf16>
    %cst_130 = arith.constant dense<0.000000e+00> : vector<8x8xf32>
    %363 = tpu.matmul %358, %360, %cst_130 {dimension_numbers = #tpu.dot_dimension_numbers<[1], [1], [0], [0], [0, 0, 1, 0], [], []>} : vector<8x32xbf16>, vector<8x32xbf16>, vector<8x8xf32> -> vector<8x8xf32>
    %cst_131 = arith.constant dense<0xFF800000> : vector<8xf32>
    %364 = vector.multi_reduction <maximumf>, %363, %cst_131 [1] : vector<8x8xf32> to vector<8xf32>
    %365 = vector.shape_cast %364 : vector<8xf32> to vector<8x1xf32>
    %366 = vector.broadcast %365 : vector<8x1xf32> to vector<8x8xf32>
    %367 = arith.subf %363, %366 : vector<8x8xf32>
    %368 = math.exp %367 : vector<8x8xf32>
    %cst_132 = arith.constant dense<0.000000e+00> : vector<8xf32>
    %369 = vector.multi_reduction <add>, %368, %cst_132 [1] : vector<8x8xf32> to vector<8xf32>
    %370 = vector.shape_cast %369 : vector<8xf32> to vector<8x1xf32>
    %371 = tpu.reciprocal %370 {approx = true} : vector<8x1xf32> -> vector<8x1xf32>
    %372 = vector.broadcast %371 : vector<8x1xf32> to vector<8x8xf32>
    %373 = arith.mulf %368, %372 : vector<8x8xf32>
    %374 = arith.truncf %373 : vector<8x8xf32> to vector<8x8xbf16>
    %cst_133 = arith.constant dense<0.000000e+00> : vector<8x32xf32>
    %375 = tpu.matmul %374, %362, %cst_133 {dimension_numbers = #tpu.dot_dimension_numbers<[1], [0], [0], [1], [0, 0, 1, 1], [], []>} : vector<8x8xbf16>, vector<8x32xbf16>, vector<8x32xf32> -> vector<8x32xf32>
    %c8_134 = arith.constant 8 : index
    %c0_135 = arith.constant 0 : index
    %376 = vector.load %arg30[%c8_134, %c0_135] : memref<16x128xf32, #tpu.memory_space<vmem>>, vector<8x32xf32>
    tpu.vector_store %arg30[%c8_134, %c0_135], %375 {strides = array<i32>} : memref<16x128xf32, #tpu.memory_space<vmem>>, vector<8x32xf32>,
    %377 = vector.extract_strided_slice %258 {offsets = [8, 32], sizes = [8, 32], strides = [1, 1]} : vector<16x128xf32> to vector<8x32xf32>
    %cst_136 = arith.constant 0.176776692 : f32
    %378 = vector.broadcast %cst_136 : f32 to vector<8x32xf32>
    %379 = arith.mulf %377, %378 : vector<8x32xf32>
    %380 = arith.truncf %379 : vector<8x32xf32> to vector<8x32xbf16>
    %381 = vector.extract_strided_slice %266 {offsets = [8, 32], sizes = [8, 32], strides = [1, 1]} : vector<16x256xf32> to vector<8x32xf32>
    %382 = arith.truncf %381 : vector<8x32xf32> to vector<8x32xbf16>
    %383 = vector.extract_strided_slice %266 {offsets = [8, 160], sizes = [8, 32], strides = [1, 1]} : vector<16x256xf32> to vector<8x32xf32>
    %384 = arith.truncf %383 : vector<8x32xf32> to vector<8x32xbf16>
    %cst_137 = arith.constant dense<0.000000e+00> : vector<8x8xf32>
    %385 = tpu.matmul %380, %382, %cst_137 {dimension_numbers = #tpu.dot_dimension_numbers<[1], [1], [0], [0], [0, 0, 1, 0], [], []>} : vector<8x32xbf16>, vector<8x32xbf16>, vector<8x8xf32> -> vector<8x8xf32>
    %cst_138 = arith.constant dense<0xFF800000> : vector<8xf32>
    %386 = vector.multi_reduction <maximumf>, %385, %cst_138 [1] : vector<8x8xf32> to vector<8xf32>
    %387 = vector.shape_cast %386 : vector<8xf32> to vector<8x1xf32>
    %388 = vector.broadcast %387 : vector<8x1xf32> to vector<8x8xf32>
    %389 = arith.subf %385, %388 : vector<8x8xf32>
    %390 = math.exp %389 : vector<8x8xf32>
    %cst_139 = arith.constant dense<0.000000e+00> : vector<8xf32>
    %391 = vector.multi_reduction <add>, %390, %cst_139 [1] : vector<8x8xf32> to vector<8xf32>
    %392 = vector.shape_cast %391 : vector<8xf32> to vector<8x1xf32>
    %393 = tpu.reciprocal %392 {approx = true} : vector<8x1xf32> -> vector<8x1xf32>
    %394 = vector.broadcast %393 : vector<8x1xf32> to vector<8x8xf32>
    %395 = arith.mulf %390, %394 : vector<8x8xf32>
    %396 = arith.truncf %395 : vector<8x8xf32> to vector<8x8xbf16>
    %cst_140 = arith.constant dense<0.000000e+00> : vector<8x32xf32>
    %397 = tpu.matmul %396, %384, %cst_140 {dimension_numbers = #tpu.dot_dimension_numbers<[1], [0], [0], [1], [0, 0, 1, 1], [], []>} : vector<8x8xbf16>, vector<8x32xbf16>, vector<8x32xf32> -> vector<8x32xf32>
    %c8_141 = arith.constant 8 : index
    %c32_142 = arith.constant 32 : index
    %398 = vector.load %arg30[%c8_141, %c32_142] : memref<16x128xf32, #tpu.memory_space<vmem>>, vector<8x32xf32>
    tpu.vector_store %arg30[%c8_141, %c32_142], %397 {strides = array<i32>} : memref<16x128xf32, #tpu.memory_space<vmem>>, vector<8x32xf32>,
    %399 = vector.extract_strided_slice %258 {offsets = [8, 64], sizes = [8, 32], strides = [1, 1]} : vector<16x128xf32> to vector<8x32xf32>
    %cst_143 = arith.constant 0.176776692 : f32
    %400 = vector.broadcast %cst_143 : f32 to vector<8x32xf32>
    %401 = arith.mulf %399, %400 : vector<8x32xf32>
    %402 = arith.truncf %401 : vector<8x32xf32> to vector<8x32xbf16>
    %403 = vector.extract_strided_slice %266 {offsets = [8, 64], sizes = [8, 32], strides = [1, 1]} : vector<16x256xf32> to vector<8x32xf32>
    %404 = arith.truncf %403 : vector<8x32xf32> to vector<8x32xbf16>
    %405 = vector.extract_strided_slice %266 {offsets = [8, 192], sizes = [8, 32], strides = [1, 1]} : vector<16x256xf32> to vector<8x32xf32>
    %406 = arith.truncf %405 : vector<8x32xf32> to vector<8x32xbf16>
    %cst_144 = arith.constant dense<0.000000e+00> : vector<8x8xf32>
    %407 = tpu.matmul %402, %404, %cst_144 {dimension_numbers = #tpu.dot_dimension_numbers<[1], [1], [0], [0], [0, 0, 1, 0], [], []>} : vector<8x32xbf16>, vector<8x32xbf16>, vector<8x8xf32> -> vector<8x8xf32>
    %cst_145 = arith.constant dense<0xFF800000> : vector<8xf32>
    %408 = vector.multi_reduction <maximumf>, %407, %cst_145 [1] : vector<8x8xf32> to vector<8xf32>
    %409 = vector.shape_cast %408 : vector<8xf32> to vector<8x1xf32>
    %410 = vector.broadcast %409 : vector<8x1xf32> to vector<8x8xf32>
    %411 = arith.subf %407, %410 : vector<8x8xf32>
    %412 = math.exp %411 : vector<8x8xf32>
    %cst_146 = arith.constant dense<0.000000e+00> : vector<8xf32>
    %413 = vector.multi_reduction <add>, %412, %cst_146 [1] : vector<8x8xf32> to vector<8xf32>
    %414 = vector.shape_cast %413 : vector<8xf32> to vector<8x1xf32>
    %415 = tpu.reciprocal %414 {approx = true} : vector<8x1xf32> -> vector<8x1xf32>
    %416 = vector.broadcast %415 : vector<8x1xf32> to vector<8x8xf32>
    %417 = arith.mulf %412, %416 : vector<8x8xf32>
    %418 = arith.truncf %417 : vector<8x8xf32> to vector<8x8xbf16>
    %cst_147 = arith.constant dense<0.000000e+00> : vector<8x32xf32>
    %419 = tpu.matmul %418, %406, %cst_147 {dimension_numbers = #tpu.dot_dimension_numbers<[1], [0], [0], [1], [0, 0, 1, 1], [], []>} : vector<8x8xbf16>, vector<8x32xbf16>, vector<8x32xf32> -> vector<8x32xf32>
    %c8_148 = arith.constant 8 : index
    %c64_149 = arith.constant 64 : index
    %420 = vector.load %arg30[%c8_148, %c64_149] : memref<16x128xf32, #tpu.memory_space<vmem>>, vector<8x32xf32>
    tpu.vector_store %arg30[%c8_148, %c64_149], %419 {strides = array<i32>} : memref<16x128xf32, #tpu.memory_space<vmem>>, vector<8x32xf32>,
    %421 = vector.extract_strided_slice %258 {offsets = [8, 96], sizes = [8, 32], strides = [1, 1]} : vector<16x128xf32> to vector<8x32xf32>
    %cst_150 = arith.constant 0.176776692 : f32
    %422 = vector.broadcast %cst_150 : f32 to vector<8x32xf32>
    %423 = arith.mulf %421, %422 : vector<8x32xf32>
    %424 = arith.truncf %423 : vector<8x32xf32> to vector<8x32xbf16>
    %425 = vector.extract_strided_slice %266 {offsets = [8, 96], sizes = [8, 32], strides = [1, 1]} : vector<16x256xf32> to vector<8x32xf32>
    %426 = arith.truncf %425 : vector<8x32xf32> to vector<8x32xbf16>
    %427 = vector.extract_strided_slice %266 {offsets = [8, 224], sizes = [8, 32], strides = [1, 1]} : vector<16x256xf32> to vector<8x32xf32>
    %428 = arith.truncf %427 : vector<8x32xf32> to vector<8x32xbf16>
    %cst_151 = arith.constant dense<0.000000e+00> : vector<8x8xf32>
    %429 = tpu.matmul %424, %426, %cst_151 {dimension_numbers = #tpu.dot_dimension_numbers<[1], [1], [0], [0], [0, 0, 1, 0], [], []>} : vector<8x32xbf16>, vector<8x32xbf16>, vector<8x8xf32> -> vector<8x8xf32>
    %cst_152 = arith.constant dense<0xFF800000> : vector<8xf32>
    %430 = vector.multi_reduction <maximumf>, %429, %cst_152 [1] : vector<8x8xf32> to vector<8xf32>
    %431 = vector.shape_cast %430 : vector<8xf32> to vector<8x1xf32>
    %432 = vector.broadcast %431 : vector<8x1xf32> to vector<8x8xf32>
    %433 = arith.subf %429, %432 : vector<8x8xf32>
    %434 = math.exp %433 : vector<8x8xf32>
    %cst_153 = arith.constant dense<0.000000e+00> : vector<8xf32>
    %435 = vector.multi_reduction <add>, %434, %cst_153 [1] : vector<8x8xf32> to vector<8xf32>
    %436 = vector.shape_cast %435 : vector<8xf32> to vector<8x1xf32>
    %437 = tpu.reciprocal %436 {approx = true} : vector<8x1xf32> -> vector<8x1xf32>
    %438 = vector.broadcast %437 : vector<8x1xf32> to vector<8x8xf32>
    %439 = arith.mulf %434, %438 : vector<8x8xf32>
    %440 = arith.truncf %439 : vector<8x8xf32> to vector<8x8xbf16>
    %cst_154 = arith.constant dense<0.000000e+00> : vector<8x32xf32>
    %441 = tpu.matmul %440, %428, %cst_154 {dimension_numbers = #tpu.dot_dimension_numbers<[1], [0], [0], [1], [0, 0, 1, 1], [], []>} : vector<8x8xbf16>, vector<8x32xbf16>, vector<8x32xf32> -> vector<8x32xf32>
    %c8_155 = arith.constant 8 : index
    %c96_156 = arith.constant 96 : index
    %442 = vector.load %arg30[%c8_155, %c96_156] : memref<16x128xf32, #tpu.memory_space<vmem>>, vector<8x32xf32>
    tpu.vector_store %arg30[%c8_155, %c96_156], %441 {strides = array<i32>} : memref<16x128xf32, #tpu.memory_space<vmem>>, vector<8x32xf32>,
    %c0_157 = arith.constant 0 : index
    %c0_158 = arith.constant 0 : index
    %443 = vector.load %arg30[%c0_157, %c0_158] : memref<16x128xf32, #tpu.memory_space<vmem>>, vector<16x128xf32>
    %c0_159 = arith.constant 0 : index
    %c0_160 = arith.constant 0 : index
    %c0_161 = arith.constant 0 : index
    %444 = vector.load %arg18[%c0_159, %c0_160, %c0_161] : memref<1x128x128xbf16, #tpu.memory_space<vmem>>, vector<1x128x128xbf16>
    %445 = vector.shape_cast %444 : vector<1x128x128xbf16> to vector<128x128xbf16>
    %446 = arith.truncf %443 : vector<16x128xf32> to vector<16x128xbf16>
    %cst_162 = arith.constant dense<0.000000e+00> : vector<16x128xf32>
    %447 = tpu.matmul %446, %445, %cst_162 {dimension_numbers = #tpu.dot_dimension_numbers<[1], [0], [0], [1], [0, 0, 1, 1], [], []>} : vector<16x128xbf16>, vector<128x128xbf16>, vector<16x128xf32> -> vector<16x128xf32>
    %448 = arith.addf %250, %447 : vector<16x128xf32>
    %c0_163 = arith.constant 0 : index
    %c0_164 = arith.constant 0 : index
    %c0_165 = arith.constant 0 : index
    %449 = vector.load %arg19[%c0_163, %c0_164, %c0_165] : memref<1x1x128xf32, #tpu.memory_space<vmem>>, vector<1x1x128xf32>
    %450 = vector.shape_cast %449 : vector<1x1x128xf32> to vector<1x128xf32>
    %451 = vector.broadcast %450 : vector<1x128xf32> to vector<16x128xf32>
    %452 = arith.addf %448, %451 : vector<16x128xf32>
    %c0_166 = arith.constant 0 : index
    %c0_167 = arith.constant 0 : index
    %c0_168 = arith.constant 0 : index
    %453 = vector.load %arg20[%c0_166, %c0_167, %c0_168] : memref<1x1x128xf32, #tpu.memory_space<vmem>>, vector<1x1x128xf32>
    %454 = vector.shape_cast %453 : vector<1x1x128xf32> to vector<1x128xf32>
    %c0_169 = arith.constant 0 : index
    %c0_170 = arith.constant 0 : index
    %c0_171 = arith.constant 0 : index
    %455 = vector.load %arg21[%c0_169, %c0_170, %c0_171] : memref<1x1x128xf32, #tpu.memory_space<vmem>>, vector<1x1x128xf32>
    %456 = vector.shape_cast %455 : vector<1x1x128xf32> to vector<1x128xf32>
    %cst_172 = arith.constant dense<0.000000e+00> : vector<16xf32>
    %457 = vector.multi_reduction <add>, %452, %cst_172 [1] : vector<16x128xf32> to vector<16xf32>
    %458 = vector.shape_cast %457 : vector<16xf32> to vector<16x1xf32>
    %cst_173 = arith.constant 1.280000e+02 : f32
    %459 = vector.broadcast %cst_173 : f32 to vector<16x1xf32>
    %460 = arith.divf %458, %459 : vector<16x1xf32>
    %461 = vector.broadcast %460 : vector<16x1xf32> to vector<16x128xf32>
    %462 = arith.subf %452, %461 : vector<16x128xf32>
    %463 = arith.mulf %462, %462 : vector<16x128xf32>
    %cst_174 = arith.constant dense<0.000000e+00> : vector<16xf32>
    %464 = vector.multi_reduction <add>, %463, %cst_174 [1] : vector<16x128xf32> to vector<16xf32>
    %465 = vector.shape_cast %464 : vector<16xf32> to vector<16x1xf32>
    %cst_175 = arith.constant 1.280000e+02 : f32
    %466 = vector.broadcast %cst_175 : f32 to vector<16x1xf32>
    %467 = arith.divf %465, %466 : vector<16x1xf32>
    %468 = vector.broadcast %460 : vector<16x1xf32> to vector<16x128xf32>
    %469 = arith.subf %452, %468 : vector<16x128xf32>
    %cst_176 = arith.constant 9.99999997E-7 : f32
    %470 = vector.broadcast %cst_176 : f32 to vector<16x1xf32>
    %471 = arith.addf %467, %470 : vector<16x1xf32>
    %472 = math.rsqrt %471 : vector<16x1xf32>
    %473 = vector.broadcast %472 : vector<16x1xf32> to vector<16x128xf32>
    %474 = arith.mulf %469, %473 : vector<16x128xf32>
    %475 = vector.broadcast %454 : vector<1x128xf32> to vector<16x128xf32>
    %476 = arith.mulf %474, %475 : vector<16x128xf32>
    %477 = vector.broadcast %456 : vector<1x128xf32> to vector<16x128xf32>
    %478 = arith.addf %476, %477 : vector<16x128xf32>
    %c0_177 = arith.constant 0 : index
    %c0_178 = arith.constant 0 : index
    %c0_179 = arith.constant 0 : index
    %479 = vector.load %arg22[%c0_177, %c0_178, %c0_179] : memref<1x128x256xbf16, #tpu.memory_space<vmem>>, vector<1x128x256xbf16>
    %480 = vector.shape_cast %479 : vector<1x128x256xbf16> to vector<128x256xbf16>
    %481 = arith.truncf %478 : vector<16x128xf32> to vector<16x128xbf16>
    %cst_180 = arith.constant dense<0.000000e+00> : vector<16x256xf32>
    %482 = tpu.matmul %481, %480, %cst_180 {dimension_numbers = #tpu.dot_dimension_numbers<[1], [0], [0], [1], [0, 0, 1, 1], [], []>} : vector<16x128xbf16>, vector<128x256xbf16>, vector<16x256xf32> -> vector<16x256xf32>
    %c0_181 = arith.constant 0 : index
    %c0_182 = arith.constant 0 : index
    %c0_183 = arith.constant 0 : index
    %483 = vector.load %arg23[%c0_181, %c0_182, %c0_183] : memref<1x1x256xf32, #tpu.memory_space<vmem>>, vector<1x1x256xf32>
    %484 = vector.shape_cast %483 : vector<1x1x256xf32> to vector<1x256xf32>
    %485 = vector.broadcast %484 : vector<1x256xf32> to vector<16x256xf32>
    %486 = arith.addf %482, %485 : vector<16x256xf32>
    %cst_184 = arith.constant 0.000000e+00 : f32
    %487 = vector.broadcast %cst_184 : f32 to vector<16x256xf32>
    %488 = arith.maximumf %486, %487 : vector<16x256xf32>
    %c0_185 = arith.constant 0 : index
    %c0_186 = arith.constant 0 : index
    %c0_187 = arith.constant 0 : index
    %489 = vector.load %arg24[%c0_185, %c0_186, %c0_187] : memref<1x256x128xbf16, #tpu.memory_space<vmem>>, vector<1x256x128xbf16>
    %490 = vector.shape_cast %489 : vector<1x256x128xbf16> to vector<256x128xbf16>
    %491 = arith.truncf %488 : vector<16x256xf32> to vector<16x256xbf16>
    %cst_188 = arith.constant dense<0.000000e+00> : vector<16x128xf32>
    %492 = tpu.matmul %491, %490, %cst_188 {dimension_numbers = #tpu.dot_dimension_numbers<[1], [0], [0], [1], [0, 0, 1, 1], [], []>} : vector<16x256xbf16>, vector<256x128xbf16>, vector<16x128xf32> -> vector<16x128xf32>
    %493 = arith.addf %478, %492 : vector<16x128xf32>
    %c0_189 = arith.constant 0 : index
    %c0_190 = arith.constant 0 : index
    %c0_191 = arith.constant 0 : index
    %494 = vector.load %arg25[%c0_189, %c0_190, %c0_191] : memref<1x1x128xf32, #tpu.memory_space<vmem>>, vector<1x1x128xf32>
    %495 = vector.shape_cast %494 : vector<1x1x128xf32> to vector<1x128xf32>
    %496 = vector.broadcast %495 : vector<1x128xf32> to vector<16x128xf32>
    %497 = arith.addf %493, %496 : vector<16x128xf32>
    %c0_192 = arith.constant 0 : index
    %c0_193 = arith.constant 0 : index
    %c0_194 = arith.constant 0 : index
    %498 = vector.load %arg26[%c0_192, %c0_193, %c0_194] : memref<1x1x128xf32, #tpu.memory_space<vmem>>, vector<1x1x128xf32>
    %499 = vector.shape_cast %498 : vector<1x1x128xf32> to vector<1x128xf32>
    %c0_195 = arith.constant 0 : index
    %c0_196 = arith.constant 0 : index
    %c0_197 = arith.constant 0 : index
    %500 = vector.load %arg27[%c0_195, %c0_196, %c0_197] : memref<1x1x128xf32, #tpu.memory_space<vmem>>, vector<1x1x128xf32>
    %501 = vector.shape_cast %500 : vector<1x1x128xf32> to vector<1x128xf32>
    %cst_198 = arith.constant dense<0.000000e+00> : vector<16xf32>
    %502 = vector.multi_reduction <add>, %497, %cst_198 [1] : vector<16x128xf32> to vector<16xf32>
    %503 = vector.shape_cast %502 : vector<16xf32> to vector<16x1xf32>
    %cst_199 = arith.constant 1.280000e+02 : f32
    %504 = vector.broadcast %cst_199 : f32 to vector<16x1xf32>
    %505 = arith.divf %503, %504 : vector<16x1xf32>
    %506 = vector.broadcast %505 : vector<16x1xf32> to vector<16x128xf32>
    %507 = arith.subf %497, %506 : vector<16x128xf32>
    %508 = arith.mulf %507, %507 : vector<16x128xf32>
    %cst_200 = arith.constant dense<0.000000e+00> : vector<16xf32>
    %509 = vector.multi_reduction <add>, %508, %cst_200 [1] : vector<16x128xf32> to vector<16xf32>
    %510 = vector.shape_cast %509 : vector<16xf32> to vector<16x1xf32>
    %cst_201 = arith.constant 1.280000e+02 : f32
    %511 = vector.broadcast %cst_201 : f32 to vector<16x1xf32>
    %512 = arith.divf %510, %511 : vector<16x1xf32>
    %513 = vector.broadcast %505 : vector<16x1xf32> to vector<16x128xf32>
    %514 = arith.subf %497, %513 : vector<16x128xf32>
    %cst_202 = arith.constant 9.99999997E-7 : f32
    %515 = vector.broadcast %cst_202 : f32 to vector<16x1xf32>
    %516 = arith.addf %512, %515 : vector<16x1xf32>
    %517 = math.rsqrt %516 : vector<16x1xf32>
    %518 = vector.broadcast %517 : vector<16x1xf32> to vector<16x128xf32>
    %519 = arith.mulf %514, %518 : vector<16x128xf32>
    %520 = vector.broadcast %499 : vector<1x128xf32> to vector<16x128xf32>
    %521 = arith.mulf %519, %520 : vector<16x128xf32>
    %522 = vector.broadcast %501 : vector<1x128xf32> to vector<16x128xf32>
    %523 = arith.addf %521, %522 : vector<16x128xf32>
    %c0_203 = arith.constant 0 : index
    %c0_204 = arith.constant 0 : index
    %524 = vector.load %arg29[%c0_203, %c0_204] : memref<16x128xf32, #tpu.memory_space<vmem>>, vector<16x128xf32>
    tpu.vector_store %arg29[%c0_203, %c0_204], %523 {strides = array<i32>} : memref<16x128xf32, #tpu.memory_space<vmem>>, vector<16x128xf32>,
    %c1_i32 = arith.constant 1 : i32
    %525 = arith.cmpi eq, %arg1, %c1_i32 : i32
    %526 = arith.extui %525 : i1 to i32
    %c0_i32_205 = arith.constant 0 : i32
    %527 = arith.cmpi ne, %526, %c0_i32_205 : i32
    scf.if %527 {
      %528 = arith.truncf %523 : vector<16x128xf32> to vector<16x128xbf16>
      %c0_206 = arith.constant 0 : index
      %c0_207 = arith.constant 0 : index
      %529 = vector.load %arg28[%c0_206, %c0_207] : memref<16x128xbf16, #tpu.memory_space<vmem>>, vector<16x128xbf16>
      tpu.vector_store %arg28[%c0_206, %c0_207], %528 {strides = array<i32>} : memref<16x128xbf16, #tpu.memory_space<vmem>>, vector<16x128xbf16>,
    } else {
    }
    return
  }
  func.func @transform_0(%arg0: i32, %arg1: i32) -> (i32, i32) {
    %c0_i32 = arith.constant 0 : i32
    %c0_i32_0 = arith.constant 0 : i32
    return %arg0, %c0_i32 : i32, i32
  }
  func.func @transform_1(%arg0: i32, %arg1: i32) -> (i32, i32) {
    %c0_i32 = arith.constant 0 : i32
    %c0_i32_0 = arith.constant 0 : i32
    return %arg0, %c0_i32 : i32, i32
  }
  func.func @transform_2(%arg0: i32, %arg1: i32) -> (i32, i32, i32) {
    %c0_i32 = arith.constant 0 : i32
    %c0_i32_0 = arith.constant 0 : i32
    %c0_i32_1 = arith.constant 0 : i32
    return %arg0, %c0_i32, %c0_i32_0 : i32, i32, i32
  }
  func.func @transform_3(%arg0: i32, %arg1: i32) -> (i32, i32) {
    %c0_i32 = arith.constant 0 : i32
    %c0_i32_0 = arith.constant 0 : i32
    %c0_i32_1 = arith.constant 0 : i32
    return %c0_i32, %c0_i32_0 : i32, i32
  }
  func.func @transform_4(%arg0: i32, %arg1: i32) -> (i32, i32) {
    %c0_i32 = arith.constant 0 : i32
    %c0_i32_0 = arith.constant 0 : i32
    %c0_i32_1 = arith.constant 0 : i32
    return %c0_i32, %c0_i32_0 : i32, i32
  }
  func.func @transform_5(%arg0: i32, %arg1: i32) -> (i32, i32) {
    %c0_i32 = arith.constant 0 : i32
    %c0_i32_0 = arith.constant 0 : i32
    %c0_i32_1 = arith.constant 0 : i32
    return %c0_i32, %c0_i32_0 : i32, i32
  }
  func.func @transform_6(%arg0: i32, %arg1: i32) -> (i32, i32, i32) {
    %c0_i32 = arith.constant 0 : i32
    %c0_i32_0 = arith.constant 0 : i32
    %c0_i32_1 = arith.constant 0 : i32
    return %arg1, %c0_i32, %c0_i32_0 : i32, i32, i32
  }
  func.func @transform_7(%arg0: i32, %arg1: i32) -> (i32, i32, i32) {
    %c0_i32 = arith.constant 0 : i32
    %c0_i32_0 = arith.constant 0 : i32
    %c0_i32_1 = arith.constant 0 : i32
    return %arg1, %c0_i32, %c0_i32_0 : i32, i32, i32
  }
  func.func @transform_8(%arg0: i32, %arg1: i32) -> (i32, i32, i32) {
    %c0_i32 = arith.constant 0 : i32
    %c0_i32_0 = arith.constant 0 : i32
    %c0_i32_1 = arith.constant 0 : i32
    return %arg1, %c0_i32, %c0_i32_0 : i32, i32, i32
  }
  func.func @transform_9(%arg0: i32, %arg1: i32) -> (i32, i32, i32) {
    %c0_i32 = arith.constant 0 : i32
    %c0_i32_0 = arith.constant 0 : i32
    %c0_i32_1 = arith.constant 0 : i32
    return %arg1, %c0_i32, %c0_i32_0 : i32, i32, i32
  }
  func.func @transform_10(%arg0: i32, %arg1: i32) -> (i32, i32, i32) {
    %c0_i32 = arith.constant 0 : i32
    %c0_i32_0 = arith.constant 0 : i32
    %c0_i32_1 = arith.constant 0 : i32
    return %arg1, %c0_i32, %c0_i32_0 : i32, i32, i32
  }
  func.func @transform_11(%arg0: i32, %arg1: i32) -> (i32, i32, i32) {
    %c0_i32 = arith.constant 0 : i32
    %c0_i32_0 = arith.constant 0 : i32
    %c0_i32_1 = arith.constant 0 : i32
    return %arg1, %c0_i32, %c0_i32_0 : i32, i32, i32
  }
  func.func @transform_12(%arg0: i32, %arg1: i32) -> (i32, i32, i32) {
    %c0_i32 = arith.constant 0 : i32
    %c0_i32_0 = arith.constant 0 : i32
    %c0_i32_1 = arith.constant 0 : i32
    return %arg1, %c0_i32, %c0_i32_0 : i32, i32, i32
  }
  func.func @transform_13(%arg0: i32, %arg1: i32) -> (i32, i32, i32) {
    %c0_i32 = arith.constant 0 : i32
    %c0_i32_0 = arith.constant 0 : i32
    %c0_i32_1 = arith.constant 0 : i32
    return %arg1, %c0_i32, %c0_i32_0 : i32, i32, i32
  }
  func.func @transform_14(%arg0: i32, %arg1: i32) -> (i32, i32, i32) {
    %c0_i32 = arith.constant 0 : i32
    %c0_i32_0 = arith.constant 0 : i32
    %c0_i32_1 = arith.constant 0 : i32
    return %arg1, %c0_i32, %c0_i32_0 : i32, i32, i32
  }
  func.func @transform_15(%arg0: i32, %arg1: i32) -> (i32, i32, i32) {
    %c0_i32 = arith.constant 0 : i32
    %c0_i32_0 = arith.constant 0 : i32
    %c0_i32_1 = arith.constant 0 : i32
    return %arg1, %c0_i32, %c0_i32_0 : i32, i32, i32
  }
  func.func @transform_16(%arg0: i32, %arg1: i32) -> (i32, i32, i32) {
    %c0_i32 = arith.constant 0 : i32
    %c0_i32_0 = arith.constant 0 : i32
    %c0_i32_1 = arith.constant 0 : i32
    return %arg1, %c0_i32, %c0_i32_0 : i32, i32, i32
  }
  func.func @transform_17(%arg0: i32, %arg1: i32) -> (i32, i32, i32) {
    %c0_i32 = arith.constant 0 : i32
    %c0_i32_0 = arith.constant 0 : i32
    %c0_i32_1 = arith.constant 0 : i32
    return %arg1, %c0_i32, %c0_i32_0 : i32, i32, i32
  }
  func.func @transform_18(%arg0: i32, %arg1: i32) -> (i32, i32, i32) {
    %c0_i32 = arith.constant 0 : i32
    %c0_i32_0 = arith.constant 0 : i32
    %c0_i32_1 = arith.constant 0 : i32
    return %arg1, %c0_i32, %c0_i32_0 : i32, i32, i32
  }
  func.func @transform_19(%arg0: i32, %arg1: i32) -> (i32, i32, i32) {
    %c0_i32 = arith.constant 0 : i32
    %c0_i32_0 = arith.constant 0 : i32
    %c0_i32_1 = arith.constant 0 : i32
    return %arg1, %c0_i32, %c0_i32_0 : i32, i32, i32
  }
  func.func @transform_20(%arg0: i32, %arg1: i32) -> (i32, i32, i32) {
    %c0_i32 = arith.constant 0 : i32
    %c0_i32_0 = arith.constant 0 : i32
    %c0_i32_1 = arith.constant 0 : i32
    return %arg1, %c0_i32, %c0_i32_0 : i32, i32, i32
  }
  func.func @transform_21(%arg0: i32, %arg1: i32) -> (i32, i32, i32) {
    %c0_i32 = arith.constant 0 : i32
    %c0_i32_0 = arith.constant 0 : i32
    %c0_i32_1 = arith.constant 0 : i32
    return %arg1, %c0_i32, %c0_i32_0 : i32, i32, i32
  }
  func.func @transform_22(%arg0: i32, %arg1: i32) -> (i32, i32, i32) {
    %c0_i32 = arith.constant 0 : i32
    %c0_i32_0 = arith.constant 0 : i32
    %c0_i32_1 = arith.constant 0 : i32
    return %arg1, %c0_i32, %c0_i32_0 : i32, i32, i32
  }
  func.func @transform_23(%arg0: i32, %arg1: i32) -> (i32, i32, i32) {
    %c0_i32 = arith.constant 0 : i32
    %c0_i32_0 = arith.constant 0 : i32
    %c0_i32_1 = arith.constant 0 : i32
    return %arg1, %c0_i32, %c0_i32_0 : i32, i32, i32
  }
  func.func @transform_24(%arg0: i32, %arg1: i32) -> (i32, i32, i32) {
    %c0_i32 = arith.constant 0 : i32
    %c0_i32_0 = arith.constant 0 : i32
    %c0_i32_1 = arith.constant 0 : i32
    return %arg1, %c0_i32, %c0_i32_0 : i32, i32, i32
  }
  func.func @transform_25(%arg0: i32, %arg1: i32) -> (i32, i32, i32) {
    %c0_i32 = arith.constant 0 : i32
    %c0_i32_0 = arith.constant 0 : i32
    %c0_i32_1 = arith.constant 0 : i32
    return %arg1, %c0_i32, %c0_i32_0 : i32, i32, i32
  }
  func.func @transform_26(%arg0: i32, %arg1: i32) -> (i32, i32) {
    %c0_i32 = arith.constant 0 : i32
    %c0_i32_0 = arith.constant 0 : i32
    return %arg0, %c0_i32 : i32, i32
  }
}

</mosaic_0001>

<llo_original>
// kernel: scene_branch_forward.5
$region0: #{scene_branch_forward.5}
  #allocation0 [shape = 'u32[]', space=smem, size = 0x4, offset = 0x4, fixed_abs, tag = 'smem constant byte address 0x4 - core index']
  #allocation1 [shape = 'u32[144,128]{1,0:T(1,128)}', space=vmem, size = 0x12000, scoped, tag = 'internal scratch']
  %s0 = inlined_call_operand.vmem [shape: bf16[16,128], index: 0, kind: input, shape index: {}]
  %s1 = inlined_call_operand.vmem [shape: bf16[128,128], index: 1, kind: input, shape index: {}]
  %s2 = inlined_call_operand.hbm [shape: f32[16,128], index: 2, kind: output, shape index: {}]
  %s3 = sld [smem:[#allocation0]]
  $region18: #{scene_branch_forward.5} parent=0
    _
  %s5 = ssub.s32 1, %s3
  %s6 = scalar_select 0, %s5, %s3
  $region1: #{scene_branch_forward.5} parent=0
    #allocation2 [shape = 'u8[8192]{0}', space=vmem, size = 0x2000, scoped, tag = 'output window, operand 0, single buffered']
    #allocation3 [shape = 's32[1]{0}', space=sflag, size = 0x4, scoped, tag = 'scoped memory for scene_branch_forward.5']
    %7 = vsyncpa [#allocation3], 0
    // Predicated region
    $region2: #{scene_branch_forward.5} parent=1 // pred_check
      _
    $region3: #{scene_branch_forward.5} parent=1 // pred_check_branch
      %9 = sbr.rel (0) target = $region5
    $region4: #{scene_branch_forward.5} parent=1 // pred_region
      _
    $region5: #{scene_branch_forward.5} parent=1 // pred_fallthru
      _
    // Predicated region
    $region6: #{scene_branch_forward.5} parent=1 // pred_check
      _
    $region7: #{scene_branch_forward.5} parent=1 // pred_check_branch
      %11 = sbr.rel (0) target = $region9
    $region8: #{scene_branch_forward.5} parent=1 // pred_region
      _
    $region9: #{scene_branch_forward.5} parent=1 // pred_fallthru
      _
    %v13 = vld [vmem:[%s0] sm:$0xf]
    %v14 = vld [vmem:[%s0 + $0x4] sm:$0xf]
    %v15 = vld [vmem:[%s1] sm:$0xf]
    %v16 = vld [vmem:[%s1 + $0x4] sm:$0xf]
    %v17 = vld [vmem:[%s1 + $0x8] sm:$0xf]
    %v18 = vld [vmem:[%s1 + $0xc] sm:$0xf]
    %v19 = vld [vmem:[%s1 + $0x10] sm:$0xf]
    %v20 = vld [vmem:[%s1 + $0x14] sm:$0xf]
    %v21 = vld [vmem:[%s1 + $0x18] sm:$0xf]
    %v22 = vld [vmem:[%s1 + $0x1c] sm:$0xf]
    %v23 = vld [vmem:[%s1 + $0x20] sm:$0xf]
    %v24 = vld [vmem:[%s1 + $0x24] sm:$0xf]
    %v25 = vld [vmem:[%s1 + $0x28] sm:$0xf]
    %v26 = vld [vmem:[%s1 + $0x2c] sm:$0xf]
    %v27 = vld [vmem:[%s1 + $0x30] sm:$0xf]
    %v28 = vld [vmem:[%s1 + $0x34] sm:$0xf]
    %v29 = vld [vmem:[%s1 + $0x38] sm:$0xf]
    %v30 = vld [vmem:[%s1 + $0x3c] sm:$0xf]
    %v33 = vunpack.c.l.b16 %v13
    %v34 = vunpack.c.l.b16 %v14
    %v35 = vpack.c.b16 %v34, %v33
    %v53 = vunpack.c.l.b16 %v15
    %v54 = vunpack.c.l.b16 %v16
    %v55 = vunpack.c.l.b16 %v17
    %v56 = vunpack.c.l.b16 %v18
    %v57 = vunpack.c.l.b16 %v19
    %v58 = vunpack.c.l.b16 %v20
    %v59 = vunpack.c.l.b16 %v21
    %v60 = vunpack.c.l.b16 %v22
    %v61 = vunpack.c.l.b16 %v23
    %v62 = vunpack.c.l.b16 %v24
    %v63 = vunpack.c.l.b16 %v25
    %v64 = vunpack.c.l.b16 %v26
    %v65 = vunpack.c.l.b16 %v27
    %v66 = vunpack.c.l.b16 %v28
    %v67 = vunpack.c.l.b16 %v29
    %v68 = vunpack.c.l.b16 %v30
    %v69 = vpack.c.b16 %v54, %v53
    %v70 = vpack.c.b16 %v56, %v55
    %v71 = vpack.c.b16 %v58, %v57
    %v72 = vpack.c.b16 %v60, %v59
    %v73 = vpack.c.b16 %v62, %v61
    %v74 = vpack.c.b16 %v64, %v63
    %v75 = vpack.c.b16 %v66, %v65
    %v76 = vpack.c.b16 %v68, %v67
    %85 = vmatprep.subr.bf16.mxu0 0
    %86 = vmatpush1.bf16.msra.mxu0 %v69
    %87 = vmatprep.subr.bf16.mxu0 0
    %88 = vmatpush1.bf16.msra.mxu0 %v70
    %89 = vmatprep.subr.bf16.mxu0 0
    %90 = vmatpush1.bf16.msra.mxu0 %v71
    %91 = vmatprep.subr.bf16.mxu0 0
    %92 = vmatpush1.bf16.msra.mxu0 %v72
    %93 = vmatprep.subr.bf16.mxu0 0
    %94 = vmatpush1.bf16.msra.mxu0 %v73
    %95 = vmatprep.subr.bf16.mxu0 0
    %96 = vmatpush1.bf16.msra.mxu0 %v74
    %97 = vmatprep.subr.bf16.mxu0 0
    %98 = vmatpush1.bf16.msra.mxu0 %v75
    %99 = vmatprep.subr.bf16.mxu0 0
    %100 = vmatpush1.bf16.msra.mxu0 %v76
    %101 = vmatprep.subr.bf16.mxu0 0
    %102 = vmatpush1.bf16.msra.mxu0 0
    %103 = vmatprep.subr.bf16.mxu0 0
    %104 = vmatpush1.bf16.msra.mxu0 0
    %105 = vmatprep.subr.bf16.mxu0 0
    %106 = vmatpush1.bf16.msra.mxu0 0
    %107 = vmatprep.subr.bf16.mxu0 0
    %108 = vmatpush1.bf16.msra.mxu0 0
    %109 = vmatprep.subr.bf16.mxu0 0
    %110 = vmatpush1.bf16.msra.mxu0 0
    %111 = vmatprep.subr.bf16.mxu0 0
    %112 = vmatpush1.bf16.msra.mxu0 0
    %113 = vmatprep.subr.bf16.mxu0 0
    %114 = vmatpush1.bf16.msra.mxu0 0
    %115 = vmatprep.subr.bf16.mxu0 0
    %116 = vmatpush1.bf16.msra.mxu0 0
    %117 = vmatprep.mubr.bf16.mxu0 0
    %118 = vmatmul.mubr.bf16.gmra.mrb[0].mxu0 %v35
    %v119 = vpop.f32.mrb[0].mxu0
    %v120 = vadd.f32 0.0, %v119
    %v121 = vpop.f32.mrb[0].mxu0
    %v122 = vpop.f32.mrb[0].mxu0
    %v123 = vadd.f32 0.0, %v122
    %v124 = vpop.f32.mrb[0].mxu0
    %125 = vdwg.mxu0
    %v126 = vmul.f32 %v120, 0.088388346
    %v127 = vmul.f32 %v123, 0.088388346
    %128 = vst [vmem:[#allocation2] sm:$0xff] %v126
    %129 = vst [vmem:[#allocation2 + $0x8] sm:$0xff] %v127
    // Predicated region
    $region10: #{scene_branch_forward.5} parent=1 // pred_check
      _
    $region11: #{scene_branch_forward.5} parent=1 // pred_check_branch
      %131 = sbr.rel (0) target = $region13
    $region12: #{scene_branch_forward.5} parent=1 // pred_region
      %s133 = ssub.s32 256, 256
      %134 = vsyncadd [#allocation3], %s133
      %s135 = sshll.u32 [#allocation2], 4
      %s136 = int_to_ptr.vmem [resolvable:$true] %s135
      %141 = dma.vmem_to_hbm [thread:$0]  %s136, 256, %s2, [#allocation3], 128, 128, 8
    $region13: #{scene_branch_forward.5} parent=1 // pred_fallthru
      _
    // Predicated region
    $region14: #{scene_branch_forward.5} parent=1 // pred_check
      _
    $region15: #{scene_branch_forward.5} parent=1 // pred_check_branch
      %143 = sbr.rel (0) target = $region17
    $region16: #{scene_branch_forward.5} parent=1 // pred_region
      %144 = dma.done [#allocation3], 256
    $region17: #{scene_branch_forward.5} parent=1 // pred_fallthru
      _
    %145 = vsyncpa [#allocation3], 1

// kernel: scene_branch_forward.3
$region0: #{scene_branch_forward.3}
  #allocation0 [shape = 'u32[]', space=smem, size = 0x4, offset = 0x4, fixed_abs, tag = 'smem constant byte address 0x4 - core index']
  #allocation1 [shape = 'u32[144,128]{1,0:T(1,128)}', space=vmem, size = 0x12000, scoped, tag = 'internal scratch']
  %s0 = inlined_call_operand.vmem [shape: bf16[16,16], index: 0, kind: input, shape index: {}]
  %s1 = inlined_call_operand.vmem [shape: bf16[16,24], index: 1, kind: input, shape index: {}]
  %s2 = inlined_call_operand.vmem [shape: bf16[16,128], index: 2, kind: input, shape index: {}]
  %s3 = inlined_call_operand.vmem [shape: f32[1,128], index: 3, kind: input, shape index: {}]
  %s4 = inlined_call_operand.vmem [shape: bf16[24,128], index: 4, kind: input, shape index: {}]
  %s5 = inlined_call_operand.vmem [shape: f32[1,128], index: 5, kind: input, shape index: {}]
  %s6 = inlined_call_operand.vmem [shape: f32[1,128], index: 6, kind: input, shape index: {}]
  %s7 = inlined_call_operand.vmem [shape: f32[1,128], index: 7, kind: input, shape index: {}]
  %s8 = inlined_call_operand.vmem [shape: bf16[16,128], index: 8, kind: output, shape index: {}]
  %s9 = sld [smem:[#allocation0]]
  $region42: #{scene_branch_forward.3} parent=0
    _
  %s11 = ssub.s32 1, %s9
  %s12 = scalar_select 0, %s11, %s9
  // Predicated region
  $region2: #{scene_branch_forward.3} parent=0 // pred_check
    _
  $region3: #{scene_branch_forward.3} parent=0 // pred_check_branch
    %14 = sbr.rel (0) target = $region5
  $region4: #{scene_branch_forward.3} parent=0 // pred_region
    _
  $region5: #{scene_branch_forward.3} parent=0 // pred_fallthru
    _
  // Predicated region
  $region6: #{scene_branch_forward.3} parent=0 // pred_check
    _
  $region7: #{scene_branch_forward.3} parent=0 // pred_check_branch
    %16 = sbr.rel (0) target = $region9
  $region8: #{scene_branch_forward.3} parent=0 // pred_region
    _
  $region9: #{scene_branch_forward.3} parent=0 // pred_fallthru
    _
  // Predicated region
  $region10: #{scene_branch_forward.3} parent=0 // pred_check
    _
  $region11: #{scene_branch_forward.3} parent=0 // pred_check_branch
    %18 = sbr.rel (0) target = $region13
  $region12: #{scene_branch_forward.3} parent=0 // pred_region
    _
  $region13: #{scene_branch_forward.3} parent=0 // pred_fallthru
    _
  // Predicated region
  $region14: #{scene_branch_forward.3} parent=0 // pred_check
    _
  $region15: #{scene_branch_forward.3} parent=0 // pred_check_branch
    %20 = sbr.rel (0) target = $region17
  $region16: #{scene_branch_forward.3} parent=0 // pred_region
    _
  $region17: #{scene_branch_forward.3} parent=0 // pred_fallthru
    _
  // Predicated region
  $region18: #{scene_branch_forward.3} parent=0 // pred_check
    _
  $region19: #{scene_branch_forward.3} parent=0 // pred_check_branch
    %22 = sbr.rel (0) target = $region21
  $region20: #{scene_branch_forward.3} parent=0 // pred_region
    _
  $region21: #{scene_branch_forward.3} parent=0 // pred_fallthru
    _
  // Predicated region
  $region22: #{scene_branch_forward.3} parent=0 // pred_check
    _
  $region23: #{scene_branch_forward.3} parent=0 // pred_check_branch
    %24 = sbr.rel (0) target = $region25
  $region24: #{scene_branch_forward.3} parent=0 // pred_region
    _
  $region25: #{scene_branch_forward.3} parent=0 // pred_fallthru
    _
  // Predicated region
  $region26: #{scene_branch_forward.3} parent=0 // pred_check
    _
  $region27: #{scene_branch_forward.3} parent=0 // pred_check_branch
    %26 = sbr.rel (0) target = $region29
  $region28: #{scene_branch_forward.3} parent=0 // pred_region
    _
  $region29: #{scene_branch_forward.3} parent=0 // pred_fallthru
    _
  // Predicated region
  $region30: #{scene_branch_forward.3} parent=0 // pred_check
    _
  $region31: #{scene_branch_forward.3} parent=0 // pred_check_branch
    %28 = sbr.rel (0) target = $region33
  $region32: #{scene_branch_forward.3} parent=0 // pred_region
    _
  $region33: #{scene_branch_forward.3} parent=0 // pred_fallthru
    _
  %v30 = vld [vmem:[%s0] sm:$0xf]
  %v31 = vld [vmem:[%s0 + $0x4] sm:$0xf]
  %v32 = vld [vmem:[%s2] sm:$0xf]
  %v33 = vld [vmem:[%s2 + $0x4] sm:$0xf]
  %v34 = vld [vmem:[%s3] sm:$0x1]
  %v36 = vlaneseq
  %v37 = vshrl.u32 %v36, 7
  %v38 = vsub.s32 0, %v37
  %v39 = vrot.slane %v34, %v38
  %v43 = vunpack.c.l.b16 %v30
  %v44 = vunpack.c.l.b16 %v31
  %v45 = vpack.c.b16 %v44, %v43
  %v48 = vunpack.c.l.b16 %v32
  %v49 = vunpack.c.l.b16 %v33
  %v50 = vpack.c.b16 %v49, %v48
  %vm52 = vcmask 130048
  %v54 = vsel %vm52, %v45, 0
  %56 = vmatprep.subr.bf16.mxu0 0
  %57 = vmatpush1.bf16.msra.mxu0 %v50
  %58 = vmatprep.subr.bf16.mxu0 0
  %59 = vmatpush1.bf16.msra.mxu0 0
  %60 = vmatprep.subr.bf16.mxu0 0
  %61 = vmatpush1.bf16.msra.mxu0 0
  %62 = vmatprep.subr.bf16.mxu0 0
  %63 = vmatpush1.bf16.msra.mxu0 0
  %64 = vmatprep.subr.bf16.mxu0 0
  %65 = vmatpush1.bf16.msra.mxu0 0
  %66 = vmatprep.subr.bf16.mxu0 0
  %67 = vmatpush1.bf16.msra.mxu0 0
  %68 = vmatprep.subr.bf16.mxu0 0
  %69 = vmatpush1.bf16.msra.mxu0 0
  %70 = vmatprep.subr.bf16.mxu0 0
  %71 = vmatpush1.bf16.msra.mxu0 0
  %72 = vmatprep.subr.bf16.mxu0 0
  %73 = vmatpush1.bf16.msra.mxu0 0
  %74 = vmatprep.subr.bf16.mxu0 0
  %75 = vmatpush1.bf16.msra.mxu0 0
  %76 = vmatprep.subr.bf16.mxu0 0
  %77 = vmatpush1.bf16.msra.mxu0 0
  %78 = vmatprep.subr.bf16.mxu0 0
  %79 = vmatpush1.bf16.msra.mxu0 0
  %80 = vmatprep.subr.bf16.mxu0 0
  %81 = vmatpush1.bf16.msra.mxu0 0
  %82 = vmatprep.subr.bf16.mxu0 0
  %83 = vmatpush1.bf16.msra.mxu0 0
  %84 = vmatprep.subr.bf16.mxu0 0
  %85 = vmatpush1.bf16.msra.mxu0 0
  %86 = vmatprep.subr.bf16.mxu0 0
  %87 = vmatpush1.bf16.msra.mxu0 0
  %88 = vmatprep.mubr.bf16.mxu0 0
  %89 = vmatmul.mubr.bf16.gmra.mrb[0].mxu0 %v54
  %v90 = vpop.f32.mrb[0].mxu0
  %v91 = vadd.f32 %v39, %v90
  %v92 = vpop.f32.mrb[0].mxu0
  %v93 = vpop.f32.mrb[0].mxu0
  %v94 = vadd.f32 %v39, %v93
  %v95 = vpop.f32.mrb[0].mxu0
  %96 = vdwg.mxu0
  %v97 = vld [vmem:[%s1] sm:$0xf]
  %v98 = vld [vmem:[%s1 + $0x4] sm:$0xf]
  %v99 = vld [vmem:[%s4] sm:$0xf]
  %v100 = vld [vmem:[%s4 + $0x4] sm:$0xf]
  %v101 = vld [vmem:[%s4 + $0x8] sm:$0xf]
  %v102 = vld [vmem:[%s5] sm:$0x1]
  %v104 = vlaneseq
  %v105 = vshrl.u32 %v104, 7
  %v106 = vsub.s32 0, %v105
  %v107 = vrot.slane %v102, %v106
  %v111 = vunpack.c.l.b16 %v97
  %v112 = vunpack.c.l.b16 %v98
  %v113 = vpack.c.b16 %v112, %v111
  %v117 = vunpack.c.l.b16 %v99
  %v118 = vunpack.c.l.b16 %v100
  %v119 = vunpack.c.l.b16 %v101
  %v120 = vpack.c.b16 %v118, %v117
  %v121 = vpack.c.b16 %v119, %v119
  %vm123 = vcmask 195584
  %v125 = vsel %vm123, %v113, 0
  %vm127 = vcmask 1043456
  %v129 = vsel %vm127, %v121, 0
  %131 = vmatprep.subr.bf16.mxu0 0
  %132 = vmatpush1.bf16.msra.mxu0 %v120
  %133 = vmatprep.subr.bf16.mxu0 0
  %134 = vmatpush1.bf16.msra.mxu0 %v129
  %135 = vmatprep.subr.bf16.mxu0 0
  %136 = vmatpush1.bf16.msra.mxu0 0
  %137 = vmatprep.subr.bf16.mxu0 0
  %138 = vmatpush1.bf16.msra.mxu0 0
  %139 = vmatprep.subr.bf16.mxu0 0
  %140 = vmatpush1.bf16.msra.mxu0 0
  %141 = vmatprep.subr.bf16.mxu0 0
  %142 = vmatpush1.bf16.msra.mxu0 0
  %143 = vmatprep.subr.bf16.mxu0 0
  %144 = vmatpush1.bf16.msra.mxu0 0
  %145 = vmatprep.subr.bf16.mxu0 0
  %146 = vmatpush1.bf16.msra.mxu0 0
  %147 = vmatprep.subr.bf16.mxu0 0
  %148 = vmatpush1.bf16.msra.mxu0 0
  %149 = vmatprep.subr.bf16.mxu0 0
  %150 = vmatpush1.bf16.msra.mxu0 0
  %151 = vmatprep.subr.bf16.mxu0 0
  %152 = vmatpush1.bf16.msra.mxu0 0
  %153 = vmatprep.subr.bf16.mxu0 0
  %154 = vmatpush1.bf16.msra.mxu0 0
  %155 = vmatprep.subr.bf16.mxu0 0
  %156 = vmatpush1.bf16.msra.mxu0 0
  %157 = vmatprep.subr.bf16.mxu0 0
  %158 = vmatpush1.bf16.msra.mxu0 0
  %159 = vmatprep.subr.bf16.mxu0 0
  %160 = vmatpush1.bf16.msra.mxu0 0
  %161 = vmatprep.subr.bf16.mxu0 0
  %162 = vmatpush1.bf16.msra.mxu0 0
  %163 = vmatprep.mubr.bf16.mxu0 0
  %164 = vmatmul.mubr.bf16.gmra.mrb[0].mxu0 %v125
  %v165 = vpop.f32.mrb[0].mxu0
  %v166 = vadd.f32 %v107, %v165
  %v167 = vpop.f32.mrb[0].mxu0
  %v168 = vpop.f32.mrb[0].mxu0
  %v169 = vadd.f32 %v107, %v168
  %v170 = vpop.f32.mrb[0].mxu0
  %171 = vdwg.mxu0
  %v172 = vmax.f32 %v91, 0.0
  %v173 = vmax.f32 %v94, 0.0
  %v174 = vmax.f32 %v166, 0.0
  %v175 = vmax.f32 %v169, 0.0
  %v176 = vadd.f32 %v172, %v174
  %v177 = vadd.f32 %v173, %v175
  %v178 = vld [vmem:[%s6] sm:$0x1]
  %v179 = vld [vmem:[%s7] sm:$0x1]
  %180 = vadd.xlane.f32.xlu0 %v176
  %v181 = vpop.xlane.xlu0 %180
  %182 = vadd.xlane.f32.xlu0 %v177
  %v183 = vpop.xlane.xlu0 %182
  %v184 = vrcp.pop 128.0
  %v185 = vmul.f32 %v181, %v184
  %v186 = vmul.f32 %v183, %v184
  %v187 = vsub.f32 %v176, %v185
  %v188 = vsub.f32 %v177, %v186
  %v189 = vmul.f32 %v187, %v187
  %v190 = vmul.f32 %v188, %v188
  %191 = vadd.xlane.f32.xlu0 %v189
  %v192 = vpop.xlane.xlu0 %191
  %193 = vadd.xlane.f32.xlu0 %v190
  %v194 = vpop.xlane.xlu0 %193
  %v195 = vmul.f32 %v192, %v184
  %v196 = vmul.f32 %v194, %v184
  %v197 = vadd.f32 %v195, 1e-06
  %v198 = vadd.f32 %v196, 1e-06
  %v199 = vrsqrt.pop %v197
  %v200 = vrsqrt.pop %v198
  %v201 = vmul.f32 %v187, %v199
  %v202 = vmul.f32 %v188, %v200
  %v204 = vlaneseq
  %v205 = vshrl.u32 %v204, 7
  %v206 = vsub.s32 0, %v205
  %v207 = vrot.slane %v178, %v206
  %v209 = vmul.f32 %v201, %v207
  %v210 = vmul.f32 %v202, %v207
  %v212 = vlaneseq
  %v213 = vshrl.u32 %v212, 7
  %v214 = vsub.s32 0, %v213
  %v215 = vrot.slane %v179, %v214
  %v217 = vadd.f32 %v209, %v215
  %v218 = vadd.f32 %v210, %v215
  %v219 = vpack.c.bf16 %v218, %v217
  %v221 = vunpack.c.l.b16 %v219
  %v222 = vunpack.c.h.b16 %v219
  %v223 = vpack.c.b16 %v221, %v221
  %v224 = vpack.c.b16 %v222, %v222
  %227 = vst [vmem:[%s8] sm:$0xf] %v223
  %228 = vst [vmem:[%s8 + $0x4] sm:$0xf] %v224
  // Predicated region
  $region34: #{scene_branch_forward.3} parent=0 // pred_check
    _
  $region35: #{scene_branch_forward.3} parent=0 // pred_check_branch
    %230 = sbr.rel (0) target = $region37
  $region36: #{scene_branch_forward.3} parent=0 // pred_region
    _
  $region37: #{scene_branch_forward.3} parent=0 // pred_fallthru
    _
  // Predicated region
  $region38: #{scene_branch_forward.3} parent=0 // pred_check
    _
  $region39: #{scene_branch_forward.3} parent=0 // pred_check_branch
    %232 = sbr.rel (0) target = $region41
  $region40: #{scene_branch_forward.3} parent=0 // pred_region
    _
  $region41: #{scene_branch_forward.3} parent=0 // pred_fallthru
    _

// kernel: scene_branch_forward.4
$region0: #{scene_branch_forward.4}
  #allocation0 [shape = 'u32[]', space=smem, size = 0x4, offset = 0x4, fixed_abs, tag = 'smem constant byte address 0x4 - core index']
  #allocation1 [shape = 'u32[144,128]{1,0:T(1,128)}', space=vmem, size = 0x12000, scoped, tag = 'internal scratch']
  #allocation2 [shape = 'f32[16,128]{1,0:T(8,128)}', space=vmem, size = 0x2000, scoped, tag = 'scratch operand']
  #allocation3 [shape = 'f32[16,128]{1,0:T(8,128)}', space=vmem, size = 0x2000, scoped, tag = 'scratch operand']
  %s0 = inlined_call_operand.vmem [shape: bf16[16,128], index: 0, kind: input, shape index: {}]
  %s1 = inlined_call_operand.vmem [shape: bf16[16,128], index: 1, kind: input, shape index: {}]
  %s2 = inlined_call_operand.vmem [shape: f32[2,1,8], index: 2, kind: input, shape index: {}]
  %s3 = inlined_call_operand.vmem [shape: f32[16,128], index: 3, kind: input, shape index: {}]
  %s4 = inlined_call_operand.vmem [shape: f32[1,128], index: 4, kind: input, shape index: {}]
  %s5 = inlined_call_operand.vmem [shape: f32[1,128], index: 5, kind: input, shape index: {}]
  %s6 = inlined_call_operand.hbm [shape: bf16[2,128,384], index: 6, kind: input, shape index: {}]
  %s7 = inlined_call_operand.hbm [shape: f32[2,1,384], index: 7, kind: input, shape index: {}]
  %s8 = inlined_call_operand.hbm [shape: bf16[2,128,128], index: 8, kind: input, shape index: {}]
  %s9 = inlined_call_operand.hbm [shape: f32[2,1,128], index: 9, kind: input, shape index: {}]
  %s10 = inlined_call_operand.hbm [shape: f32[2,1,128], index: 10, kind: input, shape index: {}]
  %s11 = inlined_call_operand.hbm [shape: f32[2,1,128], index: 11, kind: input, shape index: {}]
  %s12 = inlined_call_operand.hbm [shape: bf16[2,128,128], index: 12, kind: input, shape index: {}]
  %s13 = inlined_call_operand.hbm [shape: f32[2,1,128], index: 13, kind: input, shape index: {}]
  %s14 = inlined_call_operand.vmem [shape: bf16[2,128,256], index: 14, kind: input, shape index: {}]
  %s15 = inlined_call_operand.hbm [shape: f32[2,1,256], index: 15, kind: input, shape index: {}]
  %s16 = inlined_call_operand.hbm [shape: bf16[2,128,128], index: 16, kind: input, shape index: {}]
  %s17 = inlined_call_operand.hbm [shape: f32[2,1,128], index: 17, kind: input, shape index: {}]
  %s18 = inlined_call_operand.hbm [shape: f32[2,1,128], index: 18, kind: input, shape index: {}]
  %s19 = inlined_call_operand.hbm [shape: f32[2,1,128], index: 19, kind: input, shape index: {}]
  %s20 = inlined_call_operand.hbm [shape: bf16[2,128,256], index: 20, kind: input, shape index: {}]
  %s21 = inlined_call_operand.hbm [shape: f32[2,1,256], index: 21, kind: input, shape index: {}]
  %s22 = inlined_call_operand.hbm [shape: bf16[2,256,128], index: 22, kind: input, shape index: {}]
  %s23 = inlined_call_operand.hbm [shape: f32[2,1,128], index: 23, kind: input, shape index: {}]
  %s24 = inlined_call_operand.hbm [shape: f32[2,1,128], index: 24, kind: input, shape index: {}]
  %s25 = inlined_call_operand.hbm [shape: f32[2,1,128], index: 25, kind: input, shape index: {}]
  %s26 = inlined_call_operand.vmem [shape: bf16[16,128], index: 26, kind: output, shape index: {}]
  %s27 = sld [smem:[#allocation0]]
  $region221: #{scene_branch_forward.4} parent=0
    _
  %s29 = ssub.s32 1, %s27
  %s30 = scalar_select 0, %s29, %s27
  $region1: #{scene_branch_forward.4} parent=0
    #allocation4 [shape = 'u8[196608]{0}', space=vmem, size = 0x30000, scoped, tag = 'input window, operand 6']
    #allocation5 [shape = 's32[2]{0}', space=sflag, size = 0x8, scoped, tag = 'scoped memory for scene_branch_forward.4']
    #allocation6 [shape = 'u8[3072]{0}', space=vmem, size = 0xc00, scoped, tag = 'input window, operand 7']
    #allocation7 [shape = 's32[2]{0}', space=sflag, size = 0x8, scoped, tag = 'scoped memory for scene_branch_forward.4']
    #allocation8 [shape = 'u8[65536]{0}', space=vmem, size = 0x10000, scoped, tag = 'input window, operand 8']
    #allocation9 [shape = 'u8[1024]{0}', space=vmem, size = 0x400, scoped, tag = 'input window, operand 9']
    #allocation10 [shape = 's32[2]{0}', space=sflag, size = 0x8, scoped, tag = 'scoped memory for scene_branch_forward.4']
    #allocation11 [shape = 'u8[1024]{0}', space=vmem, size = 0x400, scoped, tag = 'input window, operand 10']
    #allocation12 [shape = 'u8[1024]{0}', space=vmem, size = 0x400, scoped, tag = 'input window, operand 11']
    #allocation13 [shape = 's32[2]{0}', space=sflag, size = 0x8, scoped, tag = 'scoped memory for scene_branch_forward.4']
    #allocation14 [shape = 'u8[65536]{0}', space=vmem, size = 0x10000, scoped, tag = 'input window, operand 12']
    #allocation15 [shape = 'u8[1024]{0}', space=vmem, size = 0x400, scoped, tag = 'input window, operand 13']
    #allocation16 [shape = 's32[2]{0}', space=sflag, size = 0x8, scoped, tag = 'scoped memory for scene_branch_forward.4']
    #allocation17 [shape = 'u8[2048]{0}', space=vmem, size = 0x800, scoped, tag = 'input window, operand 15']
    #allocation18 [shape = 'u8[65536]{0}', space=vmem, size = 0x10000, scoped, tag = 'input window, operand 16']
    #allocation19 [shape = 's32[2]{0}', space=sflag, size = 0x8, scoped, tag = 'scoped memory for scene_branch_forward.4']
    #allocation20 [shape = 'u8[1024]{0}', space=vmem, size = 0x400, scoped, tag = 'input window, operand 17']
    #allocation21 [shape = 'u8[1024]{0}', space=vmem, size = 0x400, scoped, tag = 'input window, operand 18']
    #allocation22 [shape = 's32[2]{0}', space=sflag, size = 0x8, scoped, tag = 'scoped memory for scene_branch_forward.4']
    #allocation23 [shape = 'u8[1024]{0}', space=vmem, size = 0x400, scoped, tag = 'input window, operand 19']
    #allocation24 [shape = 'u8[131072]{0}', space=vmem, size = 0x20000, scoped, tag = 'input window, operand 20']
    #allocation25 [shape = 's32[2]{0}', space=sflag, size = 0x8, scoped, tag = 'scoped memory for scene_branch_forward.4']
    #allocation26 [shape = 'u8[2048]{0}', space=vmem, size = 0x800, scoped, tag = 'input window, operand 21']
    #allocation27 [shape = 'u8[131072]{0}', space=vmem, size = 0x20000, scoped, tag = 'input window, operand 22']
    #allocation28 [shape = 's32[2]{0}', space=sflag, size = 0x8, scoped, tag = 'scoped memory for scene_branch_forward.4']
    #allocation29 [shape = 'u8[1024]{0}', space=vmem, size = 0x400, scoped, tag = 'input window, operand 23']
    #allocation30 [shape = 'u8[1024]{0}', space=vmem, size = 0x400, scoped, tag = 'input window, operand 24']
    #allocation31 [shape = 's32[2]{0}', space=sflag, size = 0x8, scoped, tag = 'scoped memory for scene_branch_forward.4']
    #allocation32 [shape = 'u8[1024]{0}', space=vmem, size = 0x400, scoped, tag = 'input window, operand 25']
    %31 = vsyncpa [#allocation5], 0
    %s32 = scalar_lea.sflag [#allocation5], 1
    %33 = vsyncpa %s32, 0
    %34 = vsyncpa [#allocation7], 0
    %s35 = scalar_lea.sflag [#allocation7], 1
    %36 = vsyncpa %s35, 0
    %37 = vsyncpa [#allocation10], 0
    %s38 = scalar_lea.sflag [#allocation10], 1
    %39 = vsyncpa %s38, 0
    %40 = vsyncpa [#allocation13], 0
    %s41 = scalar_lea.sflag [#allocation13], 1
    %42 = vsyncpa %s41, 0
    %43 = vsyncpa [#allocation16], 0
    %s44 = scalar_lea.sflag [#allocation16], 1
    %45 = vsyncpa %s44, 0
    %46 = vsyncpa [#allocation19], 0
    %s47 = scalar_lea.sflag [#allocation19], 1
    %48 = vsyncpa %s47, 0
    %49 = vsyncpa [#allocation22], 0
    %s50 = scalar_lea.sflag [#allocation22], 1
    %51 = vsyncpa %s50, 0
    %52 = vsyncpa [#allocation25], 0
    %s53 = scalar_lea.sflag [#allocation25], 1
    %54 = vsyncpa %s53, 0
    %55 = vsyncpa [#allocation28], 0
    %s56 = scalar_lea.sflag [#allocation28], 1
    %57 = vsyncpa %s56, 0
    %58 = vsyncpa [#allocation31], 0
    %s59 = scalar_lea.sflag [#allocation31], 1
    %60 = vsyncpa %s59, 0
    loop: start=0, step=1, limit=4
    $region2: #{scene_branch_forward.4} parent=1 // loop_pre_header
      _
    $region3: #{scene_branch_forward.4} parent=1 // loop_header
      %s62 = sphi 0, %s66
      %p63 = scmp.ge.s32.totalorder %s62, 4
      %s69 = sphi 0, %s81
      %s70 = sphi 0, %s77
      %s71 = sphi 0, %s69
      %s72 = sphi 0, %s70
      %s73 = sphi 0, %s71
      %s74 = sphi 0, %s72
      %s84 = sphi 0, %s86
      %s87 = sphi 0, %s84
      %s88 = sphi 0, %s87
      %s104 = sphi 0, %s88
      %s110 = sphi 0, %s112
      %s113 = sphi 0, %s110
      %s114 = sphi 0, %s113
      %s130 = sphi 0, %s114
      %s136 = sphi 0, %s138
      %s139 = sphi 0, %s136
      %s140 = sphi 0, %s139
      %s156 = sphi 0, %s140
      %s160 = sphi 0, %s160
      %s162 = sphi 0, %s160
      %s163 = sphi 0, %s162
      %s177 = sphi 0, %s163
      %s181 = sphi 0, %s181
      %s183 = sphi 0, %s181
      %s184 = sphi 0, %s183
      %s198 = sphi 0, %s184
      %s202 = sphi 0, %s202
      %s204 = sphi 0, %s202
      %s205 = sphi 0, %s204
      %s219 = sphi 0, %s205
      %s225 = sphi 0, %s227
      %s228 = sphi 0, %s225
      %s229 = sphi 0, %s228
      %s245 = sphi 0, %s229
      %s251 = sphi 0, %s253
      %s254 = sphi 0, %s251
      %s255 = sphi 0, %s254
      %s271 = sphi 0, %s255
      %s277 = sphi 0, %s279
      %s280 = sphi 0, %s277
      %s281 = sphi 0, %s280
      %s297 = sphi 0, %s281
      %s303 = sphi 0, %s305
      %s306 = sphi 0, %s303
      %s307 = sphi 0, %s306
      %s323 = sphi 0, %s307
      %s329 = sphi 0, %s331
      %s332 = sphi 0, %s329
      %s333 = sphi 0, %s332
      %s349 = sphi 0, %s333
      %s355 = sphi 0, %s357
      %s358 = sphi 0, %s355
      %s359 = sphi 0, %s358
      %s375 = sphi 0, %s359
      %s381 = sphi 0, %s383
      %s384 = sphi 0, %s381
      %s385 = sphi 0, %s384
      %s401 = sphi 0, %s385
      %s407 = sphi 0, %s409
      %s410 = sphi 0, %s407
      %s411 = sphi 0, %s410
      %s427 = sphi 0, %s411
      %s433 = sphi 0, %s435
      %s436 = sphi 0, %s433
      %s437 = sphi 0, %s436
      %s453 = sphi 0, %s437
      %s459 = sphi 0, %s461
      %s462 = sphi 0, %s459
      %s463 = sphi 0, %s462
      %s479 = sphi 0, %s463
      %s485 = sphi 0, %s487
      %s488 = sphi 0, %s485
      %s489 = sphi 0, %s488
      %s505 = sphi 0, %s489
      %s511 = sphi 0, %s513
      %s514 = sphi 0, %s511
      %s515 = sphi 0, %s514
      %s531 = sphi 0, %s515
      %s537 = sphi 0, %s539
      %s540 = sphi 0, %s537
      %s541 = sphi 0, %s540
      %s557 = sphi 0, %s541
      %s563 = sphi 0, %s565
      %s566 = sphi 0, %s563
      %s567 = sphi 0, %s566
      %s583 = sphi 0, %s567
      %s589 = sphi 0, %s591
      %s592 = sphi 0, %s589
      %s593 = sphi 0, %s592
      %s609 = sphi 0, %s593
      %s615 = sphi 0, %s617
      %s618 = sphi 0, %s615
      %s619 = sphi 0, %s618
      %s635 = sphi 0, %s619
      %s641 = sphi 0, %s643
      %s644 = sphi 0, %s641
      %s645 = sphi 0, %s644
      %s661 = sphi 0, %s645
      %s667 = sphi 0, %s669
      %s670 = sphi 0, %s667
      %s671 = sphi 0, %s670
      %s687 = sphi 0, %s671
      %s693 = sphi 0, %s695
      %s696 = sphi 0, %s693
      %s697 = sphi 0, %s696
      %s713 = sphi 0, %s697
      %s719 = sphi 0, %s721
      %s722 = sphi 0, %s719
      %s723 = sphi 0, %s722
      %s739 = sphi 0, %s723
      %s745 = sphi 0, %s747
      %s748 = sphi 0, %s745
      %s749 = sphi 0, %s748
      %s765 = sphi 0, %s749
    $region4: #{scene_branch_forward.4} parent=1 // loop_header_branch
      %65 = sbr.rel (%p63) target = $region8
    $region5: #{scene_branch_forward.4} parent=1 // loop_body
      %s67 = ssub.s32 %s62, 1
      %s68 = ssub.s32 %s62, 2
      %s75 = sadd.s32 1, %s70
      %p76 = scmp.ge.s32.totalorder %s75, 2
      %s77 = scalar_select %p76, 0, %s75
      %s78 = sadd.s32 1, %s69
      %s79 = scalar_select %p76, %s78, %s69
      %p80 = scmp.ge.s32.totalorder %s79, 1
      %s81 = scalar_select %p80, 0, %s79
      %s82 = ssub.s32 %s69, %s81
      %p83 = scmp.eq.s32.totalorder %s82, 0
      %s85 = sadd.s32 %s84, 1
      %s86 = scalar_select %p83, %s84, %s85
      %p89 = pneg %p83
      %p90 = scmp.eq.s32.totalorder %s62, 1
      %p91 = por %p89, %p90
      %p92 = scmp.ne.s32.totalorder %s84, %s87
      %p93 = scmp.eq.s32.totalorder %s62, 0
      %p94 = por %p92, %p93
      %p95 = scmp.ne.s32.totalorder %s84, %s87
      %p96 = scmp.eq.s32.totalorder %s67, 1
      %p97 = por %p95, %p96
      %p98 = scmp.ne.s32.totalorder %s87, %s88
      %p99 = scmp.eq.s32.totalorder %s67, 0
      %p100 = por %p98, %p99
      %p101 = scmp.ne.s32.totalorder %s87, %s88
      %p102 = scmp.eq.s32.totalorder %s68, 1
      %p103 = por %p101, %p102
      %p105 = scmp.ne.s32.totalorder %s88, %s104
      %p106 = scmp.eq.s32.totalorder %s68, 0
      %p107 = por %p105, %p106
      %s108 = ssub.s32 %s69, %s81
      %p109 = scmp.eq.s32.totalorder %s108, 0
      %s111 = sadd.s32 %s110, 1
      %s112 = scalar_select %p109, %s110, %s111
      %p115 = pneg %p109
      %p116 = scmp.eq.s32.totalorder %s62, 1
      %p117 = por %p115, %p116
      %p118 = scmp.ne.s32.totalorder %s110, %s113
      %p119 = scmp.eq.s32.totalorder %s62, 0
      %p120 = por %p118, %p119
      %p121 = scmp.ne.s32.totalorder %s110, %s113
      %p122 = scmp.eq.s32.totalorder %s67, 1
      %p123 = por %p121, %p122
      %p124 = scmp.ne.s32.totalorder %s113, %s114
      %p125 = scmp.eq.s32.totalorder %s67, 0
      %p126 = por %p124, %p125
      %p127 = scmp.ne.s32.totalorder %s113, %s114
      %p128 = scmp.eq.s32.totalorder %s68, 1
      %p129 = por %p127, %p128
      %p131 = scmp.ne.s32.totalorder %s114, %s130
      %p132 = scmp.eq.s32.totalorder %s68, 0
      %p133 = por %p131, %p132
      %s134 = ssub.s32 %s69, %s81
      %p135 = scmp.eq.s32.totalorder %s134, 0
      %s137 = sadd.s32 %s136, 1
      %s138 = scalar_select %p135, %s136, %s137
      %p141 = pneg %p135
      %p142 = scmp.eq.s32.totalorder %s62, 1
      %p143 = por %p141, %p142
      %p144 = scmp.ne.s32.totalorder %s136, %s139
      %p145 = scmp.eq.s32.totalorder %s62, 0
      %p146 = por %p144, %p145
      %p147 = scmp.ne.s32.totalorder %s136, %s139
      %p148 = scmp.eq.s32.totalorder %s67, 1
      %p149 = por %p147, %p148
      %p150 = scmp.ne.s32.totalorder %s139, %s140
      %p151 = scmp.eq.s32.totalorder %s67, 0
      %p152 = por %p150, %p151
      %p153 = scmp.ne.s32.totalorder %s139, %s140
      %p154 = scmp.eq.s32.totalorder %s68, 1
      %p155 = por %p153, %p154
      %p157 = scmp.ne.s32.totalorder %s140, %s156
      %p158 = scmp.eq.s32.totalorder %s68, 0
      %p159 = por %p157, %p158
      %s161 = sadd.s32 %s160, 1
      %p164 = scmp.eq.s32.totalorder %s62, 1
      %p165 = scmp.ne.s32.totalorder %s160, %s162
      %p166 = scmp.eq.s32.totalorder %s62, 0
      %p167 = por %p165, %p166
      %p168 = scmp.ne.s32.totalorder %s160, %s162
      %p169 = scmp.eq.s32.totalorder %s67, 1
      %p170 = por %p168, %p169
      %p171 = scmp.ne.s32.totalorder %s162, %s163
      %p172 = scmp.eq.s32.totalorder %s67, 0
      %p173 = por %p171, %p172
      %p174 = scmp.ne.s32.totalorder %s162, %s163
      %p175 = scmp.eq.s32.totalorder %s68, 1
      %p176 = por %p174, %p175
      %p178 = scmp.ne.s32.totalorder %s163, %s177
      %p179 = scmp.eq.s32.totalorder %s68, 0
      %p180 = por %p178, %p179
      %s182 = sadd.s32 %s181, 1
      %p185 = scmp.eq.s32.totalorder %s62, 1
      %p186 = scmp.ne.s32.totalorder %s181, %s183
      %p187 = scmp.eq.s32.totalorder %s62, 0
      %p188 = por %p186, %p187
      %p189 = scmp.ne.s32.totalorder %s181, %s183
      %p190 = scmp.eq.s32.totalorder %s67, 1
      %p191 = por %p189, %p190
      %p192 = scmp.ne.s32.totalorder %s183, %s184
      %p193 = scmp.eq.s32.totalorder %s67, 0
      %p194 = por %p192, %p193
      %p195 = scmp.ne.s32.totalorder %s183, %s184
      %p196 = scmp.eq.s32.totalorder %s68, 1
      %p197 = por %p195, %p196
      %p199 = scmp.ne.s32.totalorder %s184, %s198
      %p200 = scmp.eq.s32.totalorder %s68, 0
      %p201 = por %p199, %p200
      %s203 = sadd.s32 %s202, 1
      %p206 = scmp.eq.s32.totalorder %s62, 1
      %p207 = scmp.ne.s32.totalorder %s202, %s204
      %p208 = scmp.eq.s32.totalorder %s62, 0
      %p209 = por %p207, %p208
      %p210 = scmp.ne.s32.totalorder %s202, %s204
      %p211 = scmp.eq.s32.totalorder %s67, 1
      %p212 = por %p210, %p211
      %p213 = scmp.ne.s32.totalorder %s204, %s205
      %p214 = scmp.eq.s32.totalorder %s67, 0
      %p215 = por %p213, %p214
      %p216 = scmp.ne.s32.totalorder %s204, %s205
      %p217 = scmp.eq.s32.totalorder %s68, 1
      %p218 = por %p216, %p217
      %p220 = scmp.ne.s32.totalorder %s205, %s219
      %p221 = scmp.eq.s32.totalorder %s68, 0
      %p222 = por %p220, %p221
      %s223 = ssub.s32 %s70, %s77
      %p224 = scmp.eq.s32.totalorder %s223, 0
      %s226 = sadd.s32 %s225, 1
      %s227 = scalar_select %p224, %s225, %s226
      %p230 = pneg %p224
      %p231 = scmp.eq.s32.totalorder %s62, 1
      %p232 = por %p230, %p231
      %p233 = scmp.ne.s32.totalorder %s225, %s228
      %p234 = scmp.eq.s32.totalorder %s62, 0
      %p235 = por %p233, %p234
      %p236 = scmp.ne.s32.totalorder %s225, %s228
      %p237 = scmp.eq.s32.totalorder %s67, 1
      %p238 = por %p236, %p237
      %p239 = scmp.ne.s32.totalorder %s228, %s229
      %p240 = scmp.eq.s32.totalorder %s67, 0
      %p241 = por %p239, %p240
      %p242 = scmp.ne.s32.totalorder %s228, %s229
      %p243 = scmp.eq.s32.totalorder %s68, 1
      %p244 = por %p242, %p243
      %p246 = scmp.ne.s32.totalorder %s229, %s245
      %p247 = scmp.eq.s32.totalorder %s68, 0
      %p248 = por %p246, %p247
      %s249 = ssub.s32 %s70, %s77
      %p250 = scmp.eq.s32.totalorder %s249, 0
      %s252 = sadd.s32 %s251, 1
      %s253 = scalar_select %p250, %s251, %s252
      %p256 = pneg %p250
      %p257 = scmp.eq.s32.totalorder %s62, 1
      %p258 = por %p256, %p257
      %p259 = scmp.ne.s32.totalorder %s251, %s254
      %p260 = scmp.eq.s32.totalorder %s62, 0
      %p261 = por %p259, %p260
      %p262 = scmp.ne.s32.totalorder %s251, %s254
      %p263 = scmp.eq.s32.totalorder %s67, 1
      %p264 = por %p262, %p263
      %p265 = scmp.ne.s32.totalorder %s254, %s255
      %p266 = scmp.eq.s32.totalorder %s67, 0
      %p267 = por %p265, %p266
      %p268 = scmp.ne.s32.totalorder %s254, %s255
      %p269 = scmp.eq.s32.totalorder %s68, 1
      %p270 = por %p268, %p269
      %p272 = scmp.ne.s32.totalorder %s255, %s271
      %p273 = scmp.eq.s32.totalorder %s68, 0
      %p274 = por %p272, %p273
      %s275 = ssub.s32 %s70, %s77
      %p276 = scmp.eq.s32.totalorder %s275, 0
      %s278 = sadd.s32 %s277, 1
      %s279 = scalar_select %p276, %s277, %s278
      %p282 = pneg %p276
      %p283 = scmp.eq.s32.totalorder %s62, 1
      %p284 = por %p282, %p283
      %p285 = scmp.ne.s32.totalorder %s277, %s280
      %p286 = scmp.eq.s32.totalorder %s62, 0
      %p287 = por %p285, %p286
      %p288 = scmp.ne.s32.totalorder %s277, %s280
      %p289 = scmp.eq.s32.totalorder %s67, 1
      %p290 = por %p288, %p289
      %p291 = scmp.ne.s32.totalorder %s280, %s281
      %p292 = scmp.eq.s32.totalorder %s67, 0
      %p293 = por %p291, %p292
      %p294 = scmp.ne.s32.totalorder %s280, %s281
      %p295 = scmp.eq.s32.totalorder %s68, 1
      %p296 = por %p294, %p295
      %p298 = scmp.ne.s32.totalorder %s281, %s297
      %p299 = scmp.eq.s32.totalorder %s68, 0
      %p300 = por %p298, %p299
      %s301 = ssub.s32 %s70, %s77
      %p302 = scmp.eq.s32.totalorder %s301, 0
      %s304 = sadd.s32 %s303, 1
      %s305 = scalar_select %p302, %s303, %s304
      %p308 = pneg %p302
      %p309 = scmp.eq.s32.totalorder %s62, 1
      %p310 = por %p308, %p309
      %p311 = scmp.ne.s32.totalorder %s303, %s306
      %p312 = scmp.eq.s32.totalorder %s62, 0
      %p313 = por %p311, %p312
      %p314 = scmp.ne.s32.totalorder %s303, %s306
      %p315 = scmp.eq.s32.totalorder %s67, 1
      %p316 = por %p314, %p315
      %p317 = scmp.ne.s32.totalorder %s306, %s307
      %p318 = scmp.eq.s32.totalorder %s67, 0
      %p319 = por %p317, %p318
      %p320 = scmp.ne.s32.totalorder %s306, %s307
      %p321 = scmp.eq.s32.totalorder %s68, 1
      %p322 = por %p320, %p321
      %p324 = scmp.ne.s32.totalorder %s307, %s323
      %p325 = scmp.eq.s32.totalorder %s68, 0
      %p326 = por %p324, %p325
      %s327 = ssub.s32 %s70, %s77
      %p328 = scmp.eq.s32.totalorder %s327, 0
      %s330 = sadd.s32 %s329, 1
      %s331 = scalar_select %p328, %s329, %s330
      %p334 = pneg %p328
      %p335 = scmp.eq.s32.totalorder %s62, 1
      %p336 = por %p334, %p335
      %p337 = scmp.ne.s32.totalorder %s329, %s332
      %p338 = scmp.eq.s32.totalorder %s62, 0
      %p339 = por %p337, %p338
      %p340 = scmp.ne.s32.totalorder %s329, %s332
      %p341 = scmp.eq.s32.totalorder %s67, 1
      %p342 = por %p340, %p341
      %p343 = scmp.ne.s32.totalorder %s332, %s333
      %p344 = scmp.eq.s32.totalorder %s67, 0
      %p345 = por %p343, %p344
      %p346 = scmp.ne.s32.totalorder %s332, %s333
      %p347 = scmp.eq.s32.totalorder %s68, 1
      %p348 = por %p346, %p347
      %p350 = scmp.ne.s32.totalorder %s333, %s349
      %p351 = scmp.eq.s32.totalorder %s68, 0
      %p352 = por %p350, %p351
      %s353 = ssub.s32 %s70, %s77
      %p354 = scmp.eq.s32.totalorder %s353, 0
      %s356 = sadd.s32 %s355, 1
      %s357 = scalar_select %p354, %s355, %s356
      %p360 = pneg %p354
      %p361 = scmp.eq.s32.totalorder %s62, 1
      %p362 = por %p360, %p361
      %p363 = scmp.ne.s32.totalorder %s355, %s358
      %p364 = scmp.eq.s32.totalorder %s62, 0
      %p365 = por %p363, %p364
      %p366 = scmp.ne.s32.totalorder %s355, %s358
      %p367 = scmp.eq.s32.totalorder %s67, 1
      %p368 = por %p366, %p367
      %p369 = scmp.ne.s32.totalorder %s358, %s359
      %p370 = scmp.eq.s32.totalorder %s67, 0
      %p371 = por %p369, %p370
      %p372 = scmp.ne.s32.totalorder %s358, %s359
      %p373 = scmp.eq.s32.totalorder %s68, 1
      %p374 = por %p372, %p373
      %p376 = scmp.ne.s32.totalorder %s359, %s375
      %p377 = scmp.eq.s32.totalorder %s68, 0
      %p378 = por %p376, %p377
      %s379 = ssub.s32 %s70, %s77
      %p380 = scmp.eq.s32.totalorder %s379, 0
      %s382 = sadd.s32 %s381, 1
      %s383 = scalar_select %p380, %s381, %s382
      %p386 = pneg %p380
      %p387 = scmp.eq.s32.totalorder %s62, 1
      %p388 = por %p386, %p387
      %p389 = scmp.ne.s32.totalorder %s381, %s384
      %p390 = scmp.eq.s32.totalorder %s62, 0
      %p391 = por %p389, %p390
      %p392 = scmp.ne.s32.totalorder %s381, %s384
      %p393 = scmp.eq.s32.totalorder %s67, 1
      %p394 = por %p392, %p393
      %p395 = scmp.ne.s32.totalorder %s384, %s385
      %p396 = scmp.eq.s32.totalorder %s67, 0
      %p397 = por %p395, %p396
      %p398 = scmp.ne.s32.totalorder %s384, %s385
      %p399 = scmp.eq.s32.totalorder %s68, 1
      %p400 = por %p398, %p399
      %p402 = scmp.ne.s32.totalorder %s385, %s401
      %p403 = scmp.eq.s32.totalorder %s68, 0
      %p404 = por %p402, %p403
      %s405 = ssub.s32 %s70, %s77
      %p406 = scmp.eq.s32.totalorder %s405, 0
      %s408 = sadd.s32 %s407, 1
      %s409 = scalar_select %p406, %s407, %s408
      %p412 = pneg %p406
      %p413 = scmp.eq.s32.totalorder %s62, 1
      %p414 = por %p412, %p413
      %p415 = scmp.ne.s32.totalorder %s407, %s410
      %p416 = scmp.eq.s32.totalorder %s62, 0
      %p417 = por %p415, %p416
      %p418 = scmp.ne.s32.totalorder %s407, %s410
      %p419 = scmp.eq.s32.totalorder %s67, 1
      %p420 = por %p418, %p419
      %p421 = scmp.ne.s32.totalorder %s410, %s411
      %p422 = scmp.eq.s32.totalorder %s67, 0
      %p423 = por %p421, %p422
      %p424 = scmp.ne.s32.totalorder %s410, %s411
      %p425 = scmp.eq.s32.totalorder %s68, 1
      %p426 = por %p424, %p425
      %p428 = scmp.ne.s32.totalorder %s411, %s427
      %p429 = scmp.eq.s32.totalorder %s68, 0
      %p430 = por %p428, %p429
      %s431 = ssub.s32 %s70, %s77
      %p432 = scmp.eq.s32.totalorder %s431, 0
      %s434 = sadd.s32 %s433, 1
      %s435 = scalar_select %p432, %s433, %s434
      %p438 = pneg %p432
      %p439 = scmp.eq.s32.totalorder %s62, 1
      %p440 = por %p438, %p439
      %p441 = scmp.ne.s32.totalorder %s433, %s436
      %p442 = scmp.eq.s32.totalorder %s62, 0
      %p443 = por %p441, %p442
      %p444 = scmp.ne.s32.totalorder %s433, %s436
      %p445 = scmp.eq.s32.totalorder %s67, 1
      %p446 = por %p444, %p445
      %p447 = scmp.ne.s32.totalorder %s436, %s437
      %p448 = scmp.eq.s32.totalorder %s67, 0
      %p449 = por %p447, %p448
      %p450 = scmp.ne.s32.totalorder %s436, %s437
      %p451 = scmp.eq.s32.totalorder %s68, 1
      %p452 = por %p450, %p451
      %p454 = scmp.ne.s32.totalorder %s437, %s453
      %p455 = scmp.eq.s32.totalorder %s68, 0
      %p456 = por %p454, %p455
      %s457 = ssub.s32 %s70, %s77
      %p458 = scmp.eq.s32.totalorder %s457, 0
      %s460 = sadd.s32 %s459, 1
      %s461 = scalar_select %p458, %s459, %s460
      %p464 = pneg %p458
      %p465 = scmp.eq.s32.totalorder %s62, 1
      %p466 = por %p464, %p465
      %p467 = scmp.ne.s32.totalorder %s459, %s462
      %p468 = scmp.eq.s32.totalorder %s62, 0
      %p469 = por %p467, %p468
      %p470 = scmp.ne.s32.totalorder %s459, %s462
      %p471 = scmp.eq.s32.totalorder %s67, 1
      %p472 = por %p470, %p471
      %p473 = scmp.ne.s32.totalorder %s462, %s463
      %p474 = scmp.eq.s32.totalorder %s67, 0
      %p475 = por %p473, %p474
      %p476 = scmp.ne.s32.totalorder %s462, %s463
      %p477 = scmp.eq.s32.totalorder %s68, 1
      %p478 = por %p476, %p477
      %p480 = scmp.ne.s32.totalorder %s463, %s479
      %p481 = scmp.eq.s32.totalorder %s68, 0
      %p482 = por %p480, %p481
      %s483 = ssub.s32 %s70, %s77
      %p484 = scmp.eq.s32.totalorder %s483, 0
      %s486 = sadd.s32 %s485, 1
      %s487 = scalar_select %p484, %s485, %s486
      %p490 = pneg %p484
      %p491 = scmp.eq.s32.totalorder %s62, 1
      %p492 = por %p490, %p491
      %p493 = scmp.ne.s32.totalorder %s485, %s488
      %p494 = scmp.eq.s32.totalorder %s62, 0
      %p495 = por %p493, %p494
      %p496 = scmp.ne.s32.totalorder %s485, %s488
      %p497 = scmp.eq.s32.totalorder %s67, 1
      %p498 = por %p496, %p497
      %p499 = scmp.ne.s32.totalorder %s488, %s489
      %p500 = scmp.eq.s32.totalorder %s67, 0
      %p501 = por %p499, %p500
      %p502 = scmp.ne.s32.totalorder %s488, %s489
      %p503 = scmp.eq.s32.totalorder %s68, 1
      %p504 = por %p502, %p503
      %p506 = scmp.ne.s32.totalorder %s489, %s505
      %p507 = scmp.eq.s32.totalorder %s68, 0
      %p508 = por %p506, %p507
      %s509 = ssub.s32 %s70, %s77
      %p510 = scmp.eq.s32.totalorder %s509, 0
      %s512 = sadd.s32 %s511, 1
      %s513 = scalar_select %p510, %s511, %s512
      %p516 = pneg %p510
      %p517 = scmp.eq.s32.totalorder %s62, 1
      %p518 = por %p516, %p517
      %p519 = scmp.ne.s32.totalorder %s511, %s514
      %p520 = scmp.eq.s32.totalorder %s62, 0
      %p521 = por %p519, %p520
      %p522 = scmp.ne.s32.totalorder %s511, %s514
      %p523 = scmp.eq.s32.totalorder %s67, 1
      %p524 = por %p522, %p523
      %p525 = scmp.ne.s32.totalorder %s514, %s515
      %p526 = scmp.eq.s32.totalorder %s67, 0
      %p527 = por %p525, %p526
      %p528 = scmp.ne.s32.totalorder %s514, %s515
      %p529 = scmp.eq.s32.totalorder %s68, 1
      %p530 = por %p528, %p529
      %p532 = scmp.ne.s32.totalorder %s515, %s531
      %p533 = scmp.eq.s32.totalorder %s68, 0
      %p534 = por %p532, %p533
      %s535 = ssub.s32 %s70, %s77
      %p536 = scmp.eq.s32.totalorder %s535, 0
      %s538 = sadd.s32 %s537, 1
      %s539 = scalar_select %p536, %s537, %s538
      %p542 = pneg %p536
      %p543 = scmp.eq.s32.totalorder %s62, 1
      %p544 = por %p542, %p543
      %p545 = scmp.ne.s32.totalorder %s537, %s540
      %p546 = scmp.eq.s32.totalorder %s62, 0
      %p547 = por %p545, %p546
      %p548 = scmp.ne.s32.totalorder %s537, %s540
      %p549 = scmp.eq.s32.totalorder %s67, 1
      %p550 = por %p548, %p549
      %p551 = scmp.ne.s32.totalorder %s540, %s541
      %p552 = scmp.eq.s32.totalorder %s67, 0
      %p553 = por %p551, %p552
      %p554 = scmp.ne.s32.totalorder %s540, %s541
      %p555 = scmp.eq.s32.totalorder %s68, 1
      %p556 = por %p554, %p555
      %p558 = scmp.ne.s32.totalorder %s541, %s557
      %p559 = scmp.eq.s32.totalorder %s68, 0
      %p560 = por %p558, %p559
      %s561 = ssub.s32 %s70, %s77
      %p562 = scmp.eq.s32.totalorder %s561, 0
      %s564 = sadd.s32 %s563, 1
      %s565 = scalar_select %p562, %s563, %s564
      %p568 = pneg %p562
      %p569 = scmp.eq.s32.totalorder %s62, 1
      %p570 = por %p568, %p569
      %p571 = scmp.ne.s32.totalorder %s563, %s566
      %p572 = scmp.eq.s32.totalorder %s62, 0
      %p573 = por %p571, %p572
      %p574 = scmp.ne.s32.totalorder %s563, %s566
      %p575 = scmp.eq.s32.totalorder %s67, 1
      %p576 = por %p574, %p575
      %p577 = scmp.ne.s32.totalorder %s566, %s567
      %p578 = scmp.eq.s32.totalorder %s67, 0
      %p579 = por %p577, %p578
      %p580 = scmp.ne.s32.totalorder %s566, %s567
      %p581 = scmp.eq.s32.totalorder %s68, 1
      %p582 = por %p580, %p581
      %p584 = scmp.ne.s32.totalorder %s567, %s583
      %p585 = scmp.eq.s32.totalorder %s68, 0
      %p586 = por %p584, %p585
      %s587 = ssub.s32 %s70, %s77
      %p588 = scmp.eq.s32.totalorder %s587, 0
      %s590 = sadd.s32 %s589, 1
      %s591 = scalar_select %p588, %s589, %s590
      %p594 = pneg %p588
      %p595 = scmp.eq.s32.totalorder %s62, 1
      %p596 = por %p594, %p595
      %p597 = scmp.ne.s32.totalorder %s589, %s592
      %p598 = scmp.eq.s32.totalorder %s62, 0
      %p599 = por %p597, %p598
      %p600 = scmp.ne.s32.totalorder %s589, %s592
      %p601 = scmp.eq.s32.totalorder %s67, 1
      %p602 = por %p600, %p601
      %p603 = scmp.ne.s32.totalorder %s592, %s593
      %p604 = scmp.eq.s32.totalorder %s67, 0
      %p605 = por %p603, %p604
      %p606 = scmp.ne.s32.totalorder %s592, %s593
      %p607 = scmp.eq.s32.totalorder %s68, 1
      %p608 = por %p606, %p607
      %p610 = scmp.ne.s32.totalorder %s593, %s609
      %p611 = scmp.eq.s32.totalorder %s68, 0
      %p612 = por %p610, %p611
      %s613 = ssub.s32 %s70, %s77
      %p614 = scmp.eq.s32.totalorder %s613, 0
      %s616 = sadd.s32 %s615, 1
      %s617 = scalar_select %p614, %s615, %s616
      %p620 = pneg %p614
      %p621 = scmp.eq.s32.totalorder %s62, 1
      %p622 = por %p620, %p621
      %p623 = scmp.ne.s32.totalorder %s615, %s618
      %p624 = scmp.eq.s32.totalorder %s62, 0
      %p625 = por %p623, %p624
      %p626 = scmp.ne.s32.totalorder %s615, %s618
      %p627 = scmp.eq.s32.totalorder %s67, 1
      %p628 = por %p626, %p627
      %p629 = scmp.ne.s32.totalorder %s618, %s619
      %p630 = scmp.eq.s32.totalorder %s67, 0
      %p631 = por %p629, %p630
      %p632 = scmp.ne.s32.totalorder %s618, %s619
      %p633 = scmp.eq.s32.totalorder %s68, 1
      %p634 = por %p632, %p633
      %p636 = scmp.ne.s32.totalorder %s619, %s635
      %p637 = scmp.eq.s32.totalorder %s68, 0
      %p638 = por %p636, %p637
      %s639 = ssub.s32 %s70, %s77
      %p640 = scmp.eq.s32.totalorder %s639, 0
      %s642 = sadd.s32 %s641, 1
      %s643 = scalar_select %p640, %s641, %s642
      %p646 = pneg %p640
      %p647 = scmp.eq.s32.totalorder %s62, 1
      %p648 = por %p646, %p647
      %p649 = scmp.ne.s32.totalorder %s641, %s644
      %p650 = scmp.eq.s32.totalorder %s62, 0
      %p651 = por %p649, %p650
      %p652 = scmp.ne.s32.totalorder %s641, %s644
      %p653 = scmp.eq.s32.totalorder %s67, 1
      %p654 = por %p652, %p653
      %p655 = scmp.ne.s32.totalorder %s644, %s645
      %p656 = scmp.eq.s32.totalorder %s67, 0
      %p657 = por %p655, %p656
      %p658 = scmp.ne.s32.totalorder %s644, %s645
      %p659 = scmp.eq.s32.totalorder %s68, 1
      %p660 = por %p658, %p659
      %p662 = scmp.ne.s32.totalorder %s645, %s661
      %p663 = scmp.eq.s32.totalorder %s68, 0
      %p664 = por %p662, %p663
      %s665 = ssub.s32 %s70, %s77
      %p666 = scmp.eq.s32.totalorder %s665, 0
      %s668 = sadd.s32 %s667, 1
      %s669 = scalar_select %p666, %s667, %s668
      %p672 = pneg %p666
      %p673 = scmp.eq.s32.totalorder %s62, 1
      %p674 = por %p672, %p673
      %p675 = scmp.ne.s32.totalorder %s667, %s670
      %p676 = scmp.eq.s32.totalorder %s62, 0
      %p677 = por %p675, %p676
      %p678 = scmp.ne.s32.totalorder %s667, %s670
      %p679 = scmp.eq.s32.totalorder %s67, 1
      %p680 = por %p678, %p679
      %p681 = scmp.ne.s32.totalorder %s670, %s671
      %p682 = scmp.eq.s32.totalorder %s67, 0
      %p683 = por %p681, %p682
      %p684 = scmp.ne.s32.totalorder %s670, %s671
      %p685 = scmp.eq.s32.totalorder %s68, 1
      %p686 = por %p684, %p685
      %p688 = scmp.ne.s32.totalorder %s671, %s687
      %p689 = scmp.eq.s32.totalorder %s68, 0
      %p690 = por %p688, %p689
      %s691 = ssub.s32 %s70, %s77
      %p692 = scmp.eq.s32.totalorder %s691, 0
      %s694 = sadd.s32 %s693, 1
      %s695 = scalar_select %p692, %s693, %s694
      %p698 = pneg %p692
      %p699 = scmp.eq.s32.totalorder %s62, 1
      %p700 = por %p698, %p699
      %p701 = scmp.ne.s32.totalorder %s693, %s696
      %p702 = scmp.eq.s32.totalorder %s62, 0
      %p703 = por %p701, %p702
      %p704 = scmp.ne.s32.totalorder %s693, %s696
      %p705 = scmp.eq.s32.totalorder %s67, 1
      %p706 = por %p704, %p705
      %p707 = scmp.ne.s32.totalorder %s696, %s697
      %p708 = scmp.eq.s32.totalorder %s67, 0
      %p709 = por %p707, %p708
      %p710 = scmp.ne.s32.totalorder %s696, %s697
      %p711 = scmp.eq.s32.totalorder %s68, 1
      %p712 = por %p710, %p711
      %p714 = scmp.ne.s32.totalorder %s697, %s713
      %p715 = scmp.eq.s32.totalorder %s68, 0
      %p716 = por %p714, %p715
      %s717 = ssub.s32 %s70, %s77
      %p718 = scmp.eq.s32.totalorder %s717, 0
      %s720 = sadd.s32 %s719, 1
      %s721 = scalar_select %p718, %s719, %s720
      %p724 = pneg %p718
      %p725 = scmp.eq.s32.totalorder %s62, 1
      %p726 = por %p724, %p725
      %p727 = scmp.ne.s32.totalorder %s719, %s722
      %p728 = scmp.eq.s32.totalorder %s62, 0
      %p729 = por %p727, %p728
      %p730 = scmp.ne.s32.totalorder %s719, %s722
      %p731 = scmp.eq.s32.totalorder %s67, 1
      %p732 = por %p730, %p731
      %p733 = scmp.ne.s32.totalorder %s722, %s723
      %p734 = scmp.eq.s32.totalorder %s67, 0
      %p735 = por %p733, %p734
      %p736 = scmp.ne.s32.totalorder %s722, %s723
      %p737 = scmp.eq.s32.totalorder %s68, 1
      %p738 = por %p736, %p737
      %p740 = scmp.ne.s32.totalorder %s723, %s739
      %p741 = scmp.eq.s32.totalorder %s68, 0
      %p742 = por %p740, %p741
      %s743 = ssub.s32 %s69, %s81
      %p744 = scmp.eq.s32.totalorder %s743, 0
      %s746 = sadd.s32 %s745, 1
      %s747 = scalar_select %p744, %s745, %s746
      %p750 = pneg %p744
      %p751 = scmp.eq.s32.totalorder %s62, 1
      %p752 = por %p750, %p751
      %p753 = scmp.ne.s32.totalorder %s745, %s748
      %p754 = scmp.eq.s32.totalorder %s62, 0
      %p755 = por %p753, %p754
      %p756 = scmp.ne.s32.totalorder %s745, %s748
      %p757 = scmp.eq.s32.totalorder %s67, 1
      %p758 = por %p756, %p757
      %p759 = scmp.ne.s32.totalorder %s748, %s749
      %p760 = scmp.eq.s32.totalorder %s67, 0
      %p761 = por %p759, %p760
      %p762 = scmp.ne.s32.totalorder %s748, %s749
      %p763 = scmp.eq.s32.totalorder %s68, 1
      %p764 = por %p762, %p763
      %p766 = scmp.ne.s32.totalorder %s749, %s765
      %p767 = scmp.eq.s32.totalorder %s68, 0
      %p768 = por %p766, %p767
      %p769 = scmp.le.s32.totalorder 1, %s62
      %p770 = scmp.lt.s32.totalorder %s62, 3
      %p771 = pnand %p769, %p770
      %p772 = pneg %p771
      // Predicated region
      $region9: #{scene_branch_forward.4} parent=5 // pred_check
        _
      $region10: #{scene_branch_forward.4} parent=5 // pred_check_branch
        %774 = sbr.rel (%p771) target = $region12
      $region11: #{scene_branch_forward.4} parent=5 // pred_region
        %s775 = ssub.s32 %s62, 1
        // Predicated region
        $region13: #{scene_branch_forward.4} parent=11 // pred_check
          %p776 = pneg %p100
        $region14: #{scene_branch_forward.4} parent=11 // pred_check_branch
          %778 = sbr.rel (%p776) target = $region16
        $region15: #{scene_branch_forward.4} parent=11 // pred_region
          %s779 = smul.u32 2, %s71
          %p780 = scmp.lt.s32.totalorder %s779, 1
          %s781 = scalar_select %p780, %s779, 1
          %s782 = smul.addr %s781, 4
          %s783 = scalar_lea.vmem %s0, %s782
          %s784 = smul.u32 2, %s71
        $region16: #{scene_branch_forward.4} parent=11 // pred_fallthru
          _
        // Predicated region
        $region17: #{scene_branch_forward.4} parent=11 // pred_check
          %p785 = pneg %p126
        $region18: #{scene_branch_forward.4} parent=11 // pred_check_branch
          %787 = sbr.rel (%p785) target = $region20
        $region19: #{scene_branch_forward.4} parent=11 // pred_region
          %s788 = smul.u32 2, %s71
          %p789 = scmp.lt.s32.totalorder %s788, 1
          %s790 = scalar_select %p789, %s788, 1
          %s791 = smul.addr %s790, 4
          %s792 = scalar_lea.vmem %s1, %s791
          %s793 = smul.u32 2, %s71
        $region20: #{scene_branch_forward.4} parent=11 // pred_fallthru
          _
        // Predicated region
        $region21: #{scene_branch_forward.4} parent=11 // pred_check
          %p794 = pneg %p152
        $region22: #{scene_branch_forward.4} parent=11 // pred_check_branch
          %796 = sbr.rel (%p794) target = $region24
        $region23: #{scene_branch_forward.4} parent=11 // pred_region
          %s797 = smul.u32 2, %s71
          %p798 = scmp.lt.s32.totalorder %s797, 1
          %s799 = scalar_select %p798, %s797, 1
          %s800 = scalar_lea.vmem %s2, %s799
          %s801 = smul.u32 2, %s71
        $region24: #{scene_branch_forward.4} parent=11 // pred_fallthru
          _
        // Predicated region
        $region25: #{scene_branch_forward.4} parent=11 // pred_check
          %p802 = pneg %p173
        $region26: #{scene_branch_forward.4} parent=11 // pred_check_branch
          %804 = sbr.rel (%p802) target = $region28
        $region27: #{scene_branch_forward.4} parent=11 // pred_region
          _
        $region28: #{scene_branch_forward.4} parent=11 // pred_fallthru
          _
        // Predicated region
        $region29: #{scene_branch_forward.4} parent=11 // pred_check
          %p805 = pneg %p194
        $region30: #{scene_branch_forward.4} parent=11 // pred_check_branch
          %807 = sbr.rel (%p805) target = $region32
        $region31: #{scene_branch_forward.4} parent=11 // pred_region
          _
        $region32: #{scene_branch_forward.4} parent=11 // pred_fallthru
          _
        // Predicated region
        $region33: #{scene_branch_forward.4} parent=11 // pred_check
          %p808 = pneg %p215
        $region34: #{scene_branch_forward.4} parent=11 // pred_check_branch
          %810 = sbr.rel (%p808) target = $region36
        $region35: #{scene_branch_forward.4} parent=11 // pred_region
          _
        $region36: #{scene_branch_forward.4} parent=11 // pred_fallthru
          _
      $region12: #{scene_branch_forward.4} parent=5 // pred_fallthru
        _
      %p811 = scmp.lt.s32.totalorder %s62, 2
      // Predicated region
      $region37: #{scene_branch_forward.4} parent=5 // pred_check
        %p812 = pneg %p811
      $region38: #{scene_branch_forward.4} parent=5 // pred_check_branch
        %814 = sbr.rel (%p812) target = $region40
      $region39: #{scene_branch_forward.4} parent=5 // pred_region
        // Predicated region
        $region41: #{scene_branch_forward.4} parent=39 // pred_check
          %p815 = pneg %p235
        $region42: #{scene_branch_forward.4} parent=39 // pred_check_branch
          %817 = sbr.rel (%p815) target = $region44
        $region43: #{scene_branch_forward.4} parent=39 // pred_region
          %s818 = sand.u32 %s225, 1
          %s819 = scalar_lea.sflag [#allocation5], %s818
          %s820 = sand.u32 %s225, 1
          %s821 = smul.addr %s820, 192
          %s822 = scalar_lea.vmem [#allocation4], %s821
          %s824 = ssub.s32 3072, 3072
          %825 = vsyncadd %s819, %s824
          %s826 = smul.addr %s70, 48
          %s827 = smul.addr %s826, 64
          %s828 = scalar_lea.hbm %s6, %s827
          %s829 = sshll.u32 %s822, 4
          %s830 = int_to_ptr.vmem [resolvable:$true] %s829
          %835 = dma.hbm_to_vmem [thread:$0]  %s828, 3072, %s830, %s819, 192, 192, 12
        $region44: #{scene_branch_forward.4} parent=39 // pred_fallthru
          _
        // Predicated region
        $region45: #{scene_branch_forward.4} parent=39 // pred_check
          %p836 = pneg %p261
        $region46: #{scene_branch_forward.4} parent=39 // pred_check_branch
          %838 = sbr.rel (%p836) target = $region48
        $region47: #{scene_branch_forward.4} parent=39 // pred_region
          %s839 = sand.u32 %s62, 1
          %s840 = scalar_lea.sflag [#allocation7], %s839
          %s841 = sand.u32 %s251, 1
          %s842 = smul.addr %s841, 3
          %s843 = scalar_lea.vmem [#allocation6], %s842
          %s845 = ssub.s32 48, 48
          %846 = vsyncadd %s840, %s845
          %s847 = smul.addr %s70, 3
          %s848 = smul.addr %s847, 16
          %s849 = scalar_lea.hbm %s7, %s848
          %s851 = sshll.u32 %s843, 4
          %s852 = int_to_ptr.vmem [resolvable:$true] %s851
          %854 = dma.hbm_to_vmem [thread:$0]  %s849, 48, %s852, %s840
        $region48: #{scene_branch_forward.4} parent=39 // pred_fallthru
          _
        // Predicated region
        $region49: #{scene_branch_forward.4} parent=39 // pred_check
          %p855 = pneg %p287
        $region50: #{scene_branch_forward.4} parent=39 // pred_check_branch
          %857 = sbr.rel (%p855) target = $region52
        $region51: #{scene_branch_forward.4} parent=39 // pred_region
          %s858 = sand.u32 %s62, 1
          %s859 = scalar_lea.sflag [#allocation7], %s858
          %s860 = sand.u32 %s277, 1
          %s861 = smul.addr %s860, 64
          %s862 = scalar_lea.vmem [#allocation8], %s861
          %s864 = ssub.s32 1024, 1024
          %865 = vsyncadd %s859, %s864
          %s866 = smul.addr %s70, 16
          %s867 = smul.addr %s866, 64
          %s868 = scalar_lea.hbm %s8, %s867
          %s869 = sshll.u32 %s862, 4
          %s870 = int_to_ptr.vmem [resolvable:$true] %s869
          %875 = dma.hbm_to_vmem [thread:$0]  %s868, 1024, %s870, %s859, 64, 64, 4
        $region52: #{scene_branch_forward.4} parent=39 // pred_fallthru
          _
        // Predicated region
        $region53: #{scene_branch_forward.4} parent=39 // pred_check
          %p876 = pneg %p313
        $region54: #{scene_branch_forward.4} parent=39 // pred_check_branch
          %878 = sbr.rel (%p876) target = $region56
        $region55: #{scene_branch_forward.4} parent=39 // pred_region
          %s879 = sand.u32 %s62, 1
          %s880 = scalar_lea.sflag [#allocation10], %s879
          %s881 = sand.u32 %s303, 1
          %s882 = scalar_lea.vmem [#allocation9], %s881
          %s884 = ssub.s32 16, 16
          %885 = vsyncadd %s880, %s884
          %s886 = smul.addr %s70, 16
          %s887 = scalar_lea.hbm %s9, %s886
          %s889 = sshll.u32 %s882, 4
          %s890 = int_to_ptr.vmem [resolvable:$true] %s889
          %892 = dma.hbm_to_vmem [thread:$0]  %s887, 16, %s890, %s880
        $region56: #{scene_branch_forward.4} parent=39 // pred_fallthru
          _
        // Predicated region
        $region57: #{scene_branch_forward.4} parent=39 // pred_check
          %p893 = pneg %p339
        $region58: #{scene_branch_forward.4} parent=39 // pred_check_branch
          %895 = sbr.rel (%p893) target = $region60
        $region59: #{scene_branch_forward.4} parent=39 // pred_region
          %s896 = sand.u32 %s62, 1
          %s897 = scalar_lea.sflag [#allocation10], %s896
          %s898 = sand.u32 %s329, 1
          %s899 = scalar_lea.vmem [#allocation11], %s898
          %s901 = ssub.s32 16, 16
          %902 = vsyncadd %s897, %s901
          %s903 = smul.addr %s70, 16
          %s904 = scalar_lea.hbm %s10, %s903
          %s906 = sshll.u32 %s899, 4
          %s907 = int_to_ptr.vmem [resolvable:$true] %s906
          %909 = dma.hbm_to_vmem [thread:$0]  %s904, 16, %s907, %s897
        $region60: #{scene_branch_forward.4} parent=39 // pred_fallthru
          _
        // Predicated region
        $region61: #{scene_branch_forward.4} parent=39 // pred_check
          %p910 = pneg %p365
        $region62: #{scene_branch_forward.4} parent=39 // pred_check_branch
          %912 = sbr.rel (%p910) target = $region64
        $region63: #{scene_branch_forward.4} parent=39 // pred_region
          %s913 = sand.u32 %s62, 1
          %s914 = scalar_lea.sflag [#allocation13], %s913
          %s915 = sand.u32 %s355, 1
          %s916 = scalar_lea.vmem [#allocation12], %s915
          %s918 = ssub.s32 16, 16
          %919 = vsyncadd %s914, %s918
          %s920 = smul.addr %s70, 16
          %s921 = scalar_lea.hbm %s11, %s920
          %s923 = sshll.u32 %s916, 4
          %s924 = int_to_ptr.vmem [resolvable:$true] %s923
          %926 = dma.hbm_to_vmem [thread:$0]  %s921, 16, %s924, %s914
        $region64: #{scene_branch_forward.4} parent=39 // pred_fallthru
          _
        // Predicated region
        $region65: #{scene_branch_forward.4} parent=39 // pred_check
          %p927 = pneg %p391
        $region66: #{scene_branch_forward.4} parent=39 // pred_check_branch
          %929 = sbr.rel (%p927) target = $region68
        $region67: #{scene_branch_forward.4} parent=39 // pred_region
          %s930 = sand.u32 %s62, 1
          %s931 = scalar_lea.sflag [#allocation13], %s930
          %s932 = sand.u32 %s381, 1
          %s933 = smul.addr %s932, 64
          %s934 = scalar_lea.vmem [#allocation14], %s933
          %s936 = ssub.s32 1024, 1024
          %937 = vsyncadd %s931, %s936
          %s938 = smul.addr %s70, 16
          %s939 = smul.addr %s938, 64
          %s940 = scalar_lea.hbm %s12, %s939
          %s941 = sshll.u32 %s934, 4
          %s942 = int_to_ptr.vmem [resolvable:$true] %s941
          %947 = dma.hbm_to_vmem [thread:$0]  %s940, 1024, %s942, %s931, 64, 64, 4
        $region68: #{scene_branch_forward.4} parent=39 // pred_fallthru
          _
        // Predicated region
        $region69: #{scene_branch_forward.4} parent=39 // pred_check
          %p948 = pneg %p417
        $region70: #{scene_branch_forward.4} parent=39 // pred_check_branch
          %950 = sbr.rel (%p948) target = $region72
        $region71: #{scene_branch_forward.4} parent=39 // pred_region
          %s951 = sand.u32 %s62, 1
          %s952 = scalar_lea.sflag [#allocation16], %s951
          %s953 = sand.u32 %s407, 1
          %s954 = scalar_lea.vmem [#allocation15], %s953
          %s956 = ssub.s32 16, 16
          %957 = vsyncadd %s952, %s956
          %s958 = smul.addr %s70, 16
          %s959 = scalar_lea.hbm %s13, %s958
          %s961 = sshll.u32 %s954, 4
          %s962 = int_to_ptr.vmem [resolvable:$true] %s961
          %964 = dma.hbm_to_vmem [thread:$0]  %s959, 16, %s962, %s952
        $region72: #{scene_branch_forward.4} parent=39 // pred_fallthru
          _
        // Predicated region
        $region73: #{scene_branch_forward.4} parent=39 // pred_check
          %p965 = pneg %p443
        $region74: #{scene_branch_forward.4} parent=39 // pred_check_branch
          %967 = sbr.rel (%p965) target = $region76
        $region75: #{scene_branch_forward.4} parent=39 // pred_region
          %p968 = scmp.lt.s32.totalorder %s70, 1
          %s969 = scalar_select %p968, %s70, 1
          %s970 = smul.addr %s969, 32
          %s971 = smul.addr %s970, 4
          %s972 = scalar_lea.vmem %s14, %s971
        $region76: #{scene_branch_forward.4} parent=39 // pred_fallthru
          _
        // Predicated region
        $region77: #{scene_branch_forward.4} parent=39 // pred_check
          %p973 = pneg %p469
        $region78: #{scene_branch_forward.4} parent=39 // pred_check_branch
          %975 = sbr.rel (%p973) target = $region80
        $region79: #{scene_branch_forward.4} parent=39 // pred_region
          %s976 = sand.u32 %s62, 1
          %s977 = scalar_lea.sflag [#allocation16], %s976
          %s978 = sand.u32 %s459, 1
          %s979 = smul.addr %s978, 2
          %s980 = scalar_lea.vmem [#allocation17], %s979
          %s982 = ssub.s32 32, 32
          %983 = vsyncadd %s977, %s982
          %s984 = smul.addr %s70, 2
          %s985 = smul.addr %s984, 16
          %s986 = scalar_lea.hbm %s15, %s985
          %s988 = sshll.u32 %s980, 4
          %s989 = int_to_ptr.vmem [resolvable:$true] %s988
          %991 = dma.hbm_to_vmem [thread:$0]  %s986, 32, %s989, %s977
        $region80: #{scene_branch_forward.4} parent=39 // pred_fallthru
          _
        // Predicated region
        $region81: #{scene_branch_forward.4} parent=39 // pred_check
          %p992 = pneg %p495
        $region82: #{scene_branch_forward.4} parent=39 // pred_check_branch
          %994 = sbr.rel (%p992) target = $region84
        $region83: #{scene_branch_forward.4} parent=39 // pred_region
          %s995 = sand.u32 %s62, 1
          %s996 = scalar_lea.sflag [#allocation19], %s995
          %s997 = sand.u32 %s485, 1
          %s998 = smul.addr %s997, 64
          %s999 = scalar_lea.vmem [#allocation18], %s998
          %s1001 = ssub.s32 1024, 1024
          %1002 = vsyncadd %s996, %s1001
          %s1003 = smul.addr %s70, 16
          %s1004 = smul.addr %s1003, 64
          %s1005 = scalar_lea.hbm %s16, %s1004
          %s1006 = sshll.u32 %s999, 4
          %s1007 = int_to_ptr.vmem [resolvable:$true] %s1006
          %1012 = dma.hbm_to_vmem [thread:$0]  %s1005, 1024, %s1007, %s996, 64, 64, 4
        $region84: #{scene_branch_forward.4} parent=39 // pred_fallthru
          _
        // Predicated region
        $region85: #{scene_branch_forward.4} parent=39 // pred_check
          %p1013 = pneg %p521
        $region86: #{scene_branch_forward.4} parent=39 // pred_check_branch
          %1015 = sbr.rel (%p1013) target = $region88
        $region87: #{scene_branch_forward.4} parent=39 // pred_region
          %s1016 = sand.u32 %s62, 1
          %s1017 = scalar_lea.sflag [#allocation19], %s1016
          %s1018 = sand.u32 %s511, 1
          %s1019 = scalar_lea.vmem [#allocation20], %s1018
          %s1021 = ssub.s32 16, 16
          %1022 = vsyncadd %s1017, %s1021
          %s1023 = smul.addr %s70, 16
          %s1024 = scalar_lea.hbm %s17, %s1023
          %s1026 = sshll.u32 %s1019, 4
          %s1027 = int_to_ptr.vmem [resolvable:$true] %s1026
          %1029 = dma.hbm_to_vmem [thread:$0]  %s1024, 16, %s1027, %s1017
        $region88: #{scene_branch_forward.4} parent=39 // pred_fallthru
          _
        // Predicated region
        $region89: #{scene_branch_forward.4} parent=39 // pred_check
          %p1030 = pneg %p547
        $region90: #{scene_branch_forward.4} parent=39 // pred_check_branch
          %1032 = sbr.rel (%p1030) target = $region92
        $region91: #{scene_branch_forward.4} parent=39 // pred_region
          %s1033 = sand.u32 %s62, 1
          %s1034 = scalar_lea.sflag [#allocation22], %s1033
          %s1035 = sand.u32 %s537, 1
          %s1036 = scalar_lea.vmem [#allocation21], %s1035
          %s1038 = ssub.s32 16, 16
          %1039 = vsyncadd %s1034, %s1038
          %s1040 = smul.addr %s70, 16
          %s1041 = scalar_lea.hbm %s18, %s1040
          %s1043 = sshll.u32 %s1036, 4
          %s1044 = int_to_ptr.vmem [resolvable:$true] %s1043
          %1046 = dma.hbm_to_vmem [thread:$0]  %s1041, 16, %s1044, %s1034
        $region92: #{scene_branch_forward.4} parent=39 // pred_fallthru
          _
        // Predicated region
        $region93: #{scene_branch_forward.4} parent=39 // pred_check
          %p1047 = pneg %p573
        $region94: #{scene_branch_forward.4} parent=39 // pred_check_branch
          %1049 = sbr.rel (%p1047) target = $region96
        $region95: #{scene_branch_forward.4} parent=39 // pred_region
          %s1050 = sand.u32 %s62, 1
          %s1051 = scalar_lea.sflag [#allocation22], %s1050
          %s1052 = sand.u32 %s563, 1
          %s1053 = scalar_lea.vmem [#allocation23], %s1052
          %s1055 = ssub.s32 16, 16
          %1056 = vsyncadd %s1051, %s1055
          %s1057 = smul.addr %s70, 16
          %s1058 = scalar_lea.hbm %s19, %s1057
          %s1060 = sshll.u32 %s1053, 4
          %s1061 = int_to_ptr.vmem [resolvable:$true] %s1060
          %1063 = dma.hbm_to_vmem [thread:$0]  %s1058, 16, %s1061, %s1051
        $region96: #{scene_branch_forward.4} parent=39 // pred_fallthru
          _
        // Predicated region
        $region97: #{scene_branch_forward.4} parent=39 // pred_check
          %p1064 = pneg %p599
        $region98: #{scene_branch_forward.4} parent=39 // pred_check_branch
          %1066 = sbr.rel (%p1064) target = $region100
        $region99: #{scene_branch_forward.4} parent=39 // pred_region
          %s1067 = sand.u32 %s62, 1
          %s1068 = scalar_lea.sflag [#allocation25], %s1067
          %s1069 = sand.u32 %s589, 1
          %s1070 = smul.addr %s1069, 128
          %s1071 = scalar_lea.vmem [#allocation24], %s1070
          %s1073 = ssub.s32 2048, 2048
          %1074 = vsyncadd %s1068, %s1073
          %s1075 = smul.addr %s70, 32
          %s1076 = smul.addr %s1075, 64
          %s1077 = scalar_lea.hbm %s20, %s1076
          %s1078 = sshll.u32 %s1071, 4
          %s1079 = int_to_ptr.vmem [resolvable:$true] %s1078
          %1084 = dma.hbm_to_vmem [thread:$0]  %s1077, 2048, %s1079, %s1068, 128, 128, 8
        $region100: #{scene_branch_forward.4} parent=39 // pred_fallthru
          _
        // Predicated region
        $region101: #{scene_branch_forward.4} parent=39 // pred_check
          %p1085 = pneg %p625
        $region102: #{scene_branch_forward.4} parent=39 // pred_check_branch
          %1087 = sbr.rel (%p1085) target = $region104
        $region103: #{scene_branch_forward.4} parent=39 // pred_region
          %s1088 = sand.u32 %s62, 1
          %s1089 = scalar_lea.sflag [#allocation25], %s1088
          %s1090 = sand.u32 %s615, 1
          %s1091 = smul.addr %s1090, 2
          %s1092 = scalar_lea.vmem [#allocation26], %s1091
          %s1094 = ssub.s32 32, 32
          %1095 = vsyncadd %s1089, %s1094
          %s1096 = smul.addr %s70, 2
          %s1097 = smul.addr %s1096, 16
          %s1098 = scalar_lea.hbm %s21, %s1097
          %s1100 = sshll.u32 %s1092, 4
          %s1101 = int_to_ptr.vmem [resolvable:$true] %s1100
          %1103 = dma.hbm_to_vmem [thread:$0]  %s1098, 32, %s1101, %s1089
        $region104: #{scene_branch_forward.4} parent=39 // pred_fallthru
          _
        // Predicated region
        $region105: #{scene_branch_forward.4} parent=39 // pred_check
          %p1104 = pneg %p651
        $region106: #{scene_branch_forward.4} parent=39 // pred_check_branch
          %1106 = sbr.rel (%p1104) target = $region108
        $region107: #{scene_branch_forward.4} parent=39 // pred_region
          %s1107 = sand.u32 %s62, 1
          %s1108 = scalar_lea.sflag [#allocation28], %s1107
          %s1109 = sand.u32 %s641, 1
          %s1110 = smul.addr %s1109, 128
          %s1111 = scalar_lea.vmem [#allocation27], %s1110
          %s1113 = ssub.s32 2048, 2048
          %1114 = vsyncadd %s1108, %s1113
          %s1115 = smul.addr %s70, 32
          %s1116 = smul.addr %s1115, 64
          %s1117 = scalar_lea.hbm %s22, %s1116
          %s1118 = sshll.u32 %s1111, 4
          %s1119 = int_to_ptr.vmem [resolvable:$true] %s1118
          %1124 = dma.hbm_to_vmem [thread:$0]  %s1117, 2048, %s1119, %s1108, 64, 64, 4
        $region108: #{scene_branch_forward.4} parent=39 // pred_fallthru
          _
        // Predicated region
        $region109: #{scene_branch_forward.4} parent=39 // pred_check
          %p1125 = pneg %p677
        $region110: #{scene_branch_forward.4} parent=39 // pred_check_branch
          %1127 = sbr.rel (%p1125) target = $region112
        $region111: #{scene_branch_forward.4} parent=39 // pred_region
          %s1128 = sand.u32 %s62, 1
          %s1129 = scalar_lea.sflag [#allocation28], %s1128
          %s1130 = sand.u32 %s667, 1
          %s1131 = scalar_lea.vmem [#allocation29], %s1130
          %s1133 = ssub.s32 16, 16
          %1134 = vsyncadd %s1129, %s1133
          %s1135 = smul.addr %s70, 16
          %s1136 = scalar_lea.hbm %s23, %s1135
          %s1138 = sshll.u32 %s1131, 4
          %s1139 = int_to_ptr.vmem [resolvable:$true] %s1138
          %1141 = dma.hbm_to_vmem [thread:$0]  %s1136, 16, %s1139, %s1129
        $region112: #{scene_branch_forward.4} parent=39 // pred_fallthru
          _
        // Predicated region
        $region113: #{scene_branch_forward.4} parent=39 // pred_check
          %p1142 = pneg %p703
        $region114: #{scene_branch_forward.4} parent=39 // pred_check_branch
          %1144 = sbr.rel (%p1142) target = $region116
        $region115: #{scene_branch_forward.4} parent=39 // pred_region
          %s1145 = sand.u32 %s62, 1
          %s1146 = scalar_lea.sflag [#allocation31], %s1145
          %s1147 = sand.u32 %s693, 1
          %s1148 = scalar_lea.vmem [#allocation30], %s1147
          %s1150 = ssub.s32 16, 16
          %1151 = vsyncadd %s1146, %s1150
          %s1152 = smul.addr %s70, 16
          %s1153 = scalar_lea.hbm %s24, %s1152
          %s1155 = sshll.u32 %s1148, 4
          %s1156 = int_to_ptr.vmem [resolvable:$true] %s1155
          %1158 = dma.hbm_to_vmem [thread:$0]  %s1153, 16, %s1156, %s1146
        $region116: #{scene_branch_forward.4} parent=39 // pred_fallthru
          _
        // Predicated region
        $region117: #{scene_branch_forward.4} parent=39 // pred_check
          %p1159 = pneg %p729
        $region118: #{scene_branch_forward.4} parent=39 // pred_check_branch
          %1161 = sbr.rel (%p1159) target = $region120
        $region119: #{scene_branch_forward.4} parent=39 // pred_region
          %s1162 = sand.u32 %s62, 1
          %s1163 = scalar_lea.sflag [#allocation31], %s1162
          %s1164 = sand.u32 %s719, 1
          %s1165 = scalar_lea.vmem [#allocation32], %s1164
          %s1167 = ssub.s32 16, 16
          %1168 = vsyncadd %s1163, %s1167
          %s1169 = smul.addr %s70, 16
          %s1170 = scalar_lea.hbm %s25, %s1169
          %s1172 = sshll.u32 %s1165, 4
          %s1173 = int_to_ptr.vmem [resolvable:$true] %s1172
          %1175 = dma.hbm_to_vmem [thread:$0]  %s1170, 16, %s1173, %s1163
        $region120: #{scene_branch_forward.4} parent=39 // pred_fallthru
          _
      $region40: #{scene_branch_forward.4} parent=5 // pred_fallthru
        _
      %p1176 = scmp.le.s32.totalorder 1, %s62
      %p1177 = scmp.lt.s32.totalorder %s62, 3
      %p1178 = pnand %p1176, %p1177
      %p1179 = pneg %p1178
      // Predicated region
      $region121: #{scene_branch_forward.4} parent=5 // pred_check
        _
      $region122: #{scene_branch_forward.4} parent=5 // pred_check_branch
        %1181 = sbr.rel (%p1178) target = $region124
      $region123: #{scene_branch_forward.4} parent=5 // pred_region
        %s1182 = ssub.s32 %s62, 1
        %s1183 = sand.u32 %s228, 1
        %s1184 = scalar_lea.sflag [#allocation5], %s1183
        %s1185 = sand.u32 %s228, 1
        %s1186 = smul.addr %s1185, 192
        %s1187 = scalar_lea.vmem [#allocation4], %s1186
        // Predicated region
        $region125: #{scene_branch_forward.4} parent=123 // pred_check
          %p1188 = pneg %p241
        $region126: #{scene_branch_forward.4} parent=123 // pred_check_branch
          %1190 = sbr.rel (%p1188) target = $region128
        $region127: #{scene_branch_forward.4} parent=123 // pred_region
          %1191 = dma.done %s1184, 3072
        $region128: #{scene_branch_forward.4} parent=123 // pred_fallthru
          _
        %s1192 = sand.u32 %s67, 1
        %s1193 = scalar_lea.sflag [#allocation7], %s1192
        %s1194 = sand.u32 %s254, 1
        %s1195 = smul.addr %s1194, 3
        %s1196 = scalar_lea.vmem [#allocation6], %s1195
        // Predicated region
        $region129: #{scene_branch_forward.4} parent=123 // pred_check
          %p1197 = pneg %p267
        $region130: #{scene_branch_forward.4} parent=123 // pred_check_branch
          %1199 = sbr.rel (%p1197) target = $region132
        $region131: #{scene_branch_forward.4} parent=123 // pred_region
          %1200 = dma.done %s1193, 48
        $region132: #{scene_branch_forward.4} parent=123 // pred_fallthru
          _
        %s1201 = sand.u32 %s67, 1
        %s1202 = scalar_lea.sflag [#allocation7], %s1201
        %s1203 = sand.u32 %s280, 1
        %s1204 = smul.addr %s1203, 64
        %s1205 = scalar_lea.vmem [#allocation8], %s1204
        // Predicated region
        $region133: #{scene_branch_forward.4} parent=123 // pred_check
          %p1206 = pneg %p293
        $region134: #{scene_branch_forward.4} parent=123 // pred_check_branch
          %1208 = sbr.rel (%p1206) target = $region136
        $region135: #{scene_branch_forward.4} parent=123 // pred_region
          %1209 = dma.done %s1202, 1024
        $region136: #{scene_branch_forward.4} parent=123 // pred_fallthru
          _
        %s1210 = sand.u32 %s67, 1
        %s1211 = scalar_lea.sflag [#allocation10], %s1210
        %s1212 = sand.u32 %s306, 1
        %s1213 = scalar_lea.vmem [#allocation9], %s1212
        // Predicated region
        $region137: #{scene_branch_forward.4} parent=123 // pred_check
          %p1214 = pneg %p319
        $region138: #{scene_branch_forward.4} parent=123 // pred_check_branch
          %1216 = sbr.rel (%p1214) target = $region140
        $region139: #{scene_branch_forward.4} parent=123 // pred_region
          %1217 = dma.done %s1211, 16
        $region140: #{scene_branch_forward.4} parent=123 // pred_fallthru
          _
        %s1218 = sand.u32 %s67, 1
        %s1219 = scalar_lea.sflag [#allocation10], %s1218
        %s1220 = sand.u32 %s332, 1
        %s1221 = scalar_lea.vmem [#allocation11], %s1220
        // Predicated region
        $region141: #{scene_branch_forward.4} parent=123 // pred_check
          %p1222 = pneg %p345
        $region142: #{scene_branch_forward.4} parent=123 // pred_check_branch
          %1224 = sbr.rel (%p1222) target = $region144
        $region143: #{scene_branch_forward.4} parent=123 // pred_region
          %1225 = dma.done %s1219, 16
        $region144: #{scene_branch_forward.4} parent=123 // pred_fallthru
          _
        %s1226 = sand.u32 %s67, 1
        %s1227 = scalar_lea.sflag [#allocation13], %s1226
        %s1228 = sand.u32 %s358, 1
        %s1229 = scalar_lea.vmem [#allocation12], %s1228
        // Predicated region
        $region145: #{scene_branch_forward.4} parent=123 // pred_check
          %p1230 = pneg %p371
        $region146: #{scene_branch_forward.4} parent=123 // pred_check_branch
          %1232 = sbr.rel (%p1230) target = $region148
        $region147: #{scene_branch_forward.4} parent=123 // pred_region
          %1233 = dma.done %s1227, 16
        $region148: #{scene_branch_forward.4} parent=123 // pred_fallthru
          _
        %s1234 = sand.u32 %s67, 1
        %s1235 = scalar_lea.sflag [#allocation13], %s1234
        %s1236 = sand.u32 %s384, 1
        %s1237 = smul.addr %s1236, 64
        %s1238 = scalar_lea.vmem [#allocation14], %s1237
        // Predicated region
        $region149: #{scene_branch_forward.4} parent=123 // pred_check
          %p1239 = pneg %p397
        $region150: #{scene_branch_forward.4} parent=123 // pred_check_branch
          %1241 = sbr.rel (%p1239) target = $region152
        $region151: #{scene_branch_forward.4} parent=123 // pred_region
          %1242 = dma.done %s1235, 1024
        $region152: #{scene_branch_forward.4} parent=123 // pred_fallthru
          _
        %s1243 = sand.u32 %s67, 1
        %s1244 = scalar_lea.sflag [#allocation16], %s1243
        %s1245 = sand.u32 %s410, 1
        %s1246 = scalar_lea.vmem [#allocation15], %s1245
        // Predicated region
        $region153: #{scene_branch_forward.4} parent=123 // pred_check
          %p1247 = pneg %p423
        $region154: #{scene_branch_forward.4} parent=123 // pred_check_branch
          %1249 = sbr.rel (%p1247) target = $region156
        $region155: #{scene_branch_forward.4} parent=123 // pred_region
          %1250 = dma.done %s1244, 16
        $region156: #{scene_branch_forward.4} parent=123 // pred_fallthru
          _
        %s1251 = sand.u32 %s67, 1
        %s1252 = scalar_lea.sflag [#allocation16], %s1251
        %s1253 = sand.u32 %s462, 1
        %s1254 = smul.addr %s1253, 2
        %s1255 = scalar_lea.vmem [#allocation17], %s1254
        // Predicated region
        $region157: #{scene_branch_forward.4} parent=123 // pred_check
          %p1256 = pneg %p475
        $region158: #{scene_branch_forward.4} parent=123 // pred_check_branch
          %1258 = sbr.rel (%p1256) target = $region160
        $region159: #{scene_branch_forward.4} parent=123 // pred_region
          %1259 = dma.done %s1252, 32
        $region160: #{scene_branch_forward.4} parent=123 // pred_fallthru
          _
        %s1260 = sand.u32 %s67, 1
        %s1261 = scalar_lea.sflag [#allocation19], %s1260
        %s1262 = sand.u32 %s488, 1
        %s1263 = smul.addr %s1262, 64
        %s1264 = scalar_lea.vmem [#allocation18], %s1263
        // Predicated region
        $region161: #{scene_branch_forward.4} parent=123 // pred_check
          %p1265 = pneg %p501
        $region162: #{scene_branch_forward.4} parent=123 // pred_check_branch
          %1267 = sbr.rel (%p1265) target = $region164
        $region163: #{scene_branch_forward.4} parent=123 // pred_region
          %1268 = dma.done %s1261, 1024
        $region164: #{scene_branch_forward.4} parent=123 // pred_fallthru
          _
        %s1269 = sand.u32 %s67, 1
        %s1270 = scalar_lea.sflag [#allocation19], %s1269
        %s1271 = sand.u32 %s514, 1
        %s1272 = scalar_lea.vmem [#allocation20], %s1271
        // Predicated region
        $region165: #{scene_branch_forward.4} parent=123 // pred_check
          %p1273 = pneg %p527
        $region166: #{scene_branch_forward.4} parent=123 // pred_check_branch
          %1275 = sbr.rel (%p1273) target = $region168
        $region167: #{scene_branch_forward.4} parent=123 // pred_region
          %1276 = dma.done %s1270, 16
        $region168: #{scene_branch_forward.4} parent=123 // pred_fallthru
          _
        %s1277 = sand.u32 %s67, 1
        %s1278 = scalar_lea.sflag [#allocation22], %s1277
        %s1279 = sand.u32 %s540, 1
        %s1280 = scalar_lea.vmem [#allocation21], %s1279
        // Predicated region
        $region169: #{scene_branch_forward.4} parent=123 // pred_check
          %p1281 = pneg %p553
        $region170: #{scene_branch_forward.4} parent=123 // pred_check_branch
          %1283 = sbr.rel (%p1281) target = $region172
        $region171: #{scene_branch_forward.4} parent=123 // pred_region
          %1284 = dma.done %s1278, 16
        $region172: #{scene_branch_forward.4} parent=123 // pred_fallthru
          _
        %s1285 = sand.u32 %s67, 1
        %s1286 = scalar_lea.sflag [#allocation22], %s1285
        %s1287 = sand.u32 %s566, 1
        %s1288 = scalar_lea.vmem [#allocation23], %s1287
        // Predicated region
        $region173: #{scene_branch_forward.4} parent=123 // pred_check
          %p1289 = pneg %p579
        $region174: #{scene_branch_forward.4} parent=123 // pred_check_branch
          %1291 = sbr.rel (%p1289) target = $region176
        $region175: #{scene_branch_forward.4} parent=123 // pred_region
          %1292 = dma.done %s1286, 16
        $region176: #{scene_branch_forward.4} parent=123 // pred_fallthru
          _
        %s1293 = sand.u32 %s67, 1
        %s1294 = scalar_lea.sflag [#allocation25], %s1293
        %s1295 = sand.u32 %s592, 1
        %s1296 = smul.addr %s1295, 128
        %s1297 = scalar_lea.vmem [#allocation24], %s1296
        // Predicated region
        $region177: #{scene_branch_forward.4} parent=123 // pred_check
          %p1298 = pneg %p605
        $region178: #{scene_branch_forward.4} parent=123 // pred_check_branch
          %1300 = sbr.rel (%p1298) target = $region180
        $region179: #{scene_branch_forward.4} parent=123 // pred_region
          %1301 = dma.done %s1294, 2048
        $region180: #{scene_branch_forward.4} parent=123 // pred_fallthru
          _
        %s1302 = sand.u32 %s67, 1
        %s1303 = scalar_lea.sflag [#allocation25], %s1302
        %s1304 = sand.u32 %s618, 1
        %s1305 = smul.addr %s1304, 2
        %s1306 = scalar_lea.vmem [#allocation26], %s1305
        // Predicated region
        $region181: #{scene_branch_forward.4} parent=123 // pred_check
          %p1307 = pneg %p631
        $region182: #{scene_branch_forward.4} parent=123 // pred_check_branch
          %1309 = sbr.rel (%p1307) target = $region184
        $region183: #{scene_branch_forward.4} parent=123 // pred_region
          %1310 = dma.done %s1303, 32
        $region184: #{scene_branch_forward.4} parent=123 // pred_fallthru
          _
        %s1311 = sand.u32 %s67, 1
        %s1312 = scalar_lea.sflag [#allocation28], %s1311
        %s1313 = sand.u32 %s644, 1
        %s1314 = smul.addr %s1313, 128
        %s1315 = scalar_lea.vmem [#allocation27], %s1314
        // Predicated region
        $region185: #{scene_branch_forward.4} parent=123 // pred_check
          %p1316 = pneg %p657
        $region186: #{scene_branch_forward.4} parent=123 // pred_check_branch
          %1318 = sbr.rel (%p1316) target = $region188
        $region187: #{scene_branch_forward.4} parent=123 // pred_region
          %1319 = dma.done %s1312, 2048
        $region188: #{scene_branch_forward.4} parent=123 // pred_fallthru
          _
        %s1320 = sand.u32 %s67, 1
        %s1321 = scalar_lea.sflag [#allocation28], %s1320
        %s1322 = sand.u32 %s670, 1
        %s1323 = scalar_lea.vmem [#allocation29], %s1322
        // Predicated region
        $region189: #{scene_branch_forward.4} parent=123 // pred_check
          %p1324 = pneg %p683
        $region190: #{scene_branch_forward.4} parent=123 // pred_check_branch
          %1326 = sbr.rel (%p1324) target = $region192
        $region191: #{scene_branch_forward.4} parent=123 // pred_region
          %1327 = dma.done %s1321, 16
        $region192: #{scene_branch_forward.4} parent=123 // pred_fallthru
          _
        %s1328 = sand.u32 %s67, 1
        %s1329 = scalar_lea.sflag [#allocation31], %s1328
        %s1330 = sand.u32 %s696, 1
        %s1331 = scalar_lea.vmem [#allocation30], %s1330
        // Predicated region
        $region193: #{scene_branch_forward.4} parent=123 // pred_check
          %p1332 = pneg %p709
        $region194: #{scene_branch_forward.4} parent=123 // pred_check_branch
          %1334 = sbr.rel (%p1332) target = $region196
        $region195: #{scene_branch_forward.4} parent=123 // pred_region
          %1335 = dma.done %s1329, 16
        $region196: #{scene_branch_forward.4} parent=123 // pred_fallthru
          _
        %s1336 = sand.u32 %s67, 1
        %s1337 = scalar_lea.sflag [#allocation31], %s1336
        %s1338 = sand.u32 %s722, 1
        %s1339 = scalar_lea.vmem [#allocation32], %s1338
        // Predicated region
        $region197: #{scene_branch_forward.4} parent=123 // pred_check
          %p1340 = pneg %p735
        $region198: #{scene_branch_forward.4} parent=123 // pred_check_branch
          %1342 = sbr.rel (%p1340) target = $region200
        $region199: #{scene_branch_forward.4} parent=123 // pred_region
          %1343 = dma.done %s1337, 16
        $region200: #{scene_branch_forward.4} parent=123 // pred_fallthru
          _
        %s1344 = smul.u32 2, %s71
        %p1345 = scmp.lt.s32.totalorder %s1344, 1
        %s1346 = scalar_select %p1345, %s1344, 1
        %s1347 = smul.addr %s1346, 4
        %s1348 = scalar_lea.vmem %s0, %s1347
        %p1349 = pneg %p100
        %p1350 = pneg %p97
        %s1351 = smul.u32 2, %s71
        %p1352 = scmp.lt.s32.totalorder %s1351, 1
        %s1353 = scalar_select %p1352, %s1351, 1
        %s1354 = smul.addr %s1353, 4
        %s1355 = scalar_lea.vmem %s1, %s1354
        %p1356 = pneg %p126
        %p1357 = pneg %p123
        %s1358 = smul.u32 2, %s71
        %p1359 = scmp.lt.s32.totalorder %s1358, 1
        %s1360 = scalar_select %p1359, %s1358, 1
        %s1361 = scalar_lea.vmem %s2, %s1360
        %p1362 = pneg %p152
        %p1363 = pneg %p149
        %p1364 = pneg %p173
        %p1365 = pneg %p170
        %p1366 = pneg %p194
        %p1367 = pneg %p191
        %p1368 = pneg %p215
        %p1369 = pneg %p212
        %s1370 = sand.u32 %s228, 1
        %s1371 = scalar_lea.sflag [#allocation5], %s1370
        %s1372 = sand.u32 %s228, 1
        %s1373 = smul.addr %s1372, 192
        %s1374 = scalar_lea.vmem [#allocation4], %s1373
        %p1375 = pneg %p241
        %p1376 = pneg %p238
        %s1377 = sand.u32 %s67, 1
        %s1378 = scalar_lea.sflag [#allocation7], %s1377
        %s1379 = sand.u32 %s254, 1
        %s1380 = smul.addr %s1379, 3
        %s1381 = scalar_lea.vmem [#allocation6], %s1380
        %p1382 = pneg %p267
        %p1383 = pneg %p264
        %s1384 = sand.u32 %s67, 1
        %s1385 = scalar_lea.sflag [#allocation7], %s1384
        %s1386 = sand.u32 %s280, 1
        %s1387 = smul.addr %s1386, 64
        %s1388 = scalar_lea.vmem [#allocation8], %s1387
        %p1389 = pneg %p293
        %p1390 = pneg %p290
        %s1391 = sand.u32 %s67, 1
        %s1392 = scalar_lea.sflag [#allocation10], %s1391
        %s1393 = sand.u32 %s306, 1
        %s1394 = scalar_lea.vmem [#allocation9], %s1393
        %p1395 = pneg %p319
        %p1396 = pneg %p316
        %s1397 = sand.u32 %s67, 1
        %s1398 = scalar_lea.sflag [#allocation10], %s1397
        %s1399 = sand.u32 %s332, 1
        %s1400 = scalar_lea.vmem [#allocation11], %s1399
        %p1401 = pneg %p345
        %p1402 = pneg %p342
        %s1403 = sand.u32 %s67, 1
        %s1404 = scalar_lea.sflag [#allocation13], %s1403
        %s1405 = sand.u32 %s358, 1
        %s1406 = scalar_lea.vmem [#allocation12], %s1405
        %p1407 = pneg %p371
        %p1408 = pneg %p368
        %s1409 = sand.u32 %s67, 1
        %s1410 = scalar_lea.sflag [#allocation13], %s1409
        %s1411 = sand.u32 %s384, 1
        %s1412 = smul.addr %s1411, 64
        %s1413 = scalar_lea.vmem [#allocation14], %s1412
        %p1414 = pneg %p397
        %p1415 = pneg %p394
        %s1416 = sand.u32 %s67, 1
        %s1417 = scalar_lea.sflag [#allocation16], %s1416
        %s1418 = sand.u32 %s410, 1
        %s1419 = scalar_lea.vmem [#allocation15], %s1418
        %p1420 = pneg %p423
        %p1421 = pneg %p420
        %p1422 = scmp.lt.s32.totalorder %s72, 1
        %s1423 = scalar_select %p1422, %s72, 1
        %s1424 = smul.addr %s1423, 32
        %s1425 = smul.addr %s1424, 4
        %s1426 = scalar_lea.vmem %s14, %s1425
        %p1427 = pneg %p449
        %p1428 = pneg %p446
        %s1429 = sand.u32 %s67, 1
        %s1430 = scalar_lea.sflag [#allocation16], %s1429
        %s1431 = sand.u32 %s462, 1
        %s1432 = smul.addr %s1431, 2
        %s1433 = scalar_lea.vmem [#allocation17], %s1432
        %p1434 = pneg %p475
        %p1435 = pneg %p472
        %s1436 = sand.u32 %s67, 1
        %s1437 = scalar_lea.sflag [#allocation19], %s1436
        %s1438 = sand.u32 %s488, 1
        %s1439 = smul.addr %s1438, 64
        %s1440 = scalar_lea.vmem [#allocation18], %s1439
        %p1441 = pneg %p501
        %p1442 = pneg %p498
        %s1443 = sand.u32 %s67, 1
        %s1444 = scalar_lea.sflag [#allocation19], %s1443
        %s1445 = sand.u32 %s514, 1
        %s1446 = scalar_lea.vmem [#allocation20], %s1445
        %p1447 = pneg %p527
        %p1448 = pneg %p524
        %s1449 = sand.u32 %s67, 1
        %s1450 = scalar_lea.sflag [#allocation22], %s1449
        %s1451 = sand.u32 %s540, 1
        %s1452 = scalar_lea.vmem [#allocation21], %s1451
        %p1453 = pneg %p553
        %p1454 = pneg %p550
        %s1455 = sand.u32 %s67, 1
        %s1456 = scalar_lea.sflag [#allocation22], %s1455
        %s1457 = sand.u32 %s566, 1
        %s1458 = scalar_lea.vmem [#allocation23], %s1457
        %p1459 = pneg %p579
        %p1460 = pneg %p576
        %s1461 = sand.u32 %s67, 1
        %s1462 = scalar_lea.sflag [#allocation25], %s1461
        %s1463 = sand.u32 %s592, 1
        %s1464 = smul.addr %s1463, 128
        %s1465 = scalar_lea.vmem [#allocation24], %s1464
        %p1466 = pneg %p605
        %p1467 = pneg %p602
        %s1468 = sand.u32 %s67, 1
        %s1469 = scalar_lea.sflag [#allocation25], %s1468
        %s1470 = sand.u32 %s618, 1
        %s1471 = smul.addr %s1470, 2
        %s1472 = scalar_lea.vmem [#allocation26], %s1471
        %p1473 = pneg %p631
        %p1474 = pneg %p628
        %s1475 = sand.u32 %s67, 1
        %s1476 = scalar_lea.sflag [#allocation28], %s1475
        %s1477 = sand.u32 %s644, 1
        %s1478 = smul.addr %s1477, 128
        %s1479 = scalar_lea.vmem [#allocation27], %s1478
        %p1480 = pneg %p657
        %p1481 = pneg %p654
        %s1482 = sand.u32 %s67, 1
        %s1483 = scalar_lea.sflag [#allocation28], %s1482
        %s1484 = sand.u32 %s670, 1
        %s1485 = scalar_lea.vmem [#allocation29], %s1484
        %p1486 = pneg %p683
        %p1487 = pneg %p680
        %s1488 = sand.u32 %s67, 1
        %s1489 = scalar_lea.sflag [#allocation31], %s1488
        %s1490 = sand.u32 %s696, 1
        %s1491 = scalar_lea.vmem [#allocation30], %s1490
        %p1492 = pneg %p709
        %p1493 = pneg %p706
        %s1494 = sand.u32 %s67, 1
        %s1495 = scalar_lea.sflag [#allocation31], %s1494
        %s1496 = sand.u32 %s722, 1
        %s1497 = scalar_lea.vmem [#allocation32], %s1496
        %p1498 = pneg %p735
        %p1499 = pneg %p732
        %p1500 = pneg %p761
        %p1501 = pneg %p758
        %s1502 = smul.u32 2, %s71
        %p1503 = scmp.lt.s32.totalorder %s1502, 1
        %s1504 = scalar_select %p1503, %s1502, 1
        %s1505 = smul.addr %s1504, 4
        %s1506 = scalar_lea.vmem %s26, %s1505
        %s1507 = smul.u32 2, %s71
        %p1508 = scmp.lt.s32.totalorder %s1507, 1
        %s1509 = scalar_select %p1508, %s1507, 1
        %s1510 = smul.addr %s1509, 4
        %s1511 = scalar_lea.vmem %s0, %s1510
        %s1512 = smul.u32 2, %s71
        %s1513 = smul.u32 2, %s71
        %p1514 = scmp.lt.s32.totalorder %s1513, 1
        %s1515 = scalar_select %p1514, %s1513, 1
        %s1516 = smul.addr %s1515, 4
        %s1517 = scalar_lea.vmem %s1, %s1516
        %s1518 = smul.u32 2, %s71
        %s1519 = smul.u32 2, %s71
        %p1520 = scmp.lt.s32.totalorder %s1519, 1
        %s1521 = scalar_select %p1520, %s1519, 1
        %s1522 = scalar_lea.vmem %s2, %s1521
        %s1523 = smul.u32 2, %s71
        %p1524 = scmp.lt.s32.totalorder %s72, 1
        %s1525 = scalar_select %p1524, %s72, 1
        %s1526 = smul.addr %s1525, 32
        %s1527 = smul.addr %s1526, 4
        %s1528 = scalar_lea.vmem %s14, %s1527
        %s1529 = smul.u32 2, %s71
        %p1530 = scmp.lt.s32.totalorder %s1529, 1
        %s1531 = scalar_select %p1530, %s1529, 1
        %s1532 = smul.addr %s1531, 4
        %s1533 = scalar_lea.vmem %s26, %s1532
        %s1534 = smul.u32 2, %s71
        %p1536 = scmp.eq.s32.totalorder %s72, 0
        // Predicated region
        $region201: #{scene_branch_forward.4} parent=123 // pred_check
          %p1537 = pneg %p1536
        $region202: #{scene_branch_forward.4} parent=123 // pred_check_branch
          %1539 = sbr.rel (%p1537) target = $region204
        $region203: #{scene_branch_forward.4} parent=123 // pred_region
          %v1540 = vld [vmem:[%s1511] sm:$0xf]
          %v1541 = vld [vmem:[%s1511 + $0x4] sm:$0xf]
          %v1542 = vunpack.c.l.bf16 %v1540
          %v1543 = vunpack.c.l.bf16 %v1541
          %v1544 = vld [vmem:[%s3] sm:$0xff]
          %v1545 = vld [vmem:[%s3 + $0x8] sm:$0xff]
          %v1546 = vadd.f32 %v1542, %v1544
          %v1547 = vadd.f32 %v1543, %v1545
          %v1548 = vld [vmem:[%s4] sm:$0x1]
          %v1549 = vld [vmem:[%s5] sm:$0x1]
          %1550 = vadd.xlane.f32.xlu0 %v1546
          %v1551 = vpop.xlane.xlu0 %1550
          %1552 = vadd.xlane.f32.xlu0 %v1547
          %v1553 = vpop.xlane.xlu0 %1552
          %v1554 = vrcp.pop 128.0
          %v1555 = vmul.f32 %v1551, %v1554
          %v1556 = vmul.f32 %v1553, %v1554
          %v1557 = vsub.f32 %v1546, %v1555
          %v1558 = vsub.f32 %v1547, %v1556
          %v1559 = vmul.f32 %v1557, %v1557
          %v1560 = vmul.f32 %v1558, %v1558
          %1561 = vadd.xlane.f32.xlu0 %v1559
          %v1562 = vpop.xlane.xlu0 %1561
          %1563 = vadd.xlane.f32.xlu0 %v1560
          %v1564 = vpop.xlane.xlu0 %1563
          %v1565 = vmul.f32 %v1562, %v1554
          %v1566 = vmul.f32 %v1564, %v1554
          %v1567 = vadd.f32 %v1565, 1e-06
          %v1568 = vadd.f32 %v1566, 1e-06
          %v1569 = vrsqrt.pop %v1567
          %v1570 = vrsqrt.pop %v1568
          %v1571 = vmul.f32 %v1557, %v1569
          %v1572 = vmul.f32 %v1558, %v1570
          %v1574 = vlaneseq
          %v1575 = vshrl.u32 %v1574, 7
          %v1576 = vsub.s32 0, %v1575
          %v1577 = vrot.slane %v1548, %v1576
          %v1579 = vmul.f32 %v1571, %v1577
          %v1580 = vmul.f32 %v1572, %v1577
          %v1582 = vlaneseq
          %v1583 = vshrl.u32 %v1582, 7
          %v1584 = vsub.s32 0, %v1583
          %v1585 = vrot.slane %v1549, %v1584
          %v1587 = vadd.f32 %v1579, %v1585
          %v1588 = vadd.f32 %v1580, %v1585
          %1589 = vst [vmem:[#allocation2] sm:$0xff] %v1587
          %1590 = vst [vmem:[#allocation2 + $0x8] sm:$0xff] %v1588
        $region204: #{scene_branch_forward.4} parent=123 // pred_fallthru
          _
        %v1591 = vld [vmem:[#allocation2] sm:$0xff]
        %v1592 = vld [vmem:[#allocation2 + $0x8] sm:$0xff]
        %v1593 = vld [vmem:[%s1522] sm:$0x1]
        %v1594 = vld [vmem:[%s1522 + $0x1] sm:$0x1]
        %v1595 = vlaneseq
        %v1596 = vshrl.u32 %v1595, 7
        %v1597 = vlaneseq
        %v1598 = vand.u32 %v1597, 127
        %vm1599 = vcmp.le.s32.totalorder %v1598, %v1596
        %v1600 = vsel %vm1599, 0.0, -1e+09
        %v1601 = vld [vmem:[%s1187] sm:$0xff]
        %v1602 = vld [vmem:[%s1187 + $0x8] sm:$0xf]
        %v1603 = vld [vmem:[%s1187 + $0xc] sm:$0xff]
        %v1604 = vld [vmem:[%s1187 + $0x14] sm:$0xf]
        %v1605 = vld [vmem:[%s1187 + $0x18] sm:$0xff]
        %v1606 = vld [vmem:[%s1187 + $0x20] sm:$0xf]
        %v1607 = vld [vmem:[%s1187 + $0x24] sm:$0xff]
        %v1608 = vld [vmem:[%s1187 + $0x2c] sm:$0xf]
        %v1609 = vld [vmem:[%s1187 + $0x30] sm:$0xff]
        %v1610 = vld [vmem:[%s1187 + $0x38] sm:$0xf]
        %v1611 = vld [vmem:[%s1187 + $0x3c] sm:$0xff]
        %v1612 = vld [vmem:[%s1187 + $0x44] sm:$0xf]
        %v1613 = vld [vmem:[%s1187 + $0x48] sm:$0xff]
        %v1614 = vld [vmem:[%s1187 + $0x50] sm:$0xf]
        %v1615 = vld [vmem:[%s1187 + $0x54] sm:$0xff]
        %v1616 = vld [vmem:[%s1187 + $0x5c] sm:$0xf]
        %v1617 = vld [vmem:[%s1187 + $0x60] sm:$0xff]
        %v1618 = vld [vmem:[%s1187 + $0x68] sm:$0xf]
        %v1619 = vld [vmem:[%s1187 + $0x6c] sm:$0xff]
        %v1620 = vld [vmem:[%s1187 + $0x74] sm:$0xf]
        %v1621 = vld [vmem:[%s1187 + $0x78] sm:$0xff]
        %v1622 = vld [vmem:[%s1187 + $0x80] sm:$0xf]
        %v1623 = vld [vmem:[%s1187 + $0x84] sm:$0xff]
        %v1624 = vld [vmem:[%s1187 + $0x8c] sm:$0xf]
        %v1625 = vld [vmem:[%s1187 + $0x90] sm:$0xff]
        %v1626 = vld [vmem:[%s1187 + $0x98] sm:$0xf]
        %v1627 = vld [vmem:[%s1187 + $0x9c] sm:$0xff]
        %v1628 = vld [vmem:[%s1187 + $0xa4] sm:$0xf]
        %v1629 = vld [vmem:[%s1187 + $0xa8] sm:$0xff]
        %v1630 = vld [vmem:[%s1187 + $0xb0] sm:$0xf]
        %v1631 = vld [vmem:[%s1187 + $0xb4] sm:$0xff]
        %v1632 = vld [vmem:[%s1187 + $0xbc] sm:$0xf]
        %v1633 = vpack.c.bf16 %v1592, %v1591
        %v1634 = vld [vmem:[%s1196] sm:$0x7]
        %v1636 = vlaneseq
        %v1637 = vshrl.u32 %v1636, 7
        %v1638 = vsub.s32 0, %v1637
        %v1639 = vrot.slane %v1634, %v1638
        %v1640 = vlaneseq
        %v1641 = vshrl.u32 %v1640, 7
        %v1642 = vsub.s32 1, %v1641
        %v1643 = vrot.slane %v1634, %v1642
        %v1644 = vlaneseq
        %v1645 = vshrl.u32 %v1644, 7
        %v1646 = vsub.s32 2, %v1645
        %v1647 = vrot.slane %v1634, %v1646
        %v1683 = vunpack.c.l.b16 %v1601
        %v1684 = vunpack.c.h.b16 %v1601
        %v1685 = vunpack.c.l.b16 %v1602
        %v1686 = vunpack.c.l.b16 %v1603
        %v1687 = vunpack.c.h.b16 %v1603
        %v1688 = vunpack.c.l.b16 %v1604
        %v1689 = vunpack.c.l.b16 %v1605
        %v1690 = vunpack.c.h.b16 %v1605
        %v1691 = vunpack.c.l.b16 %v1606
        %v1692 = vunpack.c.l.b16 %v1607
        %v1693 = vunpack.c.h.b16 %v1607
        %v1694 = vunpack.c.l.b16 %v1608
        %v1695 = vunpack.c.l.b16 %v1609
        %v1696 = vunpack.c.h.b16 %v1609
        %v1697 = vunpack.c.l.b16 %v1610
        %v1698 = vunpack.c.l.b16 %v1611
        %v1699 = vunpack.c.h.b16 %v1611
        %v1700 = vunpack.c.l.b16 %v1612
        %v1701 = vunpack.c.l.b16 %v1613
        %v1702 = vunpack.c.h.b16 %v1613
        %v1703 = vunpack.c.l.b16 %v1614
        %v1704 = vunpack.c.l.b16 %v1615
        %v1705 = vunpack.c.h.b16 %v1615
        %v1706 = vunpack.c.l.b16 %v1616
        %v1707 = vunpack.c.l.b16 %v1617
        %v1708 = vunpack.c.h.b16 %v1617
        %v1709 = vunpack.c.l.b16 %v1618
        %v1710 = vunpack.c.l.b16 %v1619
        %v1711 = vunpack.c.h.b16 %v1619
        %v1712 = vunpack.c.l.b16 %v1620
        %v1713 = vunpack.c.l.b16 %v1621
        %v1714 = vunpack.c.h.b16 %v1621
        %v1715 = vunpack.c.l.b16 %v1622
        %v1716 = vunpack.c.l.b16 %v1623
        %v1717 = vunpack.c.h.b16 %v1623
        %v1718 = vunpack.c.l.b16 %v1624
        %v1719 = vunpack.c.l.b16 %v1625
        %v1720 = vunpack.c.h.b16 %v1625
        %v1721 = vunpack.c.l.b16 %v1626
        %v1722 = vunpack.c.l.b16 %v1627
        %v1723 = vunpack.c.h.b16 %v1627
        %v1724 = vunpack.c.l.b16 %v1628
        %v1725 = vunpack.c.l.b16 %v1629
        %v1726 = vunpack.c.h.b16 %v1629
        %v1727 = vunpack.c.l.b16 %v1630
        %v1728 = vunpack.c.l.b16 %v1631
        %v1729 = vunpack.c.h.b16 %v1631
        %v1730 = vunpack.c.l.b16 %v1632
        %v1731 = vpack.c.b16 %v1686, %v1683
        %v1732 = vpack.c.b16 %v1687, %v1684
        %v1733 = vpack.c.b16 %v1688, %v1685
        %v1734 = vpack.c.b16 %v1692, %v1689
        %v1735 = vpack.c.b16 %v1693, %v1690
        %v1736 = vpack.c.b16 %v1694, %v1691
        %v1737 = vpack.c.b16 %v1698, %v1695
        %v1738 = vpack.c.b16 %v1699, %v1696
        %v1739 = vpack.c.b16 %v1700, %v1697
        %v1740 = vpack.c.b16 %v1704, %v1701
        %v1741 = vpack.c.b16 %v1705, %v1702
        %v1742 = vpack.c.b16 %v1706, %v1703
        %v1743 = vpack.c.b16 %v1710, %v1707
        %v1744 = vpack.c.b16 %v1711, %v1708
        %v1745 = vpack.c.b16 %v1712, %v1709
        %v1746 = vpack.c.b16 %v1716, %v1713
        %v1747 = vpack.c.b16 %v1717, %v1714
        %v1748 = vpack.c.b16 %v1718, %v1715
        %v1749 = vpack.c.b16 %v1722, %v1719
        %v1750 = vpack.c.b16 %v1723, %v1720
        %v1751 = vpack.c.b16 %v1724, %v1721
        %v1752 = vpack.c.b16 %v1728, %v1725
        %v1753 = vpack.c.b16 %v1729, %v1726
        %v1754 = vpack.c.b16 %v1730, %v1727
        %1779 = vmatprep.subr.bf16.mxu0 %v1732
        %1780 = vmatpush1.bf16.msra.mxu0 %v1731
        %1781 = vmatprep.subr.bf16.mxu0 %v1735
        %1782 = vmatpush1.bf16.msra.mxu0 %v1734
        %1783 = vmatprep.subr.bf16.mxu0 %v1738
        %1784 = vmatpush1.bf16.msra.mxu0 %v1737
        %1785 = vmatprep.subr.bf16.mxu0 %v1741
        %1786 = vmatpush1.bf16.msra.mxu0 %v1740
        %1787 = vmatprep.subr.bf16.mxu0 %v1744
        %1788 = vmatpush1.bf16.msra.mxu0 %v1743
        %1789 = vmatprep.subr.bf16.mxu0 %v1747
        %1790 = vmatpush1.bf16.msra.mxu0 %v1746
        %1791 = vmatprep.subr.bf16.mxu0 %v1750
        %1792 = vmatpush1.bf16.msra.mxu0 %v1749
        %1793 = vmatprep.subr.bf16.mxu0 %v1753
        %1794 = vmatpush1.bf16.msra.mxu0 %v1752
        %1795 = vmatprep.subr.bf16.mxu0 0
        %1796 = vmatpush1.bf16.msra.mxu0 0
        %1797 = vmatprep.subr.bf16.mxu0 0
        %1798 = vmatpush1.bf16.msra.mxu0 0
        %1799 = vmatprep.subr.bf16.mxu0 0
        %1800 = vmatpush1.bf16.msra.mxu0 0
        %1801 = vmatprep.subr.bf16.mxu0 0
        %1802 = vmatpush1.bf16.msra.mxu0 0
        %1803 = vmatprep.subr.bf16.mxu0 0
        %1804 = vmatpush1.bf16.msra.mxu0 0
        %1805 = vmatprep.subr.bf16.mxu0 0
        %1806 = vmatpush1.bf16.msra.mxu0 0
        %1807 = vmatprep.subr.bf16.mxu0 0
        %1808 = vmatpush1.bf16.msra.mxu0 0
        %1809 = vmatprep.subr.bf16.mxu0 0
        %1810 = vmatpush1.bf16.msra.mxu0 0
        %1811 = vmatprep.mubr.bf16.mxu0 0
        %1812 = vmatmul.mubr.bf16.gmra.mrb[0].mxu0 %v1633
        %v1813 = vpop.f32.mrb[0].mxu0
        %v1814 = vadd.f32 %v1639, %v1813
        %v1815 = vpop.f32.mrb[0].mxu0
        %v1816 = vadd.f32 %v1643, %v1815
        %v1817 = vpop.f32.mrb[0].mxu0
        %v1818 = vadd.f32 %v1639, %v1817
        %v1819 = vpop.f32.mrb[0].mxu0
        %v1820 = vadd.f32 %v1643, %v1819
        %1821 = vdwg.mxu0
        %1822 = vmatprep.subr.bf16.mxu0 0
        %1823 = vmatpush1.bf16.msra.mxu0 %v1733
        %1824 = vmatprep.subr.bf16.mxu0 0
        %1825 = vmatpush1.bf16.msra.mxu0 %v1736
        %1826 = vmatprep.subr.bf16.mxu0 0
        %1827 = vmatpush1.bf16.msra.mxu0 %v1739
        %1828 = vmatprep.subr.bf16.mxu0 0
        %1829 = vmatpush1.bf16.msra.mxu0 %v1742
        %1830 = vmatprep.subr.bf16.mxu0 0
        %1831 = vmatpush1.bf16.msra.mxu0 %v1745
        %1832 = vmatprep.subr.bf16.mxu0 0
        %1833 = vmatpush1.bf16.msra.mxu0 %v1748
        %1834 = vmatprep.subr.bf16.mxu0 0
        %1835 = vmatpush1.bf16.msra.mxu0 %v1751
        %1836 = vmatprep.subr.bf16.mxu0 0
        %1837 = vmatpush1.bf16.msra.mxu0 %v1754
        %1838 = vmatprep.subr.bf16.mxu0 0
        %1839 = vmatpush1.bf16.msra.mxu0 0
        %1840 = vmatprep.subr.bf16.mxu0 0
        %1841 = vmatpush1.bf16.msra.mxu0 0
        %1842 = vmatprep.subr.bf16.mxu0 0
        %1843 = vmatpush1.bf16.msra.mxu0 0
        %1844 = vmatprep.subr.bf16.mxu0 0
        %1845 = vmatpush1.bf16.msra.mxu0 0
        %1846 = vmatprep.subr.bf16.mxu0 0
        %1847 = vmatpush1.bf16.msra.mxu0 0
        %1848 = vmatprep.subr.bf16.mxu0 0
        %1849 = vmatpush1.bf16.msra.mxu0 0
        %1850 = vmatprep.subr.bf16.mxu0 0
        %1851 = vmatpush1.bf16.msra.mxu0 0
        %1852 = vmatprep.subr.bf16.mxu0 0
        %1853 = vmatpush1.bf16.msra.mxu0 0
        %1854 = vmatprep.mubr.bf16.mxu0 0
        %1855 = vmatmul.mubr.bf16.gmra.mrb[0].mxu0 %v1633
        %v1856 = vpop.f32.mrb[0].mxu0
        %v1857 = vadd.f32 %v1647, %v1856
        %v1858 = vpop.f32.mrb[0].mxu0
        %v1859 = vpop.f32.mrb[0].mxu0
        %v1860 = vadd.f32 %v1647, %v1859
        %v1861 = vpop.f32.mrb[0].mxu0
        %1862 = vdwg.mxu0
        %v1864 = vlaneseq
        %v1865 = vshrl.u32 %v1864, 7
        %v1866 = vsub.s32 0, %v1865
        %v1867 = vrot.slane %v1593, %v1866
        %v1869 = vadd.f32 %v1600, %v1867
        %v1871 = vlaneseq
        %v1872 = vshrl.u32 %v1871, 7
        %v1873 = vsub.s32 0, %v1872
        %v1874 = vrot.slane %v1594, %v1873
        %v1876 = vadd.f32 %v1600, %v1874
        %v1877 = vmul.f32 %v1814, 0.17677669
        %v1878 = vpack.c.bf16 %v1877, %v1877
        %v1879 = vpack.c.bf16 %v1816, %v1816
        %v1880 = vpack.c.bf16 %v1857, %v1857
        %vm1881 = vcmask 261120
        %v1883 = vsel %vm1881, %v1878, 0
        %v1886 = vsel %vm1881, %v1879, 0
        %1888 = vmatprep.subr.bf16.mxu0 0
        %1889 = vmatpush1.bf16.xpose.msra.mxu0 %v1886
        %1890 = vmatprep.subr.bf16.mxu0 0
        %1891 = vmatpush1.bf16.xpose.msra.mxu0 0
        %1892 = vmatprep.subr.bf16.mxu0 0
        %1893 = vmatpush1.bf16.xpose.msra.mxu0 0
        %1894 = vmatprep.subr.bf16.mxu0 0
        %1895 = vmatpush1.bf16.xpose.msra.mxu0 0
        %1896 = vmatprep.subr.bf16.mxu0 0
        %1897 = vmatpush1.bf16.xpose.msra.mxu0 0
        %1898 = vmatprep.subr.bf16.mxu0 0
        %1899 = vmatpush1.bf16.xpose.msra.mxu0 0
        %1900 = vmatprep.subr.bf16.mxu0 0
        %1901 = vmatpush1.bf16.xpose.msra.mxu0 0
        %1902 = vmatprep.subr.bf16.mxu0 0
        %1903 = vmatpush1.bf16.xpose.msra.mxu0 0
        %1904 = vmatprep.subr.bf16.mxu0 0
        %1905 = vmatpush1.bf16.xpose.msra.mxu0 0
        %1906 = vmatprep.subr.bf16.mxu0 0
        %1907 = vmatpush1.bf16.xpose.msra.mxu0 0
        %1908 = vmatprep.subr.bf16.mxu0 0
        %1909 = vmatpush1.bf16.xpose.msra.mxu0 0
        %1910 = vmatprep.subr.bf16.mxu0 0
        %1911 = vmatpush1.bf16.xpose.msra.mxu0 0
        %1912 = vmatprep.subr.bf16.mxu0 0
        %1913 = vmatpush1.bf16.xpose.msra.mxu0 0
        %1914 = vmatprep.subr.bf16.mxu0 0
        %1915 = vmatpush1.bf16.xpose.msra.mxu0 0
        %1916 = vmatprep.subr.bf16.mxu0 0
        %1917 = vmatpush1.bf16.xpose.msra.mxu0 0
        %1918 = vmatprep.subr.bf16.mxu0 0
        %1919 = vmatpush1.bf16.xpose.msra.mxu0 0
        %1920 = vmatprep.mubr.bf16.mxu0 0
        %1921 = vmatmul.mubr.bf16.gmra.mrb[0].mxu0 %v1883
        %v1922 = vpop.f32.mrb[0].mxu0
        %v1923 = vadd.f32 %v1869, %v1922
        %v1924 = vpop.f32.mrb[0].mxu0
        %v1925 = vpop.f32.mrb[0].mxu0
        %v1926 = vpop.f32.mrb[0].mxu0
        %1927 = vdwg.mxu0
        %vm1928 = vcmask 64512
        %v1929 = vsel %vm1928, %v1923, -inf
        %1930 = vmax.xlane.f32.xlu0 %v1929
        %v1931 = vpop.xlane.xlu0 %1930
        %v1932 = vsub.f32 %v1923, %v1931
        %v1933 = vmul.f32 %v1932, 1.442695
        %v1934 = vpow.pop %v1933
        %v1935 = vsel %vm1928, %v1934, 0.0
        %1936 = vadd.xlane.f32.xlu0 %v1935
        %v1937 = vpop.xlane.xlu0 %1936
        %v1938 = vrcp.pop %v1937
        %v1939 = vmul.f32 %v1934, %v1938
        %v1940 = vpack.c.bf16 %v1939, %v1939
        %v1942 = vsel %vm1928, %v1940, 0
        %vm1944 = vcmask 1043456
        %v1946 = vsel %vm1944, %v1880, 0
        %1948 = vmatprep.subr.bf16.mxu0 0
        %1949 = vmatpush1.bf16.msra.mxu0 %v1946
        %1950 = vmatprep.subr.bf16.mxu0 0
        %1951 = vmatpush1.bf16.msra.mxu0 0
        %1952 = vmatprep.subr.bf16.mxu0 0
        %1953 = vmatpush1.bf16.msra.mxu0 0
        %1954 = vmatprep.subr.bf16.mxu0 0
        %1955 = vmatpush1.bf16.msra.mxu0 0
        %1956 = vmatprep.subr.bf16.mxu0 0
        %1957 = vmatpush1.bf16.msra.mxu0 0
        %1958 = vmatprep.subr.bf16.mxu0 0
        %1959 = vmatpush1.bf16.msra.mxu0 0
        %1960 = vmatprep.subr.bf16.mxu0 0
        %1961 = vmatpush1.bf16.msra.mxu0 0
        %1962 = vmatprep.subr.bf16.mxu0 0
        %1963 = vmatpush1.bf16.msra.mxu0 0
        %1964 = vmatprep.subr.bf16.mxu0 0
        %1965 = vmatpush1.bf16.msra.mxu0 0
        %1966 = vmatprep.subr.bf16.mxu0 0
        %1967 = vmatpush1.bf16.msra.mxu0 0
        %1968 = vmatprep.subr.bf16.mxu0 0
        %1969 = vmatpush1.bf16.msra.mxu0 0
        %1970 = vmatprep.subr.bf16.mxu0 0
        %1971 = vmatpush1.bf16.msra.mxu0 0
        %1972 = vmatprep.subr.bf16.mxu0 0
        %1973 = vmatpush1.bf16.msra.mxu0 0
        %1974 = vmatprep.subr.bf16.mxu0 0
        %1975 = vmatpush1.bf16.msra.mxu0 0
        %1976 = vmatprep.subr.bf16.mxu0 0
        %1977 = vmatpush1.bf16.msra.mxu0 0
        %1978 = vmatprep.subr.bf16.mxu0 0
        %1979 = vmatpush1.bf16.msra.mxu0 0
        %1980 = vmatprep.mubr.bf16.mxu0 0
        %1981 = vmatmul.mubr.bf16.gmra.mrb[0].mxu0 %v1942
        %v1982 = vpop.f32.mrb[0].mxu0
        %v1983 = vadd.f32 0.0, %v1982
        %v1984 = vpop.f32.mrb[0].mxu0
        %v1985 = vpop.f32.mrb[0].mxu0
        %v1986 = vpop.f32.mrb[0].mxu0
        %1987 = vdwg.mxu0
        %1988 = vst.msk [vmem:[#allocation3] sm:$0xff] %vm1881, %v1983
        %1990 = vrot.lane.b32.xlu0 %v1878, 96
        %v1991 = vpop.permute.xlu0 %1990
        %1993 = vrot.lane.b32.xlu0 %v1879, 96
        %v1994 = vpop.permute.xlu0 %1993
        %v1996 = vsel %vm1881, %v1991, 0
        %v1999 = vsel %vm1881, %v1994, 0
        %2001 = vmatprep.subr.bf16.mxu0 0
        %2002 = vmatpush1.bf16.xpose.msra.mxu0 %v1999
        %2003 = vmatprep.subr.bf16.mxu0 0
        %2004 = vmatpush1.bf16.xpose.msra.mxu0 0
        %2005 = vmatprep.subr.bf16.mxu0 0
        %2006 = vmatpush1.bf16.xpose.msra.mxu0 0
        %2007 = vmatprep.subr.bf16.mxu0 0
        %2008 = vmatpush1.bf16.xpose.msra.mxu0 0
        %2009 = vmatprep.subr.bf16.mxu0 0
        %2010 = vmatpush1.bf16.xpose.msra.mxu0 0
        %2011 = vmatprep.subr.bf16.mxu0 0
        %2012 = vmatpush1.bf16.xpose.msra.mxu0 0
        %2013 = vmatprep.subr.bf16.mxu0 0
        %2014 = vmatpush1.bf16.xpose.msra.mxu0 0
        %2015 = vmatprep.subr.bf16.mxu0 0
        %2016 = vmatpush1.bf16.xpose.msra.mxu0 0
        %2017 = vmatprep.subr.bf16.mxu0 0
        %2018 = vmatpush1.bf16.xpose.msra.mxu0 0
        %2019 = vmatprep.subr.bf16.mxu0 0
        %2020 = vmatpush1.bf16.xpose.msra.mxu0 0
        %2021 = vmatprep.subr.bf16.mxu0 0
        %2022 = vmatpush1.bf16.xpose.msra.mxu0 0
        %2023 = vmatprep.subr.bf16.mxu0 0
        %2024 = vmatpush1.bf16.xpose.msra.mxu0 0
        %2025 = vmatprep.subr.bf16.mxu0 0
        %2026 = vmatpush1.bf16.xpose.msra.mxu0 0
        %2027 = vmatprep.subr.bf16.mxu0 0
        %2028 = vmatpush1.bf16.xpose.msra.mxu0 0
        %2029 = vmatprep.subr.bf16.mxu0 0
        %2030 = vmatpush1.bf16.xpose.msra.mxu0 0
        %2031 = vmatprep.subr.bf16.mxu0 0
        %2032 = vmatpush1.bf16.xpose.msra.mxu0 0
        %2033 = vmatprep.mubr.bf16.mxu0 0
        %2034 = vmatmul.mubr.bf16.gmra.mrb[0].mxu0 %v1996
        %v2035 = vpop.f32.mrb[0].mxu0
        %v2036 = vadd.f32 %v1869, %v2035
        %v2037 = vpop.f32.mrb[0].mxu0
        %v2038 = vpop.f32.mrb[0].mxu0
        %v2039 = vpop.f32.mrb[0].mxu0
        %2040 = vdwg.mxu0
        %v2041 = vsel %vm1928, %v2036, -inf
        %2042 = vmax.xlane.f32.xlu0 %v2041
        %v2043 = vpop.xlane.xlu0 %2042
        %v2044 = vsub.f32 %v2036, %v2043
        %v2045 = vmul.f32 %v2044, 1.442695
        %v2046 = vpow.pop %v2045
        %v2047 = vsel %vm1928, %v2046, 0.0
        %2048 = vadd.xlane.f32.xlu0 %v2047
        %v2049 = vpop.xlane.xlu0 %2048
        %v2050 = vrcp.pop %v2049
        %v2051 = vmul.f32 %v2046, %v2050
        %v2052 = vpack.c.bf16 %v2051, %v2051
        %2054 = vrot.lane.b32.xlu0 %v1880, 96
        %v2055 = vpop.permute.xlu0 %2054
        %v2057 = vsel %vm1928, %v2052, 0
        %v2060 = vsel %vm1944, %v2055, 0
        %2062 = vmatprep.subr.bf16.mxu0 0
        %2063 = vmatpush1.bf16.msra.mxu0 %v2060
        %2064 = vmatprep.subr.bf16.mxu0 0
        %2065 = vmatpush1.bf16.msra.mxu0 0
        %2066 = vmatprep.subr.bf16.mxu0 0
        %2067 = vmatpush1.bf16.msra.mxu0 0
        %2068 = vmatprep.subr.bf16.mxu0 0
        %2069 = vmatpush1.bf16.msra.mxu0 0
        %2070 = vmatprep.subr.bf16.mxu0 0
        %2071 = vmatpush1.bf16.msra.mxu0 0
        %2072 = vmatprep.subr.bf16.mxu0 0
        %2073 = vmatpush1.bf16.msra.mxu0 0
        %2074 = vmatprep.subr.bf16.mxu0 0
        %2075 = vmatpush1.bf16.msra.mxu0 0
        %2076 = vmatprep.subr.bf16.mxu0 0
        %2077 = vmatpush1.bf16.msra.mxu0 0
        %2078 = vmatprep.subr.bf16.mxu0 0
        %2079 = vmatpush1.bf16.msra.mxu0 0
        %2080 = vmatprep.subr.bf16.mxu0 0
        %2081 = vmatpush1.bf16.msra.mxu0 0
        %2082 = vmatprep.subr.bf16.mxu0 0
        %2083 = vmatpush1.bf16.msra.mxu0 0
        %2084 = vmatprep.subr.bf16.mxu0 0
        %2085 = vmatpush1.bf16.msra.mxu0 0
        %2086 = vmatprep.subr.bf16.mxu0 0
        %2087 = vmatpush1.bf16.msra.mxu0 0
        %2088 = vmatprep.subr.bf16.mxu0 0
        %2089 = vmatpush1.bf16.msra.mxu0 0
        %2090 = vmatprep.subr.bf16.mxu0 0
        %2091 = vmatpush1.bf16.msra.mxu0 0
        %2092 = vmatprep.subr.bf16.mxu0 0
        %2093 = vmatpush1.bf16.msra.mxu0 0
        %2094 = vmatprep.mubr.bf16.mxu0 0
        %2095 = vmatmul.mubr.bf16.gmra.mrb[0].mxu0 %v2057
        %v2096 = vpop.f32.mrb[0].mxu0
        %v2097 = vadd.f32 0.0, %v2096
        %v2098 = vpop.f32.mrb[0].mxu0
        %v2099 = vpop.f32.mrb[0].mxu0
        %v2100 = vpop.f32.mrb[0].mxu0
        %2101 = vdwg.mxu0
        %2103 = vrot.lane.b32.xlu0 %v2097, 32
        %v2104 = vpop.permute.xlu0 %2103
        %vm2106 = vcmask 523520
        %2107 = vst.msk [vmem:[#allocation3] sm:$0xff] %vm2106, %v2104
        %2108 = vrot.lane.b32.xlu0 %v1878, 64
        %v2109 = vpop.permute.xlu0 %2108
        %2110 = vrot.lane.b32.xlu0 %v1879, 64
        %v2111 = vpop.permute.xlu0 %2110
        %v2113 = vsel %vm1881, %v2109, 0
        %v2116 = vsel %vm1881, %v2111, 0
        %2118 = vmatprep.subr.bf16.mxu0 0
        %2119 = vmatpush1.bf16.xpose.msra.mxu0 %v2116
        %2120 = vmatprep.subr.bf16.mxu0 0
        %2121 = vmatpush1.bf16.xpose.msra.mxu0 0
        %2122 = vmatprep.subr.bf16.mxu0 0
        %2123 = vmatpush1.bf16.xpose.msra.mxu0 0
        %2124 = vmatprep.subr.bf16.mxu0 0
        %2125 = vmatpush1.bf16.xpose.msra.mxu0 0
        %2126 = vmatprep.subr.bf16.mxu0 0
        %2127 = vmatpush1.bf16.xpose.msra.mxu0 0
        %2128 = vmatprep.subr.bf16.mxu0 0
        %2129 = vmatpush1.bf16.xpose.msra.mxu0 0
        %2130 = vmatprep.subr.bf16.mxu0 0
        %2131 = vmatpush1.bf16.xpose.msra.mxu0 0
        %2132 = vmatprep.subr.bf16.mxu0 0
        %2133 = vmatpush1.bf16.xpose.msra.mxu0 0
        %2134 = vmatprep.subr.bf16.mxu0 0
        %2135 = vmatpush1.bf16.xpose.msra.mxu0 0
        %2136 = vmatprep.subr.bf16.mxu0 0
        %2137 = vmatpush1.bf16.xpose.msra.mxu0 0
        %2138 = vmatprep.subr.bf16.mxu0 0
        %2139 = vmatpush1.bf16.xpose.msra.mxu0 0
        %2140 = vmatprep.subr.bf16.mxu0 0
        %2141 = vmatpush1.bf16.xpose.msra.mxu0 0
        %2142 = vmatprep.subr.bf16.mxu0 0
        %2143 = vmatpush1.bf16.xpose.msra.mxu0 0
        %2144 = vmatprep.subr.bf16.mxu0 0
        %2145 = vmatpush1.bf16.xpose.msra.mxu0 0
        %2146 = vmatprep.subr.bf16.mxu0 0
        %2147 = vmatpush1.bf16.xpose.msra.mxu0 0
        %2148 = vmatprep.subr.bf16.mxu0 0
        %2149 = vmatpush1.bf16.xpose.msra.mxu0 0
        %2150 = vmatprep.mubr.bf16.mxu0 0
        %2151 = vmatmul.mubr.bf16.gmra.mrb[0].mxu0 %v2113
        %v2152 = vpop.f32.mrb[0].mxu0
        %v2153 = vadd.f32 %v1869, %v2152
        %v2154 = vpop.f32.mrb[0].mxu0
        %v2155 = vpop.f32.mrb[0].mxu0
        %v2156 = vpop.f32.mrb[0].mxu0
        %2157 = vdwg.mxu0
        %v2158 = vsel %vm1928, %v2153, -inf
        %2159 = vmax.xlane.f32.xlu0 %v2158
        %v2160 = vpop.xlane.xlu0 %2159
        %v2161 = vsub.f32 %v2153, %v2160
        %v2162 = vmul.f32 %v2161, 1.442695
        %v2163 = vpow.pop %v2162
        %v2164 = vsel %vm1928, %v2163, 0.0
        %2165 = vadd.xlane.f32.xlu0 %v2164
        %v2166 = vpop.xlane.xlu0 %2165
        %v2167 = vrcp.pop %v2166
        %v2168 = vmul.f32 %v2163, %v2167
        %v2169 = vpack.c.bf16 %v2168, %v2168
        %2170 = vrot.lane.b32.xlu0 %v1880, 64
        %v2171 = vpop.permute.xlu0 %2170
        %v2173 = vsel %vm1928, %v2169, 0
        %v2176 = vsel %vm1944, %v2171, 0
        %2178 = vmatprep.subr.bf16.mxu0 0
        %2179 = vmatpush1.bf16.msra.mxu0 %v2176
        %2180 = vmatprep.subr.bf16.mxu0 0
        %2181 = vmatpush1.bf16.msra.mxu0 0
        %2182 = vmatprep.subr.bf16.mxu0 0
        %2183 = vmatpush1.bf16.msra.mxu0 0
        %2184 = vmatprep.subr.bf16.mxu0 0
        %2185 = vmatpush1.bf16.msra.mxu0 0
        %2186 = vmatprep.subr.bf16.mxu0 0
        %2187 = vmatpush1.bf16.msra.mxu0 0
        %2188 = vmatprep.subr.bf16.mxu0 0
        %2189 = vmatpush1.bf16.msra.mxu0 0
        %2190 = vmatprep.subr.bf16.mxu0 0
        %2191 = vmatpush1.bf16.msra.mxu0 0
        %2192 = vmatprep.subr.bf16.mxu0 0
        %2193 = vmatpush1.bf16.msra.mxu0 0
        %2194 = vmatprep.subr.bf16.mxu0 0
        %2195 = vmatpush1.bf16.msra.mxu0 0
        %2196 = vmatprep.subr.bf16.mxu0 0
        %2197 = vmatpush1.bf16.msra.mxu0 0
        %2198 = vmatprep.subr.bf16.mxu0 0
        %2199 = vmatpush1.bf16.msra.mxu0 0
        %2200 = vmatprep.subr.bf16.mxu0 0
        %2201 = vmatpush1.bf16.msra.mxu0 0
        %2202 = vmatprep.subr.bf16.mxu0 0
        %2203 = vmatpush1.bf16.msra.mxu0 0
        %2204 = vmatprep.subr.bf16.mxu0 0
        %2205 = vmatpush1.bf16.msra.mxu0 0
        %2206 = vmatprep.subr.bf16.mxu0 0
        %2207 = vmatpush1.bf16.msra.mxu0 0
        %2208 = vmatprep.subr.bf16.mxu0 0
        %2209 = vmatpush1.bf16.msra.mxu0 0
        %2210 = vmatprep.mubr.bf16.mxu0 0
        %2211 = vmatmul.mubr.bf16.gmra.mrb[0].mxu0 %v2173
        %v2212 = vpop.f32.mrb[0].mxu0
        %v2213 = vadd.f32 0.0, %v2212
        %v2214 = vpop.f32.mrb[0].mxu0
        %v2215 = vpop.f32.mrb[0].mxu0
        %v2216 = vpop.f32.mrb[0].mxu0
        %2217 = vdwg.mxu0
        %2219 = vrot.lane.b32.xlu0 %v2213, 64
        %v2220 = vpop.permute.xlu0 %2219
        %vm2222 = vcmask 785920
        %2223 = vst.msk [vmem:[#allocation3] sm:$0xff] %vm2222, %v2220
        %2224 = vrot.lane.b32.xlu0 %v1878, 32
        %v2225 = vpop.permute.xlu0 %2224
        %2226 = vrot.lane.b32.xlu0 %v1879, 32
        %v2227 = vpop.permute.xlu0 %2226
        %v2229 = vsel %vm1881, %v2225, 0
        %v2232 = vsel %vm1881, %v2227, 0
        %2234 = vmatprep.subr.bf16.mxu0 0
        %2235 = vmatpush1.bf16.xpose.msra.mxu0 %v2232
        %2236 = vmatprep.subr.bf16.mxu0 0
        %2237 = vmatpush1.bf16.xpose.msra.mxu0 0
        %2238 = vmatprep.subr.bf16.mxu0 0
        %2239 = vmatpush1.bf16.xpose.msra.mxu0 0
        %2240 = vmatprep.subr.bf16.mxu0 0
        %2241 = vmatpush1.bf16.xpose.msra.mxu0 0
        %2242 = vmatprep.subr.bf16.mxu0 0
        %2243 = vmatpush1.bf16.xpose.msra.mxu0 0
        %2244 = vmatprep.subr.bf16.mxu0 0
        %2245 = vmatpush1.bf16.xpose.msra.mxu0 0
        %2246 = vmatprep.subr.bf16.mxu0 0
        %2247 = vmatpush1.bf16.xpose.msra.mxu0 0
        %2248 = vmatprep.subr.bf16.mxu0 0
        %2249 = vmatpush1.bf16.xpose.msra.mxu0 0
        %2250 = vmatprep.subr.bf16.mxu0 0
        %2251 = vmatpush1.bf16.xpose.msra.mxu0 0
        %2252 = vmatprep.subr.bf16.mxu0 0
        %2253 = vmatpush1.bf16.xpose.msra.mxu0 0
        %2254 = vmatprep.subr.bf16.mxu0 0
        %2255 = vmatpush1.bf16.xpose.msra.mxu0 0
        %2256 = vmatprep.subr.bf16.mxu0 0
        %2257 = vmatpush1.bf16.xpose.msra.mxu0 0
        %2258 = vmatprep.subr.bf16.mxu0 0
        %2259 = vmatpush1.bf16.xpose.msra.mxu0 0
        %2260 = vmatprep.subr.bf16.mxu0 0
        %2261 = vmatpush1.bf16.xpose.msra.mxu0 0
        %2262 = vmatprep.subr.bf16.mxu0 0
        %2263 = vmatpush1.bf16.xpose.msra.mxu0 0
        %2264 = vmatprep.subr.bf16.mxu0 0
        %2265 = vmatpush1.bf16.xpose.msra.mxu0 0
        %2266 = vmatprep.mubr.bf16.mxu0 0
        %2267 = vmatmul.mubr.bf16.gmra.mrb[0].mxu0 %v2229
        %v2268 = vpop.f32.mrb[0].mxu0
        %v2269 = vadd.f32 %v1869, %v2268
        %v2270 = vpop.f32.mrb[0].mxu0
        %v2271 = vpop.f32.mrb[0].mxu0
        %v2272 = vpop.f32.mrb[0].mxu0
        %2273 = vdwg.mxu0
        %v2274 = vsel %vm1928, %v2269, -inf
        %2275 = vmax.xlane.f32.xlu0 %v2274
        %v2276 = vpop.xlane.xlu0 %2275
        %v2277 = vsub.f32 %v2269, %v2276
        %v2278 = vmul.f32 %v2277, 1.442695
        %v2279 = vpow.pop %v2278
        %v2280 = vsel %vm1928, %v2279, 0.0
        %2281 = vadd.xlane.f32.xlu0 %v2280
        %v2282 = vpop.xlane.xlu0 %2281
        %v2283 = vrcp.pop %v2282
        %v2284 = vmul.f32 %v2279, %v2283
        %v2285 = vpack.c.bf16 %v2284, %v2284
        %2286 = vrot.lane.b32.xlu0 %v1880, 32
        %v2287 = vpop.permute.xlu0 %2286
        %v2289 = vsel %vm1928, %v2285, 0
        %v2292 = vsel %vm1944, %v2287, 0
        %2294 = vmatprep.subr.bf16.mxu0 0
        %2295 = vmatpush1.bf16.msra.mxu0 %v2292
        %2296 = vmatprep.subr.bf16.mxu0 0
        %2297 = vmatpush1.bf16.msra.mxu0 0
        %2298 = vmatprep.subr.bf16.mxu0 0
        %2299 = vmatpush1.bf16.msra.mxu0 0
        %2300 = vmatprep.subr.bf16.mxu0 0
        %2301 = vmatpush1.bf16.msra.mxu0 0
        %2302 = vmatprep.subr.bf16.mxu0 0
        %2303 = vmatpush1.bf16.msra.mxu0 0
        %2304 = vmatprep.subr.bf16.mxu0 0
        %2305 = vmatpush1.bf16.msra.mxu0 0
        %2306 = vmatprep.subr.bf16.mxu0 0
        %2307 = vmatpush1.bf16.msra.mxu0 0
        %2308 = vmatprep.subr.bf16.mxu0 0
        %2309 = vmatpush1.bf16.msra.mxu0 0
        %2310 = vmatprep.subr.bf16.mxu0 0
        %2311 = vmatpush1.bf16.msra.mxu0 0
        %2312 = vmatprep.subr.bf16.mxu0 0
        %2313 = vmatpush1.bf16.msra.mxu0 0
        %2314 = vmatprep.subr.bf16.mxu0 0
        %2315 = vmatpush1.bf16.msra.mxu0 0
        %2316 = vmatprep.subr.bf16.mxu0 0
        %2317 = vmatpush1.bf16.msra.mxu0 0
        %2318 = vmatprep.subr.bf16.mxu0 0
        %2319 = vmatpush1.bf16.msra.mxu0 0
        %2320 = vmatprep.subr.bf16.mxu0 0
        %2321 = vmatpush1.bf16.msra.mxu0 0
        %2322 = vmatprep.subr.bf16.mxu0 0
        %2323 = vmatpush1.bf16.msra.mxu0 0
        %2324 = vmatprep.subr.bf16.mxu0 0
        %2325 = vmatpush1.bf16.msra.mxu0 0
        %2326 = vmatprep.mubr.bf16.mxu0 0
        %2327 = vmatmul.mubr.bf16.gmra.mrb[0].mxu0 %v2289
        %v2328 = vpop.f32.mrb[0].mxu0
        %v2329 = vadd.f32 0.0, %v2328
        %v2330 = vpop.f32.mrb[0].mxu0
        %v2331 = vpop.f32.mrb[0].mxu0
        %v2332 = vpop.f32.mrb[0].mxu0
        %2333 = vdwg.mxu0
        %2335 = vrot.lane.b32.xlu0 %v2329, 96
        %v2336 = vpop.permute.xlu0 %2335
        %vm2338 = vcmask 1048320
        %2339 = vst.msk [vmem:[#allocation3] sm:$0xff] %vm2338, %v2336
        %v2340 = vmul.f32 %v1818, 0.17677669
        %v2341 = vpack.c.bf16 %v2340, %v2340
        %v2342 = vpack.c.bf16 %v1820, %v1820
        %v2343 = vpack.c.bf16 %v1860, %v1860
        %v2345 = vsel %vm1881, %v2341, 0
        %v2348 = vsel %vm1881, %v2342, 0
        %2350 = vmatprep.subr.bf16.mxu0 0
        %2351 = vmatpush1.bf16.xpose.msra.mxu0 %v2348
        %2352 = vmatprep.subr.bf16.mxu0 0
        %2353 = vmatpush1.bf16.xpose.msra.mxu0 0
        %2354 = vmatprep.subr.bf16.mxu0 0
        %2355 = vmatpush1.bf16.xpose.msra.mxu0 0
        %2356 = vmatprep.subr.bf16.mxu0 0
        %2357 = vmatpush1.bf16.xpose.msra.mxu0 0
        %2358 = vmatprep.subr.bf16.mxu0 0
        %2359 = vmatpush1.bf16.xpose.msra.mxu0 0
        %2360 = vmatprep.subr.bf16.mxu0 0
        %2361 = vmatpush1.bf16.xpose.msra.mxu0 0
        %2362 = vmatprep.subr.bf16.mxu0 0
        %2363 = vmatpush1.bf16.xpose.msra.mxu0 0
        %2364 = vmatprep.subr.bf16.mxu0 0
        %2365 = vmatpush1.bf16.xpose.msra.mxu0 0
        %2366 = vmatprep.subr.bf16.mxu0 0
        %2367 = vmatpush1.bf16.xpose.msra.mxu0 0
        %2368 = vmatprep.subr.bf16.mxu0 0
        %2369 = vmatpush1.bf16.xpose.msra.mxu0 0
        %2370 = vmatprep.subr.bf16.mxu0 0
        %2371 = vmatpush1.bf16.xpose.msra.mxu0 0
        %2372 = vmatprep.subr.bf16.mxu0 0
        %2373 = vmatpush1.bf16.xpose.msra.mxu0 0
        %2374 = vmatprep.subr.bf16.mxu0 0
        %2375 = vmatpush1.bf16.xpose.msra.mxu0 0
        %2376 = vmatprep.subr.bf16.mxu0 0
        %2377 = vmatpush1.bf16.xpose.msra.mxu0 0
        %2378 = vmatprep.subr.bf16.mxu0 0
        %2379 = vmatpush1.bf16.xpose.msra.mxu0 0
        %2380 = vmatprep.subr.bf16.mxu0 0
        %2381 = vmatpush1.bf16.xpose.msra.mxu0 0
        %2382 = vmatprep.mubr.bf16.mxu0 0
        %2383 = vmatmul.mubr.bf16.gmra.mrb[0].mxu0 %v2345
        %v2384 = vpop.f32.mrb[0].mxu0
        %v2385 = vadd.f32 %v1876, %v2384
        %v2386 = vpop.f32.mrb[0].mxu0
        %v2387 = vpop.f32.mrb[0].mxu0
        %v2388 = vpop.f32.mrb[0].mxu0
        %2389 = vdwg.mxu0
        %v2390 = vsel %vm1928, %v2385, -inf
        %2391 = vmax.xlane.f32.xlu0 %v2390
        %v2392 = vpop.xlane.xlu0 %2391
        %v2393 = vsub.f32 %v2385, %v2392
        %v2394 = vmul.f32 %v2393, 1.442695
        %v2395 = vpow.pop %v2394
        %v2396 = vsel %vm1928, %v2395, 0.0
        %2397 = vadd.xlane.f32.xlu0 %v2396
        %v2398 = vpop.xlane.xlu0 %2397
        %v2399 = vrcp.pop %v2398
        %v2400 = vmul.f32 %v2395, %v2399
        %v2401 = vpack.c.bf16 %v2400, %v2400
        %v2403 = vsel %vm1928, %v2401, 0
        %v2406 = vsel %vm1944, %v2343, 0
        %2408 = vmatprep.subr.bf16.mxu0 0
        %2409 = vmatpush1.bf16.msra.mxu0 %v2406
        %2410 = vmatprep.subr.bf16.mxu0 0
        %2411 = vmatpush1.bf16.msra.mxu0 0
        %2412 = vmatprep.subr.bf16.mxu0 0
        %2413 = vmatpush1.bf16.msra.mxu0 0
        %2414 = vmatprep.subr.bf16.mxu0 0
        %2415 = vmatpush1.bf16.msra.mxu0 0
        %2416 = vmatprep.subr.bf16.mxu0 0
        %2417 = vmatpush1.bf16.msra.mxu0 0
        %2418 = vmatprep.subr.bf16.mxu0 0
        %2419 = vmatpush1.bf16.msra.mxu0 0
        %2420 = vmatprep.subr.bf16.mxu0 0
        %2421 = vmatpush1.bf16.msra.mxu0 0
        %2422 = vmatprep.subr.bf16.mxu0 0
        %2423 = vmatpush1.bf16.msra.mxu0 0
        %2424 = vmatprep.subr.bf16.mxu0 0
        %2425 = vmatpush1.bf16.msra.mxu0 0
        %2426 = vmatprep.subr.bf16.mxu0 0
        %2427 = vmatpush1.bf16.msra.mxu0 0
        %2428 = vmatprep.subr.bf16.mxu0 0
        %2429 = vmatpush1.bf16.msra.mxu0 0
        %2430 = vmatprep.subr.bf16.mxu0 0
        %2431 = vmatpush1.bf16.msra.mxu0 0
        %2432 = vmatprep.subr.bf16.mxu0 0
        %2433 = vmatpush1.bf16.msra.mxu0 0
        %2434 = vmatprep.subr.bf16.mxu0 0
        %2435 = vmatpush1.bf16.msra.mxu0 0
        %2436 = vmatprep.subr.bf16.mxu0 0
        %2437 = vmatpush1.bf16.msra.mxu0 0
        %2438 = vmatprep.subr.bf16.mxu0 0
        %2439 = vmatpush1.bf16.msra.mxu0 0
        %2440 = vmatprep.mubr.bf16.mxu0 0
        %2441 = vmatmul.mubr.bf16.gmra.mrb[0].mxu0 %v2403
        %v2442 = vpop.f32.mrb[0].mxu0
        %v2443 = vadd.f32 0.0, %v2442
        %v2444 = vpop.f32.mrb[0].mxu0
        %v2445 = vpop.f32.mrb[0].mxu0
        %v2446 = vpop.f32.mrb[0].mxu0
        %2447 = vdwg.mxu0
        %2448 = vst.msk [vmem:[#allocation3 + $0x8] sm:$0xff] %vm1881, %v2443
        %2450 = vrot.lane.b32.xlu0 %v2341, 96
        %v2451 = vpop.permute.xlu0 %2450
        %2453 = vrot.lane.b32.xlu0 %v2342, 96
        %v2454 = vpop.permute.xlu0 %2453
        %v2456 = vsel %vm1881, %v2451, 0
        %v2459 = vsel %vm1881, %v2454, 0
        %2461 = vmatprep.subr.bf16.mxu0 0
        %2462 = vmatpush1.bf16.xpose.msra.mxu0 %v2459
        %2463 = vmatprep.subr.bf16.mxu0 0
        %2464 = vmatpush1.bf16.xpose.msra.mxu0 0
        %2465 = vmatprep.subr.bf16.mxu0 0
        %2466 = vmatpush1.bf16.xpose.msra.mxu0 0
        %2467 = vmatprep.subr.bf16.mxu0 0
        %2468 = vmatpush1.bf16.xpose.msra.mxu0 0
        %2469 = vmatprep.subr.bf16.mxu0 0
        %2470 = vmatpush1.bf16.xpose.msra.mxu0 0
        %2471 = vmatprep.subr.bf16.mxu0 0
        %2472 = vmatpush1.bf16.xpose.msra.mxu0 0
        %2473 = vmatprep.subr.bf16.mxu0 0
        %2474 = vmatpush1.bf16.xpose.msra.mxu0 0
        %2475 = vmatprep.subr.bf16.mxu0 0
        %2476 = vmatpush1.bf16.xpose.msra.mxu0 0
        %2477 = vmatprep.subr.bf16.mxu0 0
        %2478 = vmatpush1.bf16.xpose.msra.mxu0 0
        %2479 = vmatprep.subr.bf16.mxu0 0
        %2480 = vmatpush1.bf16.xpose.msra.mxu0 0
        %2481 = vmatprep.subr.bf16.mxu0 0
        %2482 = vmatpush1.bf16.xpose.msra.mxu0 0
        %2483 = vmatprep.subr.bf16.mxu0 0
        %2484 = vmatpush1.bf16.xpose.msra.mxu0 0
        %2485 = vmatprep.subr.bf16.mxu0 0
        %2486 = vmatpush1.bf16.xpose.msra.mxu0 0
        %2487 = vmatprep.subr.bf16.mxu0 0
        %2488 = vmatpush1.bf16.xpose.msra.mxu0 0
        %2489 = vmatprep.subr.bf16.mxu0 0
        %2490 = vmatpush1.bf16.xpose.msra.mxu0 0
        %2491 = vmatprep.subr.bf16.mxu0 0
        %2492 = vmatpush1.bf16.xpose.msra.mxu0 0
        %2493 = vmatprep.mubr.bf16.mxu0 0
        %2494 = vmatmul.mubr.bf16.gmra.mrb[0].mxu0 %v2456
        %v2495 = vpop.f32.mrb[0].mxu0
        %v2496 = vadd.f32 %v1876, %v2495
        %v2497 = vpop.f32.mrb[0].mxu0
        %v2498 = vpop.f32.mrb[0].mxu0
        %v2499 = vpop.f32.mrb[0].mxu0
        %2500 = vdwg.mxu0
        %v2501 = vsel %vm1928, %v2496, -inf
        %2502 = vmax.xlane.f32.xlu0 %v2501
        %v2503 = vpop.xlane.xlu0 %2502
        %v2504 = vsub.f32 %v2496, %v2503
        %v2505 = vmul.f32 %v2504, 1.442695
        %v2506 = vpow.pop %v2505
        %v2507 = vsel %vm1928, %v2506, 0.0
        %2508 = vadd.xlane.f32.xlu0 %v2507
        %v2509 = vpop.xlane.xlu0 %2508
        %v2510 = vrcp.pop %v2509
        %v2511 = vmul.f32 %v2506, %v2510
        %v2512 = vpack.c.bf16 %v2511, %v2511
        %2514 = vrot.lane.b32.xlu0 %v2343, 96
        %v2515 = vpop.permute.xlu0 %2514
        %v2517 = vsel %vm1928, %v2512, 0
        %v2520 = vsel %vm1944, %v2515, 0
        %2522 = vmatprep.subr.bf16.mxu0 0
        %2523 = vmatpush1.bf16.msra.mxu0 %v2520
        %2524 = vmatprep.subr.bf16.mxu0 0
        %2525 = vmatpush1.bf16.msra.mxu0 0
        %2526 = vmatprep.subr.bf16.mxu0 0
        %2527 = vmatpush1.bf16.msra.mxu0 0
        %2528 = vmatprep.subr.bf16.mxu0 0
        %2529 = vmatpush1.bf16.msra.mxu0 0
        %2530 = vmatprep.subr.bf16.mxu0 0
        %2531 = vmatpush1.bf16.msra.mxu0 0
        %2532 = vmatprep.subr.bf16.mxu0 0
        %2533 = vmatpush1.bf16.msra.mxu0 0
        %2534 = vmatprep.subr.bf16.mxu0 0
        %2535 = vmatpush1.bf16.msra.mxu0 0
        %2536 = vmatprep.subr.bf16.mxu0 0
        %2537 = vmatpush1.bf16.msra.mxu0 0
        %2538 = vmatprep.subr.bf16.mxu0 0
        %2539 = vmatpush1.bf16.msra.mxu0 0
        %2540 = vmatprep.subr.bf16.mxu0 0
        %2541 = vmatpush1.bf16.msra.mxu0 0
        %2542 = vmatprep.subr.bf16.mxu0 0
        %2543 = vmatpush1.bf16.msra.mxu0 0
        %2544 = vmatprep.subr.bf16.mxu0 0
        %2545 = vmatpush1.bf16.msra.mxu0 0
        %2546 = vmatprep.subr.bf16.mxu0 0
        %2547 = vmatpush1.bf16.msra.mxu0 0
        %2548 = vmatprep.subr.bf16.mxu0 0
        %2549 = vmatpush1.bf16.msra.mxu0 0
        %2550 = vmatprep.subr.bf16.mxu0 0
        %2551 = vmatpush1.bf16.msra.mxu0 0
        %2552 = vmatprep.subr.bf16.mxu0 0
        %2553 = vmatpush1.bf16.msra.mxu0 0
        %2554 = vmatprep.mubr.bf16.mxu0 0
        %2555 = vmatmul.mubr.bf16.gmra.mrb[0].mxu0 %v2517
        %v2556 = vpop.f32.mrb[0].mxu0
        %v2557 = vadd.f32 0.0, %v2556
        %v2558 = vpop.f32.mrb[0].mxu0
        %v2559 = vpop.f32.mrb[0].mxu0
        %v2560 = vpop.f32.mrb[0].mxu0
        %2561 = vdwg.mxu0
        %2563 = vrot.lane.b32.xlu0 %v2557, 32
        %v2564 = vpop.permute.xlu0 %2563
        %2566 = vst.msk [vmem:[#allocation3 + $0x8] sm:$0xff] %vm2106, %v2564
        %2567 = vrot.lane.b32.xlu0 %v2341, 64
        %v2568 = vpop.permute.xlu0 %2567
        %2569 = vrot.lane.b32.xlu0 %v2342, 64
        %v2570 = vpop.permute.xlu0 %2569
        %v2572 = vsel %vm1881, %v2568, 0
        %v2575 = vsel %vm1881, %v2570, 0
        %2577 = vmatprep.subr.bf16.mxu0 0
        %2578 = vmatpush1.bf16.xpose.msra.mxu0 %v2575
        %2579 = vmatprep.subr.bf16.mxu0 0
        %2580 = vmatpush1.bf16.xpose.msra.mxu0 0
        %2581 = vmatprep.subr.bf16.mxu0 0
        %2582 = vmatpush1.bf16.xpose.msra.mxu0 0
        %2583 = vmatprep.subr.bf16.mxu0 0
        %2584 = vmatpush1.bf16.xpose.msra.mxu0 0
        %2585 = vmatprep.subr.bf16.mxu0 0
        %2586 = vmatpush1.bf16.xpose.msra.mxu0 0
        %2587 = vmatprep.subr.bf16.mxu0 0
        %2588 = vmatpush1.bf16.xpose.msra.mxu0 0
        %2589 = vmatprep.subr.bf16.mxu0 0
        %2590 = vmatpush1.bf16.xpose.msra.mxu0 0
        %2591 = vmatprep.subr.bf16.mxu0 0
        %2592 = vmatpush1.bf16.xpose.msra.mxu0 0
        %2593 = vmatprep.subr.bf16.mxu0 0
        %2594 = vmatpush1.bf16.xpose.msra.mxu0 0
        %2595 = vmatprep.subr.bf16.mxu0 0
        %2596 = vmatpush1.bf16.xpose.msra.mxu0 0
        %2597 = vmatprep.subr.bf16.mxu0 0
        %2598 = vmatpush1.bf16.xpose.msra.mxu0 0
        %2599 = vmatprep.subr.bf16.mxu0 0
        %2600 = vmatpush1.bf16.xpose.msra.mxu0 0
        %2601 = vmatprep.subr.bf16.mxu0 0
        %2602 = vmatpush1.bf16.xpose.msra.mxu0 0
        %2603 = vmatprep.subr.bf16.mxu0 0
        %2604 = vmatpush1.bf16.xpose.msra.mxu0 0
        %2605 = vmatprep.subr.bf16.mxu0 0
        %2606 = vmatpush1.bf16.xpose.msra.mxu0 0
        %2607 = vmatprep.subr.bf16.mxu0 0
        %2608 = vmatpush1.bf16.xpose.msra.mxu0 0
        %2609 = vmatprep.mubr.bf16.mxu0 0
        %2610 = vmatmul.mubr.bf16.gmra.mrb[0].mxu0 %v2572
        %v2611 = vpop.f32.mrb[0].mxu0
        %v2612 = vadd.f32 %v1876, %v2611
        %v2613 = vpop.f32.mrb[0].mxu0
        %v2614 = vpop.f32.mrb[0].mxu0
        %v2615 = vpop.f32.mrb[0].mxu0
        %2616 = vdwg.mxu0
        %v2617 = vsel %vm1928, %v2612, -inf
        %2618 = vmax.xlane.f32.xlu0 %v2617
        %v2619 = vpop.xlane.xlu0 %2618
        %v2620 = vsub.f32 %v2612, %v2619
        %v2621 = vmul.f32 %v2620, 1.442695
        %v2622 = vpow.pop %v2621
        %v2623 = vsel %vm1928, %v2622, 0.0
        %2624 = vadd.xlane.f32.xlu0 %v2623
        %v2625 = vpop.xlane.xlu0 %2624
        %v2626 = vrcp.pop %v2625
        %v2627 = vmul.f32 %v2622, %v2626
        %v2628 = vpack.c.bf16 %v2627, %v2627
        %2629 = vrot.lane.b32.xlu0 %v2343, 64
        %v2630 = vpop.permute.xlu0 %2629
        %v2632 = vsel %vm1928, %v2628, 0
        %v2635 = vsel %vm1944, %v2630, 0
        %2637 = vmatprep.subr.bf16.mxu0 0
        %2638 = vmatpush1.bf16.msra.mxu0 %v2635
        %2639 = vmatprep.subr.bf16.mxu0 0
        %2640 = vmatpush1.bf16.msra.mxu0 0
        %2641 = vmatprep.subr.bf16.mxu0 0
        %2642 = vmatpush1.bf16.msra.mxu0 0
        %2643 = vmatprep.subr.bf16.mxu0 0
        %2644 = vmatpush1.bf16.msra.mxu0 0
        %2645 = vmatprep.subr.bf16.mxu0 0
        %2646 = vmatpush1.bf16.msra.mxu0 0
        %2647 = vmatprep.subr.bf16.mxu0 0
        %2648 = vmatpush1.bf16.msra.mxu0 0
        %2649 = vmatprep.subr.bf16.mxu0 0
        %2650 = vmatpush1.bf16.msra.mxu0 0
        %2651 = vmatprep.subr.bf16.mxu0 0
        %2652 = vmatpush1.bf16.msra.mxu0 0
        %2653 = vmatprep.subr.bf16.mxu0 0
        %2654 = vmatpush1.bf16.msra.mxu0 0
        %2655 = vmatprep.subr.bf16.mxu0 0
        %2656 = vmatpush1.bf16.msra.mxu0 0
        %2657 = vmatprep.subr.bf16.mxu0 0
        %2658 = vmatpush1.bf16.msra.mxu0 0
        %2659 = vmatprep.subr.bf16.mxu0 0
        %2660 = vmatpush1.bf16.msra.mxu0 0
        %2661 = vmatprep.subr.bf16.mxu0 0
        %2662 = vmatpush1.bf16.msra.mxu0 0
        %2663 = vmatprep.subr.bf16.mxu0 0
        %2664 = vmatpush1.bf16.msra.mxu0 0
        %2665 = vmatprep.subr.bf16.mxu0 0
        %2666 = vmatpush1.bf16.msra.mxu0 0
        %2667 = vmatprep.subr.bf16.mxu0 0
        %2668 = vmatpush1.bf16.msra.mxu0 0
        %2669 = vmatprep.mubr.bf16.mxu0 0
        %2670 = vmatmul.mubr.bf16.gmra.mrb[0].mxu0 %v2632
        %v2671 = vpop.f32.mrb[0].mxu0
        %v2672 = vadd.f32 0.0, %v2671
        %v2673 = vpop.f32.mrb[0].mxu0
        %v2674 = vpop.f32.mrb[0].mxu0
        %v2675 = vpop.f32.mrb[0].mxu0
        %2676 = vdwg.mxu0
        %2678 = vrot.lane.b32.xlu0 %v2672, 64
        %v2679 = vpop.permute.xlu0 %2678
        %2681 = vst.msk [vmem:[#allocation3 + $0x8] sm:$0xff] %vm2222, %v2679
        %2682 = vrot.lane.b32.xlu0 %v2341, 32
        %v2683 = vpop.permute.xlu0 %2682
        %2684 = vrot.lane.b32.xlu0 %v2342, 32
        %v2685 = vpop.permute.xlu0 %2684
        %v2687 = vsel %vm1881, %v2683, 0
        %v2690 = vsel %vm1881, %v2685, 0
        %2692 = vmatprep.subr.bf16.mxu0 0
        %2693 = vmatpush1.bf16.xpose.msra.mxu0 %v2690
        %2694 = vmatprep.subr.bf16.mxu0 0
        %2695 = vmatpush1.bf16.xpose.msra.mxu0 0
        %2696 = vmatprep.subr.bf16.mxu0 0
        %2697 = vmatpush1.bf16.xpose.msra.mxu0 0
        %2698 = vmatprep.subr.bf16.mxu0 0
        %2699 = vmatpush1.bf16.xpose.msra.mxu0 0
        %2700 = vmatprep.subr.bf16.mxu0 0
        %2701 = vmatpush1.bf16.xpose.msra.mxu0 0
        %2702 = vmatprep.subr.bf16.mxu0 0
        %2703 = vmatpush1.bf16.xpose.msra.mxu0 0
        %2704 = vmatprep.subr.bf16.mxu0 0
        %2705 = vmatpush1.bf16.xpose.msra.mxu0 0
        %2706 = vmatprep.subr.bf16.mxu0 0
        %2707 = vmatpush1.bf16.xpose.msra.mxu0 0
        %2708 = vmatprep.subr.bf16.mxu0 0
        %2709 = vmatpush1.bf16.xpose.msra.mxu0 0
        %2710 = vmatprep.subr.bf16.mxu0 0
        %2711 = vmatpush1.bf16.xpose.msra.mxu0 0
        %2712 = vmatprep.subr.bf16.mxu0 0
        %2713 = vmatpush1.bf16.xpose.msra.mxu0 0
        %2714 = vmatprep.subr.bf16.mxu0 0
        %2715 = vmatpush1.bf16.xpose.msra.mxu0 0
        %2716 = vmatprep.subr.bf16.mxu0 0
        %2717 = vmatpush1.bf16.xpose.msra.mxu0 0
        %2718 = vmatprep.subr.bf16.mxu0 0
        %2719 = vmatpush1.bf16.xpose.msra.mxu0 0
        %2720 = vmatprep.subr.bf16.mxu0 0
        %2721 = vmatpush1.bf16.xpose.msra.mxu0 0
        %2722 = vmatprep.subr.bf16.mxu0 0
        %2723 = vmatpush1.bf16.xpose.msra.mxu0 0
        %2724 = vmatprep.mubr.bf16.mxu0 0
        %2725 = vmatmul.mubr.bf16.gmra.mrb[0].mxu0 %v2687
        %v2726 = vpop.f32.mrb[0].mxu0
        %v2727 = vadd.f32 %v1876, %v2726
        %v2728 = vpop.f32.mrb[0].mxu0
        %v2729 = vpop.f32.mrb[0].mxu0
        %v2730 = vpop.f32.mrb[0].mxu0
        %2731 = vdwg.mxu0
        %v2732 = vsel %vm1928, %v2727, -inf
        %2733 = vmax.xlane.f32.xlu0 %v2732
        %v2734 = vpop.xlane.xlu0 %2733
        %v2735 = vsub.f32 %v2727, %v2734
        %v2736 = vmul.f32 %v2735, 1.442695
        %v2737 = vpow.pop %v2736
        %v2738 = vsel %vm1928, %v2737, 0.0
        %2739 = vadd.xlane.f32.xlu0 %v2738
        %v2740 = vpop.xlane.xlu0 %2739
        %v2741 = vrcp.pop %v2740
        %v2742 = vmul.f32 %v2737, %v2741
        %v2743 = vpack.c.bf16 %v2742, %v2742
        %2744 = vrot.lane.b32.xlu0 %v2343, 32
        %v2745 = vpop.permute.xlu0 %2744
        %v2747 = vsel %vm1928, %v2743, 0
        %v2750 = vsel %vm1944, %v2745, 0
        %2752 = vmatprep.subr.bf16.mxu0 0
        %2753 = vmatpush1.bf16.msra.mxu0 %v2750
        %2754 = vmatprep.subr.bf16.mxu0 0
        %2755 = vmatpush1.bf16.msra.mxu0 0
        %2756 = vmatprep.subr.bf16.mxu0 0
        %2757 = vmatpush1.bf16.msra.mxu0 0
        %2758 = vmatprep.subr.bf16.mxu0 0
        %2759 = vmatpush1.bf16.msra.mxu0 0
        %2760 = vmatprep.subr.bf16.mxu0 0
        %2761 = vmatpush1.bf16.msra.mxu0 0
        %2762 = vmatprep.subr.bf16.mxu0 0
        %2763 = vmatpush1.bf16.msra.mxu0 0
        %2764 = vmatprep.subr.bf16.mxu0 0
        %2765 = vmatpush1.bf16.msra.mxu0 0
        %2766 = vmatprep.subr.bf16.mxu0 0
        %2767 = vmatpush1.bf16.msra.mxu0 0
        %2768 = vmatprep.subr.bf16.mxu0 0
        %2769 = vmatpush1.bf16.msra.mxu0 0
        %2770 = vmatprep.subr.bf16.mxu0 0
        %2771 = vmatpush1.bf16.msra.mxu0 0
        %2772 = vmatprep.subr.bf16.mxu0 0
        %2773 = vmatpush1.bf16.msra.mxu0 0
        %2774 = vmatprep.subr.bf16.mxu0 0
        %2775 = vmatpush1.bf16.msra.mxu0 0
        %2776 = vmatprep.subr.bf16.mxu0 0
        %2777 = vmatpush1.bf16.msra.mxu0 0
        %2778 = vmatprep.subr.bf16.mxu0 0
        %2779 = vmatpush1.bf16.msra.mxu0 0
        %2780 = vmatprep.subr.bf16.mxu0 0
        %2781 = vmatpush1.bf16.msra.mxu0 0
        %2782 = vmatprep.subr.bf16.mxu0 0
        %2783 = vmatpush1.bf16.msra.mxu0 0
        %2784 = vmatprep.mubr.bf16.mxu0 0
        %2785 = vmatmul.mubr.bf16.gmra.mrb[0].mxu0 %v2747
        %v2786 = vpop.f32.mrb[0].mxu0
        %v2787 = vadd.f32 0.0, %v2786
        %v2788 = vpop.f32.mrb[0].mxu0
        %v2789 = vpop.f32.mrb[0].mxu0
        %v2790 = vpop.f32.mrb[0].mxu0
        %2791 = vdwg.mxu0
        %2793 = vrot.lane.b32.xlu0 %v2787, 96
        %v2794 = vpop.permute.xlu0 %2793
        %2796 = vst.msk [vmem:[#allocation3 + $0x8] sm:$0xff] %vm2338, %v2794
        %v2797 = vld [vmem:[#allocation3] sm:$0xff]
        %v2798 = vld [vmem:[#allocation3 + $0x8] sm:$0xff]
        %v2799 = vld [vmem:[%s1205] sm:$0xf]
        %v2800 = vld [vmem:[%s1205 + $0x4] sm:$0xf]
        %v2801 = vld [vmem:[%s1205 + $0x8] sm:$0xf]
        %v2802 = vld [vmem:[%s1205 + $0xc] sm:$0xf]
        %v2803 = vld [vmem:[%s1205 + $0x10] sm:$0xf]
        %v2804 = vld [vmem:[%s1205 + $0x14] sm:$0xf]
        %v2805 = vld [vmem:[%s1205 + $0x18] sm:$0xf]
        %v2806 = vld [vmem:[%s1205 + $0x1c] sm:$0xf]
        %v2807 = vld [vmem:[%s1205 + $0x20] sm:$0xf]
        %v2808 = vld [vmem:[%s1205 + $0x24] sm:$0xf]
        %v2809 = vld [vmem:[%s1205 + $0x28] sm:$0xf]
        %v2810 = vld [vmem:[%s1205 + $0x2c] sm:$0xf]
        %v2811 = vld [vmem:[%s1205 + $0x30] sm:$0xf]
        %v2812 = vld [vmem:[%s1205 + $0x34] sm:$0xf]
        %v2813 = vld [vmem:[%s1205 + $0x38] sm:$0xf]
        %v2814 = vld [vmem:[%s1205 + $0x3c] sm:$0xf]
        %v2815 = vpack.c.bf16 %v2798, %v2797
        %v2832 = vunpack.c.l.b16 %v2799
        %v2833 = vunpack.c.l.b16 %v2800
        %v2834 = vunpack.c.l.b16 %v2801
        %v2835 = vunpack.c.l.b16 %v2802
        %v2836 = vunpack.c.l.b16 %v2803
        %v2837 = vunpack.c.l.b16 %v2804
        %v2838 = vunpack.c.l.b16 %v2805
        %v2839 = vunpack.c.l.b16 %v2806
        %v2840 = vunpack.c.l.b16 %v2807
        %v2841 = vunpack.c.l.b16 %v2808
        %v2842 = vunpack.c.l.b16 %v2809
        %v2843 = vunpack.c.l.b16 %v2810
        %v2844 = vunpack.c.l.b16 %v2811
        %v2845 = vunpack.c.l.b16 %v2812
        %v2846 = vunpack.c.l.b16 %v2813
        %v2847 = vunpack.c.l.b16 %v2814
        %v2848 = vpack.c.b16 %v2833, %v2832
        %v2849 = vpack.c.b16 %v2835, %v2834
        %v2850 = vpack.c.b16 %v2837, %v2836
        %v2851 = vpack.c.b16 %v2839, %v2838
        %v2852 = vpack.c.b16 %v2841, %v2840
        %v2853 = vpack.c.b16 %v2843, %v2842
        %v2854 = vpack.c.b16 %v2845, %v2844
        %v2855 = vpack.c.b16 %v2847, %v2846
        %2864 = vmatprep.subr.bf16.mxu0 0
        %2865 = vmatpush1.bf16.msra.mxu0 %v2848
        %2866 = vmatprep.subr.bf16.mxu0 0
        %2867 = vmatpush1.bf16.msra.mxu0 %v2849
        %2868 = vmatprep.subr.bf16.mxu0 0
        %2869 = vmatpush1.bf16.msra.mxu0 %v2850
        %2870 = vmatprep.subr.bf16.mxu0 0
        %2871 = vmatpush1.bf16.msra.mxu0 %v2851
        %2872 = vmatprep.subr.bf16.mxu0 0
        %2873 = vmatpush1.bf16.msra.mxu0 %v2852
        %2874 = vmatprep.subr.bf16.mxu0 0
        %2875 = vmatpush1.bf16.msra.mxu0 %v2853
        %2876 = vmatprep.subr.bf16.mxu0 0
        %2877 = vmatpush1.bf16.msra.mxu0 %v2854
        %2878 = vmatprep.subr.bf16.mxu0 0
        %2879 = vmatpush1.bf16.msra.mxu0 %v2855
        %2880 = vmatprep.subr.bf16.mxu0 0
        %2881 = vmatpush1.bf16.msra.mxu0 0
        %2882 = vmatprep.subr.bf16.mxu0 0
        %2883 = vmatpush1.bf16.msra.mxu0 0
        %2884 = vmatprep.subr.bf16.mxu0 0
        %2885 = vmatpush1.bf16.msra.mxu0 0
        %2886 = vmatprep.subr.bf16.mxu0 0
        %2887 = vmatpush1.bf16.msra.mxu0 0
        %2888 = vmatprep.subr.bf16.mxu0 0
        %2889 = vmatpush1.bf16.msra.mxu0 0
        %2890 = vmatprep.subr.bf16.mxu0 0
        %2891 = vmatpush1.bf16.msra.mxu0 0
        %2892 = vmatprep.subr.bf16.mxu0 0
        %2893 = vmatpush1.bf16.msra.mxu0 0
        %2894 = vmatprep.subr.bf16.mxu0 0
        %2895 = vmatpush1.bf16.msra.mxu0 0
        %2896 = vmatprep.mubr.bf16.mxu0 0
        %2897 = vmatmul.mubr.bf16.gmra.mrb[0].mxu0 %v2815
        %v2898 = vpop.f32.mrb[0].mxu0
        %v2899 = vadd.f32 0.0, %v2898
        %v2900 = vpop.f32.mrb[0].mxu0
        %v2901 = vpop.f32.mrb[0].mxu0
        %v2902 = vadd.f32 0.0, %v2901
        %v2903 = vpop.f32.mrb[0].mxu0
        %2904 = vdwg.mxu0
        %v2905 = vadd.f32 %v1591, %v2899
        %v2906 = vadd.f32 %v1592, %v2902
        %v2907 = vld [vmem:[%s1213] sm:$0x1]
        %v2909 = vlaneseq
        %v2910 = vshrl.u32 %v2909, 7
        %v2911 = vsub.s32 0, %v2910
        %v2912 = vrot.slane %v2907, %v2911
        %v2914 = vadd.f32 %v2905, %v2912
        %v2915 = vadd.f32 %v2906, %v2912
        %v2916 = vld [vmem:[%s1221] sm:$0x1]
        %v2917 = vld [vmem:[%s1229] sm:$0x1]
        %2918 = vadd.xlane.f32.xlu0 %v2914
        %v2919 = vpop.xlane.xlu0 %2918
        %2920 = vadd.xlane.f32.xlu0 %v2915
        %v2921 = vpop.xlane.xlu0 %2920
        %v2922 = vrcp.pop 128.0
        %v2923 = vmul.f32 %v2919, %v2922
        %v2924 = vmul.f32 %v2921, %v2922
        %v2925 = vsub.f32 %v2914, %v2923
        %v2926 = vsub.f32 %v2915, %v2924
        %v2927 = vmul.f32 %v2925, %v2925
        %v2928 = vmul.f32 %v2926, %v2926
        %2929 = vadd.xlane.f32.xlu0 %v2927
        %v2930 = vpop.xlane.xlu0 %2929
        %2931 = vadd.xlane.f32.xlu0 %v2928
        %v2932 = vpop.xlane.xlu0 %2931
        %v2933 = vmul.f32 %v2930, %v2922
        %v2934 = vmul.f32 %v2932, %v2922
        %v2935 = vadd.f32 %v2933, 1e-06
        %v2936 = vadd.f32 %v2934, 1e-06
        %v2937 = vrsqrt.pop %v2935
        %v2938 = vrsqrt.pop %v2936
        %v2939 = vmul.f32 %v2925, %v2937
        %v2940 = vmul.f32 %v2926, %v2938
        %v2942 = vlaneseq
        %v2943 = vshrl.u32 %v2942, 7
        %v2944 = vsub.s32 0, %v2943
        %v2945 = vrot.slane %v2916, %v2944
        %v2947 = vmul.f32 %v2939, %v2945
        %v2948 = vmul.f32 %v2940, %v2945
        %v2950 = vlaneseq
        %v2951 = vshrl.u32 %v2950, 7
        %v2952 = vsub.s32 0, %v2951
        %v2953 = vrot.slane %v2917, %v2952
        %v2955 = vadd.f32 %v2947, %v2953
        %v2956 = vadd.f32 %v2948, %v2953
        %v2957 = vld [vmem:[%s1238] sm:$0xf]
        %v2958 = vld [vmem:[%s1238 + $0x4] sm:$0xf]
        %v2959 = vld [vmem:[%s1238 + $0x8] sm:$0xf]
        %v2960 = vld [vmem:[%s1238 + $0xc] sm:$0xf]
        %v2961 = vld [vmem:[%s1238 + $0x10] sm:$0xf]
        %v2962 = vld [vmem:[%s1238 + $0x14] sm:$0xf]
        %v2963 = vld [vmem:[%s1238 + $0x18] sm:$0xf]
        %v2964 = vld [vmem:[%s1238 + $0x1c] sm:$0xf]
        %v2965 = vld [vmem:[%s1238 + $0x20] sm:$0xf]
        %v2966 = vld [vmem:[%s1238 + $0x24] sm:$0xf]
        %v2967 = vld [vmem:[%s1238 + $0x28] sm:$0xf]
        %v2968 = vld [vmem:[%s1238 + $0x2c] sm:$0xf]
        %v2969 = vld [vmem:[%s1238 + $0x30] sm:$0xf]
        %v2970 = vld [vmem:[%s1238 + $0x34] sm:$0xf]
        %v2971 = vld [vmem:[%s1238 + $0x38] sm:$0xf]
        %v2972 = vld [vmem:[%s1238 + $0x3c] sm:$0xf]
        %v2973 = vpack.c.bf16 %v2956, %v2955
        %v2974 = vld [vmem:[%s1246] sm:$0x1]
        %v2976 = vlaneseq
        %v2977 = vshrl.u32 %v2976, 7
        %v2978 = vsub.s32 0, %v2977
        %v2979 = vrot.slane %v2974, %v2978
        %v2997 = vunpack.c.l.b16 %v2957
        %v2998 = vunpack.c.l.b16 %v2958
        %v2999 = vunpack.c.l.b16 %v2959
        %v3000 = vunpack.c.l.b16 %v2960
        %v3001 = vunpack.c.l.b16 %v2961
        %v3002 = vunpack.c.l.b16 %v2962
        %v3003 = vunpack.c.l.b16 %v2963
        %v3004 = vunpack.c.l.b16 %v2964
        %v3005 = vunpack.c.l.b16 %v2965
        %v3006 = vunpack.c.l.b16 %v2966
        %v3007 = vunpack.c.l.b16 %v2967
        %v3008 = vunpack.c.l.b16 %v2968
        %v3009 = vunpack.c.l.b16 %v2969
        %v3010 = vunpack.c.l.b16 %v2970
        %v3011 = vunpack.c.l.b16 %v2971
        %v3012 = vunpack.c.l.b16 %v2972
        %v3013 = vpack.c.b16 %v2998, %v2997
        %v3014 = vpack.c.b16 %v3000, %v2999
        %v3015 = vpack.c.b16 %v3002, %v3001
        %v3016 = vpack.c.b16 %v3004, %v3003
        %v3017 = vpack.c.b16 %v3006, %v3005
        %v3018 = vpack.c.b16 %v3008, %v3007
        %v3019 = vpack.c.b16 %v3010, %v3009
        %v3020 = vpack.c.b16 %v3012, %v3011
        %3029 = vmatprep.subr.bf16.mxu0 0
        %3030 = vmatpush1.bf16.msra.mxu0 %v3013
        %3031 = vmatprep.subr.bf16.mxu0 0
        %3032 = vmatpush1.bf16.msra.mxu0 %v3014
        %3033 = vmatprep.subr.bf16.mxu0 0
        %3034 = vmatpush1.bf16.msra.mxu0 %v3015
        %3035 = vmatprep.subr.bf16.mxu0 0
        %3036 = vmatpush1.bf16.msra.mxu0 %v3016
        %3037 = vmatprep.subr.bf16.mxu0 0
        %3038 = vmatpush1.bf16.msra.mxu0 %v3017
        %3039 = vmatprep.subr.bf16.mxu0 0
        %3040 = vmatpush1.bf16.msra.mxu0 %v3018
        %3041 = vmatprep.subr.bf16.mxu0 0
        %3042 = vmatpush1.bf16.msra.mxu0 %v3019
        %3043 = vmatprep.subr.bf16.mxu0 0
        %3044 = vmatpush1.bf16.msra.mxu0 %v3020
        %3045 = vmatprep.subr.bf16.mxu0 0
        %3046 = vmatpush1.bf16.msra.mxu0 0
        %3047 = vmatprep.subr.bf16.mxu0 0
        %3048 = vmatpush1.bf16.msra.mxu0 0
        %3049 = vmatprep.subr.bf16.mxu0 0
        %3050 = vmatpush1.bf16.msra.mxu0 0
        %3051 = vmatprep.subr.bf16.mxu0 0
        %3052 = vmatpush1.bf16.msra.mxu0 0
        %3053 = vmatprep.subr.bf16.mxu0 0
        %3054 = vmatpush1.bf16.msra.mxu0 0
        %3055 = vmatprep.subr.bf16.mxu0 0
        %3056 = vmatpush1.bf16.msra.mxu0 0
        %3057 = vmatprep.subr.bf16.mxu0 0
        %3058 = vmatpush1.bf16.msra.mxu0 0
        %3059 = vmatprep.subr.bf16.mxu0 0
        %3060 = vmatpush1.bf16.msra.mxu0 0
        %3061 = vmatprep.mubr.bf16.mxu0 0
        %3062 = vmatmul.mubr.bf16.gmra.mrb[0].mxu0 %v2973
        %v3063 = vpop.f32.mrb[0].mxu0
        %v3064 = vadd.f32 %v2979, %v3063
        %v3065 = vpop.f32.mrb[0].mxu0
        %v3066 = vpop.f32.mrb[0].mxu0
        %v3067 = vadd.f32 %v2979, %v3066
        %v3068 = vpop.f32.mrb[0].mxu0
        %3069 = vdwg.mxu0
        %v3070 = vld [vmem:[%s1517] sm:$0xf]
        %v3071 = vld [vmem:[%s1517 + $0x4] sm:$0xf]
        %v3072 = vld [vmem:[%s1528] sm:$0xff]
        %v3073 = vld [vmem:[%s1528 + $0x8] sm:$0xff]
        %v3074 = vld [vmem:[%s1528 + $0x10] sm:$0xff]
        %v3075 = vld [vmem:[%s1528 + $0x18] sm:$0xff]
        %v3076 = vld [vmem:[%s1528 + $0x20] sm:$0xff]
        %v3077 = vld [vmem:[%s1528 + $0x28] sm:$0xff]
        %v3078 = vld [vmem:[%s1528 + $0x30] sm:$0xff]
        %v3079 = vld [vmem:[%s1528 + $0x38] sm:$0xff]
        %v3080 = vld [vmem:[%s1528 + $0x40] sm:$0xff]
        %v3081 = vld [vmem:[%s1528 + $0x48] sm:$0xff]
        %v3082 = vld [vmem:[%s1528 + $0x50] sm:$0xff]
        %v3083 = vld [vmem:[%s1528 + $0x58] sm:$0xff]
        %v3084 = vld [vmem:[%s1528 + $0x60] sm:$0xff]
        %v3085 = vld [vmem:[%s1528 + $0x68] sm:$0xff]
        %v3086 = vld [vmem:[%s1528 + $0x70] sm:$0xff]
        %v3087 = vld [vmem:[%s1528 + $0x78] sm:$0xff]
        %v3088 = vld [vmem:[%s1255] sm:$0x3]
        %v3090 = vlaneseq
        %v3091 = vshrl.u32 %v3090, 7
        %v3092 = vsub.s32 0, %v3091
        %v3093 = vrot.slane %v3088, %v3092
        %v3094 = vlaneseq
        %v3095 = vshrl.u32 %v3094, 7
        %v3096 = vsub.s32 1, %v3095
        %v3097 = vrot.slane %v3088, %v3096
        %v3102 = vunpack.c.l.b16 %v3070
        %v3103 = vunpack.c.l.b16 %v3071
        %v3104 = vpack.c.b16 %v3103, %v3102
        %v3122 = vunpack.c.l.b16 %v3072
        %v3123 = vunpack.c.h.b16 %v3072
        %v3124 = vunpack.c.l.b16 %v3073
        %v3125 = vunpack.c.h.b16 %v3073
        %v3126 = vunpack.c.l.b16 %v3074
        %v3127 = vunpack.c.h.b16 %v3074
        %v3128 = vunpack.c.l.b16 %v3075
        %v3129 = vunpack.c.h.b16 %v3075
        %v3130 = vunpack.c.l.b16 %v3076
        %v3131 = vunpack.c.h.b16 %v3076
        %v3132 = vunpack.c.l.b16 %v3077
        %v3133 = vunpack.c.h.b16 %v3077
        %v3134 = vunpack.c.l.b16 %v3078
        %v3135 = vunpack.c.h.b16 %v3078
        %v3136 = vunpack.c.l.b16 %v3079
        %v3137 = vunpack.c.h.b16 %v3079
        %v3138 = vunpack.c.l.b16 %v3080
        %v3139 = vunpack.c.h.b16 %v3080
        %v3140 = vunpack.c.l.b16 %v3081
        %v3141 = vunpack.c.h.b16 %v3081
        %v3142 = vunpack.c.l.b16 %v3082
        %v3143 = vunpack.c.h.b16 %v3082
        %v3144 = vunpack.c.l.b16 %v3083
        %v3145 = vunpack.c.h.b16 %v3083
        %v3146 = vunpack.c.l.b16 %v3084
        %v3147 = vunpack.c.h.b16 %v3084
        %v3148 = vunpack.c.l.b16 %v3085
        %v3149 = vunpack.c.h.b16 %v3085
        %v3150 = vunpack.c.l.b16 %v3086
        %v3151 = vunpack.c.h.b16 %v3086
        %v3152 = vunpack.c.l.b16 %v3087
        %v3153 = vunpack.c.h.b16 %v3087
        %v3154 = vpack.c.b16 %v3124, %v3122
        %v3155 = vpack.c.b16 %v3125, %v3123
        %v3156 = vpack.c.b16 %v3128, %v3126
        %v3157 = vpack.c.b16 %v3129, %v3127
        %v3158 = vpack.c.b16 %v3132, %v3130
        %v3159 = vpack.c.b16 %v3133, %v3131
        %v3160 = vpack.c.b16 %v3136, %v3134
        %v3161 = vpack.c.b16 %v3137, %v3135
        %v3162 = vpack.c.b16 %v3140, %v3138
        %v3163 = vpack.c.b16 %v3141, %v3139
        %v3164 = vpack.c.b16 %v3144, %v3142
        %v3165 = vpack.c.b16 %v3145, %v3143
        %v3166 = vpack.c.b16 %v3148, %v3146
        %v3167 = vpack.c.b16 %v3149, %v3147
        %v3168 = vpack.c.b16 %v3152, %v3150
        %v3169 = vpack.c.b16 %v3153, %v3151
        %3186 = vmatprep.subr.bf16.mxu0 %v3155
        %3187 = vmatpush1.bf16.msra.mxu0 %v3154
        %3188 = vmatprep.subr.bf16.mxu0 %v3157
        %3189 = vmatpush1.bf16.msra.mxu0 %v3156
        %3190 = vmatprep.subr.bf16.mxu0 %v3159
        %3191 = vmatpush1.bf16.msra.mxu0 %v3158
        %3192 = vmatprep.subr.bf16.mxu0 %v3161
        %3193 = vmatpush1.bf16.msra.mxu0 %v3160
        %3194 = vmatprep.subr.bf16.mxu0 %v3163
        %3195 = vmatpush1.bf16.msra.mxu0 %v3162
        %3196 = vmatprep.subr.bf16.mxu0 %v3165
        %3197 = vmatpush1.bf16.msra.mxu0 %v3164
        %3198 = vmatprep.subr.bf16.mxu0 %v3167
        %3199 = vmatpush1.bf16.msra.mxu0 %v3166
        %3200 = vmatprep.subr.bf16.mxu0 %v3169
        %3201 = vmatpush1.bf16.msra.mxu0 %v3168
        %3202 = vmatprep.subr.bf16.mxu0 0
        %3203 = vmatpush1.bf16.msra.mxu0 0
        %3204 = vmatprep.subr.bf16.mxu0 0
        %3205 = vmatpush1.bf16.msra.mxu0 0
        %3206 = vmatprep.subr.bf16.mxu0 0
        %3207 = vmatpush1.bf16.msra.mxu0 0
        %3208 = vmatprep.subr.bf16.mxu0 0
        %3209 = vmatpush1.bf16.msra.mxu0 0
        %3210 = vmatprep.subr.bf16.mxu0 0
        %3211 = vmatpush1.bf16.msra.mxu0 0
        %3212 = vmatprep.subr.bf16.mxu0 0
        %3213 = vmatpush1.bf16.msra.mxu0 0
        %3214 = vmatprep.subr.bf16.mxu0 0
        %3215 = vmatpush1.bf16.msra.mxu0 0
        %3216 = vmatprep.subr.bf16.mxu0 0
        %3217 = vmatpush1.bf16.msra.mxu0 0
        %3218 = vmatprep.mubr.bf16.mxu0 0
        %3219 = vmatmul.mubr.bf16.gmra.mrb[0].mxu0 %v3104
        %v3220 = vpop.f32.mrb[0].mxu0
        %v3221 = vadd.f32 %v3093, %v3220
        %v3222 = vpop.f32.mrb[0].mxu0
        %v3223 = vadd.f32 %v3097, %v3222
        %v3224 = vpop.f32.mrb[0].mxu0
        %v3225 = vadd.f32 %v3093, %v3224
        %v3226 = vpop.f32.mrb[0].mxu0
        %v3227 = vadd.f32 %v3097, %v3226
        %3228 = vdwg.mxu0
        %v3229 = vmul.f32 %v3064, 0.17677669
        %v3230 = vpack.c.bf16 %v3229, %v3229
        %v3231 = vpack.c.bf16 %v3221, %v3221
        %v3232 = vpack.c.bf16 %v3223, %v3223
        %v3234 = vsel %vm1881, %v3230, 0
        %v3237 = vsel %vm1881, %v3231, 0
        %3239 = vmatprep.subr.bf16.mxu0 0
        %3240 = vmatpush1.bf16.xpose.msra.mxu0 %v3237
        %3241 = vmatprep.subr.bf16.mxu0 0
        %3242 = vmatpush1.bf16.xpose.msra.mxu0 0
        %3243 = vmatprep.subr.bf16.mxu0 0
        %3244 = vmatpush1.bf16.xpose.msra.mxu0 0
        %3245 = vmatprep.subr.bf16.mxu0 0
        %3246 = vmatpush1.bf16.xpose.msra.mxu0 0
        %3247 = vmatprep.subr.bf16.mxu0 0
        %3248 = vmatpush1.bf16.xpose.msra.mxu0 0
        %3249 = vmatprep.subr.bf16.mxu0 0
        %3250 = vmatpush1.bf16.xpose.msra.mxu0 0
        %3251 = vmatprep.subr.bf16.mxu0 0
        %3252 = vmatpush1.bf16.xpose.msra.mxu0 0
        %3253 = vmatprep.subr.bf16.mxu0 0
        %3254 = vmatpush1.bf16.xpose.msra.mxu0 0
        %3255 = vmatprep.subr.bf16.mxu0 0
        %3256 = vmatpush1.bf16.xpose.msra.mxu0 0
        %3257 = vmatprep.subr.bf16.mxu0 0
        %3258 = vmatpush1.bf16.xpose.msra.mxu0 0
        %3259 = vmatprep.subr.bf16.mxu0 0
        %3260 = vmatpush1.bf16.xpose.msra.mxu0 0
        %3261 = vmatprep.subr.bf16.mxu0 0
        %3262 = vmatpush1.bf16.xpose.msra.mxu0 0
        %3263 = vmatprep.subr.bf16.mxu0 0
        %3264 = vmatpush1.bf16.xpose.msra.mxu0 0
        %3265 = vmatprep.subr.bf16.mxu0 0
        %3266 = vmatpush1.bf16.xpose.msra.mxu0 0
        %3267 = vmatprep.subr.bf16.mxu0 0
        %3268 = vmatpush1.bf16.xpose.msra.mxu0 0
        %3269 = vmatprep.subr.bf16.mxu0 0
        %3270 = vmatpush1.bf16.xpose.msra.mxu0 0
        %3271 = vmatprep.mubr.bf16.mxu0 0
        %3272 = vmatmul.mubr.bf16.gmra.mrb[0].mxu0 %v3234
        %v3273 = vpop.f32.mrb[0].mxu0
        %v3274 = vadd.f32 0.0, %v3273
        %v3275 = vpop.f32.mrb[0].mxu0
        %v3276 = vpop.f32.mrb[0].mxu0
        %v3277 = vpop.f32.mrb[0].mxu0
        %3278 = vdwg.mxu0
        %v3279 = vsel %vm1928, %v3274, -inf
        %3280 = vmax.xlane.f32.xlu0 %v3279
        %v3281 = vpop.xlane.xlu0 %3280
        %v3282 = vsub.f32 %v3274, %v3281
        %v3283 = vmul.f32 %v3282, 1.442695
        %v3284 = vpow.pop %v3283
        %v3285 = vsel %vm1928, %v3284, 0.0
        %3286 = vadd.xlane.f32.xlu0 %v3285
        %v3287 = vpop.xlane.xlu0 %3286
        %v3288 = vrcp.pop %v3287
        %v3289 = vmul.f32 %v3284, %v3288
        %v3290 = vpack.c.bf16 %v3289, %v3289
        %v3292 = vsel %vm1928, %v3290, 0
        %v3295 = vsel %vm1944, %v3232, 0
        %3297 = vmatprep.subr.bf16.mxu0 0
        %3298 = vmatpush1.bf16.msra.mxu0 %v3295
        %3299 = vmatprep.subr.bf16.mxu0 0
        %3300 = vmatpush1.bf16.msra.mxu0 0
        %3301 = vmatprep.subr.bf16.mxu0 0
        %3302 = vmatpush1.bf16.msra.mxu0 0
        %3303 = vmatprep.subr.bf16.mxu0 0
        %3304 = vmatpush1.bf16.msra.mxu0 0
        %3305 = vmatprep.subr.bf16.mxu0 0
        %3306 = vmatpush1.bf16.msra.mxu0 0
        %3307 = vmatprep.subr.bf16.mxu0 0
        %3308 = vmatpush1.bf16.msra.mxu0 0
        %3309 = vmatprep.subr.bf16.mxu0 0
        %3310 = vmatpush1.bf16.msra.mxu0 0
        %3311 = vmatprep.subr.bf16.mxu0 0
        %3312 = vmatpush1.bf16.msra.mxu0 0
        %3313 = vmatprep.subr.bf16.mxu0 0
        %3314 = vmatpush1.bf16.msra.mxu0 0
        %3315 = vmatprep.subr.bf16.mxu0 0
        %3316 = vmatpush1.bf16.msra.mxu0 0
        %3317 = vmatprep.subr.bf16.mxu0 0
        %3318 = vmatpush1.bf16.msra.mxu0 0
        %3319 = vmatprep.subr.bf16.mxu0 0
        %3320 = vmatpush1.bf16.msra.mxu0 0
        %3321 = vmatprep.subr.bf16.mxu0 0
        %3322 = vmatpush1.bf16.msra.mxu0 0
        %3323 = vmatprep.subr.bf16.mxu0 0
        %3324 = vmatpush1.bf16.msra.mxu0 0
        %3325 = vmatprep.subr.bf16.mxu0 0
        %3326 = vmatpush1.bf16.msra.mxu0 0
        %3327 = vmatprep.subr.bf16.mxu0 0
        %3328 = vmatpush1.bf16.msra.mxu0 0
        %3329 = vmatprep.mubr.bf16.mxu0 0
        %3330 = vmatmul.mubr.bf16.gmra.mrb[0].mxu0 %v3292
        %v3331 = vpop.f32.mrb[0].mxu0
        %v3332 = vadd.f32 0.0, %v3331
        %v3333 = vpop.f32.mrb[0].mxu0
        %v3334 = vpop.f32.mrb[0].mxu0
        %v3335 = vpop.f32.mrb[0].mxu0
        %3336 = vdwg.mxu0
        %3337 = vst.msk [vmem:[#allocation3] sm:$0xff] %vm1881, %v3332
        %3339 = vrot.lane.b32.xlu0 %v3230, 96
        %v3340 = vpop.permute.xlu0 %3339
        %3342 = vrot.lane.b32.xlu0 %v3231, 96
        %v3343 = vpop.permute.xlu0 %3342
        %v3345 = vsel %vm1881, %v3340, 0
        %v3348 = vsel %vm1881, %v3343, 0
        %3350 = vmatprep.subr.bf16.mxu0 0
        %3351 = vmatpush1.bf16.xpose.msra.mxu0 %v3348
        %3352 = vmatprep.subr.bf16.mxu0 0
        %3353 = vmatpush1.bf16.xpose.msra.mxu0 0
        %3354 = vmatprep.subr.bf16.mxu0 0
        %3355 = vmatpush1.bf16.xpose.msra.mxu0 0
        %3356 = vmatprep.subr.bf16.mxu0 0
        %3357 = vmatpush1.bf16.xpose.msra.mxu0 0
        %3358 = vmatprep.subr.bf16.mxu0 0
        %3359 = vmatpush1.bf16.xpose.msra.mxu0 0
        %3360 = vmatprep.subr.bf16.mxu0 0
        %3361 = vmatpush1.bf16.xpose.msra.mxu0 0
        %3362 = vmatprep.subr.bf16.mxu0 0
        %3363 = vmatpush1.bf16.xpose.msra.mxu0 0
        %3364 = vmatprep.subr.bf16.mxu0 0
        %3365 = vmatpush1.bf16.xpose.msra.mxu0 0
        %3366 = vmatprep.subr.bf16.mxu0 0
        %3367 = vmatpush1.bf16.xpose.msra.mxu0 0
        %3368 = vmatprep.subr.bf16.mxu0 0
        %3369 = vmatpush1.bf16.xpose.msra.mxu0 0
        %3370 = vmatprep.subr.bf16.mxu0 0
        %3371 = vmatpush1.bf16.xpose.msra.mxu0 0
        %3372 = vmatprep.subr.bf16.mxu0 0
        %3373 = vmatpush1.bf16.xpose.msra.mxu0 0
        %3374 = vmatprep.subr.bf16.mxu0 0
        %3375 = vmatpush1.bf16.xpose.msra.mxu0 0
        %3376 = vmatprep.subr.bf16.mxu0 0
        %3377 = vmatpush1.bf16.xpose.msra.mxu0 0
        %3378 = vmatprep.subr.bf16.mxu0 0
        %3379 = vmatpush1.bf16.xpose.msra.mxu0 0
        %3380 = vmatprep.subr.bf16.mxu0 0
        %3381 = vmatpush1.bf16.xpose.msra.mxu0 0
        %3382 = vmatprep.mubr.bf16.mxu0 0
        %3383 = vmatmul.mubr.bf16.gmra.mrb[0].mxu0 %v3345
        %v3384 = vpop.f32.mrb[0].mxu0
        %v3385 = vadd.f32 0.0, %v3384
        %v3386 = vpop.f32.mrb[0].mxu0
        %v3387 = vpop.f32.mrb[0].mxu0
        %v3388 = vpop.f32.mrb[0].mxu0
        %3389 = vdwg.mxu0
        %v3390 = vsel %vm1928, %v3385, -inf
        %3391 = vmax.xlane.f32.xlu0 %v3390
        %v3392 = vpop.xlane.xlu0 %3391
        %v3393 = vsub.f32 %v3385, %v3392
        %v3394 = vmul.f32 %v3393, 1.442695
        %v3395 = vpow.pop %v3394
        %v3396 = vsel %vm1928, %v3395, 0.0
        %3397 = vadd.xlane.f32.xlu0 %v3396
        %v3398 = vpop.xlane.xlu0 %3397
        %v3399 = vrcp.pop %v3398
        %v3400 = vmul.f32 %v3395, %v3399
        %v3401 = vpack.c.bf16 %v3400, %v3400
        %3403 = vrot.lane.b32.xlu0 %v3232, 96
        %v3404 = vpop.permute.xlu0 %3403
        %v3406 = vsel %vm1928, %v3401, 0
        %v3409 = vsel %vm1944, %v3404, 0
        %3411 = vmatprep.subr.bf16.mxu0 0
        %3412 = vmatpush1.bf16.msra.mxu0 %v3409
        %3413 = vmatprep.subr.bf16.mxu0 0
        %3414 = vmatpush1.bf16.msra.mxu0 0
        %3415 = vmatprep.subr.bf16.mxu0 0
        %3416 = vmatpush1.bf16.msra.mxu0 0
        %3417 = vmatprep.subr.bf16.mxu0 0
        %3418 = vmatpush1.bf16.msra.mxu0 0
        %3419 = vmatprep.subr.bf16.mxu0 0
        %3420 = vmatpush1.bf16.msra.mxu0 0
        %3421 = vmatprep.subr.bf16.mxu0 0
        %3422 = vmatpush1.bf16.msra.mxu0 0
        %3423 = vmatprep.subr.bf16.mxu0 0
        %3424 = vmatpush1.bf16.msra.mxu0 0
        %3425 = vmatprep.subr.bf16.mxu0 0
        %3426 = vmatpush1.bf16.msra.mxu0 0
        %3427 = vmatprep.subr.bf16.mxu0 0
        %3428 = vmatpush1.bf16.msra.mxu0 0
        %3429 = vmatprep.subr.bf16.mxu0 0
        %3430 = vmatpush1.bf16.msra.mxu0 0
        %3431 = vmatprep.subr.bf16.mxu0 0
        %3432 = vmatpush1.bf16.msra.mxu0 0
        %3433 = vmatprep.subr.bf16.mxu0 0
        %3434 = vmatpush1.bf16.msra.mxu0 0
        %3435 = vmatprep.subr.bf16.mxu0 0
        %3436 = vmatpush1.bf16.msra.mxu0 0
        %3437 = vmatprep.subr.bf16.mxu0 0
        %3438 = vmatpush1.bf16.msra.mxu0 0
        %3439 = vmatprep.subr.bf16.mxu0 0
        %3440 = vmatpush1.bf16.msra.mxu0 0
        %3441 = vmatprep.subr.bf16.mxu0 0
        %3442 = vmatpush1.bf16.msra.mxu0 0
        %3443 = vmatprep.mubr.bf16.mxu0 0
        %3444 = vmatmul.mubr.bf16.gmra.mrb[0].mxu0 %v3406
        %v3445 = vpop.f32.mrb[0].mxu0
        %v3446 = vadd.f32 0.0, %v3445
        %v3447 = vpop.f32.mrb[0].mxu0
        %v3448 = vpop.f32.mrb[0].mxu0
        %v3449 = vpop.f32.mrb[0].mxu0
        %3450 = vdwg.mxu0
        %3452 = vrot.lane.b32.xlu0 %v3446, 32
        %v3453 = vpop.permute.xlu0 %3452
        %3455 = vst.msk [vmem:[#allocation3] sm:$0xff] %vm2106, %v3453
        %3456 = vrot.lane.b32.xlu0 %v3230, 64
        %v3457 = vpop.permute.xlu0 %3456
        %3458 = vrot.lane.b32.xlu0 %v3231, 64
        %v3459 = vpop.permute.xlu0 %3458
        %v3461 = vsel %vm1881, %v3457, 0
        %v3464 = vsel %vm1881, %v3459, 0
        %3466 = vmatprep.subr.bf16.mxu0 0
        %3467 = vmatpush1.bf16.xpose.msra.mxu0 %v3464
        %3468 = vmatprep.subr.bf16.mxu0 0
        %3469 = vmatpush1.bf16.xpose.msra.mxu0 0
        %3470 = vmatprep.subr.bf16.mxu0 0
        %3471 = vmatpush1.bf16.xpose.msra.mxu0 0
        %3472 = vmatprep.subr.bf16.mxu0 0
        %3473 = vmatpush1.bf16.xpose.msra.mxu0 0
        %3474 = vmatprep.subr.bf16.mxu0 0
        %3475 = vmatpush1.bf16.xpose.msra.mxu0 0
        %3476 = vmatprep.subr.bf16.mxu0 0
        %3477 = vmatpush1.bf16.xpose.msra.mxu0 0
        %3478 = vmatprep.subr.bf16.mxu0 0
        %3479 = vmatpush1.bf16.xpose.msra.mxu0 0
        %3480 = vmatprep.subr.bf16.mxu0 0
        %3481 = vmatpush1.bf16.xpose.msra.mxu0 0
        %3482 = vmatprep.subr.bf16.mxu0 0
        %3483 = vmatpush1.bf16.xpose.msra.mxu0 0
        %3484 = vmatprep.subr.bf16.mxu0 0
        %3485 = vmatpush1.bf16.xpose.msra.mxu0 0
        %3486 = vmatprep.subr.bf16.mxu0 0
        %3487 = vmatpush1.bf16.xpose.msra.mxu0 0
        %3488 = vmatprep.subr.bf16.mxu0 0
        %3489 = vmatpush1.bf16.xpose.msra.mxu0 0
        %3490 = vmatprep.subr.bf16.mxu0 0
        %3491 = vmatpush1.bf16.xpose.msra.mxu0 0
        %3492 = vmatprep.subr.bf16.mxu0 0
        %3493 = vmatpush1.bf16.xpose.msra.mxu0 0
        %3494 = vmatprep.subr.bf16.mxu0 0
        %3495 = vmatpush1.bf16.xpose.msra.mxu0 0
        %3496 = vmatprep.subr.bf16.mxu0 0
        %3497 = vmatpush1.bf16.xpose.msra.mxu0 0
        %3498 = vmatprep.mubr.bf16.mxu0 0
        %3499 = vmatmul.mubr.bf16.gmra.mrb[0].mxu0 %v3461
        %v3500 = vpop.f32.mrb[0].mxu0
        %v3501 = vadd.f32 0.0, %v3500
        %v3502 = vpop.f32.mrb[0].mxu0
        %v3503 = vpop.f32.mrb[0].mxu0
        %v3504 = vpop.f32.mrb[0].mxu0
        %3505 = vdwg.mxu0
        %v3506 = vsel %vm1928, %v3501, -inf
        %3507 = vmax.xlane.f32.xlu0 %v3506
        %v3508 = vpop.xlane.xlu0 %3507
        %v3509 = vsub.f32 %v3501, %v3508
        %v3510 = vmul.f32 %v3509, 1.442695
        %v3511 = vpow.pop %v3510
        %v3512 = vsel %vm1928, %v3511, 0.0
        %3513 = vadd.xlane.f32.xlu0 %v3512
        %v3514 = vpop.xlane.xlu0 %3513
        %v3515 = vrcp.pop %v3514
        %v3516 = vmul.f32 %v3511, %v3515
        %v3517 = vpack.c.bf16 %v3516, %v3516
        %3518 = vrot.lane.b32.xlu0 %v3232, 64
        %v3519 = vpop.permute.xlu0 %3518
        %v3521 = vsel %vm1928, %v3517, 0
        %v3524 = vsel %vm1944, %v3519, 0
        %3526 = vmatprep.subr.bf16.mxu0 0
        %3527 = vmatpush1.bf16.msra.mxu0 %v3524
        %3528 = vmatprep.subr.bf16.mxu0 0
        %3529 = vmatpush1.bf16.msra.mxu0 0
        %3530 = vmatprep.subr.bf16.mxu0 0
        %3531 = vmatpush1.bf16.msra.mxu0 0
        %3532 = vmatprep.subr.bf16.mxu0 0
        %3533 = vmatpush1.bf16.msra.mxu0 0
        %3534 = vmatprep.subr.bf16.mxu0 0
        %3535 = vmatpush1.bf16.msra.mxu0 0
        %3536 = vmatprep.subr.bf16.mxu0 0
        %3537 = vmatpush1.bf16.msra.mxu0 0
        %3538 = vmatprep.subr.bf16.mxu0 0
        %3539 = vmatpush1.bf16.msra.mxu0 0
        %3540 = vmatprep.subr.bf16.mxu0 0
        %3541 = vmatpush1.bf16.msra.mxu0 0
        %3542 = vmatprep.subr.bf16.mxu0 0
        %3543 = vmatpush1.bf16.msra.mxu0 0
        %3544 = vmatprep.subr.bf16.mxu0 0
        %3545 = vmatpush1.bf16.msra.mxu0 0
        %3546 = vmatprep.subr.bf16.mxu0 0
        %3547 = vmatpush1.bf16.msra.mxu0 0
        %3548 = vmatprep.subr.bf16.mxu0 0
        %3549 = vmatpush1.bf16.msra.mxu0 0
        %3550 = vmatprep.subr.bf16.mxu0 0
        %3551 = vmatpush1.bf16.msra.mxu0 0
        %3552 = vmatprep.subr.bf16.mxu0 0
        %3553 = vmatpush1.bf16.msra.mxu0 0
        %3554 = vmatprep.subr.bf16.mxu0 0
        %3555 = vmatpush1.bf16.msra.mxu0 0
        %3556 = vmatprep.subr.bf16.mxu0 0
        %3557 = vmatpush1.bf16.msra.mxu0 0
        %3558 = vmatprep.mubr.bf16.mxu0 0
        %3559 = vmatmul.mubr.bf16.gmra.mrb[0].mxu0 %v3521
        %v3560 = vpop.f32.mrb[0].mxu0
        %v3561 = vadd.f32 0.0, %v3560
        %v3562 = vpop.f32.mrb[0].mxu0
        %v3563 = vpop.f32.mrb[0].mxu0
        %v3564 = vpop.f32.mrb[0].mxu0
        %3565 = vdwg.mxu0
        %3567 = vrot.lane.b32.xlu0 %v3561, 64
        %v3568 = vpop.permute.xlu0 %3567
        %3570 = vst.msk [vmem:[#allocation3] sm:$0xff] %vm2222, %v3568
        %3571 = vrot.lane.b32.xlu0 %v3230, 32
        %v3572 = vpop.permute.xlu0 %3571
        %3573 = vrot.lane.b32.xlu0 %v3231, 32
        %v3574 = vpop.permute.xlu0 %3573
        %v3576 = vsel %vm1881, %v3572, 0
        %v3579 = vsel %vm1881, %v3574, 0
        %3581 = vmatprep.subr.bf16.mxu0 0
        %3582 = vmatpush1.bf16.xpose.msra.mxu0 %v3579
        %3583 = vmatprep.subr.bf16.mxu0 0
        %3584 = vmatpush1.bf16.xpose.msra.mxu0 0
        %3585 = vmatprep.subr.bf16.mxu0 0
        %3586 = vmatpush1.bf16.xpose.msra.mxu0 0
        %3587 = vmatprep.subr.bf16.mxu0 0
        %3588 = vmatpush1.bf16.xpose.msra.mxu0 0
        %3589 = vmatprep.subr.bf16.mxu0 0
        %3590 = vmatpush1.bf16.xpose.msra.mxu0 0
        %3591 = vmatprep.subr.bf16.mxu0 0
        %3592 = vmatpush1.bf16.xpose.msra.mxu0 0
        %3593 = vmatprep.subr.bf16.mxu0 0
        %3594 = vmatpush1.bf16.xpose.msra.mxu0 0
        %3595 = vmatprep.subr.bf16.mxu0 0
        %3596 = vmatpush1.bf16.xpose.msra.mxu0 0
        %3597 = vmatprep.subr.bf16.mxu0 0
        %3598 = vmatpush1.bf16.xpose.msra.mxu0 0
        %3599 = vmatprep.subr.bf16.mxu0 0
        %3600 = vmatpush1.bf16.xpose.msra.mxu0 0
        %3601 = vmatprep.subr.bf16.mxu0 0
        %3602 = vmatpush1.bf16.xpose.msra.mxu0 0
        %3603 = vmatprep.subr.bf16.mxu0 0
        %3604 = vmatpush1.bf16.xpose.msra.mxu0 0
        %3605 = vmatprep.subr.bf16.mxu0 0
        %3606 = vmatpush1.bf16.xpose.msra.mxu0 0
        %3607 = vmatprep.subr.bf16.mxu0 0
        %3608 = vmatpush1.bf16.xpose.msra.mxu0 0
        %3609 = vmatprep.subr.bf16.mxu0 0
        %3610 = vmatpush1.bf16.xpose.msra.mxu0 0
        %3611 = vmatprep.subr.bf16.mxu0 0
        %3612 = vmatpush1.bf16.xpose.msra.mxu0 0
        %3613 = vmatprep.mubr.bf16.mxu0 0
        %3614 = vmatmul.mubr.bf16.gmra.mrb[0].mxu0 %v3576
        %v3615 = vpop.f32.mrb[0].mxu0
        %v3616 = vadd.f32 0.0, %v3615
        %v3617 = vpop.f32.mrb[0].mxu0
        %v3618 = vpop.f32.mrb[0].mxu0
        %v3619 = vpop.f32.mrb[0].mxu0
        %3620 = vdwg.mxu0
        %v3621 = vsel %vm1928, %v3616, -inf
        %3622 = vmax.xlane.f32.xlu0 %v3621
        %v3623 = vpop.xlane.xlu0 %3622
        %v3624 = vsub.f32 %v3616, %v3623
        %v3625 = vmul.f32 %v3624, 1.442695
        %v3626 = vpow.pop %v3625
        %v3627 = vsel %vm1928, %v3626, 0.0
        %3628 = vadd.xlane.f32.xlu0 %v3627
        %v3629 = vpop.xlane.xlu0 %3628
        %v3630 = vrcp.pop %v3629
        %v3631 = vmul.f32 %v3626, %v3630
        %v3632 = vpack.c.bf16 %v3631, %v3631
        %3633 = vrot.lane.b32.xlu0 %v3232, 32
        %v3634 = vpop.permute.xlu0 %3633
        %v3636 = vsel %vm1928, %v3632, 0
        %v3639 = vsel %vm1944, %v3634, 0
        %3641 = vmatprep.subr.bf16.mxu0 0
        %3642 = vmatpush1.bf16.msra.mxu0 %v3639
        %3643 = vmatprep.subr.bf16.mxu0 0
        %3644 = vmatpush1.bf16.msra.mxu0 0
        %3645 = vmatprep.subr.bf16.mxu0 0
        %3646 = vmatpush1.bf16.msra.mxu0 0
        %3647 = vmatprep.subr.bf16.mxu0 0
        %3648 = vmatpush1.bf16.msra.mxu0 0
        %3649 = vmatprep.subr.bf16.mxu0 0
        %3650 = vmatpush1.bf16.msra.mxu0 0
        %3651 = vmatprep.subr.bf16.mxu0 0
        %3652 = vmatpush1.bf16.msra.mxu0 0
        %3653 = vmatprep.subr.bf16.mxu0 0
        %3654 = vmatpush1.bf16.msra.mxu0 0
        %3655 = vmatprep.subr.bf16.mxu0 0
        %3656 = vmatpush1.bf16.msra.mxu0 0
        %3657 = vmatprep.subr.bf16.mxu0 0
        %3658 = vmatpush1.bf16.msra.mxu0 0
        %3659 = vmatprep.subr.bf16.mxu0 0
        %3660 = vmatpush1.bf16.msra.mxu0 0
        %3661 = vmatprep.subr.bf16.mxu0 0
        %3662 = vmatpush1.bf16.msra.mxu0 0
        %3663 = vmatprep.subr.bf16.mxu0 0
        %3664 = vmatpush1.bf16.msra.mxu0 0
        %3665 = vmatprep.subr.bf16.mxu0 0
        %3666 = vmatpush1.bf16.msra.mxu0 0
        %3667 = vmatprep.subr.bf16.mxu0 0
        %3668 = vmatpush1.bf16.msra.mxu0 0
        %3669 = vmatprep.subr.bf16.mxu0 0
        %3670 = vmatpush1.bf16.msra.mxu0 0
        %3671 = vmatprep.subr.bf16.mxu0 0
        %3672 = vmatpush1.bf16.msra.mxu0 0
        %3673 = vmatprep.mubr.bf16.mxu0 0
        %3674 = vmatmul.mubr.bf16.gmra.mrb[0].mxu0 %v3636
        %v3675 = vpop.f32.mrb[0].mxu0
        %v3676 = vadd.f32 0.0, %v3675
        %v3677 = vpop.f32.mrb[0].mxu0
        %v3678 = vpop.f32.mrb[0].mxu0
        %v3679 = vpop.f32.mrb[0].mxu0
        %3680 = vdwg.mxu0
        %3682 = vrot.lane.b32.xlu0 %v3676, 96
        %v3683 = vpop.permute.xlu0 %3682
        %3685 = vst.msk [vmem:[#allocation3] sm:$0xff] %vm2338, %v3683
        %v3686 = vmul.f32 %v3067, 0.17677669
        %v3687 = vpack.c.bf16 %v3686, %v3686
        %v3688 = vpack.c.bf16 %v3225, %v3225
        %v3689 = vpack.c.bf16 %v3227, %v3227
        %v3691 = vsel %vm1881, %v3687, 0
        %v3694 = vsel %vm1881, %v3688, 0
        %3696 = vmatprep.subr.bf16.mxu0 0
        %3697 = vmatpush1.bf16.xpose.msra.mxu0 %v3694
        %3698 = vmatprep.subr.bf16.mxu0 0
        %3699 = vmatpush1.bf16.xpose.msra.mxu0 0
        %3700 = vmatprep.subr.bf16.mxu0 0
        %3701 = vmatpush1.bf16.xpose.msra.mxu0 0
        %3702 = vmatprep.subr.bf16.mxu0 0
        %3703 = vmatpush1.bf16.xpose.msra.mxu0 0
        %3704 = vmatprep.subr.bf16.mxu0 0
        %3705 = vmatpush1.bf16.xpose.msra.mxu0 0
        %3706 = vmatprep.subr.bf16.mxu0 0
        %3707 = vmatpush1.bf16.xpose.msra.mxu0 0
        %3708 = vmatprep.subr.bf16.mxu0 0
        %3709 = vmatpush1.bf16.xpose.msra.mxu0 0
        %3710 = vmatprep.subr.bf16.mxu0 0
        %3711 = vmatpush1.bf16.xpose.msra.mxu0 0
        %3712 = vmatprep.subr.bf16.mxu0 0
        %3713 = vmatpush1.bf16.xpose.msra.mxu0 0
        %3714 = vmatprep.subr.bf16.mxu0 0
        %3715 = vmatpush1.bf16.xpose.msra.mxu0 0
        %3716 = vmatprep.subr.bf16.mxu0 0
        %3717 = vmatpush1.bf16.xpose.msra.mxu0 0
        %3718 = vmatprep.subr.bf16.mxu0 0
        %3719 = vmatpush1.bf16.xpose.msra.mxu0 0
        %3720 = vmatprep.subr.bf16.mxu0 0
        %3721 = vmatpush1.bf16.xpose.msra.mxu0 0
        %3722 = vmatprep.subr.bf16.mxu0 0
        %3723 = vmatpush1.bf16.xpose.msra.mxu0 0
        %3724 = vmatprep.subr.bf16.mxu0 0
        %3725 = vmatpush1.bf16.xpose.msra.mxu0 0
        %3726 = vmatprep.subr.bf16.mxu0 0
        %3727 = vmatpush1.bf16.xpose.msra.mxu0 0
        %3728 = vmatprep.mubr.bf16.mxu0 0
        %3729 = vmatmul.mubr.bf16.gmra.mrb[0].mxu0 %v3691
        %v3730 = vpop.f32.mrb[0].mxu0
        %v3731 = vadd.f32 0.0, %v3730
        %v3732 = vpop.f32.mrb[0].mxu0
        %v3733 = vpop.f32.mrb[0].mxu0
        %v3734 = vpop.f32.mrb[0].mxu0
        %3735 = vdwg.mxu0
        %v3736 = vsel %vm1928, %v3731, -inf
        %3737 = vmax.xlane.f32.xlu0 %v3736
        %v3738 = vpop.xlane.xlu0 %3737
        %v3739 = vsub.f32 %v3731, %v3738
        %v3740 = vmul.f32 %v3739, 1.442695
        %v3741 = vpow.pop %v3740
        %v3742 = vsel %vm1928, %v3741, 0.0
        %3743 = vadd.xlane.f32.xlu0 %v3742
        %v3744 = vpop.xlane.xlu0 %3743
        %v3745 = vrcp.pop %v3744
        %v3746 = vmul.f32 %v3741, %v3745
        %v3747 = vpack.c.bf16 %v3746, %v3746
        %v3749 = vsel %vm1928, %v3747, 0
        %v3752 = vsel %vm1944, %v3689, 0
        %3754 = vmatprep.subr.bf16.mxu0 0
        %3755 = vmatpush1.bf16.msra.mxu0 %v3752
        %3756 = vmatprep.subr.bf16.mxu0 0
        %3757 = vmatpush1.bf16.msra.mxu0 0
        %3758 = vmatprep.subr.bf16.mxu0 0
        %3759 = vmatpush1.bf16.msra.mxu0 0
        %3760 = vmatprep.subr.bf16.mxu0 0
        %3761 = vmatpush1.bf16.msra.mxu0 0
        %3762 = vmatprep.subr.bf16.mxu0 0
        %3763 = vmatpush1.bf16.msra.mxu0 0
        %3764 = vmatprep.subr.bf16.mxu0 0
        %3765 = vmatpush1.bf16.msra.mxu0 0
        %3766 = vmatprep.subr.bf16.mxu0 0
        %3767 = vmatpush1.bf16.msra.mxu0 0
        %3768 = vmatprep.subr.bf16.mxu0 0
        %3769 = vmatpush1.bf16.msra.mxu0 0
        %3770 = vmatprep.subr.bf16.mxu0 0
        %3771 = vmatpush1.bf16.msra.mxu0 0
        %3772 = vmatprep.subr.bf16.mxu0 0
        %3773 = vmatpush1.bf16.msra.mxu0 0
        %3774 = vmatprep.subr.bf16.mxu0 0
        %3775 = vmatpush1.bf16.msra.mxu0 0
        %3776 = vmatprep.subr.bf16.mxu0 0
        %3777 = vmatpush1.bf16.msra.mxu0 0
        %3778 = vmatprep.subr.bf16.mxu0 0
        %3779 = vmatpush1.bf16.msra.mxu0 0
        %3780 = vmatprep.subr.bf16.mxu0 0
        %3781 = vmatpush1.bf16.msra.mxu0 0
        %3782 = vmatprep.subr.bf16.mxu0 0
        %3783 = vmatpush1.bf16.msra.mxu0 0
        %3784 = vmatprep.subr.bf16.mxu0 0
        %3785 = vmatpush1.bf16.msra.mxu0 0
        %3786 = vmatprep.mubr.bf16.mxu0 0
        %3787 = vmatmul.mubr.bf16.gmra.mrb[0].mxu0 %v3749
        %v3788 = vpop.f32.mrb[0].mxu0
        %v3789 = vadd.f32 0.0, %v3788
        %v3790 = vpop.f32.mrb[0].mxu0
        %v3791 = vpop.f32.mrb[0].mxu0
        %v3792 = vpop.f32.mrb[0].mxu0
        %3793 = vdwg.mxu0
        %3794 = vst.msk [vmem:[#allocation3 + $0x8] sm:$0xff] %vm1881, %v3789
        %3796 = vrot.lane.b32.xlu0 %v3687, 96
        %v3797 = vpop.permute.xlu0 %3796
        %3799 = vrot.lane.b32.xlu0 %v3688, 96
        %v3800 = vpop.permute.xlu0 %3799
        %v3802 = vsel %vm1881, %v3797, 0
        %v3805 = vsel %vm1881, %v3800, 0
        %3807 = vmatprep.subr.bf16.mxu0 0
        %3808 = vmatpush1.bf16.xpose.msra.mxu0 %v3805
        %3809 = vmatprep.subr.bf16.mxu0 0
        %3810 = vmatpush1.bf16.xpose.msra.mxu0 0
        %3811 = vmatprep.subr.bf16.mxu0 0
        %3812 = vmatpush1.bf16.xpose.msra.mxu0 0
        %3813 = vmatprep.subr.bf16.mxu0 0
        %3814 = vmatpush1.bf16.xpose.msra.mxu0 0
        %3815 = vmatprep.subr.bf16.mxu0 0
        %3816 = vmatpush1.bf16.xpose.msra.mxu0 0
        %3817 = vmatprep.subr.bf16.mxu0 0
        %3818 = vmatpush1.bf16.xpose.msra.mxu0 0
        %3819 = vmatprep.subr.bf16.mxu0 0
        %3820 = vmatpush1.bf16.xpose.msra.mxu0 0
        %3821 = vmatprep.subr.bf16.mxu0 0
        %3822 = vmatpush1.bf16.xpose.msra.mxu0 0
        %3823 = vmatprep.subr.bf16.mxu0 0
        %3824 = vmatpush1.bf16.xpose.msra.mxu0 0
        %3825 = vmatprep.subr.bf16.mxu0 0
        %3826 = vmatpush1.bf16.xpose.msra.mxu0 0
        %3827 = vmatprep.subr.bf16.mxu0 0
        %3828 = vmatpush1.bf16.xpose.msra.mxu0 0
        %3829 = vmatprep.subr.bf16.mxu0 0
        %3830 = vmatpush1.bf16.xpose.msra.mxu0 0
        %3831 = vmatprep.subr.bf16.mxu0 0
        %3832 = vmatpush1.bf16.xpose.msra.mxu0 0
        %3833 = vmatprep.subr.bf16.mxu0 0
        %3834 = vmatpush1.bf16.xpose.msra.mxu0 0
        %3835 = vmatprep.subr.bf16.mxu0 0
        %3836 = vmatpush1.bf16.xpose.msra.mxu0 0
        %3837 = vmatprep.subr.bf16.mxu0 0
        %3838 = vmatpush1.bf16.xpose.msra.mxu0 0
        %3839 = vmatprep.mubr.bf16.mxu0 0
        %3840 = vmatmul.mubr.bf16.gmra.mrb[0].mxu0 %v3802
        %v3841 = vpop.f32.mrb[0].mxu0
        %v3842 = vadd.f32 0.0, %v3841
        %v3843 = vpop.f32.mrb[0].mxu0
        %v3844 = vpop.f32.mrb[0].mxu0
        %v3845 = vpop.f32.mrb[0].mxu0
        %3846 = vdwg.mxu0
        %v3847 = vsel %vm1928, %v3842, -inf
        %3848 = vmax.xlane.f32.xlu0 %v3847
        %v3849 = vpop.xlane.xlu0 %3848
        %v3850 = vsub.f32 %v3842, %v3849
        %v3851 = vmul.f32 %v3850, 1.442695
        %v3852 = vpow.pop %v3851
        %v3853 = vsel %vm1928, %v3852, 0.0
        %3854 = vadd.xlane.f32.xlu0 %v3853
        %v3855 = vpop.xlane.xlu0 %3854
        %v3856 = vrcp.pop %v3855
        %v3857 = vmul.f32 %v3852, %v3856
        %v3858 = vpack.c.bf16 %v3857, %v3857
        %3860 = vrot.lane.b32.xlu0 %v3689, 96
        %v3861 = vpop.permute.xlu0 %3860
        %v3863 = vsel %vm1928, %v3858, 0
        %v3866 = vsel %vm1944, %v3861, 0
        %3868 = vmatprep.subr.bf16.mxu0 0
        %3869 = vmatpush1.bf16.msra.mxu0 %v3866
        %3870 = vmatprep.subr.bf16.mxu0 0
        %3871 = vmatpush1.bf16.msra.mxu0 0
        %3872 = vmatprep.subr.bf16.mxu0 0
        %3873 = vmatpush1.bf16.msra.mxu0 0
        %3874 = vmatprep.subr.bf16.mxu0 0
        %3875 = vmatpush1.bf16.msra.mxu0 0
        %3876 = vmatprep.subr.bf16.mxu0 0
        %3877 = vmatpush1.bf16.msra.mxu0 0
        %3878 = vmatprep.subr.bf16.mxu0 0
        %3879 = vmatpush1.bf16.msra.mxu0 0
        %3880 = vmatprep.subr.bf16.mxu0 0
        %3881 = vmatpush1.bf16.msra.mxu0 0
        %3882 = vmatprep.subr.bf16.mxu0 0
        %3883 = vmatpush1.bf16.msra.mxu0 0
        %3884 = vmatprep.subr.bf16.mxu0 0
        %3885 = vmatpush1.bf16.msra.mxu0 0
        %3886 = vmatprep.subr.bf16.mxu0 0
        %3887 = vmatpush1.bf16.msra.mxu0 0
        %3888 = vmatprep.subr.bf16.mxu0 0
        %3889 = vmatpush1.bf16.msra.mxu0 0
        %3890 = vmatprep.subr.bf16.mxu0 0
        %3891 = vmatpush1.bf16.msra.mxu0 0
        %3892 = vmatprep.subr.bf16.mxu0 0
        %3893 = vmatpush1.bf16.msra.mxu0 0
        %3894 = vmatprep.subr.bf16.mxu0 0
        %3895 = vmatpush1.bf16.msra.mxu0 0
        %3896 = vmatprep.subr.bf16.mxu0 0
        %3897 = vmatpush1.bf16.msra.mxu0 0
        %3898 = vmatprep.subr.bf16.mxu0 0
        %3899 = vmatpush1.bf16.msra.mxu0 0
        %3900 = vmatprep.mubr.bf16.mxu0 0
        %3901 = vmatmul.mubr.bf16.gmra.mrb[0].mxu0 %v3863
        %v3902 = vpop.f32.mrb[0].mxu0
        %v3903 = vadd.f32 0.0, %v3902
        %v3904 = vpop.f32.mrb[0].mxu0
        %v3905 = vpop.f32.mrb[0].mxu0
        %v3906 = vpop.f32.mrb[0].mxu0
        %3907 = vdwg.mxu0
        %3909 = vrot.lane.b32.xlu0 %v3903, 32
        %v3910 = vpop.permute.xlu0 %3909
        %3912 = vst.msk [vmem:[#allocation3 + $0x8] sm:$0xff] %vm2106, %v3910
        %3913 = vrot.lane.b32.xlu0 %v3687, 64
        %v3914 = vpop.permute.xlu0 %3913
        %3915 = vrot.lane.b32.xlu0 %v3688, 64
        %v3916 = vpop.permute.xlu0 %3915
        %v3918 = vsel %vm1881, %v3914, 0
        %v3921 = vsel %vm1881, %v3916, 0
        %3923 = vmatprep.subr.bf16.mxu0 0
        %3924 = vmatpush1.bf16.xpose.msra.mxu0 %v3921
        %3925 = vmatprep.subr.bf16.mxu0 0
        %3926 = vmatpush1.bf16.xpose.msra.mxu0 0
        %3927 = vmatprep.subr.bf16.mxu0 0
        %3928 = vmatpush1.bf16.xpose.msra.mxu0 0
        %3929 = vmatprep.subr.bf16.mxu0 0
        %3930 = vmatpush1.bf16.xpose.msra.mxu0 0
        %3931 = vmatprep.subr.bf16.mxu0 0
        %3932 = vmatpush1.bf16.xpose.msra.mxu0 0
        %3933 = vmatprep.subr.bf16.mxu0 0
        %3934 = vmatpush1.bf16.xpose.msra.mxu0 0
        %3935 = vmatprep.subr.bf16.mxu0 0
        %3936 = vmatpush1.bf16.xpose.msra.mxu0 0
        %3937 = vmatprep.subr.bf16.mxu0 0
        %3938 = vmatpush1.bf16.xpose.msra.mxu0 0
        %3939 = vmatprep.subr.bf16.mxu0 0
        %3940 = vmatpush1.bf16.xpose.msra.mxu0 0
        %3941 = vmatprep.subr.bf16.mxu0 0
        %3942 = vmatpush1.bf16.xpose.msra.mxu0 0
        %3943 = vmatprep.subr.bf16.mxu0 0
        %3944 = vmatpush1.bf16.xpose.msra.mxu0 0
        %3945 = vmatprep.subr.bf16.mxu0 0
        %3946 = vmatpush1.bf16.xpose.msra.mxu0 0
        %3947 = vmatprep.subr.bf16.mxu0 0
        %3948 = vmatpush1.bf16.xpose.msra.mxu0 0
        %3949 = vmatprep.subr.bf16.mxu0 0
        %3950 = vmatpush1.bf16.xpose.msra.mxu0 0
        %3951 = vmatprep.subr.bf16.mxu0 0
        %3952 = vmatpush1.bf16.xpose.msra.mxu0 0
        %3953 = vmatprep.subr.bf16.mxu0 0
        %3954 = vmatpush1.bf16.xpose.msra.mxu0 0
        %3955 = vmatprep.mubr.bf16.mxu0 0
        %3956 = vmatmul.mubr.bf16.gmra.mrb[0].mxu0 %v3918
        %v3957 = vpop.f32.mrb[0].mxu0
        %v3958 = vadd.f32 0.0, %v3957
        %v3959 = vpop.f32.mrb[0].mxu0
        %v3960 = vpop.f32.mrb[0].mxu0
        %v3961 = vpop.f32.mrb[0].mxu0
        %3962 = vdwg.mxu0
        %v3963 = vsel %vm1928, %v3958, -inf
        %3964 = vmax.xlane.f32.xlu0 %v3963
        %v3965 = vpop.xlane.xlu0 %3964
        %v3966 = vsub.f32 %v3958, %v3965
        %v3967 = vmul.f32 %v3966, 1.442695
        %v3968 = vpow.pop %v3967
        %v3969 = vsel %vm1928, %v3968, 0.0
        %3970 = vadd.xlane.f32.xlu0 %v3969
        %v3971 = vpop.xlane.xlu0 %3970
        %v3972 = vrcp.pop %v3971
        %v3973 = vmul.f32 %v3968, %v3972
        %v3974 = vpack.c.bf16 %v3973, %v3973
        %3975 = vrot.lane.b32.xlu0 %v3689, 64
        %v3976 = vpop.permute.xlu0 %3975
        %v3978 = vsel %vm1928, %v3974, 0
        %v3981 = vsel %vm1944, %v3976, 0
        %3983 = vmatprep.subr.bf16.mxu0 0
        %3984 = vmatpush1.bf16.msra.mxu0 %v3981
        %3985 = vmatprep.subr.bf16.mxu0 0
        %3986 = vmatpush1.bf16.msra.mxu0 0
        %3987 = vmatprep.subr.bf16.mxu0 0
        %3988 = vmatpush1.bf16.msra.mxu0 0
        %3989 = vmatprep.subr.bf16.mxu0 0
        %3990 = vmatpush1.bf16.msra.mxu0 0
        %3991 = vmatprep.subr.bf16.mxu0 0
        %3992 = vmatpush1.bf16.msra.mxu0 0
        %3993 = vmatprep.subr.bf16.mxu0 0
        %3994 = vmatpush1.bf16.msra.mxu0 0
        %3995 = vmatprep.subr.bf16.mxu0 0
        %3996 = vmatpush1.bf16.msra.mxu0 0
        %3997 = vmatprep.subr.bf16.mxu0 0
        %3998 = vmatpush1.bf16.msra.mxu0 0
        %3999 = vmatprep.subr.bf16.mxu0 0
        %4000 = vmatpush1.bf16.msra.mxu0 0
        %4001 = vmatprep.subr.bf16.mxu0 0
        %4002 = vmatpush1.bf16.msra.mxu0 0
        %4003 = vmatprep.subr.bf16.mxu0 0
        %4004 = vmatpush1.bf16.msra.mxu0 0
        %4005 = vmatprep.subr.bf16.mxu0 0
        %4006 = vmatpush1.bf16.msra.mxu0 0
        %4007 = vmatprep.subr.bf16.mxu0 0
        %4008 = vmatpush1.bf16.msra.mxu0 0
        %4009 = vmatprep.subr.bf16.mxu0 0
        %4010 = vmatpush1.bf16.msra.mxu0 0
        %4011 = vmatprep.subr.bf16.mxu0 0
        %4012 = vmatpush1.bf16.msra.mxu0 0
        %4013 = vmatprep.subr.bf16.mxu0 0
        %4014 = vmatpush1.bf16.msra.mxu0 0
        %4015 = vmatprep.mubr.bf16.mxu0 0
        %4016 = vmatmul.mubr.bf16.gmra.mrb[0].mxu0 %v3978
        %v4017 = vpop.f32.mrb[0].mxu0
        %v4018 = vadd.f32 0.0, %v4017
        %v4019 = vpop.f32.mrb[0].mxu0
        %v4020 = vpop.f32.mrb[0].mxu0
        %v4021 = vpop.f32.mrb[0].mxu0
        %4022 = vdwg.mxu0
        %4024 = vrot.lane.b32.xlu0 %v4018, 64
        %v4025 = vpop.permute.xlu0 %4024
        %4027 = vst.msk [vmem:[#allocation3 + $0x8] sm:$0xff] %vm2222, %v4025
        %4028 = vrot.lane.b32.xlu0 %v3687, 32
        %v4029 = vpop.permute.xlu0 %4028
        %4030 = vrot.lane.b32.xlu0 %v3688, 32
        %v4031 = vpop.permute.xlu0 %4030
        %v4033 = vsel %vm1881, %v4029, 0
        %v4036 = vsel %vm1881, %v4031, 0
        %4038 = vmatprep.subr.bf16.mxu0 0
        %4039 = vmatpush1.bf16.xpose.msra.mxu0 %v4036
        %4040 = vmatprep.subr.bf16.mxu0 0
        %4041 = vmatpush1.bf16.xpose.msra.mxu0 0
        %4042 = vmatprep.subr.bf16.mxu0 0
        %4043 = vmatpush1.bf16.xpose.msra.mxu0 0
        %4044 = vmatprep.subr.bf16.mxu0 0
        %4045 = vmatpush1.bf16.xpose.msra.mxu0 0
        %4046 = vmatprep.subr.bf16.mxu0 0
        %4047 = vmatpush1.bf16.xpose.msra.mxu0 0
        %4048 = vmatprep.subr.bf16.mxu0 0
        %4049 = vmatpush1.bf16.xpose.msra.mxu0 0
        %4050 = vmatprep.subr.bf16.mxu0 0
        %4051 = vmatpush1.bf16.xpose.msra.mxu0 0
        %4052 = vmatprep.subr.bf16.mxu0 0
        %4053 = vmatpush1.bf16.xpose.msra.mxu0 0
        %4054 = vmatprep.subr.bf16.mxu0 0
        %4055 = vmatpush1.bf16.xpose.msra.mxu0 0
        %4056 = vmatprep.subr.bf16.mxu0 0
        %4057 = vmatpush1.bf16.xpose.msra.mxu0 0
        %4058 = vmatprep.subr.bf16.mxu0 0
        %4059 = vmatpush1.bf16.xpose.msra.mxu0 0
        %4060 = vmatprep.subr.bf16.mxu0 0
        %4061 = vmatpush1.bf16.xpose.msra.mxu0 0
        %4062 = vmatprep.subr.bf16.mxu0 0
        %4063 = vmatpush1.bf16.xpose.msra.mxu0 0
        %4064 = vmatprep.subr.bf16.mxu0 0
        %4065 = vmatpush1.bf16.xpose.msra.mxu0 0
        %4066 = vmatprep.subr.bf16.mxu0 0
        %4067 = vmatpush1.bf16.xpose.msra.mxu0 0
        %4068 = vmatprep.subr.bf16.mxu0 0
        %4069 = vmatpush1.bf16.xpose.msra.mxu0 0
        %4070 = vmatprep.mubr.bf16.mxu0 0
        %4071 = vmatmul.mubr.bf16.gmra.mrb[0].mxu0 %v4033
        %v4072 = vpop.f32.mrb[0].mxu0
        %v4073 = vadd.f32 0.0, %v4072
        %v4074 = vpop.f32.mrb[0].mxu0
        %v4075 = vpop.f32.mrb[0].mxu0
        %v4076 = vpop.f32.mrb[0].mxu0
        %4077 = vdwg.mxu0
        %v4078 = vsel %vm1928, %v4073, -inf
        %4079 = vmax.xlane.f32.xlu0 %v4078
        %v4080 = vpop.xlane.xlu0 %4079
        %v4081 = vsub.f32 %v4073, %v4080
        %v4082 = vmul.f32 %v4081, 1.442695
        %v4083 = vpow.pop %v4082
        %v4084 = vsel %vm1928, %v4083, 0.0
        %4085 = vadd.xlane.f32.xlu0 %v4084
        %v4086 = vpop.xlane.xlu0 %4085
        %v4087 = vrcp.pop %v4086
        %v4088 = vmul.f32 %v4083, %v4087
        %v4089 = vpack.c.bf16 %v4088, %v4088
        %4090 = vrot.lane.b32.xlu0 %v3689, 32
        %v4091 = vpop.permute.xlu0 %4090
        %v4093 = vsel %vm1928, %v4089, 0
        %v4096 = vsel %vm1944, %v4091, 0
        %4098 = vmatprep.subr.bf16.mxu0 0
        %4099 = vmatpush1.bf16.msra.mxu0 %v4096
        %4100 = vmatprep.subr.bf16.mxu0 0
        %4101 = vmatpush1.bf16.msra.mxu0 0
        %4102 = vmatprep.subr.bf16.mxu0 0
        %4103 = vmatpush1.bf16.msra.mxu0 0
        %4104 = vmatprep.subr.bf16.mxu0 0
        %4105 = vmatpush1.bf16.msra.mxu0 0
        %4106 = vmatprep.subr.bf16.mxu0 0
        %4107 = vmatpush1.bf16.msra.mxu0 0
        %4108 = vmatprep.subr.bf16.mxu0 0
        %4109 = vmatpush1.bf16.msra.mxu0 0
        %4110 = vmatprep.subr.bf16.mxu0 0
        %4111 = vmatpush1.bf16.msra.mxu0 0
        %4112 = vmatprep.subr.bf16.mxu0 0
        %4113 = vmatpush1.bf16.msra.mxu0 0
        %4114 = vmatprep.subr.bf16.mxu0 0
        %4115 = vmatpush1.bf16.msra.mxu0 0
        %4116 = vmatprep.subr.bf16.mxu0 0
        %4117 = vmatpush1.bf16.msra.mxu0 0
        %4118 = vmatprep.subr.bf16.mxu0 0
        %4119 = vmatpush1.bf16.msra.mxu0 0
        %4120 = vmatprep.subr.bf16.mxu0 0
        %4121 = vmatpush1.bf16.msra.mxu0 0
        %4122 = vmatprep.subr.bf16.mxu0 0
        %4123 = vmatpush1.bf16.msra.mxu0 0
        %4124 = vmatprep.subr.bf16.mxu0 0
        %4125 = vmatpush1.bf16.msra.mxu0 0
        %4126 = vmatprep.subr.bf16.mxu0 0
        %4127 = vmatpush1.bf16.msra.mxu0 0
        %4128 = vmatprep.subr.bf16.mxu0 0
        %4129 = vmatpush1.bf16.msra.mxu0 0
        %4130 = vmatprep.mubr.bf16.mxu0 0
        %4131 = vmatmul.mubr.bf16.gmra.mrb[0].mxu0 %v4093
        %v4132 = vpop.f32.mrb[0].mxu0
        %v4133 = vadd.f32 0.0, %v4132
        %v4134 = vpop.f32.mrb[0].mxu0
        %v4135 = vpop.f32.mrb[0].mxu0
        %v4136 = vpop.f32.mrb[0].mxu0
        %4137 = vdwg.mxu0
        %4139 = vrot.lane.b32.xlu0 %v4133, 96
        %v4140 = vpop.permute.xlu0 %4139
        %4142 = vst.msk [vmem:[#allocation3 + $0x8] sm:$0xff] %vm2338, %v4140
        %v4143 = vld [vmem:[#allocation3] sm:$0xff]
        %v4144 = vld [vmem:[#allocation3 + $0x8] sm:$0xff]
        %v4145 = vld [vmem:[%s1264] sm:$0xf]
        %v4146 = vld [vmem:[%s1264 + $0x4] sm:$0xf]
        %v4147 = vld [vmem:[%s1264 + $0x8] sm:$0xf]
        %v4148 = vld [vmem:[%s1264 + $0xc] sm:$0xf]
        %v4149 = vld [vmem:[%s1264 + $0x10] sm:$0xf]
        %v4150 = vld [vmem:[%s1264 + $0x14] sm:$0xf]
        %v4151 = vld [vmem:[%s1264 + $0x18] sm:$0xf]
        %v4152 = vld [vmem:[%s1264 + $0x1c] sm:$0xf]
        %v4153 = vld [vmem:[%s1264 + $0x20] sm:$0xf]
        %v4154 = vld [vmem:[%s1264 + $0x24] sm:$0xf]
        %v4155 = vld [vmem:[%s1264 + $0x28] sm:$0xf]
        %v4156 = vld [vmem:[%s1264 + $0x2c] sm:$0xf]
        %v4157 = vld [vmem:[%s1264 + $0x30] sm:$0xf]
        %v4158 = vld [vmem:[%s1264 + $0x34] sm:$0xf]
        %v4159 = vld [vmem:[%s1264 + $0x38] sm:$0xf]
        %v4160 = vld [vmem:[%s1264 + $0x3c] sm:$0xf]
        %v4161 = vpack.c.bf16 %v4144, %v4143
        %v4178 = vunpack.c.l.b16 %v4145
        %v4179 = vunpack.c.l.b16 %v4146
        %v4180 = vunpack.c.l.b16 %v4147
        %v4181 = vunpack.c.l.b16 %v4148
        %v4182 = vunpack.c.l.b16 %v4149
        %v4183 = vunpack.c.l.b16 %v4150
        %v4184 = vunpack.c.l.b16 %v4151
        %v4185 = vunpack.c.l.b16 %v4152
        %v4186 = vunpack.c.l.b16 %v4153
        %v4187 = vunpack.c.l.b16 %v4154
        %v4188 = vunpack.c.l.b16 %v4155
        %v4189 = vunpack.c.l.b16 %v4156
        %v4190 = vunpack.c.l.b16 %v4157
        %v4191 = vunpack.c.l.b16 %v4158
        %v4192 = vunpack.c.l.b16 %v4159
        %v4193 = vunpack.c.l.b16 %v4160
        %v4194 = vpack.c.b16 %v4179, %v4178
        %v4195 = vpack.c.b16 %v4181, %v4180
        %v4196 = vpack.c.b16 %v4183, %v4182
        %v4197 = vpack.c.b16 %v4185, %v4184
        %v4198 = vpack.c.b16 %v4187, %v4186
        %v4199 = vpack.c.b16 %v4189, %v4188
        %v4200 = vpack.c.b16 %v4191, %v4190
        %v4201 = vpack.c.b16 %v4193, %v4192
        %4210 = vmatprep.subr.bf16.mxu0 0
        %4211 = vmatpush1.bf16.msra.mxu0 %v4194
        %4212 = vmatprep.subr.bf16.mxu0 0
        %4213 = vmatpush1.bf16.msra.mxu0 %v4195
        %4214 = vmatprep.subr.bf16.mxu0 0
        %4215 = vmatpush1.bf16.msra.mxu0 %v4196
        %4216 = vmatprep.subr.bf16.mxu0 0
        %4217 = vmatpush1.bf16.msra.mxu0 %v4197
        %4218 = vmatprep.subr.bf16.mxu0 0
        %4219 = vmatpush1.bf16.msra.mxu0 %v4198
        %4220 = vmatprep.subr.bf16.mxu0 0
        %4221 = vmatpush1.bf16.msra.mxu0 %v4199
        %4222 = vmatprep.subr.bf16.mxu0 0
        %4223 = vmatpush1.bf16.msra.mxu0 %v4200
        %4224 = vmatprep.subr.bf16.mxu0 0
        %4225 = vmatpush1.bf16.msra.mxu0 %v4201
        %4226 = vmatprep.subr.bf16.mxu0 0
        %4227 = vmatpush1.bf16.msra.mxu0 0
        %4228 = vmatprep.subr.bf16.mxu0 0
        %4229 = vmatpush1.bf16.msra.mxu0 0
        %4230 = vmatprep.subr.bf16.mxu0 0
        %4231 = vmatpush1.bf16.msra.mxu0 0
        %4232 = vmatprep.subr.bf16.mxu0 0
        %4233 = vmatpush1.bf16.msra.mxu0 0
        %4234 = vmatprep.subr.bf16.mxu0 0
        %4235 = vmatpush1.bf16.msra.mxu0 0
        %4236 = vmatprep.subr.bf16.mxu0 0
        %4237 = vmatpush1.bf16.msra.mxu0 0
        %4238 = vmatprep.subr.bf16.mxu0 0
        %4239 = vmatpush1.bf16.msra.mxu0 0
        %4240 = vmatprep.subr.bf16.mxu0 0
        %4241 = vmatpush1.bf16.msra.mxu0 0
        %4242 = vmatprep.mubr.bf16.mxu0 0
        %4243 = vmatmul.mubr.bf16.gmra.mrb[0].mxu0 %v4161
        %v4244 = vpop.f32.mrb[0].mxu0
        %v4245 = vadd.f32 0.0, %v4244
        %v4246 = vpop.f32.mrb[0].mxu0
        %v4247 = vpop.f32.mrb[0].mxu0
        %v4248 = vadd.f32 0.0, %v4247
        %v4249 = vpop.f32.mrb[0].mxu0
        %4250 = vdwg.mxu0
        %v4251 = vadd.f32 %v2955, %v4245
        %v4252 = vadd.f32 %v2956, %v4248
        %v4253 = vld [vmem:[%s1272] sm:$0x1]
        %v4255 = vlaneseq
        %v4256 = vshrl.u32 %v4255, 7
        %v4257 = vsub.s32 0, %v4256
        %v4258 = vrot.slane %v4253, %v4257
        %v4260 = vadd.f32 %v4251, %v4258
        %v4261 = vadd.f32 %v4252, %v4258
        %v4262 = vld [vmem:[%s1280] sm:$0x1]
        %v4263 = vld [vmem:[%s1288] sm:$0x1]
        %4264 = vadd.xlane.f32.xlu0 %v4260
        %v4265 = vpop.xlane.xlu0 %4264
        %4266 = vadd.xlane.f32.xlu0 %v4261
        %v4267 = vpop.xlane.xlu0 %4266
        %v4268 = vmul.f32 %v4265, %v2922
        %v4269 = vmul.f32 %v4267, %v2922
        %v4270 = vsub.f32 %v4260, %v4268
        %v4271 = vsub.f32 %v4261, %v4269
        %v4272 = vmul.f32 %v4270, %v4270
        %v4273 = vmul.f32 %v4271, %v4271
        %4274 = vadd.xlane.f32.xlu0 %v4272
        %v4275 = vpop.xlane.xlu0 %4274
        %4276 = vadd.xlane.f32.xlu0 %v4273
        %v4277 = vpop.xlane.xlu0 %4276
        %v4278 = vmul.f32 %v4275, %v2922
        %v4279 = vmul.f32 %v4277, %v2922
        %v4280 = vadd.f32 %v4278, 1e-06
        %v4281 = vadd.f32 %v4279, 1e-06
        %v4282 = vrsqrt.pop %v4280
        %v4283 = vrsqrt.pop %v4281
        %v4284 = vmul.f32 %v4270, %v4282
        %v4285 = vmul.f32 %v4271, %v4283
        %v4287 = vlaneseq
        %v4288 = vshrl.u32 %v4287, 7
        %v4289 = vsub.s32 0, %v4288
        %v4290 = vrot.slane %v4262, %v4289
        %v4292 = vmul.f32 %v4284, %v4290
        %v4293 = vmul.f32 %v4285, %v4290
        %v4295 = vlaneseq
        %v4296 = vshrl.u32 %v4295, 7
        %v4297 = vsub.s32 0, %v4296
        %v4298 = vrot.slane %v4263, %v4297
        %v4300 = vadd.f32 %v4292, %v4298
        %v4301 = vadd.f32 %v4293, %v4298
        %v4302 = vld [vmem:[%s1297] sm:$0xff]
        %v4303 = vld [vmem:[%s1297 + $0x8] sm:$0xff]
        %v4304 = vld [vmem:[%s1297 + $0x10] sm:$0xff]
        %v4305 = vld [vmem:[%s1297 + $0x18] sm:$0xff]
        %v4306 = vld [vmem:[%s1297 + $0x20] sm:$0xff]
        %v4307 = vld [vmem:[%s1297 + $0x28] sm:$0xff]
        %v4308 = vld [vmem:[%s1297 + $0x30] sm:$0xff]
        %v4309 = vld [vmem:[%s1297 + $0x38] sm:$0xff]
        %v4310 = vld [vmem:[%s1297 + $0x40] sm:$0xff]
        %v4311 = vld [vmem:[%s1297 + $0x48] sm:$0xff]
        %v4312 = vld [vmem:[%s1297 + $0x50] sm:$0xff]
        %v4313 = vld [vmem:[%s1297 + $0x58] sm:$0xff]
        %v4314 = vld [vmem:[%s1297 + $0x60] sm:$0xff]
        %v4315 = vld [vmem:[%s1297 + $0x68] sm:$0xff]
        %v4316 = vld [vmem:[%s1297 + $0x70] sm:$0xff]
        %v4317 = vld [vmem:[%s1297 + $0x78] sm:$0xff]
        %v4318 = vpack.c.bf16 %v4301, %v4300
        %v4319 = vld [vmem:[%s1306] sm:$0x3]
        %v4321 = vlaneseq
        %v4322 = vshrl.u32 %v4321, 7
        %v4323 = vsub.s32 0, %v4322
        %v4324 = vrot.slane %v4319, %v4323
        %v4325 = vlaneseq
        %v4326 = vshrl.u32 %v4325, 7
        %v4327 = vsub.s32 1, %v4326
        %v4328 = vrot.slane %v4319, %v4327
        %v4347 = vunpack.c.l.b16 %v4302
        %v4348 = vunpack.c.h.b16 %v4302
        %v4349 = vunpack.c.l.b16 %v4303
        %v4350 = vunpack.c.h.b16 %v4303
        %v4351 = vunpack.c.l.b16 %v4304
        %v4352 = vunpack.c.h.b16 %v4304
        %v4353 = vunpack.c.l.b16 %v4305
        %v4354 = vunpack.c.h.b16 %v4305
        %v4355 = vunpack.c.l.b16 %v4306
        %v4356 = vunpack.c.h.b16 %v4306
        %v4357 = vunpack.c.l.b16 %v4307
        %v4358 = vunpack.c.h.b16 %v4307
        %v4359 = vunpack.c.l.b16 %v4308
        %v4360 = vunpack.c.h.b16 %v4308
        %v4361 = vunpack.c.l.b16 %v4309
        %v4362 = vunpack.c.h.b16 %v4309
        %v4363 = vunpack.c.l.b16 %v4310
        %v4364 = vunpack.c.h.b16 %v4310
        %v4365 = vunpack.c.l.b16 %v4311
        %v4366 = vunpack.c.h.b16 %v4311
        %v4367 = vunpack.c.l.b16 %v4312
        %v4368 = vunpack.c.h.b16 %v4312
        %v4369 = vunpack.c.l.b16 %v4313
        %v4370 = vunpack.c.h.b16 %v4313
        %v4371 = vunpack.c.l.b16 %v4314
        %v4372 = vunpack.c.h.b16 %v4314
        %v4373 = vunpack.c.l.b16 %v4315
        %v4374 = vunpack.c.h.b16 %v4315
        %v4375 = vunpack.c.l.b16 %v4316
        %v4376 = vunpack.c.h.b16 %v4316
        %v4377 = vunpack.c.l.b16 %v4317
        %v4378 = vunpack.c.h.b16 %v4317
        %v4379 = vpack.c.b16 %v4349, %v4347
        %v4380 = vpack.c.b16 %v4350, %v4348
        %v4381 = vpack.c.b16 %v4353, %v4351
        %v4382 = vpack.c.b16 %v4354, %v4352
        %v4383 = vpack.c.b16 %v4357, %v4355
        %v4384 = vpack.c.b16 %v4358, %v4356
        %v4385 = vpack.c.b16 %v4361, %v4359
        %v4386 = vpack.c.b16 %v4362, %v4360
        %v4387 = vpack.c.b16 %v4365, %v4363
        %v4388 = vpack.c.b16 %v4366, %v4364
        %v4389 = vpack.c.b16 %v4369, %v4367
        %v4390 = vpack.c.b16 %v4370, %v4368
        %v4391 = vpack.c.b16 %v4373, %v4371
        %v4392 = vpack.c.b16 %v4374, %v4372
        %v4393 = vpack.c.b16 %v4377, %v4375
        %v4394 = vpack.c.b16 %v4378, %v4376
        %4411 = vmatprep.subr.bf16.mxu0 %v4380
        %4412 = vmatpush1.bf16.msra.mxu0 %v4379
        %4413 = vmatprep.subr.bf16.mxu0 %v4382
        %4414 = vmatpush1.bf16.msra.mxu0 %v4381
        %4415 = vmatprep.subr.bf16.mxu0 %v4384
        %4416 = vmatpush1.bf16.msra.mxu0 %v4383
        %4417 = vmatprep.subr.bf16.mxu0 %v4386
        %4418 = vmatpush1.bf16.msra.mxu0 %v4385
        %4419 = vmatprep.subr.bf16.mxu0 %v4388
        %4420 = vmatpush1.bf16.msra.mxu0 %v4387
        %4421 = vmatprep.subr.bf16.mxu0 %v4390
        %4422 = vmatpush1.bf16.msra.mxu0 %v4389
        %4423 = vmatprep.subr.bf16.mxu0 %v4392
        %4424 = vmatpush1.bf16.msra.mxu0 %v4391
        %4425 = vmatprep.subr.bf16.mxu0 %v4394
        %4426 = vmatpush1.bf16.msra.mxu0 %v4393
        %4427 = vmatprep.subr.bf16.mxu0 0
        %4428 = vmatpush1.bf16.msra.mxu0 0
        %4429 = vmatprep.subr.bf16.mxu0 0
        %4430 = vmatpush1.bf16.msra.mxu0 0
        %4431 = vmatprep.subr.bf16.mxu0 0
        %4432 = vmatpush1.bf16.msra.mxu0 0
        %4433 = vmatprep.subr.bf16.mxu0 0
        %4434 = vmatpush1.bf16.msra.mxu0 0
        %4435 = vmatprep.subr.bf16.mxu0 0
        %4436 = vmatpush1.bf16.msra.mxu0 0
        %4437 = vmatprep.subr.bf16.mxu0 0
        %4438 = vmatpush1.bf16.msra.mxu0 0
        %4439 = vmatprep.subr.bf16.mxu0 0
        %4440 = vmatpush1.bf16.msra.mxu0 0
        %4441 = vmatprep.subr.bf16.mxu0 0
        %4442 = vmatpush1.bf16.msra.mxu0 0
        %4443 = vmatprep.mubr.bf16.mxu0 0
        %4444 = vmatmul.mubr.bf16.gmra.mrb[0].mxu0 %v4318
        %v4445 = vpop.f32.mrb[0].mxu0
        %v4446 = vadd.f32 %v4324, %v4445
        %v4447 = vpop.f32.mrb[0].mxu0
        %v4448 = vadd.f32 %v4328, %v4447
        %v4449 = vpop.f32.mrb[0].mxu0
        %v4450 = vadd.f32 %v4324, %v4449
        %v4451 = vpop.f32.mrb[0].mxu0
        %v4452 = vadd.f32 %v4328, %v4451
        %4453 = vdwg.mxu0
        %v4454 = vmax.f32 %v4446, 0.0
        %v4455 = vmax.f32 %v4448, 0.0
        %v4456 = vmax.f32 %v4450, 0.0
        %v4457 = vmax.f32 %v4452, 0.0
        %v4458 = vld [vmem:[%s1315] sm:$0xf]
        %v4459 = vld [vmem:[%s1315 + $0x4] sm:$0xf]
        %v4460 = vld [vmem:[%s1315 + $0x8] sm:$0xf]
        %v4461 = vld [vmem:[%s1315 + $0xc] sm:$0xf]
        %v4462 = vld [vmem:[%s1315 + $0x10] sm:$0xf]
        %v4463 = vld [vmem:[%s1315 + $0x14] sm:$0xf]
        %v4464 = vld [vmem:[%s1315 + $0x18] sm:$0xf]
        %v4465 = vld [vmem:[%s1315 + $0x1c] sm:$0xf]
        %v4466 = vld [vmem:[%s1315 + $0x20] sm:$0xf]
        %v4467 = vld [vmem:[%s1315 + $0x24] sm:$0xf]
        %v4468 = vld [vmem:[%s1315 + $0x28] sm:$0xf]
        %v4469 = vld [vmem:[%s1315 + $0x2c] sm:$0xf]
        %v4470 = vld [vmem:[%s1315 + $0x30] sm:$0xf]
        %v4471 = vld [vmem:[%s1315 + $0x34] sm:$0xf]
        %v4472 = vld [vmem:[%s1315 + $0x38] sm:$0xf]
        %v4473 = vld [vmem:[%s1315 + $0x3c] sm:$0xf]
        %v4474 = vld [vmem:[%s1315 + $0x40] sm:$0xf]
        %v4475 = vld [vmem:[%s1315 + $0x44] sm:$0xf]
        %v4476 = vld [vmem:[%s1315 + $0x48] sm:$0xf]
        %v4477 = vld [vmem:[%s1315 + $0x4c] sm:$0xf]
        %v4478 = vld [vmem:[%s1315 + $0x50] sm:$0xf]
        %v4479 = vld [vmem:[%s1315 + $0x54] sm:$0xf]
        %v4480 = vld [vmem:[%s1315 + $0x58] sm:$0xf]
        %v4481 = vld [vmem:[%s1315 + $0x5c] sm:$0xf]
        %v4482 = vld [vmem:[%s1315 + $0x60] sm:$0xf]
        %v4483 = vld [vmem:[%s1315 + $0x64] sm:$0xf]
        %v4484 = vld [vmem:[%s1315 + $0x68] sm:$0xf]
        %v4485 = vld [vmem:[%s1315 + $0x6c] sm:$0xf]
        %v4486 = vld [vmem:[%s1315 + $0x70] sm:$0xf]
        %v4487 = vld [vmem:[%s1315 + $0x74] sm:$0xf]
        %v4488 = vld [vmem:[%s1315 + $0x78] sm:$0xf]
        %v4489 = vld [vmem:[%s1315 + $0x7c] sm:$0xf]
        %v4490 = vpack.c.bf16 %v4456, %v4454
        %v4491 = vpack.c.bf16 %v4457, %v4455
        %v4524 = vunpack.c.l.b16 %v4458
        %v4525 = vunpack.c.l.b16 %v4459
        %v4526 = vunpack.c.l.b16 %v4460
        %v4527 = vunpack.c.l.b16 %v4461
        %v4528 = vunpack.c.l.b16 %v4462
        %v4529 = vunpack.c.l.b16 %v4463
        %v4530 = vunpack.c.l.b16 %v4464
        %v4531 = vunpack.c.l.b16 %v4465
        %v4532 = vunpack.c.l.b16 %v4466
        %v4533 = vunpack.c.l.b16 %v4467
        %v4534 = vunpack.c.l.b16 %v4468
        %v4535 = vunpack.c.l.b16 %v4469
        %v4536 = vunpack.c.l.b16 %v4470
        %v4537 = vunpack.c.l.b16 %v4471
        %v4538 = vunpack.c.l.b16 %v4472
        %v4539 = vunpack.c.l.b16 %v4473
        %v4540 = vunpack.c.l.b16 %v4474
        %v4541 = vunpack.c.l.b16 %v4475
        %v4542 = vunpack.c.l.b16 %v4476
        %v4543 = vunpack.c.l.b16 %v4477
        %v4544 = vunpack.c.l.b16 %v4478
        %v4545 = vunpack.c.l.b16 %v4479
        %v4546 = vunpack.c.l.b16 %v4480
        %v4547 = vunpack.c.l.b16 %v4481
        %v4548 = vunpack.c.l.b16 %v4482
        %v4549 = vunpack.c.l.b16 %v4483
        %v4550 = vunpack.c.l.b16 %v4484
        %v4551 = vunpack.c.l.b16 %v4485
        %v4552 = vunpack.c.l.b16 %v4486
        %v4553 = vunpack.c.l.b16 %v4487
        %v4554 = vunpack.c.l.b16 %v4488
        %v4555 = vunpack.c.l.b16 %v4489
        %v4556 = vpack.c.b16 %v4525, %v4524
        %v4557 = vpack.c.b16 %v4527, %v4526
        %v4558 = vpack.c.b16 %v4529, %v4528
        %v4559 = vpack.c.b16 %v4531, %v4530
        %v4560 = vpack.c.b16 %v4533, %v4532
        %v4561 = vpack.c.b16 %v4535, %v4534
        %v4562 = vpack.c.b16 %v4537, %v4536
        %v4563 = vpack.c.b16 %v4539, %v4538
        %v4564 = vpack.c.b16 %v4541, %v4540
        %v4565 = vpack.c.b16 %v4543, %v4542
        %v4566 = vpack.c.b16 %v4545, %v4544
        %v4567 = vpack.c.b16 %v4547, %v4546
        %v4568 = vpack.c.b16 %v4549, %v4548
        %v4569 = vpack.c.b16 %v4551, %v4550
        %v4570 = vpack.c.b16 %v4553, %v4552
        %v4571 = vpack.c.b16 %v4555, %v4554
        %4588 = vmatprep.subr.bf16.mxu0 0
        %4589 = vmatpush1.bf16.msra.mxu0 %v4556
        %4590 = vmatprep.subr.bf16.mxu0 0
        %4591 = vmatpush1.bf16.msra.mxu0 %v4557
        %4592 = vmatprep.subr.bf16.mxu0 0
        %4593 = vmatpush1.bf16.msra.mxu0 %v4558
        %4594 = vmatprep.subr.bf16.mxu0 0
        %4595 = vmatpush1.bf16.msra.mxu0 %v4559
        %4596 = vmatprep.subr.bf16.mxu0 0
        %4597 = vmatpush1.bf16.msra.mxu0 %v4560
        %4598 = vmatprep.subr.bf16.mxu0 0
        %4599 = vmatpush1.bf16.msra.mxu0 %v4561
        %4600 = vmatprep.subr.bf16.mxu0 0
        %4601 = vmatpush1.bf16.msra.mxu0 %v4562
        %4602 = vmatprep.subr.bf16.mxu0 0
        %4603 = vmatpush1.bf16.msra.mxu0 %v4563
        %4604 = vmatprep.subr.bf16.mxu0 0
        %4605 = vmatpush1.bf16.msra.mxu0 %v4564
        %4606 = vmatprep.subr.bf16.mxu0 0
        %4607 = vmatpush1.bf16.msra.mxu0 %v4565
        %4608 = vmatprep.subr.bf16.mxu0 0
        %4609 = vmatpush1.bf16.msra.mxu0 %v4566
        %4610 = vmatprep.subr.bf16.mxu0 0
        %4611 = vmatpush1.bf16.msra.mxu0 %v4567
        %4612 = vmatprep.subr.bf16.mxu0 0
        %4613 = vmatpush1.bf16.msra.mxu0 %v4568
        %4614 = vmatprep.subr.bf16.mxu0 0
        %4615 = vmatpush1.bf16.msra.mxu0 %v4569
        %4616 = vmatprep.subr.bf16.mxu0 0
        %4617 = vmatpush1.bf16.msra.mxu0 %v4570
        %4618 = vmatprep.subr.bf16.mxu0 0
        %4619 = vmatpush1.bf16.msra.mxu0 %v4571
        %4620 = vmatprep.mubr.bf16.mxu0 %v4491
        %4621 = vmatmul.mubr.bf16.gmra.mrb[0].mxu0 %v4490
        %v4622 = vpop.f32.mrb[0].mxu0
        %v4623 = vadd.f32 0.0, %v4622
        %v4624 = vpop.f32.mrb[0].mxu0
        %v4625 = vpop.f32.mrb[0].mxu0
        %v4626 = vadd.f32 0.0, %v4625
        %v4627 = vpop.f32.mrb[0].mxu0
        %4628 = vdwg.mxu0
        %v4629 = vadd.f32 %v4300, %v4623
        %v4630 = vadd.f32 %v4301, %v4626
        %v4631 = vld [vmem:[%s1323] sm:$0x1]
        %v4633 = vlaneseq
        %v4634 = vshrl.u32 %v4633, 7
        %v4635 = vsub.s32 0, %v4634
        %v4636 = vrot.slane %v4631, %v4635
        %v4638 = vadd.f32 %v4629, %v4636
        %v4639 = vadd.f32 %v4630, %v4636
        %v4640 = vld [vmem:[%s1331] sm:$0x1]
        %v4641 = vld [vmem:[%s1339] sm:$0x1]
        %4642 = vadd.xlane.f32.xlu0 %v4638
        %v4643 = vpop.xlane.xlu0 %4642
        %4644 = vadd.xlane.f32.xlu0 %v4639
        %v4645 = vpop.xlane.xlu0 %4644
        %v4646 = vmul.f32 %v4643, %v2922
        %v4647 = vmul.f32 %v4645, %v2922
        %v4648 = vsub.f32 %v4638, %v4646
        %v4649 = vsub.f32 %v4639, %v4647
        %v4650 = vmul.f32 %v4648, %v4648
        %v4651 = vmul.f32 %v4649, %v4649
        %4652 = vadd.xlane.f32.xlu0 %v4650
        %v4653 = vpop.xlane.xlu0 %4652
        %4654 = vadd.xlane.f32.xlu0 %v4651
        %v4655 = vpop.xlane.xlu0 %4654
        %v4656 = vmul.f32 %v4653, %v2922
        %v4657 = vmul.f32 %v4655, %v2922
        %v4658 = vadd.f32 %v4656, 1e-06
        %v4659 = vadd.f32 %v4657, 1e-06
        %v4660 = vrsqrt.pop %v4658
        %v4661 = vrsqrt.pop %v4659
        %v4662 = vmul.f32 %v4648, %v4660
        %v4663 = vmul.f32 %v4649, %v4661
        %v4665 = vlaneseq
        %v4666 = vshrl.u32 %v4665, 7
        %v4667 = vsub.s32 0, %v4666
        %v4668 = vrot.slane %v4640, %v4667
        %v4670 = vmul.f32 %v4662, %v4668
        %v4671 = vmul.f32 %v4663, %v4668
        %v4673 = vlaneseq
        %v4674 = vshrl.u32 %v4673, 7
        %v4675 = vsub.s32 0, %v4674
        %v4676 = vrot.slane %v4641, %v4675
        %v4678 = vadd.f32 %v4670, %v4676
        %v4679 = vadd.f32 %v4671, %v4676
        %4680 = vst [vmem:[#allocation2] sm:$0xff] %v4678
        %4681 = vst [vmem:[#allocation2 + $0x8] sm:$0xff] %v4679
        %p4682 = scmp.eq.s32.totalorder %s72, 1
        // Predicated region
        $region205: #{scene_branch_forward.4} parent=123 // pred_check
          %p4683 = pneg %p4682
        $region206: #{scene_branch_forward.4} parent=123 // pred_check_branch
          %4685 = sbr.rel (%p4683) target = $region208
        $region207: #{scene_branch_forward.4} parent=123 // pred_region
          %v4686 = vpack.c.bf16 %v4679, %v4678
          %v4688 = vunpack.c.l.b16 %v4686
          %v4689 = vunpack.c.h.b16 %v4686
          %v4690 = vpack.c.b16 %v4688, %v4688
          %v4691 = vpack.c.b16 %v4689, %v4689
          %4694 = vst [vmem:[%s1533] sm:$0xf] %v4690
          %4695 = vst [vmem:[%s1533 + $0x4] sm:$0xf] %v4691
        $region208: #{scene_branch_forward.4} parent=123 // pred_fallthru
          _
        %s4696 = smul.u32 2, %s71
        %p4697 = scmp.lt.s32.totalorder %s4696, 1
        %s4698 = scalar_select %p4697, %s4696, 1
        %s4699 = smul.addr %s4698, 4
        %s4700 = scalar_lea.vmem %s26, %s4699
        // Predicated region
        $region209: #{scene_branch_forward.4} parent=123 // pred_check
          %p4701 = pneg %p758
        $region210: #{scene_branch_forward.4} parent=123 // pred_check_branch
          %4703 = sbr.rel (%p4701) target = $region212
        $region211: #{scene_branch_forward.4} parent=123 // pred_region
          %s4704 = smul.u32 2, %s71
        $region212: #{scene_branch_forward.4} parent=123 // pred_fallthru
          _
        // Predicated region
        $region213: #{scene_branch_forward.4} parent=123 // pred_check
          %p4705 = pneg %p758
        $region214: #{scene_branch_forward.4} parent=123 // pred_check_branch
          %4707 = sbr.rel (%p4705) target = $region216
        $region215: #{scene_branch_forward.4} parent=123 // pred_region
          %s4708 = smul.u32 2, %s71
          %p4709 = scmp.lt.s32.totalorder %s4708, 1
          %s4710 = scalar_select %p4709, %s4708, 1
          %s4711 = smul.addr %s4710, 4
          %s4712 = scalar_lea.vmem %s26, %s4711
        $region216: #{scene_branch_forward.4} parent=123 // pred_fallthru
          _
      $region124: #{scene_branch_forward.4} parent=5 // pred_fallthru
        _
      %p4713 = scmp.le.s32.totalorder 2, %s62
      // Predicated region
      $region217: #{scene_branch_forward.4} parent=5 // pred_check
        %p4714 = pneg %p4713
      $region218: #{scene_branch_forward.4} parent=5 // pred_check_branch
        %4716 = sbr.rel (%p4714) target = $region220
      $region219: #{scene_branch_forward.4} parent=5 // pred_region
        %s4717 = ssub.s32 %s62, 2
      $region220: #{scene_branch_forward.4} parent=5 // pred_fallthru
        _
    $region6: #{scene_branch_forward.4} parent=1 // loop_footer
      %s66 = sadd.s32 1, %s62
    $region7: #{scene_branch_forward.4} parent=1 // loop_footer_branch
      %61 = sbr.rel target = $region3
    $region8: #{scene_branch_forward.4} parent=1 // loop_exit
      _
    %4718 = vsyncpa [#allocation5], 1
    %s4719 = scalar_lea.sflag [#allocation5], 1
    %4720 = vsyncpa %s4719, 1
    %4721 = vsyncpa [#allocation7], 1
    %s4722 = scalar_lea.sflag [#allocation7], 1
    %4723 = vsyncpa %s4722, 1
    %4724 = vsyncpa [#allocation10], 1
    %s4725 = scalar_lea.sflag [#allocation10], 1
    %4726 = vsyncpa %s4725, 1
    %4727 = vsyncpa [#allocation13], 1
    %s4728 = scalar_lea.sflag [#allocation13], 1
    %4729 = vsyncpa %s4728, 1
    %4730 = vsyncpa [#allocation16], 1
    %s4731 = scalar_lea.sflag [#allocation16], 1
    %4732 = vsyncpa %s4731, 1
    %4733 = vsyncpa [#allocation19], 1
    %s4734 = scalar_lea.sflag [#allocation19], 1
    %4735 = vsyncpa %s4734, 1
    %4736 = vsyncpa [#allocation22], 1
    %s4737 = scalar_lea.sflag [#allocation22], 1
    %4738 = vsyncpa %s4737, 1
    %4739 = vsyncpa [#allocation25], 1
    %s4740 = scalar_lea.sflag [#allocation25], 1
    %4741 = vsyncpa %s4740, 1
    %4742 = vsyncpa [#allocation28], 1
    %s4743 = scalar_lea.sflag [#allocation28], 1
    %4744 = vsyncpa %s4743, 1
    %4745 = vsyncpa [#allocation31], 1
    %s4746 = scalar_lea.sflag [#allocation31], 1
    %4747 = vsyncpa %s4746, 1

</llo_original>
